<compile_context>
chip_gen: v7x
topology: tpu7x:2x2x1
jax: 0.10.0
libtpu: 0.0.40
codegen_flags: <defaults>
</compile_context>

<pallas_src>
from functools import partial

import jax
import jax.numpy as jnp
from jax.experimental import pallas as pl
from jax.experimental.pallas import tpu as pltpu


# ---------------------------------------------------------------------------
# Fused decoder-stack kernel: grid = (batch, layer); tgt carried in VMEM scratch.
# ---------------------------------------------------------------------------
def _decoder_stack_kernel(
    # activations
    memv_ref, memk_ref, qpos_ref,
    # self-attention params (scale pre-folded into wq / bq), stacked over layers
    sa_wq, sa_wk, sa_wv, sa_bq, sa_bk, sa_bv, sa_wo, sa_bo,
    # cross-attention params (scale pre-folded into wq / bq), stacked over layers
    ca_wq, ca_wk, ca_wv, ca_bq, ca_bk, ca_bv, ca_wo, ca_bo,
    # layer norms, stacked over layers
    g1, be1, g2, be2, g3, be3,
    # feed-forward, stacked over layers
    w1, fb1, w2, fb2,
    # output
    out_ref,
    # scratch: running decoder state for the current batch element
    tgt_ref,
    *, num_heads):
    f32 = jnp.float32
    bf16 = jnp.bfloat16

    layer = pl.program_id(1)
    last = pl.num_programs(1) - 1

    # tgt starts as zeros for every batch element (PyTorch: tgt = zeros_like(query_embed))
    @pl.when(layer == 0)
    def _():
        tgt_ref[...] = jnp.zeros_like(tgt_ref)

    tgt = tgt_ref[...]       # (Q, D) f32, carried across the layer axis
    memv = memv_ref[0]       # (N, D) f32  (attention "value" = memory)
    memk = memk_ref[0]       # (N, D) f32  (attention "key"   = memory + pos)
    qpos = qpos_ref[...]     # (Q, D) f32  (query_pos, shared across batch)

    def linear(x, w_ref, b_ref):
        # bf16 MXU operands, f32 accumulation, f32 bias add.
        return jnp.dot(x.astype(bf16), w_ref[0],
                       preferred_element_type=f32) + b_ref[0]

    def layernorm(x, g_ref, b_ref):
        mu = jnp.mean(x, axis=-1, keepdims=True)
        xc = x - mu
        var = jnp.mean(xc * xc, axis=-1, keepdims=True)
        return xc * jax.lax.rsqrt(var + 1e-5) * g_ref[0] + b_ref[0]

    def attention(xq, xk, xv, wq, wk, wv, bq, bk, bv, wo, bo):
        q = linear(xq, wq, bq)          # (Lq, D)  -- scale already folded in
        k = linear(xk, wk, bk)          # (Lk, D)
        v = linear(xv, wv, bv)          # (Lk, D)
        lq, d = q.shape
        lk = k.shape[0]
        dh = d // num_heads
        qh = q.reshape(lq, num_heads, dh)
        kh = k.reshape(lk, num_heads, dh)
        vh = v.reshape(lk, num_heads, dh)
        # Head-batched score / context matmuls (no per-head Python loop).
        s = jnp.einsum('qhd,khd->hqk', qh.astype(bf16), kh.astype(bf16),
                       preferred_element_type=f32)                       # (H, Lq, Lk)
        s = s - jnp.max(s, axis=-1, keepdims=True)
        p = jnp.exp(s)
        p = p * pl.reciprocal(jnp.sum(p, axis=-1, keepdims=True), approx=True)
        # attn_drop -> identity at inference
        o = jnp.einsum('hqk,khd->qhd', p.astype(bf16), vh.astype(bf16),
                       preferred_element_type=f32).reshape(lq, d)        # (Lq, D)
        return linear(o, wo, bo)

    # 1) self-attention block (dropout1 -> identity)
    qk_in = tgt + qpos
    x = layernorm(
        tgt + attention(qk_in, qk_in, tgt,
                        sa_wq, sa_wk, sa_wv, sa_bq, sa_bk, sa_bv, sa_wo, sa_bo),
        g1, be1)
    # 2) cross-attention block (dropout2 -> identity)
    x = layernorm(
        x + attention(x + qpos, memk, memv,
                      ca_wq, ca_wk, ca_wv, ca_bq, ca_bk, ca_bv, ca_wo, ca_bo),
        g2, be2)
    # 3) feed-forward with relu (dropout / dropout3 -> identity)
    h = jnp.maximum(linear(x, w1, fb1), 0.0)
    x = layernorm(x + linear(h, w2, fb2), g3, be3)

    tgt_ref[...] = x

    @pl.when(layer == last)
    def _():
        out_ref[0] = x.astype(out_ref.dtype)


def _stack_layer_params(layers):
    """Stack per-layer params along a leading layer axis, in kernel argument order."""
    attn_keys = ('wq', 'wk', 'wv', 'bq', 'bk', 'bv', 'wo', 'bo')
    flat = []
    for attn in ('self_attn', 'cross_attn'):
        for k in attn_keys:
            flat.append(jnp.stack([lp[attn][k] for lp in layers]))
    for k in ('g1', 'be1', 'g2', 'be2', 'g3', 'be3', 'w1', 'b1', 'w2', 'b2'):
        flat.append(jnp.stack([lp[k] for lp in layers]))
    return flat


def _decoder_stack(memory, mem_k, query_pos, stacked, *, num_heads):
    B, N, D = memory.shape
    Q = query_pos.shape[0]
    L = stacked[0].shape[0]

    def w_spec(a):
        rest = a.shape[1:]
        nrest = len(rest)
        return pl.BlockSpec((1,) + rest, lambda b, l, _n=nrest: (l,) + (0,) * _n)

    in_specs = [
        pl.BlockSpec((1, N, D), lambda b, l: (b, 0, 0)),   # memory (value)
        pl.BlockSpec((1, N, D), lambda b, l: (b, 0, 0)),   # memory + pos (key)
        pl.BlockSpec((Q, D), lambda b, l: (0, 0)),         # query_pos (shared)
    ] + [w_spec(a) for a in stacked]

    return pl.pallas_call(
        partial(_decoder_stack_kernel, num_heads=num_heads),
        out_shape=jax.ShapeDtypeStruct((B, Q, D), jnp.float32),
        grid=(B, L),
        in_specs=in_specs,
        out_specs=pl.BlockSpec((1, Q, D), lambda b, l: (b, 0, 0)),
        scratch_shapes=[pltpu.VMEM((Q, D), jnp.float32)],
        compiler_params=pltpu.CompilerParams(
            dimension_semantics=("parallel", "arbitrary")),
    )(memory, mem_k, query_pos, *stacked)


# ---------------------------------------------------------------------------
# Fused class_embed + bbox_embed head kernel (single combined lane-dense output).
# ---------------------------------------------------------------------------
def _heads_kernel(x_ref, w_ref, b_ref, out_ref, *, num_logits):
    f32 = jnp.float32
    y = jnp.dot(x_ref[...].astype(jnp.bfloat16), w_ref[...],
                preferred_element_type=f32) + b_ref[...]
    col = jax.lax.broadcasted_iota(jnp.int32, y.shape, 1)
    sig = 1.0 / (1.0 + jnp.exp(-y))                      # sigmoid for the bbox lanes
    out_ref[...] = jnp.where(col < num_logits, y, sig).astype(out_ref.dtype)


def _heads(x2d, w_head, b_head, *, num_logits):
    M, D = x2d.shape
    P = w_head.shape[1]
    return pl.pallas_call(
        partial(_heads_kernel, num_logits=num_logits),
        out_shape=jax.ShapeDtypeStruct((M, P), jnp.float32),
        grid=(1,),
        in_specs=[pl.BlockSpec((M, D), lambda i: (0, 0)),
                  pl.BlockSpec((D, P), lambda i: (0, 0)),
                  pl.BlockSpec((1, P), lambda i: (0, 0))],
        out_specs=pl.BlockSpec((M, P), lambda i: (0, 0)),
    )(x2d, w_head, b_head)


# ---------------------------------------------------------------------------
# PostFormer forward (batch-first layout; equivalent to the PyTorch seq-first one).
# ---------------------------------------------------------------------------
def postformer_forward(params, src, mask=None, query_embed=None, pos_embed=None,
                       *, num_heads):
    # TODO(synk): tgt_key_padding_mask support; only mask=None is implemented here.
    assert mask is None, "key_padding_mask not supported in this kernel"
    B, N, D = src.shape
    qe = params['query_embed'] if query_embed is None else query_embed   # (Q, D)
    Q = qe.shape[0]

    memory = src.astype(jnp.float32)
    mem_k = memory + pos_embed if pos_embed is not None else memory

    stacked = _stack_layer_params(params['layers'])
    tgt = _decoder_stack(memory, mem_k, qe, stacked, num_heads=num_heads)   # (B, Q, D)

    num_logits = params['w_head'].shape[1] - 4
    flat = _heads(tgt.reshape(B * Q, D), params['w_head'], params['b_head'],
                  num_logits=num_logits)
    pred = flat.reshape(B, Q, -1)
    return {'pred_logits': pred[..., :num_logits],
            'pred_boxes': pred[..., num_logits:]}


# ---------------------------------------------------------------------------
# Parameter construction (weights stored transposed (in, out), bf16; biases f32).
# ---------------------------------------------------------------------------
def init_params(key, *, d_model, nhead, num_layers, dim_feedforward,
                num_queries, num_classes):
    D, F, Q = d_model, dim_feedforward, num_queries
    head_dim = D // nhead
    scale = float(head_dim) ** -0.5
    keys = iter(jax.random.split(key, 256))

    def rnd(shape, s=0.1):
        return jax.random.normal(next(keys), shape, jnp.float32) * s

    def attn_params():
        # Attention scale folded into the Q projection.
        return dict(
            wq=(rnd((D, D)) * scale).astype(jnp.bfloat16),
            wk=rnd((D, D)).astype(jnp.bfloat16),
            wv=rnd((D, D)).astype(jnp.bfloat16),
            bq=rnd((1, D)) * scale,
            bk=rnd((1, D)),
            bv=rnd((1, D)),
            wo=rnd((D, D)).astype(jnp.bfloat16),
            bo=rnd((1, D)),
        )

    layers = []
    for _ in range(num_layers):
        layers.append(dict(
            self_attn=attn_params(),
            cross_attn=attn_params(),
            g1=jnp.ones((1, D), jnp.float32), be1=jnp.zeros((1, D), jnp.float32),
            g2=jnp.ones((1, D), jnp.float32), be2=jnp.zeros((1, D), jnp.float32),
            g3=jnp.ones((1, D), jnp.float32), be3=jnp.zeros((1, D), jnp.float32),
            w1=rnd((D, F)).astype(jnp.bfloat16), b1=rnd((1, F)),
            w2=rnd((F, D)).astype(jnp.bfloat16), b2=rnd((1, D)),
        ))

    # class_embed and bbox_embed fused into one (D, num_classes+1+4) weight.
    w_cls, w_box = rnd((D, num_classes + 1)), rnd((D, 4))
    b_cls, b_box = rnd((1, num_classes + 1)), rnd((1, 4))
    return dict(
        layers=layers,
        query_embed=rnd((Q, D), 0.5),
        w_head=jnp.concatenate([w_cls, w_box], axis=1).astype(jnp.bfloat16),
        b_head=jnp.concatenate([b_cls, b_box], axis=1),
    )


# ---------------------------------------------------------------------------
# Pure-JAX reference (mirrors the kernel numerics: bf16 dot inputs, f32 accumulate).
# ---------------------------------------------------------------------------
def _ref_layernorm(x, g, b):
    mu = jnp.mean(x, axis=-1, keepdims=True)
    xc = x - mu
    var = jnp.mean(xc * xc, axis=-1, keepdims=True)
    return xc * jax.lax.rsqrt(var + 1e-5) * g + b


def _ref_attention(xq, xk, xv, p, num_heads):
    bf16, f32 = jnp.bfloat16, jnp.float32
    q = jnp.dot(xq.astype(bf16), p['wq'], preferred_element_type=f32) + p['bq']
    k = jnp.dot(xk.astype(bf16), p['wk'], preferred_element_type=f32) + p['bk']
    v = jnp.dot(xv.astype(bf16), p['wv'], preferred_element_type=f32) + p['bv']
    lq, d = q.shape
    dh = d // num_heads
    qh = q.reshape(lq, num_heads, dh)
    kh = k.reshape(-1, num_heads, dh)
    vh = v.reshape(-1, num_heads, dh)
    s = jnp.einsum('qhd,khd->hqk', qh.astype(bf16), kh.astype(bf16),
                   preferred_element_type=f32)
    a = jax.nn.softmax(s, axis=-1)
    o = jnp.einsum('hqk,khd->qhd', a.astype(bf16), vh.astype(bf16),
                   preferred_element_type=f32).reshape(lq, d)
    return jnp.dot(o.astype(bf16), p['wo'], preferred_element_type=f32) + p['bo']


def _ref_forward(params, src, pos_embed, *, num_heads):
    bf16, f32 = jnp.bfloat16, jnp.float32
    B, N, D = src.shape
    qe = params['query_embed']
    Q = qe.shape[0]
    memory = src.astype(f32)
    mem_k = memory + pos_embed if pos_embed is not None else memory

    outs = []
    for b in range(B):
        tgt = jnp.zeros((Q, D), f32)
        mv, mk = memory[b], mem_k[b]
        for lp in params['layers']:
            qk_in = tgt + qe
            tgt = _ref_layernorm(
                tgt + _ref_attention(qk_in, qk_in, tgt, lp['self_attn'], num_heads),
                lp['g1'], lp['be1'])
            tgt = _ref_layernorm(
                tgt + _ref_attention(tgt + qe, mk, mv, lp['cross_attn'], num_heads),
                lp['g2'], lp['be2'])
            h = jnp.maximum(
                jnp.dot(tgt.astype(bf16), lp['w1'], preferred_element_type=f32) + lp['b1'],
                0.0)
            tgt = _ref_layernorm(
                tgt + jnp.dot(h.astype(bf16), lp['w2'], preferred_element_type=f32) + lp['b2'],
                lp['g3'], lp['be3'])
        outs.append(tgt)
    out = jnp.stack(outs)                                        # (B, Q, D)

    num_logits = params['w_head'].shape[1] - 4
    y = jnp.dot(out.reshape(B * Q, D).astype(bf16), params['w_head'],
                preferred_element_type=f32) + params['b_head']
    y = y.reshape(B, Q, -1)
    return {'pred_logits': y[..., :num_logits],
            'pred_boxes': jax.nn.sigmoid(y[..., num_logits:])}


if __name__ == "__main__":
    # Small shapes consistent with the module (hidden_dim must equal d_model).
    d_model = 32
    nhead = 4
    num_decoder_layers = 2
    dim_feedforward = 64
    num_queries = 8
    num_classes = 4
    B, N = 2, 16

    key = jax.random.PRNGKey(0)
    kp, ks, kpos = jax.random.split(key, 3)

    params = init_params(kp, d_model=d_model, nhead=nhead,
                         num_layers=num_decoder_layers,
                         dim_feedforward=dim_feedforward,
                         num_queries=num_queries, num_classes=num_classes)
    src = jax.random.normal(ks, (B, N, d_model), jnp.float32)
    pos_embed = jax.random.normal(kpos, (B, N, d_model), jnp.float32) * 0.1

    out = postformer_forward(params, src, mask=None, pos_embed=pos_embed,
                             num_heads=nhead)
    jax.block_until_ready(out)

    ref = _ref_forward(params, src, pos_embed, num_heads=nhead)

    assert out['pred_logits'].shape == (B, num_queries, num_classes + 1)
    assert out['pred_boxes'].shape == (B, num_queries, 4)
    assert jnp.allclose(out['pred_logits'], ref['pred_logits'], atol=2e-2, rtol=2e-2)
    assert jnp.allclose(out['pred_boxes'], ref['pred_boxes'], atol=2e-2, rtol=2e-2)

    print("KERNEL_OK")
</pallas_src>

<mosaic_0001>
module attributes {stable_mosaic.version = 11 : i64} {
  func.func @_decoder_stack_kernel(%arg0: i32, %arg1: i32, %arg2: memref<1x16x32xf32, #tpu.memory_space<vmem>>, %arg3: memref<1x16x32xf32, #tpu.memory_space<vmem>>, %arg4: memref<8x32xf32, #tpu.memory_space<vmem>>, %arg5: memref<1x32x32xbf16, #tpu.memory_space<vmem>>, %arg6: memref<1x32x32xbf16, #tpu.memory_space<vmem>>, %arg7: memref<1x32x32xbf16, #tpu.memory_space<vmem>>, %arg8: memref<1x1x32xf32, #tpu.memory_space<vmem>>, %arg9: memref<1x1x32xf32, #tpu.memory_space<vmem>>, %arg10: memref<1x1x32xf32, #tpu.memory_space<vmem>>, %arg11: memref<1x32x32xbf16, #tpu.memory_space<vmem>>, %arg12: memref<1x1x32xf32, #tpu.memory_space<vmem>>, %arg13: memref<1x32x32xbf16, #tpu.memory_space<vmem>>, %arg14: memref<1x32x32xbf16, #tpu.memory_space<vmem>>, %arg15: memref<1x32x32xbf16, #tpu.memory_space<vmem>>, %arg16: memref<1x1x32xf32, #tpu.memory_space<vmem>>, %arg17: memref<1x1x32xf32, #tpu.memory_space<vmem>>, %arg18: memref<1x1x32xf32, #tpu.memory_space<vmem>>, %arg19: memref<1x32x32xbf16, #tpu.memory_space<vmem>>, %arg20: memref<1x1x32xf32, #tpu.memory_space<vmem>>, %arg21: memref<1x1x32xf32, #tpu.memory_space<vmem>>, %arg22: memref<1x1x32xf32, #tpu.memory_space<vmem>>, %arg23: memref<1x1x32xf32, #tpu.memory_space<vmem>>, %arg24: memref<1x1x32xf32, #tpu.memory_space<vmem>>, %arg25: memref<1x1x32xf32, #tpu.memory_space<vmem>>, %arg26: memref<1x1x32xf32, #tpu.memory_space<vmem>>, %arg27: memref<1x32x64xbf16, #tpu.memory_space<vmem>>, %arg28: memref<1x1x64xf32, #tpu.memory_space<vmem>>, %arg29: memref<1x64x32xbf16, #tpu.memory_space<vmem>>, %arg30: memref<1x1x32xf32, #tpu.memory_space<vmem>>, %arg31: memref<1x8x32xf32, #tpu.memory_space<vmem>>, %arg32: memref<8x32xf32, #tpu.memory_space<vmem>>) attributes {dimension_semantics = [#tpu.dimension_semantics<parallel>, #tpu.dimension_semantics<arbitrary>], iteration_bounds = array<i64: 2, 2>, scalar_prefetch = 0 : i64, scratch_operands = 1 : i64, tpu.core_type = #tpu.core_type<tc>, window_params = [{transform_indices = @transform_0, window_bounds = array<i64: 1, 16, 32>}, {transform_indices = @transform_1, window_bounds = array<i64: 1, 16, 32>}, {pipeline_mode = #tpu.pipeline_mode<synchronous>, transform_indices = @transform_2, window_bounds = array<i64: 8, 32>}, {transform_indices = @transform_3, window_bounds = array<i64: 1, 32, 32>}, {transform_indices = @transform_4, window_bounds = array<i64: 1, 32, 32>}, {transform_indices = @transform_5, window_bounds = array<i64: 1, 32, 32>}, {transform_indices = @transform_6, window_bounds = array<i64: 1, 1, 32>}, {transform_indices = @transform_7, window_bounds = array<i64: 1, 1, 32>}, {transform_indices = @transform_8, window_bounds = array<i64: 1, 1, 32>}, {transform_indices = @transform_9, window_bounds = array<i64: 1, 32, 32>}, {transform_indices = @transform_10, window_bounds = array<i64: 1, 1, 32>}, {transform_indices = @transform_11, window_bounds = array<i64: 1, 32, 32>}, {transform_indices = @transform_12, window_bounds = array<i64: 1, 32, 32>}, {transform_indices = @transform_13, window_bounds = array<i64: 1, 32, 32>}, {transform_indices = @transform_14, window_bounds = array<i64: 1, 1, 32>}, {transform_indices = @transform_15, window_bounds = array<i64: 1, 1, 32>}, {transform_indices = @transform_16, window_bounds = array<i64: 1, 1, 32>}, {transform_indices = @transform_17, window_bounds = array<i64: 1, 32, 32>}, {transform_indices = @transform_18, window_bounds = array<i64: 1, 1, 32>}, {transform_indices = @transform_19, window_bounds = array<i64: 1, 1, 32>}, {transform_indices = @transform_20, window_bounds = array<i64: 1, 1, 32>}, {transform_indices = @transform_21, window_bounds = array<i64: 1, 1, 32>}, {transform_indices = @transform_22, window_bounds = array<i64: 1, 1, 32>}, {transform_indices = @transform_23, window_bounds = array<i64: 1, 1, 32>}, {transform_indices = @transform_24, window_bounds = array<i64: 1, 1, 32>}, {transform_indices = @transform_25, window_bounds = array<i64: 1, 32, 64>}, {transform_indices = @transform_26, window_bounds = array<i64: 1, 1, 64>}, {transform_indices = @transform_27, window_bounds = array<i64: 1, 64, 32>}, {transform_indices = @transform_28, window_bounds = array<i64: 1, 1, 32>}, {transform_indices = @transform_29, window_bounds = array<i64: 1, 8, 32>}]} {
    %c0_i32 = arith.constant 0 : i32
    %0 = arith.cmpi eq, %arg1, %c0_i32 : i32
    %1 = arith.extui %0 : i1 to i32
    %c0_i32_0 = arith.constant 0 : i32
    %2 = arith.cmpi ne, %1, %c0_i32_0 : i32
    scf.if %2 {
      %cst_124 = arith.constant 0.000000e+00 : f32
      %214 = vector.broadcast %cst_124 : f32 to vector<8x32xf32>
      %c0_125 = arith.constant 0 : index
      %c0_126 = arith.constant 0 : index
      %215 = vector.load %arg32[%c0_125, %c0_126] : memref<8x32xf32, #tpu.memory_space<vmem>>, vector<8x32xf32>
      tpu.vector_store %arg32[%c0_125, %c0_126], %214 {strides = array<i32>} : memref<8x32xf32, #tpu.memory_space<vmem>>, vector<8x32xf32>,
    } else {
    }
    %c0 = arith.constant 0 : index
    %c0_1 = arith.constant 0 : index
    %3 = vector.load %arg32[%c0, %c0_1] : memref<8x32xf32, #tpu.memory_space<vmem>>, vector<8x32xf32>
    %c0_2 = arith.constant 0 : index
    %c0_3 = arith.constant 0 : index
    %c0_4 = arith.constant 0 : index
    %4 = vector.load %arg2[%c0_2, %c0_3, %c0_4] : memref<1x16x32xf32, #tpu.memory_space<vmem>>, vector<1x16x32xf32>
    %5 = vector.shape_cast %4 : vector<1x16x32xf32> to vector<16x32xf32>
    %c0_5 = arith.constant 0 : index
    %c0_6 = arith.constant 0 : index
    %c0_7 = arith.constant 0 : index
    %6 = vector.load %arg3[%c0_5, %c0_6, %c0_7] : memref<1x16x32xf32, #tpu.memory_space<vmem>>, vector<1x16x32xf32>
    %7 = vector.shape_cast %6 : vector<1x16x32xf32> to vector<16x32xf32>
    %c0_8 = arith.constant 0 : index
    %c0_9 = arith.constant 0 : index
    %8 = vector.load %arg4[%c0_8, %c0_9] : memref<8x32xf32, #tpu.memory_space<vmem>>, vector<8x32xf32>
    %9 = arith.addf %3, %8 : vector<8x32xf32>
    %10 = arith.truncf %9 : vector<8x32xf32> to vector<8x32xbf16>
    %c0_10 = arith.constant 0 : index
    %c0_11 = arith.constant 0 : index
    %c0_12 = arith.constant 0 : index
    %11 = vector.load %arg5[%c0_10, %c0_11, %c0_12] : memref<1x32x32xbf16, #tpu.memory_space<vmem>>, vector<1x32x32xbf16>
    %12 = vector.shape_cast %11 : vector<1x32x32xbf16> to vector<32x32xbf16>
    %cst = arith.constant dense<0.000000e+00> : vector<8x32xf32>
    %13 = tpu.matmul %10, %12, %cst {dimension_numbers = #tpu.dot_dimension_numbers<[1], [0], [0], [1], [0, 0, 1, 1], [], []>} : vector<8x32xbf16>, vector<32x32xbf16>, vector<8x32xf32> -> vector<8x32xf32>
    %c0_13 = arith.constant 0 : index
    %c0_14 = arith.constant 0 : index
    %c0_15 = arith.constant 0 : index
    %14 = vector.load %arg8[%c0_13, %c0_14, %c0_15] : memref<1x1x32xf32, #tpu.memory_space<vmem>>, vector<1x1x32xf32>
    %15 = vector.shape_cast %14 : vector<1x1x32xf32> to vector<1x32xf32>
    %16 = vector.broadcast %15 : vector<1x32xf32> to vector<8x32xf32>
    %17 = arith.addf %13, %16 : vector<8x32xf32>
    %18 = arith.truncf %9 : vector<8x32xf32> to vector<8x32xbf16>
    %c0_16 = arith.constant 0 : index
    %c0_17 = arith.constant 0 : index
    %c0_18 = arith.constant 0 : index
    %19 = vector.load %arg6[%c0_16, %c0_17, %c0_18] : memref<1x32x32xbf16, #tpu.memory_space<vmem>>, vector<1x32x32xbf16>
    %20 = vector.shape_cast %19 : vector<1x32x32xbf16> to vector<32x32xbf16>
    %cst_19 = arith.constant dense<0.000000e+00> : vector<8x32xf32>
    %21 = tpu.matmul %18, %20, %cst_19 {dimension_numbers = #tpu.dot_dimension_numbers<[1], [0], [0], [1], [0, 0, 1, 1], [], []>} : vector<8x32xbf16>, vector<32x32xbf16>, vector<8x32xf32> -> vector<8x32xf32>
    %c0_20 = arith.constant 0 : index
    %c0_21 = arith.constant 0 : index
    %c0_22 = arith.constant 0 : index
    %22 = vector.load %arg9[%c0_20, %c0_21, %c0_22] : memref<1x1x32xf32, #tpu.memory_space<vmem>>, vector<1x1x32xf32>
    %23 = vector.shape_cast %22 : vector<1x1x32xf32> to vector<1x32xf32>
    %24 = vector.broadcast %23 : vector<1x32xf32> to vector<8x32xf32>
    %25 = arith.addf %21, %24 : vector<8x32xf32>
    %26 = arith.truncf %3 : vector<8x32xf32> to vector<8x32xbf16>
    %c0_23 = arith.constant 0 : index
    %c0_24 = arith.constant 0 : index
    %c0_25 = arith.constant 0 : index
    %27 = vector.load %arg7[%c0_23, %c0_24, %c0_25] : memref<1x32x32xbf16, #tpu.memory_space<vmem>>, vector<1x32x32xbf16>
    %28 = vector.shape_cast %27 : vector<1x32x32xbf16> to vector<32x32xbf16>
    %cst_26 = arith.constant dense<0.000000e+00> : vector<8x32xf32>
    %29 = tpu.matmul %26, %28, %cst_26 {dimension_numbers = #tpu.dot_dimension_numbers<[1], [0], [0], [1], [0, 0, 1, 1], [], []>} : vector<8x32xbf16>, vector<32x32xbf16>, vector<8x32xf32> -> vector<8x32xf32>
    %c0_27 = arith.constant 0 : index
    %c0_28 = arith.constant 0 : index
    %c0_29 = arith.constant 0 : index
    %30 = vector.load %arg10[%c0_27, %c0_28, %c0_29] : memref<1x1x32xf32, #tpu.memory_space<vmem>>, vector<1x1x32xf32>
    %31 = vector.shape_cast %30 : vector<1x1x32xf32> to vector<1x32xf32>
    %32 = vector.broadcast %31 : vector<1x32xf32> to vector<8x32xf32>
    %33 = arith.addf %29, %32 : vector<8x32xf32>
    %34 = vector.shape_cast %17 : vector<8x32xf32> to vector<8x4x8xf32>
    %35 = vector.shape_cast %25 : vector<8x32xf32> to vector<8x4x8xf32>
    %36 = vector.shape_cast %33 : vector<8x32xf32> to vector<8x4x8xf32>
    %37 = arith.truncf %34 : vector<8x4x8xf32> to vector<8x4x8xbf16>
    %38 = arith.truncf %35 : vector<8x4x8xf32> to vector<8x4x8xbf16>
    "tpu.trace_start"() <{level = 10 : i32, message = "qhd,khd->hqk"}> : () -> ()
    %cst_30 = arith.constant dense<0.000000e+00> : vector<4x8x8xf32>
    %39 = tpu.matmul %37, %38, %cst_30 {dimension_numbers = #tpu.dot_dimension_numbers<[2], [2], [0], [0], [0, 1, 0, 0, 1, 0], [1], [1]>} : vector<8x4x8xbf16>, vector<8x4x8xbf16>, vector<4x8x8xf32> -> vector<4x8x8xf32>
    "tpu.trace_stop"() : () -> ()
    %cst_31 = arith.constant dense<0xFF800000> : vector<4x8xf32>
    %40 = vector.multi_reduction <maximumf>, %39, %cst_31 [2] : vector<4x8x8xf32> to vector<4x8xf32>
    %41 = vector.shape_cast %40 : vector<4x8xf32> to vector<4x8x1xf32>
    %42 = vector.broadcast %41 : vector<4x8x1xf32> to vector<4x8x8xf32>
    %43 = arith.subf %39, %42 : vector<4x8x8xf32>
    %44 = math.exp %43 : vector<4x8x8xf32>
    %cst_32 = arith.constant dense<0.000000e+00> : vector<4x8xf32>
    %45 = vector.multi_reduction <add>, %44, %cst_32 [2] : vector<4x8x8xf32> to vector<4x8xf32>
    %46 = vector.shape_cast %45 : vector<4x8xf32> to vector<4x8x1xf32>
    %47 = tpu.reciprocal %46 {approx = true} : vector<4x8x1xf32> -> vector<4x8x1xf32>
    %48 = vector.broadcast %47 : vector<4x8x1xf32> to vector<4x8x8xf32>
    %49 = arith.mulf %44, %48 : vector<4x8x8xf32>
    %50 = arith.truncf %49 : vector<4x8x8xf32> to vector<4x8x8xbf16>
    %51 = arith.truncf %36 : vector<8x4x8xf32> to vector<8x4x8xbf16>
    "tpu.trace_start"() <{level = 10 : i32, message = "hqk,khd->qhd"}> : () -> ()
    %cst_33 = arith.constant dense<0.000000e+00> : vector<4x8x8xf32>
    %52 = tpu.matmul %51, %50, %cst_33 {dimension_numbers = #tpu.dot_dimension_numbers<[0], [2], [2], [1], [0, 1, 0, 2, 1, 1], [1], [0]>} : vector<8x4x8xbf16>, vector<4x8x8xbf16>, vector<4x8x8xf32> -> vector<4x8x8xf32>
    %53 = tpu.transpose %52, [2, 0, 1] : vector<4x8x8xf32> -> vector<8x4x8xf32>
    "tpu.trace_stop"() : () -> ()
    %54 = vector.shape_cast %53 : vector<8x4x8xf32> to vector<8x32xf32>
    %55 = arith.truncf %54 : vector<8x32xf32> to vector<8x32xbf16>
    %c0_34 = arith.constant 0 : index
    %c0_35 = arith.constant 0 : index
    %c0_36 = arith.constant 0 : index
    %56 = vector.load %arg11[%c0_34, %c0_35, %c0_36] : memref<1x32x32xbf16, #tpu.memory_space<vmem>>, vector<1x32x32xbf16>
    %57 = vector.shape_cast %56 : vector<1x32x32xbf16> to vector<32x32xbf16>
    %cst_37 = arith.constant dense<0.000000e+00> : vector<8x32xf32>
    %58 = tpu.matmul %55, %57, %cst_37 {dimension_numbers = #tpu.dot_dimension_numbers<[1], [0], [0], [1], [0, 0, 1, 1], [], []>} : vector<8x32xbf16>, vector<32x32xbf16>, vector<8x32xf32> -> vector<8x32xf32>
    %c0_38 = arith.constant 0 : index
    %c0_39 = arith.constant 0 : index
    %c0_40 = arith.constant 0 : index
    %59 = vector.load %arg12[%c0_38, %c0_39, %c0_40] : memref<1x1x32xf32, #tpu.memory_space<vmem>>, vector<1x1x32xf32>
    %60 = vector.shape_cast %59 : vector<1x1x32xf32> to vector<1x32xf32>
    %61 = vector.broadcast %60 : vector<1x32xf32> to vector<8x32xf32>
    %62 = arith.addf %58, %61 : vector<8x32xf32>
    %63 = arith.addf %3, %62 : vector<8x32xf32>
    %cst_41 = arith.constant dense<0.000000e+00> : vector<8xf32>
    %64 = vector.multi_reduction <add>, %63, %cst_41 [1] : vector<8x32xf32> to vector<8xf32>
    %65 = vector.shape_cast %64 : vector<8xf32> to vector<8x1xf32>
    %cst_42 = arith.constant 3.200000e+01 : f32
    %66 = vector.broadcast %cst_42 : f32 to vector<8x1xf32>
    %67 = arith.divf %65, %66 : vector<8x1xf32>
    %68 = vector.broadcast %67 : vector<8x1xf32> to vector<8x32xf32>
    %69 = arith.subf %63, %68 : vector<8x32xf32>
    %70 = arith.mulf %69, %69 : vector<8x32xf32>
    %cst_43 = arith.constant dense<0.000000e+00> : vector<8xf32>
    %71 = vector.multi_reduction <add>, %70, %cst_43 [1] : vector<8x32xf32> to vector<8xf32>
    %72 = vector.shape_cast %71 : vector<8xf32> to vector<8x1xf32>
    %cst_44 = arith.constant 3.200000e+01 : f32
    %73 = vector.broadcast %cst_44 : f32 to vector<8x1xf32>
    %74 = arith.divf %72, %73 : vector<8x1xf32>
    %cst_45 = arith.constant 9.99999974E-6 : f32
    %75 = vector.broadcast %cst_45 : f32 to vector<8x1xf32>
    %76 = arith.addf %74, %75 : vector<8x1xf32>
    %77 = math.rsqrt %76 : vector<8x1xf32>
    %78 = vector.broadcast %77 : vector<8x1xf32> to vector<8x32xf32>
    %79 = arith.mulf %69, %78 : vector<8x32xf32>
    %c0_46 = arith.constant 0 : index
    %c0_47 = arith.constant 0 : index
    %c0_48 = arith.constant 0 : index
    %80 = vector.load %arg21[%c0_46, %c0_47, %c0_48] : memref<1x1x32xf32, #tpu.memory_space<vmem>>, vector<1x1x32xf32>
    %81 = vector.shape_cast %80 : vector<1x1x32xf32> to vector<1x32xf32>
    %82 = vector.broadcast %81 : vector<1x32xf32> to vector<8x32xf32>
    %83 = arith.mulf %79, %82 : vector<8x32xf32>
    %c0_49 = arith.constant 0 : index
    %c0_50 = arith.constant 0 : index
    %c0_51 = arith.constant 0 : index
    %84 = vector.load %arg22[%c0_49, %c0_50, %c0_51] : memref<1x1x32xf32, #tpu.memory_space<vmem>>, vector<1x1x32xf32>
    %85 = vector.shape_cast %84 : vector<1x1x32xf32> to vector<1x32xf32>
    %86 = vector.broadcast %85 : vector<1x32xf32> to vector<8x32xf32>
    %87 = arith.addf %83, %86 : vector<8x32xf32>
    %88 = arith.addf %87, %8 : vector<8x32xf32>
    %89 = arith.truncf %88 : vector<8x32xf32> to vector<8x32xbf16>
    %c0_52 = arith.constant 0 : index
    %c0_53 = arith.constant 0 : index
    %c0_54 = arith.constant 0 : index
    %90 = vector.load %arg13[%c0_52, %c0_53, %c0_54] : memref<1x32x32xbf16, #tpu.memory_space<vmem>>, vector<1x32x32xbf16>
    %91 = vector.shape_cast %90 : vector<1x32x32xbf16> to vector<32x32xbf16>
    %cst_55 = arith.constant dense<0.000000e+00> : vector<8x32xf32>
    %92 = tpu.matmul %89, %91, %cst_55 {dimension_numbers = #tpu.dot_dimension_numbers<[1], [0], [0], [1], [0, 0, 1, 1], [], []>} : vector<8x32xbf16>, vector<32x32xbf16>, vector<8x32xf32> -> vector<8x32xf32>
    %c0_56 = arith.constant 0 : index
    %c0_57 = arith.constant 0 : index
    %c0_58 = arith.constant 0 : index
    %93 = vector.load %arg16[%c0_56, %c0_57, %c0_58] : memref<1x1x32xf32, #tpu.memory_space<vmem>>, vector<1x1x32xf32>
    %94 = vector.shape_cast %93 : vector<1x1x32xf32> to vector<1x32xf32>
    %95 = vector.broadcast %94 : vector<1x32xf32> to vector<8x32xf32>
    %96 = arith.addf %92, %95 : vector<8x32xf32>
    %97 = arith.truncf %7 : vector<16x32xf32> to vector<16x32xbf16>
    %c0_59 = arith.constant 0 : index
    %c0_60 = arith.constant 0 : index
    %c0_61 = arith.constant 0 : index
    %98 = vector.load %arg14[%c0_59, %c0_60, %c0_61] : memref<1x32x32xbf16, #tpu.memory_space<vmem>>, vector<1x32x32xbf16>
    %99 = vector.shape_cast %98 : vector<1x32x32xbf16> to vector<32x32xbf16>
    %cst_62 = arith.constant dense<0.000000e+00> : vector<16x32xf32>
    %100 = tpu.matmul %97, %99, %cst_62 {dimension_numbers = #tpu.dot_dimension_numbers<[1], [0], [0], [1], [0, 0, 1, 1], [], []>} : vector<16x32xbf16>, vector<32x32xbf16>, vector<16x32xf32> -> vector<16x32xf32>
    %c0_63 = arith.constant 0 : index
    %c0_64 = arith.constant 0 : index
    %c0_65 = arith.constant 0 : index
    %101 = vector.load %arg17[%c0_63, %c0_64, %c0_65] : memref<1x1x32xf32, #tpu.memory_space<vmem>>, vector<1x1x32xf32>
    %102 = vector.shape_cast %101 : vector<1x1x32xf32> to vector<1x32xf32>
    %103 = vector.broadcast %102 : vector<1x32xf32> to vector<16x32xf32>
    %104 = arith.addf %100, %103 : vector<16x32xf32>
    %105 = arith.truncf %5 : vector<16x32xf32> to vector<16x32xbf16>
    %c0_66 = arith.constant 0 : index
    %c0_67 = arith.constant 0 : index
    %c0_68 = arith.constant 0 : index
    %106 = vector.load %arg15[%c0_66, %c0_67, %c0_68] : memref<1x32x32xbf16, #tpu.memory_space<vmem>>, vector<1x32x32xbf16>
    %107 = vector.shape_cast %106 : vector<1x32x32xbf16> to vector<32x32xbf16>
    %cst_69 = arith.constant dense<0.000000e+00> : vector<16x32xf32>
    %108 = tpu.matmul %105, %107, %cst_69 {dimension_numbers = #tpu.dot_dimension_numbers<[1], [0], [0], [1], [0, 0, 1, 1], [], []>} : vector<16x32xbf16>, vector<32x32xbf16>, vector<16x32xf32> -> vector<16x32xf32>
    %c0_70 = arith.constant 0 : index
    %c0_71 = arith.constant 0 : index
    %c0_72 = arith.constant 0 : index
    %109 = vector.load %arg18[%c0_70, %c0_71, %c0_72] : memref<1x1x32xf32, #tpu.memory_space<vmem>>, vector<1x1x32xf32>
    %110 = vector.shape_cast %109 : vector<1x1x32xf32> to vector<1x32xf32>
    %111 = vector.broadcast %110 : vector<1x32xf32> to vector<16x32xf32>
    %112 = arith.addf %108, %111 : vector<16x32xf32>
    %113 = vector.shape_cast %96 : vector<8x32xf32> to vector<8x4x8xf32>
    %114 = vector.shape_cast %104 : vector<16x32xf32> to vector<16x4x8xf32>
    %115 = vector.shape_cast %112 : vector<16x32xf32> to vector<16x4x8xf32>
    %116 = arith.truncf %113 : vector<8x4x8xf32> to vector<8x4x8xbf16>
    %117 = arith.truncf %114 : vector<16x4x8xf32> to vector<16x4x8xbf16>
    "tpu.trace_start"() <{level = 10 : i32, message = "qhd,khd->hqk"}> : () -> ()
    %cst_73 = arith.constant dense<0.000000e+00> : vector<4x8x16xf32>
    %118 = tpu.matmul %116, %117, %cst_73 {dimension_numbers = #tpu.dot_dimension_numbers<[2], [2], [0], [0], [0, 1, 0, 0, 1, 0], [1], [1]>} : vector<8x4x8xbf16>, vector<16x4x8xbf16>, vector<4x8x16xf32> -> vector<4x8x16xf32>
    "tpu.trace_stop"() : () -> ()
    %cst_74 = arith.constant dense<0xFF800000> : vector<4x8xf32>
    %119 = vector.multi_reduction <maximumf>, %118, %cst_74 [2] : vector<4x8x16xf32> to vector<4x8xf32>
    %120 = vector.shape_cast %119 : vector<4x8xf32> to vector<4x8x1xf32>
    %121 = vector.broadcast %120 : vector<4x8x1xf32> to vector<4x8x16xf32>
    %122 = arith.subf %118, %121 : vector<4x8x16xf32>
    %123 = math.exp %122 : vector<4x8x16xf32>
    %cst_75 = arith.constant dense<0.000000e+00> : vector<4x8xf32>
    %124 = vector.multi_reduction <add>, %123, %cst_75 [2] : vector<4x8x16xf32> to vector<4x8xf32>
    %125 = vector.shape_cast %124 : vector<4x8xf32> to vector<4x8x1xf32>
    %126 = tpu.reciprocal %125 {approx = true} : vector<4x8x1xf32> -> vector<4x8x1xf32>
    %127 = vector.broadcast %126 : vector<4x8x1xf32> to vector<4x8x16xf32>
    %128 = arith.mulf %123, %127 : vector<4x8x16xf32>
    %129 = arith.truncf %128 : vector<4x8x16xf32> to vector<4x8x16xbf16>
    %130 = arith.truncf %115 : vector<16x4x8xf32> to vector<16x4x8xbf16>
    "tpu.trace_start"() <{level = 10 : i32, message = "hqk,khd->qhd"}> : () -> ()
    %cst_76 = arith.constant dense<0.000000e+00> : vector<4x8x8xf32>
    %131 = tpu.matmul %130, %129, %cst_76 {dimension_numbers = #tpu.dot_dimension_numbers<[0], [2], [2], [1], [0, 1, 0, 2, 1, 1], [1], [0]>} : vector<16x4x8xbf16>, vector<4x8x16xbf16>, vector<4x8x8xf32> -> vector<4x8x8xf32>
    %132 = tpu.transpose %131, [2, 0, 1] : vector<4x8x8xf32> -> vector<8x4x8xf32>
    "tpu.trace_stop"() : () -> ()
    %133 = vector.shape_cast %132 : vector<8x4x8xf32> to vector<8x32xf32>
    %134 = arith.truncf %133 : vector<8x32xf32> to vector<8x32xbf16>
    %c0_77 = arith.constant 0 : index
    %c0_78 = arith.constant 0 : index
    %c0_79 = arith.constant 0 : index
    %135 = vector.load %arg19[%c0_77, %c0_78, %c0_79] : memref<1x32x32xbf16, #tpu.memory_space<vmem>>, vector<1x32x32xbf16>
    %136 = vector.shape_cast %135 : vector<1x32x32xbf16> to vector<32x32xbf16>
    %cst_80 = arith.constant dense<0.000000e+00> : vector<8x32xf32>
    %137 = tpu.matmul %134, %136, %cst_80 {dimension_numbers = #tpu.dot_dimension_numbers<[1], [0], [0], [1], [0, 0, 1, 1], [], []>} : vector<8x32xbf16>, vector<32x32xbf16>, vector<8x32xf32> -> vector<8x32xf32>
    %c0_81 = arith.constant 0 : index
    %c0_82 = arith.constant 0 : index
    %c0_83 = arith.constant 0 : index
    %138 = vector.load %arg20[%c0_81, %c0_82, %c0_83] : memref<1x1x32xf32, #tpu.memory_space<vmem>>, vector<1x1x32xf32>
    %139 = vector.shape_cast %138 : vector<1x1x32xf32> to vector<1x32xf32>
    %140 = vector.broadcast %139 : vector<1x32xf32> to vector<8x32xf32>
    %141 = arith.addf %137, %140 : vector<8x32xf32>
    %142 = arith.addf %87, %141 : vector<8x32xf32>
    %cst_84 = arith.constant dense<0.000000e+00> : vector<8xf32>
    %143 = vector.multi_reduction <add>, %142, %cst_84 [1] : vector<8x32xf32> to vector<8xf32>
    %144 = vector.shape_cast %143 : vector<8xf32> to vector<8x1xf32>
    %cst_85 = arith.constant 3.200000e+01 : f32
    %145 = vector.broadcast %cst_85 : f32 to vector<8x1xf32>
    %146 = arith.divf %144, %145 : vector<8x1xf32>
    %147 = vector.broadcast %146 : vector<8x1xf32> to vector<8x32xf32>
    %148 = arith.subf %142, %147 : vector<8x32xf32>
    %149 = arith.mulf %148, %148 : vector<8x32xf32>
    %cst_86 = arith.constant dense<0.000000e+00> : vector<8xf32>
    %150 = vector.multi_reduction <add>, %149, %cst_86 [1] : vector<8x32xf32> to vector<8xf32>
    %151 = vector.shape_cast %150 : vector<8xf32> to vector<8x1xf32>
    %cst_87 = arith.constant 3.200000e+01 : f32
    %152 = vector.broadcast %cst_87 : f32 to vector<8x1xf32>
    %153 = arith.divf %151, %152 : vector<8x1xf32>
    %cst_88 = arith.constant 9.99999974E-6 : f32
    %154 = vector.broadcast %cst_88 : f32 to vector<8x1xf32>
    %155 = arith.addf %153, %154 : vector<8x1xf32>
    %156 = math.rsqrt %155 : vector<8x1xf32>
    %157 = vector.broadcast %156 : vector<8x1xf32> to vector<8x32xf32>
    %158 = arith.mulf %148, %157 : vector<8x32xf32>
    %c0_89 = arith.constant 0 : index
    %c0_90 = arith.constant 0 : index
    %c0_91 = arith.constant 0 : index
    %159 = vector.load %arg23[%c0_89, %c0_90, %c0_91] : memref<1x1x32xf32, #tpu.memory_space<vmem>>, vector<1x1x32xf32>
    %160 = vector.shape_cast %159 : vector<1x1x32xf32> to vector<1x32xf32>
    %161 = vector.broadcast %160 : vector<1x32xf32> to vector<8x32xf32>
    %162 = arith.mulf %158, %161 : vector<8x32xf32>
    %c0_92 = arith.constant 0 : index
    %c0_93 = arith.constant 0 : index
    %c0_94 = arith.constant 0 : index
    %163 = vector.load %arg24[%c0_92, %c0_93, %c0_94] : memref<1x1x32xf32, #tpu.memory_space<vmem>>, vector<1x1x32xf32>
    %164 = vector.shape_cast %163 : vector<1x1x32xf32> to vector<1x32xf32>
    %165 = vector.broadcast %164 : vector<1x32xf32> to vector<8x32xf32>
    %166 = arith.addf %162, %165 : vector<8x32xf32>
    %167 = arith.truncf %166 : vector<8x32xf32> to vector<8x32xbf16>
    %c0_95 = arith.constant 0 : index
    %c0_96 = arith.constant 0 : index
    %c0_97 = arith.constant 0 : index
    %168 = vector.load %arg27[%c0_95, %c0_96, %c0_97] : memref<1x32x64xbf16, #tpu.memory_space<vmem>>, vector<1x32x64xbf16>
    %169 = vector.shape_cast %168 : vector<1x32x64xbf16> to vector<32x64xbf16>
    %cst_98 = arith.constant dense<0.000000e+00> : vector<8x64xf32>
    %170 = tpu.matmul %167, %169, %cst_98 {dimension_numbers = #tpu.dot_dimension_numbers<[1], [0], [0], [1], [0, 0, 1, 1], [], []>} : vector<8x32xbf16>, vector<32x64xbf16>, vector<8x64xf32> -> vector<8x64xf32>
    %c0_99 = arith.constant 0 : index
    %c0_100 = arith.constant 0 : index
    %c0_101 = arith.constant 0 : index
    %171 = vector.load %arg28[%c0_99, %c0_100, %c0_101] : memref<1x1x64xf32, #tpu.memory_space<vmem>>, vector<1x1x64xf32>
    %172 = vector.shape_cast %171 : vector<1x1x64xf32> to vector<1x64xf32>
    %173 = vector.broadcast %172 : vector<1x64xf32> to vector<8x64xf32>
    %174 = arith.addf %170, %173 : vector<8x64xf32>
    %cst_102 = arith.constant 0.000000e+00 : f32
    %175 = vector.broadcast %cst_102 : f32 to vector<8x64xf32>
    %176 = arith.maximumf %174, %175 : vector<8x64xf32>
    %177 = arith.truncf %176 : vector<8x64xf32> to vector<8x64xbf16>
    %c0_103 = arith.constant 0 : index
    %c0_104 = arith.constant 0 : index
    %c0_105 = arith.constant 0 : index
    %178 = vector.load %arg29[%c0_103, %c0_104, %c0_105] : memref<1x64x32xbf16, #tpu.memory_space<vmem>>, vector<1x64x32xbf16>
    %179 = vector.shape_cast %178 : vector<1x64x32xbf16> to vector<64x32xbf16>
    %cst_106 = arith.constant dense<0.000000e+00> : vector<8x32xf32>
    %180 = tpu.matmul %177, %179, %cst_106 {dimension_numbers = #tpu.dot_dimension_numbers<[1], [0], [0], [1], [0, 0, 1, 1], [], []>} : vector<8x64xbf16>, vector<64x32xbf16>, vector<8x32xf32> -> vector<8x32xf32>
    %c0_107 = arith.constant 0 : index
    %c0_108 = arith.constant 0 : index
    %c0_109 = arith.constant 0 : index
    %181 = vector.load %arg30[%c0_107, %c0_108, %c0_109] : memref<1x1x32xf32, #tpu.memory_space<vmem>>, vector<1x1x32xf32>
    %182 = vector.shape_cast %181 : vector<1x1x32xf32> to vector<1x32xf32>
    %183 = vector.broadcast %182 : vector<1x32xf32> to vector<8x32xf32>
    %184 = arith.addf %180, %183 : vector<8x32xf32>
    %185 = arith.addf %166, %184 : vector<8x32xf32>
    %cst_110 = arith.constant dense<0.000000e+00> : vector<8xf32>
    %186 = vector.multi_reduction <add>, %185, %cst_110 [1] : vector<8x32xf32> to vector<8xf32>
    %187 = vector.shape_cast %186 : vector<8xf32> to vector<8x1xf32>
    %cst_111 = arith.constant 3.200000e+01 : f32
    %188 = vector.broadcast %cst_111 : f32 to vector<8x1xf32>
    %189 = arith.divf %187, %188 : vector<8x1xf32>
    %190 = vector.broadcast %189 : vector<8x1xf32> to vector<8x32xf32>
    %191 = arith.subf %185, %190 : vector<8x32xf32>
    %192 = arith.mulf %191, %191 : vector<8x32xf32>
    %cst_112 = arith.constant dense<0.000000e+00> : vector<8xf32>
    %193 = vector.multi_reduction <add>, %192, %cst_112 [1] : vector<8x32xf32> to vector<8xf32>
    %194 = vector.shape_cast %193 : vector<8xf32> to vector<8x1xf32>
    %cst_113 = arith.constant 3.200000e+01 : f32
    %195 = vector.broadcast %cst_113 : f32 to vector<8x1xf32>
    %196 = arith.divf %194, %195 : vector<8x1xf32>
    %cst_114 = arith.constant 9.99999974E-6 : f32
    %197 = vector.broadcast %cst_114 : f32 to vector<8x1xf32>
    %198 = arith.addf %196, %197 : vector<8x1xf32>
    %199 = math.rsqrt %198 : vector<8x1xf32>
    %200 = vector.broadcast %199 : vector<8x1xf32> to vector<8x32xf32>
    %201 = arith.mulf %191, %200 : vector<8x32xf32>
    %c0_115 = arith.constant 0 : index
    %c0_116 = arith.constant 0 : index
    %c0_117 = arith.constant 0 : index
    %202 = vector.load %arg25[%c0_115, %c0_116, %c0_117] : memref<1x1x32xf32, #tpu.memory_space<vmem>>, vector<1x1x32xf32>
    %203 = vector.shape_cast %202 : vector<1x1x32xf32> to vector<1x32xf32>
    %204 = vector.broadcast %203 : vector<1x32xf32> to vector<8x32xf32>
    %205 = arith.mulf %201, %204 : vector<8x32xf32>
    %c0_118 = arith.constant 0 : index
    %c0_119 = arith.constant 0 : index
    %c0_120 = arith.constant 0 : index
    %206 = vector.load %arg26[%c0_118, %c0_119, %c0_120] : memref<1x1x32xf32, #tpu.memory_space<vmem>>, vector<1x1x32xf32>
    %207 = vector.shape_cast %206 : vector<1x1x32xf32> to vector<1x32xf32>
    %208 = vector.broadcast %207 : vector<1x32xf32> to vector<8x32xf32>
    %209 = arith.addf %205, %208 : vector<8x32xf32>
    %c0_121 = arith.constant 0 : index
    %c0_122 = arith.constant 0 : index
    %210 = vector.load %arg32[%c0_121, %c0_122] : memref<8x32xf32, #tpu.memory_space<vmem>>, vector<8x32xf32>
    tpu.vector_store %arg32[%c0_121, %c0_122], %209 {strides = array<i32>} : memref<8x32xf32, #tpu.memory_space<vmem>>, vector<8x32xf32>,
    %c1_i32 = arith.constant 1 : i32
    %211 = arith.cmpi eq, %arg1, %c1_i32 : i32
    %212 = arith.extui %211 : i1 to i32
    %c0_i32_123 = arith.constant 0 : i32
    %213 = arith.cmpi ne, %212, %c0_i32_123 : i32
    scf.if %213 {
      %c0_124 = arith.constant 0 : index
      %c0_125 = arith.constant 0 : index
      %c0_126 = arith.constant 0 : index
      %214 = vector.load %arg31[%c0_124, %c0_125, %c0_126] : memref<1x8x32xf32, #tpu.memory_space<vmem>>, vector<1x8x32xf32>
      %215 = vector.shape_cast %214 : vector<1x8x32xf32> to vector<8x32xf32>
      %216 = vector.shape_cast %209 : vector<8x32xf32> to vector<1x8x32xf32>
      tpu.vector_store %arg31[%c0_124, %c0_125, %c0_126], %216 {strides = array<i32>} : memref<1x8x32xf32, #tpu.memory_space<vmem>>, vector<1x8x32xf32>,
    } else {
    }
    return
  }
  func.func @transform_0(%arg0: i32, %arg1: i32) -> (i32, i32, i32) {
    %c0_i32 = arith.constant 0 : i32
    %c0_i32_0 = arith.constant 0 : i32
    %c0_i32_1 = arith.constant 0 : i32
    return %arg0, %c0_i32, %c0_i32_0 : i32, i32, i32
  }
  func.func @transform_1(%arg0: i32, %arg1: i32) -> (i32, i32, i32) {
    %c0_i32 = arith.constant 0 : i32
    %c0_i32_0 = arith.constant 0 : i32
    %c0_i32_1 = arith.constant 0 : i32
    return %arg0, %c0_i32, %c0_i32_0 : i32, i32, i32
  }
  func.func @transform_2(%arg0: i32, %arg1: i32) -> (i32, i32) {
    %c0_i32 = arith.constant 0 : i32
    %c0_i32_0 = arith.constant 0 : i32
    %c0_i32_1 = arith.constant 0 : i32
    return %c0_i32, %c0_i32_0 : i32, i32
  }
  func.func @transform_3(%arg0: i32, %arg1: i32) -> (i32, i32, i32) {
    %c0_i32 = arith.constant 0 : i32
    %c0_i32_0 = arith.constant 0 : i32
    %c0_i32_1 = arith.constant 0 : i32
    return %arg1, %c0_i32, %c0_i32_0 : i32, i32, i32
  }
  func.func @transform_4(%arg0: i32, %arg1: i32) -> (i32, i32, i32) {
    %c0_i32 = arith.constant 0 : i32
    %c0_i32_0 = arith.constant 0 : i32
    %c0_i32_1 = arith.constant 0 : i32
    return %arg1, %c0_i32, %c0_i32_0 : i32, i32, i32
  }
  func.func @transform_5(%arg0: i32, %arg1: i32) -> (i32, i32, i32) {
    %c0_i32 = arith.constant 0 : i32
    %c0_i32_0 = arith.constant 0 : i32
    %c0_i32_1 = arith.constant 0 : i32
    return %arg1, %c0_i32, %c0_i32_0 : i32, i32, i32
  }
  func.func @transform_6(%arg0: i32, %arg1: i32) -> (i32, i32, i32) {
    %c0_i32 = arith.constant 0 : i32
    %c0_i32_0 = arith.constant 0 : i32
    %c0_i32_1 = arith.constant 0 : i32
    return %arg1, %c0_i32, %c0_i32_0 : i32, i32, i32
  }
  func.func @transform_7(%arg0: i32, %arg1: i32) -> (i32, i32, i32) {
    %c0_i32 = arith.constant 0 : i32
    %c0_i32_0 = arith.constant 0 : i32
    %c0_i32_1 = arith.constant 0 : i32
    return %arg1, %c0_i32, %c0_i32_0 : i32, i32, i32
  }
  func.func @transform_8(%arg0: i32, %arg1: i32) -> (i32, i32, i32) {
    %c0_i32 = arith.constant 0 : i32
    %c0_i32_0 = arith.constant 0 : i32
    %c0_i32_1 = arith.constant 0 : i32
    return %arg1, %c0_i32, %c0_i32_0 : i32, i32, i32
  }
  func.func @transform_9(%arg0: i32, %arg1: i32) -> (i32, i32, i32) {
    %c0_i32 = arith.constant 0 : i32
    %c0_i32_0 = arith.constant 0 : i32
    %c0_i32_1 = arith.constant 0 : i32
    return %arg1, %c0_i32, %c0_i32_0 : i32, i32, i32
  }
  func.func @transform_10(%arg0: i32, %arg1: i32) -> (i32, i32, i32) {
    %c0_i32 = arith.constant 0 : i32
    %c0_i32_0 = arith.constant 0 : i32
    %c0_i32_1 = arith.constant 0 : i32
    return %arg1, %c0_i32, %c0_i32_0 : i32, i32, i32
  }
  func.func @transform_11(%arg0: i32, %arg1: i32) -> (i32, i32, i32) {
    %c0_i32 = arith.constant 0 : i32
    %c0_i32_0 = arith.constant 0 : i32
    %c0_i32_1 = arith.constant 0 : i32
    return %arg1, %c0_i32, %c0_i32_0 : i32, i32, i32
  }
  func.func @transform_12(%arg0: i32, %arg1: i32) -> (i32, i32, i32) {
    %c0_i32 = arith.constant 0 : i32
    %c0_i32_0 = arith.constant 0 : i32
    %c0_i32_1 = arith.constant 0 : i32
    return %arg1, %c0_i32, %c0_i32_0 : i32, i32, i32
  }
  func.func @transform_13(%arg0: i32, %arg1: i32) -> (i32, i32, i32) {
    %c0_i32 = arith.constant 0 : i32
    %c0_i32_0 = arith.constant 0 : i32
    %c0_i32_1 = arith.constant 0 : i32
    return %arg1, %c0_i32, %c0_i32_0 : i32, i32, i32
  }
  func.func @transform_14(%arg0: i32, %arg1: i32) -> (i32, i32, i32) {
    %c0_i32 = arith.constant 0 : i32
    %c0_i32_0 = arith.constant 0 : i32
    %c0_i32_1 = arith.constant 0 : i32
    return %arg1, %c0_i32, %c0_i32_0 : i32, i32, i32
  }
  func.func @transform_15(%arg0: i32, %arg1: i32) -> (i32, i32, i32) {
    %c0_i32 = arith.constant 0 : i32
    %c0_i32_0 = arith.constant 0 : i32
    %c0_i32_1 = arith.constant 0 : i32
    return %arg1, %c0_i32, %c0_i32_0 : i32, i32, i32
  }
  func.func @transform_16(%arg0: i32, %arg1: i32) -> (i32, i32, i32) {
    %c0_i32 = arith.constant 0 : i32
    %c0_i32_0 = arith.constant 0 : i32
    %c0_i32_1 = arith.constant 0 : i32
    return %arg1, %c0_i32, %c0_i32_0 : i32, i32, i32
  }
  func.func @transform_17(%arg0: i32, %arg1: i32) -> (i32, i32, i32) {
    %c0_i32 = arith.constant 0 : i32
    %c0_i32_0 = arith.constant 0 : i32
    %c0_i32_1 = arith.constant 0 : i32
    return %arg1, %c0_i32, %c0_i32_0 : i32, i32, i32
  }
  func.func @transform_18(%arg0: i32, %arg1: i32) -> (i32, i32, i32) {
    %c0_i32 = arith.constant 0 : i32
    %c0_i32_0 = arith.constant 0 : i32
    %c0_i32_1 = arith.constant 0 : i32
    return %arg1, %c0_i32, %c0_i32_0 : i32, i32, i32
  }
  func.func @transform_19(%arg0: i32, %arg1: i32) -> (i32, i32, i32) {
    %c0_i32 = arith.constant 0 : i32
    %c0_i32_0 = arith.constant 0 : i32
    %c0_i32_1 = arith.constant 0 : i32
    return %arg1, %c0_i32, %c0_i32_0 : i32, i32, i32
  }
  func.func @transform_20(%arg0: i32, %arg1: i32) -> (i32, i32, i32) {
    %c0_i32 = arith.constant 0 : i32
    %c0_i32_0 = arith.constant 0 : i32
    %c0_i32_1 = arith.constant 0 : i32
    return %arg1, %c0_i32, %c0_i32_0 : i32, i32, i32
  }
  func.func @transform_21(%arg0: i32, %arg1: i32) -> (i32, i32, i32) {
    %c0_i32 = arith.constant 0 : i32
    %c0_i32_0 = arith.constant 0 : i32
    %c0_i32_1 = arith.constant 0 : i32
    return %arg1, %c0_i32, %c0_i32_0 : i32, i32, i32
  }
  func.func @transform_22(%arg0: i32, %arg1: i32) -> (i32, i32, i32) {
    %c0_i32 = arith.constant 0 : i32
    %c0_i32_0 = arith.constant 0 : i32
    %c0_i32_1 = arith.constant 0 : i32
    return %arg1, %c0_i32, %c0_i32_0 : i32, i32, i32
  }
  func.func @transform_23(%arg0: i32, %arg1: i32) -> (i32, i32, i32) {
    %c0_i32 = arith.constant 0 : i32
    %c0_i32_0 = arith.constant 0 : i32
    %c0_i32_1 = arith.constant 0 : i32
    return %arg1, %c0_i32, %c0_i32_0 : i32, i32, i32
  }
  func.func @transform_24(%arg0: i32, %arg1: i32) -> (i32, i32, i32) {
    %c0_i32 = arith.constant 0 : i32
    %c0_i32_0 = arith.constant 0 : i32
    %c0_i32_1 = arith.constant 0 : i32
    return %arg1, %c0_i32, %c0_i32_0 : i32, i32, i32
  }
  func.func @transform_25(%arg0: i32, %arg1: i32) -> (i32, i32, i32) {
    %c0_i32 = arith.constant 0 : i32
    %c0_i32_0 = arith.constant 0 : i32
    %c0_i32_1 = arith.constant 0 : i32
    return %arg1, %c0_i32, %c0_i32_0 : i32, i32, i32
  }
  func.func @transform_26(%arg0: i32, %arg1: i32) -> (i32, i32, i32) {
    %c0_i32 = arith.constant 0 : i32
    %c0_i32_0 = arith.constant 0 : i32
    %c0_i32_1 = arith.constant 0 : i32
    return %arg1, %c0_i32, %c0_i32_0 : i32, i32, i32
  }
  func.func @transform_27(%arg0: i32, %arg1: i32) -> (i32, i32, i32) {
    %c0_i32 = arith.constant 0 : i32
    %c0_i32_0 = arith.constant 0 : i32
    %c0_i32_1 = arith.constant 0 : i32
    return %arg1, %c0_i32, %c0_i32_0 : i32, i32, i32
  }
  func.func @transform_28(%arg0: i32, %arg1: i32) -> (i32, i32, i32) {
    %c0_i32 = arith.constant 0 : i32
    %c0_i32_0 = arith.constant 0 : i32
    %c0_i32_1 = arith.constant 0 : i32
    return %arg1, %c0_i32, %c0_i32_0 : i32, i32, i32
  }
  func.func @transform_29(%arg0: i32, %arg1: i32) -> (i32, i32, i32) {
    %c0_i32 = arith.constant 0 : i32
    %c0_i32_0 = arith.constant 0 : i32
    %c0_i32_1 = arith.constant 0 : i32
    return %arg0, %c0_i32, %c0_i32_0 : i32, i32, i32
  }
}

</mosaic_0001>

<llo_original>
// kernel: tpu_custom_call.1
$region0: #{tpu_custom_call.1}
  #allocation0 [shape = 'u32[]', space=smem, size = 0x4, offset = 0x4, fixed_abs, tag = 'smem constant byte address 0x4 - core index']
  #allocation1 [shape = 'u32[144,128]{1,0:T(1,128)}', space=vmem, size = 0x12000, scoped, tag = 'internal scratch']
  #allocation2 [shape = 'f32[8,32]{1,0:T(8,128)}', space=vmem, size = 0x1000, scoped, tag = 'scratch operand']
  %s0 = inlined_call_operand.smem [shape: u32[30], index: -1, kind: input, shape index: {}]
  %s1 = sld [smem:[%s0]]
  %s2 = scalar_lea.smem %s0, 1
  %s3 = sld [smem:[%s2]]
  %s4 = scalar_lea.smem %s0, 2
  %s5 = sld [smem:[%s4]]
  %s6 = scalar_lea.smem %s0, 3
  %s7 = sld [smem:[%s6]]
  %s8 = scalar_lea.smem %s0, 4
  %s9 = sld [smem:[%s8]]
  %s10 = scalar_lea.smem %s0, 5
  %s11 = sld [smem:[%s10]]
  %s12 = scalar_lea.smem %s0, 6
  %s13 = sld [smem:[%s12]]
  %s14 = scalar_lea.smem %s0, 7
  %s15 = sld [smem:[%s14]]
  %s16 = scalar_lea.smem %s0, 8
  %s17 = sld [smem:[%s16]]
  %s18 = scalar_lea.smem %s0, 9
  %s19 = sld [smem:[%s18]]
  %s20 = scalar_lea.smem %s0, 10
  %s21 = sld [smem:[%s20]]
  %s22 = scalar_lea.smem %s0, 11
  %s23 = sld [smem:[%s22]]
  %s24 = scalar_lea.smem %s0, 12
  %s25 = sld [smem:[%s24]]
  %s26 = scalar_lea.smem %s0, 13
  %s27 = sld [smem:[%s26]]
  %s28 = scalar_lea.smem %s0, 14
  %s29 = sld [smem:[%s28]]
  %s30 = scalar_lea.smem %s0, 15
  %s31 = sld [smem:[%s30]]
  %s32 = scalar_lea.smem %s0, 16
  %s33 = sld [smem:[%s32]]
  %s34 = scalar_lea.smem %s0, 17
  %s35 = sld [smem:[%s34]]
  %s36 = scalar_lea.smem %s0, 18
  %s37 = sld [smem:[%s36]]
  %s38 = scalar_lea.smem %s0, 19
  %s39 = sld [smem:[%s38]]
  %s40 = scalar_lea.smem %s0, 20
  %s41 = sld [smem:[%s40]]
  %s42 = scalar_lea.smem %s0, 21
  %s43 = sld [smem:[%s42]]
  %s44 = scalar_lea.smem %s0, 22
  %s45 = sld [smem:[%s44]]
  %s46 = scalar_lea.smem %s0, 23
  %s47 = sld [smem:[%s46]]
  %s48 = scalar_lea.smem %s0, 24
  %s49 = sld [smem:[%s48]]
  %s50 = scalar_lea.smem %s0, 25
  %s51 = sld [smem:[%s50]]
  %s52 = scalar_lea.smem %s0, 26
  %s53 = sld [smem:[%s52]]
  %s54 = scalar_lea.smem %s0, 27
  %s55 = sld [smem:[%s54]]
  %s56 = scalar_lea.smem %s0, 28
  %s57 = sld [smem:[%s56]]
  %s58 = scalar_lea.smem %s0, 29
  %s59 = sld [smem:[%s58]]
  %s60 = sld [smem:[#allocation0]]
  $region217: #{tpu_custom_call.1} parent=0
    _
  %s62 = ssub.s32 1, %s60
  %s63 = scalar_select 0, %s62, %s60
  $region1: #{tpu_custom_call.1} parent=0
    #allocation3 [shape = 'u8[4096]{0}', space=vmem, size = 0x1000, scoped, tag = 'input window, operand 2, single buffered']
    #allocation4 [shape = 's32[2]{0}', space=sflag, size = 0x8, scoped, tag = 'scoped memory for tpu_custom_call.1']
    #allocation5 [shape = 's32[2]{0}', space=sflag, size = 0x8, scoped, tag = 'scoped memory for tpu_custom_call.1']
    #allocation6 [shape = 'u8[16384]{0}', space=vmem, size = 0x4000, scoped, tag = 'input window, operand 4']
    #allocation7 [shape = 's32[2]{0}', space=sflag, size = 0x8, scoped, tag = 'scoped memory for tpu_custom_call.1']
    #allocation8 [shape = 'u8[16384]{0}', space=vmem, size = 0x4000, scoped, tag = 'input window, operand 5']
    #allocation9 [shape = 'u8[1024]{0}', space=vmem, size = 0x400, scoped, tag = 'input window, operand 6']
    #allocation10 [shape = 's32[2]{0}', space=sflag, size = 0x8, scoped, tag = 'scoped memory for tpu_custom_call.1']
    #allocation11 [shape = 'u8[1024]{0}', space=vmem, size = 0x400, scoped, tag = 'input window, operand 7']
    #allocation12 [shape = 'u8[1024]{0}', space=vmem, size = 0x400, scoped, tag = 'input window, operand 8']
    #allocation13 [shape = 's32[2]{0}', space=sflag, size = 0x8, scoped, tag = 'scoped memory for tpu_custom_call.1']
    #allocation14 [shape = 'u8[1024]{0}', space=vmem, size = 0x400, scoped, tag = 'input window, operand 10']
    #allocation15 [shape = 'u8[16384]{0}', space=vmem, size = 0x4000, scoped, tag = 'input window, operand 11']
    #allocation16 [shape = 's32[2]{0}', space=sflag, size = 0x8, scoped, tag = 'scoped memory for tpu_custom_call.1']
    #allocation17 [shape = 'u8[16384]{0}', space=vmem, size = 0x4000, scoped, tag = 'input window, operand 12']
    #allocation18 [shape = 'u8[16384]{0}', space=vmem, size = 0x4000, scoped, tag = 'input window, operand 13']
    #allocation19 [shape = 's32[2]{0}', space=sflag, size = 0x8, scoped, tag = 'scoped memory for tpu_custom_call.1']
    #allocation20 [shape = 'u8[1024]{0}', space=vmem, size = 0x400, scoped, tag = 'input window, operand 14']
    #allocation21 [shape = 'u8[1024]{0}', space=vmem, size = 0x400, scoped, tag = 'input window, operand 15']
    #allocation22 [shape = 's32[2]{0}', space=sflag, size = 0x8, scoped, tag = 'scoped memory for tpu_custom_call.1']
    #allocation23 [shape = 'u8[1024]{0}', space=vmem, size = 0x400, scoped, tag = 'input window, operand 16']
    #allocation24 [shape = 'u8[16384]{0}', space=vmem, size = 0x4000, scoped, tag = 'input window, operand 17']
    #allocation25 [shape = 's32[2]{0}', space=sflag, size = 0x8, scoped, tag = 'scoped memory for tpu_custom_call.1']
    #allocation26 [shape = 'u8[16384]{0}', space=vmem, size = 0x4000, scoped, tag = 'input window, operand 25']
    #allocation27 [shape = 'u8[8192]{0}', space=vmem, size = 0x2000, scoped, tag = 'output window, operand 0']
    %64 = vsyncpa [#allocation4], 0
    %65 = vsyncpa [#allocation7], 0
    %s66 = scalar_lea.sflag [#allocation7], 1
    %67 = vsyncpa %s66, 0
    %68 = vsyncpa [#allocation10], 0
    %s69 = scalar_lea.sflag [#allocation10], 1
    %70 = vsyncpa %s69, 0
    %71 = vsyncpa [#allocation13], 0
    %s72 = scalar_lea.sflag [#allocation13], 1
    %73 = vsyncpa %s72, 0
    %74 = vsyncpa [#allocation16], 0
    %s75 = scalar_lea.sflag [#allocation16], 1
    %76 = vsyncpa %s75, 0
    %77 = vsyncpa [#allocation19], 0
    %s78 = scalar_lea.sflag [#allocation19], 1
    %79 = vsyncpa %s78, 0
    %80 = vsyncpa [#allocation22], 0
    %s81 = scalar_lea.sflag [#allocation22], 1
    %82 = vsyncpa %s81, 0
    %83 = vsyncpa [#allocation25], 0
    %s84 = scalar_lea.sflag [#allocation25], 1
    %85 = vsyncpa %s84, 0
    %86 = vsyncpa [#allocation5], 0
    %s87 = scalar_lea.sflag [#allocation5], 1
    %88 = vsyncpa %s87, 0
    loop: start=0, step=1, limit=6
    $region2: #{tpu_custom_call.1} parent=1 // loop_pre_header
      _
    $region3: #{tpu_custom_call.1} parent=1 // loop_header
      %s90 = sphi 0, %s94
      %p91 = scmp.ge.s32.totalorder %s90, 6
      %s97 = sphi 0, %s109
      %s98 = sphi 0, %s105
      %s99 = sphi 0, %s97
      %s100 = sphi 0, %s98
      %s101 = sphi 0, %s99
      %s102 = sphi 0, %s100
      %s112 = sphi 0, %s114
      %s115 = sphi 0, %s112
      %s116 = sphi 0, %s115
      %s132 = sphi 0, %s116
      %s138 = sphi 0, %s140
      %s141 = sphi 0, %s138
      %s142 = sphi 0, %s141
      %s158 = sphi 0, %s142
      %s162 = sphi 0, %s162
      %s164 = sphi 0, %s162
      %s165 = sphi 0, %s164
      %s179 = sphi 0, %s165
      %s185 = sphi 0, %s187
      %s188 = sphi 0, %s185
      %s189 = sphi 0, %s188
      %s205 = sphi 0, %s189
      %s211 = sphi 0, %s213
      %s214 = sphi 0, %s211
      %s215 = sphi 0, %s214
      %s231 = sphi 0, %s215
      %s237 = sphi 0, %s239
      %s240 = sphi 0, %s237
      %s241 = sphi 0, %s240
      %s257 = sphi 0, %s241
      %s263 = sphi 0, %s265
      %s266 = sphi 0, %s263
      %s267 = sphi 0, %s266
      %s283 = sphi 0, %s267
      %s289 = sphi 0, %s291
      %s292 = sphi 0, %s289
      %s293 = sphi 0, %s292
      %s309 = sphi 0, %s293
      %s315 = sphi 0, %s317
      %s318 = sphi 0, %s315
      %s319 = sphi 0, %s318
      %s335 = sphi 0, %s319
      %s341 = sphi 0, %s343
      %s344 = sphi 0, %s341
      %s345 = sphi 0, %s344
      %s361 = sphi 0, %s345
      %s367 = sphi 0, %s369
      %s370 = sphi 0, %s367
      %s371 = sphi 0, %s370
      %s387 = sphi 0, %s371
      %s393 = sphi 0, %s395
      %s396 = sphi 0, %s393
      %s397 = sphi 0, %s396
      %s413 = sphi 0, %s397
      %s419 = sphi 0, %s421
      %s422 = sphi 0, %s419
      %s423 = sphi 0, %s422
      %s439 = sphi 0, %s423
      %s445 = sphi 0, %s447
      %s448 = sphi 0, %s445
      %s449 = sphi 0, %s448
      %s465 = sphi 0, %s449
      %s471 = sphi 0, %s473
      %s474 = sphi 0, %s471
      %s475 = sphi 0, %s474
      %s491 = sphi 0, %s475
      %s497 = sphi 0, %s499
      %s500 = sphi 0, %s497
      %s501 = sphi 0, %s500
      %s517 = sphi 0, %s501
      %s523 = sphi 0, %s525
      %s526 = sphi 0, %s523
      %s527 = sphi 0, %s526
      %s543 = sphi 0, %s527
      %s549 = sphi 0, %s551
      %s552 = sphi 0, %s549
      %s553 = sphi 0, %s552
      %s569 = sphi 0, %s553
      %s575 = sphi 0, %s577
      %s578 = sphi 0, %s575
      %s579 = sphi 0, %s578
      %s595 = sphi 0, %s579
      %s601 = sphi 0, %s603
      %s604 = sphi 0, %s601
      %s605 = sphi 0, %s604
      %s621 = sphi 0, %s605
      %s627 = sphi 0, %s629
      %s630 = sphi 0, %s627
      %s631 = sphi 0, %s630
      %s647 = sphi 0, %s631
      %s653 = sphi 0, %s655
      %s656 = sphi 0, %s653
      %s657 = sphi 0, %s656
      %s673 = sphi 0, %s657
      %s679 = sphi 0, %s681
      %s682 = sphi 0, %s679
      %s683 = sphi 0, %s682
      %s699 = sphi 0, %s683
      %s705 = sphi 0, %s707
      %s708 = sphi 0, %s705
      %s709 = sphi 0, %s708
      %s725 = sphi 0, %s709
      %s731 = sphi 0, %s733
      %s734 = sphi 0, %s731
      %s735 = sphi 0, %s734
      %s751 = sphi 0, %s735
      %s757 = sphi 0, %s759
      %s760 = sphi 0, %s757
      %s761 = sphi 0, %s760
      %s777 = sphi 0, %s761
      %s783 = sphi 0, %s785
      %s786 = sphi 0, %s783
      %s787 = sphi 0, %s786
      %s803 = sphi 0, %s787
      %s809 = sphi 0, %s811
      %s812 = sphi 0, %s809
      %s813 = sphi 0, %s812
      %s829 = sphi 0, %s813
      %s835 = sphi 0, %s837
      %s838 = sphi 0, %s835
      %s839 = sphi 0, %s838
      %s855 = sphi 0, %s839
      %s861 = sphi 0, %s863
      %s864 = sphi 0, %s861
      %s865 = sphi 0, %s864
      %s881 = sphi 0, %s865
    $region4: #{tpu_custom_call.1} parent=1 // loop_header_branch
      %93 = sbr.rel (%p91) target = $region8
    $region5: #{tpu_custom_call.1} parent=1 // loop_body
      %s95 = ssub.s32 %s90, 1
      %s96 = ssub.s32 %s90, 2
      %s103 = sadd.s32 1, %s98
      %p104 = scmp.ge.s32.totalorder %s103, 2
      %s105 = scalar_select %p104, 0, %s103
      %s106 = sadd.s32 1, %s97
      %s107 = scalar_select %p104, %s106, %s97
      %p108 = scmp.ge.s32.totalorder %s107, 2
      %s109 = scalar_select %p108, 0, %s107
      %s110 = ssub.s32 %s97, %s109
      %p111 = scmp.eq.s32.totalorder %s110, 0
      %s113 = sadd.s32 %s112, 1
      %s114 = scalar_select %p111, %s112, %s113
      %p117 = pneg %p111
      %p118 = scmp.eq.s32.totalorder %s90, 3
      %p119 = por %p117, %p118
      %p120 = scmp.ne.s32.totalorder %s112, %s115
      %p121 = scmp.eq.s32.totalorder %s90, 0
      %p122 = por %p120, %p121
      %p123 = scmp.ne.s32.totalorder %s112, %s115
      %p124 = scmp.eq.s32.totalorder %s95, 3
      %p125 = por %p123, %p124
      %p126 = scmp.ne.s32.totalorder %s115, %s116
      %p127 = scmp.eq.s32.totalorder %s95, 0
      %p128 = por %p126, %p127
      %p129 = scmp.ne.s32.totalorder %s115, %s116
      %p130 = scmp.eq.s32.totalorder %s96, 3
      %p131 = por %p129, %p130
      %p133 = scmp.ne.s32.totalorder %s116, %s132
      %p134 = scmp.eq.s32.totalorder %s96, 0
      %p135 = por %p133, %p134
      %s136 = ssub.s32 %s97, %s109
      %p137 = scmp.eq.s32.totalorder %s136, 0
      %s139 = sadd.s32 %s138, 1
      %s140 = scalar_select %p137, %s138, %s139
      %p143 = pneg %p137
      %p144 = scmp.eq.s32.totalorder %s90, 3
      %p145 = por %p143, %p144
      %p146 = scmp.ne.s32.totalorder %s138, %s141
      %p147 = scmp.eq.s32.totalorder %s90, 0
      %p148 = por %p146, %p147
      %p149 = scmp.ne.s32.totalorder %s138, %s141
      %p150 = scmp.eq.s32.totalorder %s95, 3
      %p151 = por %p149, %p150
      %p152 = scmp.ne.s32.totalorder %s141, %s142
      %p153 = scmp.eq.s32.totalorder %s95, 0
      %p154 = por %p152, %p153
      %p155 = scmp.ne.s32.totalorder %s141, %s142
      %p156 = scmp.eq.s32.totalorder %s96, 3
      %p157 = por %p155, %p156
      %p159 = scmp.ne.s32.totalorder %s142, %s158
      %p160 = scmp.eq.s32.totalorder %s96, 0
      %p161 = por %p159, %p160
      %s163 = sadd.s32 %s162, 1
      %p166 = scmp.eq.s32.totalorder %s90, 3
      %p167 = scmp.ne.s32.totalorder %s162, %s164
      %p168 = scmp.eq.s32.totalorder %s90, 0
      %p169 = por %p167, %p168
      %p170 = scmp.ne.s32.totalorder %s162, %s164
      %p171 = scmp.eq.s32.totalorder %s95, 3
      %p172 = por %p170, %p171
      %p173 = scmp.ne.s32.totalorder %s164, %s165
      %p174 = scmp.eq.s32.totalorder %s95, 0
      %p175 = por %p173, %p174
      %p176 = scmp.ne.s32.totalorder %s164, %s165
      %p177 = scmp.eq.s32.totalorder %s96, 3
      %p178 = por %p176, %p177
      %p180 = scmp.ne.s32.totalorder %s165, %s179
      %p181 = scmp.eq.s32.totalorder %s96, 0
      %p182 = por %p180, %p181
      %s183 = ssub.s32 %s98, %s105
      %p184 = scmp.eq.s32.totalorder %s183, 0
      %s186 = sadd.s32 %s185, 1
      %s187 = scalar_select %p184, %s185, %s186
      %p190 = pneg %p184
      %p191 = scmp.eq.s32.totalorder %s90, 3
      %p192 = por %p190, %p191
      %p193 = scmp.ne.s32.totalorder %s185, %s188
      %p194 = scmp.eq.s32.totalorder %s90, 0
      %p195 = por %p193, %p194
      %p196 = scmp.ne.s32.totalorder %s185, %s188
      %p197 = scmp.eq.s32.totalorder %s95, 3
      %p198 = por %p196, %p197
      %p199 = scmp.ne.s32.totalorder %s188, %s189
      %p200 = scmp.eq.s32.totalorder %s95, 0
      %p201 = por %p199, %p200
      %p202 = scmp.ne.s32.totalorder %s188, %s189
      %p203 = scmp.eq.s32.totalorder %s96, 3
      %p204 = por %p202, %p203
      %p206 = scmp.ne.s32.totalorder %s189, %s205
      %p207 = scmp.eq.s32.totalorder %s96, 0
      %p208 = por %p206, %p207
      %s209 = ssub.s32 %s98, %s105
      %p210 = scmp.eq.s32.totalorder %s209, 0
      %s212 = sadd.s32 %s211, 1
      %s213 = scalar_select %p210, %s211, %s212
      %p216 = pneg %p210
      %p217 = scmp.eq.s32.totalorder %s90, 3
      %p218 = por %p216, %p217
      %p219 = scmp.ne.s32.totalorder %s211, %s214
      %p220 = scmp.eq.s32.totalorder %s90, 0
      %p221 = por %p219, %p220
      %p222 = scmp.ne.s32.totalorder %s211, %s214
      %p223 = scmp.eq.s32.totalorder %s95, 3
      %p224 = por %p222, %p223
      %p225 = scmp.ne.s32.totalorder %s214, %s215
      %p226 = scmp.eq.s32.totalorder %s95, 0
      %p227 = por %p225, %p226
      %p228 = scmp.ne.s32.totalorder %s214, %s215
      %p229 = scmp.eq.s32.totalorder %s96, 3
      %p230 = por %p228, %p229
      %p232 = scmp.ne.s32.totalorder %s215, %s231
      %p233 = scmp.eq.s32.totalorder %s96, 0
      %p234 = por %p232, %p233
      %s235 = ssub.s32 %s98, %s105
      %p236 = scmp.eq.s32.totalorder %s235, 0
      %s238 = sadd.s32 %s237, 1
      %s239 = scalar_select %p236, %s237, %s238
      %p242 = pneg %p236
      %p243 = scmp.eq.s32.totalorder %s90, 3
      %p244 = por %p242, %p243
      %p245 = scmp.ne.s32.totalorder %s237, %s240
      %p246 = scmp.eq.s32.totalorder %s90, 0
      %p247 = por %p245, %p246
      %p248 = scmp.ne.s32.totalorder %s237, %s240
      %p249 = scmp.eq.s32.totalorder %s95, 3
      %p250 = por %p248, %p249
      %p251 = scmp.ne.s32.totalorder %s240, %s241
      %p252 = scmp.eq.s32.totalorder %s95, 0
      %p253 = por %p251, %p252
      %p254 = scmp.ne.s32.totalorder %s240, %s241
      %p255 = scmp.eq.s32.totalorder %s96, 3
      %p256 = por %p254, %p255
      %p258 = scmp.ne.s32.totalorder %s241, %s257
      %p259 = scmp.eq.s32.totalorder %s96, 0
      %p260 = por %p258, %p259
      %s261 = ssub.s32 %s98, %s105
      %p262 = scmp.eq.s32.totalorder %s261, 0
      %s264 = sadd.s32 %s263, 1
      %s265 = scalar_select %p262, %s263, %s264
      %p268 = pneg %p262
      %p269 = scmp.eq.s32.totalorder %s90, 3
      %p270 = por %p268, %p269
      %p271 = scmp.ne.s32.totalorder %s263, %s266
      %p272 = scmp.eq.s32.totalorder %s90, 0
      %p273 = por %p271, %p272
      %p274 = scmp.ne.s32.totalorder %s263, %s266
      %p275 = scmp.eq.s32.totalorder %s95, 3
      %p276 = por %p274, %p275
      %p277 = scmp.ne.s32.totalorder %s266, %s267
      %p278 = scmp.eq.s32.totalorder %s95, 0
      %p279 = por %p277, %p278
      %p280 = scmp.ne.s32.totalorder %s266, %s267
      %p281 = scmp.eq.s32.totalorder %s96, 3
      %p282 = por %p280, %p281
      %p284 = scmp.ne.s32.totalorder %s267, %s283
      %p285 = scmp.eq.s32.totalorder %s96, 0
      %p286 = por %p284, %p285
      %s287 = ssub.s32 %s98, %s105
      %p288 = scmp.eq.s32.totalorder %s287, 0
      %s290 = sadd.s32 %s289, 1
      %s291 = scalar_select %p288, %s289, %s290
      %p294 = pneg %p288
      %p295 = scmp.eq.s32.totalorder %s90, 3
      %p296 = por %p294, %p295
      %p297 = scmp.ne.s32.totalorder %s289, %s292
      %p298 = scmp.eq.s32.totalorder %s90, 0
      %p299 = por %p297, %p298
      %p300 = scmp.ne.s32.totalorder %s289, %s292
      %p301 = scmp.eq.s32.totalorder %s95, 3
      %p302 = por %p300, %p301
      %p303 = scmp.ne.s32.totalorder %s292, %s293
      %p304 = scmp.eq.s32.totalorder %s95, 0
      %p305 = por %p303, %p304
      %p306 = scmp.ne.s32.totalorder %s292, %s293
      %p307 = scmp.eq.s32.totalorder %s96, 3
      %p308 = por %p306, %p307
      %p310 = scmp.ne.s32.totalorder %s293, %s309
      %p311 = scmp.eq.s32.totalorder %s96, 0
      %p312 = por %p310, %p311
      %s313 = ssub.s32 %s98, %s105
      %p314 = scmp.eq.s32.totalorder %s313, 0
      %s316 = sadd.s32 %s315, 1
      %s317 = scalar_select %p314, %s315, %s316
      %p320 = pneg %p314
      %p321 = scmp.eq.s32.totalorder %s90, 3
      %p322 = por %p320, %p321
      %p323 = scmp.ne.s32.totalorder %s315, %s318
      %p324 = scmp.eq.s32.totalorder %s90, 0
      %p325 = por %p323, %p324
      %p326 = scmp.ne.s32.totalorder %s315, %s318
      %p327 = scmp.eq.s32.totalorder %s95, 3
      %p328 = por %p326, %p327
      %p329 = scmp.ne.s32.totalorder %s318, %s319
      %p330 = scmp.eq.s32.totalorder %s95, 0
      %p331 = por %p329, %p330
      %p332 = scmp.ne.s32.totalorder %s318, %s319
      %p333 = scmp.eq.s32.totalorder %s96, 3
      %p334 = por %p332, %p333
      %p336 = scmp.ne.s32.totalorder %s319, %s335
      %p337 = scmp.eq.s32.totalorder %s96, 0
      %p338 = por %p336, %p337
      %s339 = ssub.s32 %s98, %s105
      %p340 = scmp.eq.s32.totalorder %s339, 0
      %s342 = sadd.s32 %s341, 1
      %s343 = scalar_select %p340, %s341, %s342
      %p346 = pneg %p340
      %p347 = scmp.eq.s32.totalorder %s90, 3
      %p348 = por %p346, %p347
      %p349 = scmp.ne.s32.totalorder %s341, %s344
      %p350 = scmp.eq.s32.totalorder %s90, 0
      %p351 = por %p349, %p350
      %p352 = scmp.ne.s32.totalorder %s341, %s344
      %p353 = scmp.eq.s32.totalorder %s95, 3
      %p354 = por %p352, %p353
      %p355 = scmp.ne.s32.totalorder %s344, %s345
      %p356 = scmp.eq.s32.totalorder %s95, 0
      %p357 = por %p355, %p356
      %p358 = scmp.ne.s32.totalorder %s344, %s345
      %p359 = scmp.eq.s32.totalorder %s96, 3
      %p360 = por %p358, %p359
      %p362 = scmp.ne.s32.totalorder %s345, %s361
      %p363 = scmp.eq.s32.totalorder %s96, 0
      %p364 = por %p362, %p363
      %s365 = ssub.s32 %s98, %s105
      %p366 = scmp.eq.s32.totalorder %s365, 0
      %s368 = sadd.s32 %s367, 1
      %s369 = scalar_select %p366, %s367, %s368
      %p372 = pneg %p366
      %p373 = scmp.eq.s32.totalorder %s90, 3
      %p374 = por %p372, %p373
      %p375 = scmp.ne.s32.totalorder %s367, %s370
      %p376 = scmp.eq.s32.totalorder %s90, 0
      %p377 = por %p375, %p376
      %p378 = scmp.ne.s32.totalorder %s367, %s370
      %p379 = scmp.eq.s32.totalorder %s95, 3
      %p380 = por %p378, %p379
      %p381 = scmp.ne.s32.totalorder %s370, %s371
      %p382 = scmp.eq.s32.totalorder %s95, 0
      %p383 = por %p381, %p382
      %p384 = scmp.ne.s32.totalorder %s370, %s371
      %p385 = scmp.eq.s32.totalorder %s96, 3
      %p386 = por %p384, %p385
      %p388 = scmp.ne.s32.totalorder %s371, %s387
      %p389 = scmp.eq.s32.totalorder %s96, 0
      %p390 = por %p388, %p389
      %s391 = ssub.s32 %s98, %s105
      %p392 = scmp.eq.s32.totalorder %s391, 0
      %s394 = sadd.s32 %s393, 1
      %s395 = scalar_select %p392, %s393, %s394
      %p398 = pneg %p392
      %p399 = scmp.eq.s32.totalorder %s90, 3
      %p400 = por %p398, %p399
      %p401 = scmp.ne.s32.totalorder %s393, %s396
      %p402 = scmp.eq.s32.totalorder %s90, 0
      %p403 = por %p401, %p402
      %p404 = scmp.ne.s32.totalorder %s393, %s396
      %p405 = scmp.eq.s32.totalorder %s95, 3
      %p406 = por %p404, %p405
      %p407 = scmp.ne.s32.totalorder %s396, %s397
      %p408 = scmp.eq.s32.totalorder %s95, 0
      %p409 = por %p407, %p408
      %p410 = scmp.ne.s32.totalorder %s396, %s397
      %p411 = scmp.eq.s32.totalorder %s96, 3
      %p412 = por %p410, %p411
      %p414 = scmp.ne.s32.totalorder %s397, %s413
      %p415 = scmp.eq.s32.totalorder %s96, 0
      %p416 = por %p414, %p415
      %s417 = ssub.s32 %s98, %s105
      %p418 = scmp.eq.s32.totalorder %s417, 0
      %s420 = sadd.s32 %s419, 1
      %s421 = scalar_select %p418, %s419, %s420
      %p424 = pneg %p418
      %p425 = scmp.eq.s32.totalorder %s90, 3
      %p426 = por %p424, %p425
      %p427 = scmp.ne.s32.totalorder %s419, %s422
      %p428 = scmp.eq.s32.totalorder %s90, 0
      %p429 = por %p427, %p428
      %p430 = scmp.ne.s32.totalorder %s419, %s422
      %p431 = scmp.eq.s32.totalorder %s95, 3
      %p432 = por %p430, %p431
      %p433 = scmp.ne.s32.totalorder %s422, %s423
      %p434 = scmp.eq.s32.totalorder %s95, 0
      %p435 = por %p433, %p434
      %p436 = scmp.ne.s32.totalorder %s422, %s423
      %p437 = scmp.eq.s32.totalorder %s96, 3
      %p438 = por %p436, %p437
      %p440 = scmp.ne.s32.totalorder %s423, %s439
      %p441 = scmp.eq.s32.totalorder %s96, 0
      %p442 = por %p440, %p441
      %s443 = ssub.s32 %s98, %s105
      %p444 = scmp.eq.s32.totalorder %s443, 0
      %s446 = sadd.s32 %s445, 1
      %s447 = scalar_select %p444, %s445, %s446
      %p450 = pneg %p444
      %p451 = scmp.eq.s32.totalorder %s90, 3
      %p452 = por %p450, %p451
      %p453 = scmp.ne.s32.totalorder %s445, %s448
      %p454 = scmp.eq.s32.totalorder %s90, 0
      %p455 = por %p453, %p454
      %p456 = scmp.ne.s32.totalorder %s445, %s448
      %p457 = scmp.eq.s32.totalorder %s95, 3
      %p458 = por %p456, %p457
      %p459 = scmp.ne.s32.totalorder %s448, %s449
      %p460 = scmp.eq.s32.totalorder %s95, 0
      %p461 = por %p459, %p460
      %p462 = scmp.ne.s32.totalorder %s448, %s449
      %p463 = scmp.eq.s32.totalorder %s96, 3
      %p464 = por %p462, %p463
      %p466 = scmp.ne.s32.totalorder %s449, %s465
      %p467 = scmp.eq.s32.totalorder %s96, 0
      %p468 = por %p466, %p467
      %s469 = ssub.s32 %s98, %s105
      %p470 = scmp.eq.s32.totalorder %s469, 0
      %s472 = sadd.s32 %s471, 1
      %s473 = scalar_select %p470, %s471, %s472
      %p476 = pneg %p470
      %p477 = scmp.eq.s32.totalorder %s90, 3
      %p478 = por %p476, %p477
      %p479 = scmp.ne.s32.totalorder %s471, %s474
      %p480 = scmp.eq.s32.totalorder %s90, 0
      %p481 = por %p479, %p480
      %p482 = scmp.ne.s32.totalorder %s471, %s474
      %p483 = scmp.eq.s32.totalorder %s95, 3
      %p484 = por %p482, %p483
      %p485 = scmp.ne.s32.totalorder %s474, %s475
      %p486 = scmp.eq.s32.totalorder %s95, 0
      %p487 = por %p485, %p486
      %p488 = scmp.ne.s32.totalorder %s474, %s475
      %p489 = scmp.eq.s32.totalorder %s96, 3
      %p490 = por %p488, %p489
      %p492 = scmp.ne.s32.totalorder %s475, %s491
      %p493 = scmp.eq.s32.totalorder %s96, 0
      %p494 = por %p492, %p493
      %s495 = ssub.s32 %s98, %s105
      %p496 = scmp.eq.s32.totalorder %s495, 0
      %s498 = sadd.s32 %s497, 1
      %s499 = scalar_select %p496, %s497, %s498
      %p502 = pneg %p496
      %p503 = scmp.eq.s32.totalorder %s90, 3
      %p504 = por %p502, %p503
      %p505 = scmp.ne.s32.totalorder %s497, %s500
      %p506 = scmp.eq.s32.totalorder %s90, 0
      %p507 = por %p505, %p506
      %p508 = scmp.ne.s32.totalorder %s497, %s500
      %p509 = scmp.eq.s32.totalorder %s95, 3
      %p510 = por %p508, %p509
      %p511 = scmp.ne.s32.totalorder %s500, %s501
      %p512 = scmp.eq.s32.totalorder %s95, 0
      %p513 = por %p511, %p512
      %p514 = scmp.ne.s32.totalorder %s500, %s501
      %p515 = scmp.eq.s32.totalorder %s96, 3
      %p516 = por %p514, %p515
      %p518 = scmp.ne.s32.totalorder %s501, %s517
      %p519 = scmp.eq.s32.totalorder %s96, 0
      %p520 = por %p518, %p519
      %s521 = ssub.s32 %s98, %s105
      %p522 = scmp.eq.s32.totalorder %s521, 0
      %s524 = sadd.s32 %s523, 1
      %s525 = scalar_select %p522, %s523, %s524
      %p528 = pneg %p522
      %p529 = scmp.eq.s32.totalorder %s90, 3
      %p530 = por %p528, %p529
      %p531 = scmp.ne.s32.totalorder %s523, %s526
      %p532 = scmp.eq.s32.totalorder %s90, 0
      %p533 = por %p531, %p532
      %p534 = scmp.ne.s32.totalorder %s523, %s526
      %p535 = scmp.eq.s32.totalorder %s95, 3
      %p536 = por %p534, %p535
      %p537 = scmp.ne.s32.totalorder %s526, %s527
      %p538 = scmp.eq.s32.totalorder %s95, 0
      %p539 = por %p537, %p538
      %p540 = scmp.ne.s32.totalorder %s526, %s527
      %p541 = scmp.eq.s32.totalorder %s96, 3
      %p542 = por %p540, %p541
      %p544 = scmp.ne.s32.totalorder %s527, %s543
      %p545 = scmp.eq.s32.totalorder %s96, 0
      %p546 = por %p544, %p545
      %s547 = ssub.s32 %s98, %s105
      %p548 = scmp.eq.s32.totalorder %s547, 0
      %s550 = sadd.s32 %s549, 1
      %s551 = scalar_select %p548, %s549, %s550
      %p554 = pneg %p548
      %p555 = scmp.eq.s32.totalorder %s90, 3
      %p556 = por %p554, %p555
      %p557 = scmp.ne.s32.totalorder %s549, %s552
      %p558 = scmp.eq.s32.totalorder %s90, 0
      %p559 = por %p557, %p558
      %p560 = scmp.ne.s32.totalorder %s549, %s552
      %p561 = scmp.eq.s32.totalorder %s95, 3
      %p562 = por %p560, %p561
      %p563 = scmp.ne.s32.totalorder %s552, %s553
      %p564 = scmp.eq.s32.totalorder %s95, 0
      %p565 = por %p563, %p564
      %p566 = scmp.ne.s32.totalorder %s552, %s553
      %p567 = scmp.eq.s32.totalorder %s96, 3
      %p568 = por %p566, %p567
      %p570 = scmp.ne.s32.totalorder %s553, %s569
      %p571 = scmp.eq.s32.totalorder %s96, 0
      %p572 = por %p570, %p571
      %s573 = ssub.s32 %s98, %s105
      %p574 = scmp.eq.s32.totalorder %s573, 0
      %s576 = sadd.s32 %s575, 1
      %s577 = scalar_select %p574, %s575, %s576
      %p580 = pneg %p574
      %p581 = scmp.eq.s32.totalorder %s90, 3
      %p582 = por %p580, %p581
      %p583 = scmp.ne.s32.totalorder %s575, %s578
      %p584 = scmp.eq.s32.totalorder %s90, 0
      %p585 = por %p583, %p584
      %p586 = scmp.ne.s32.totalorder %s575, %s578
      %p587 = scmp.eq.s32.totalorder %s95, 3
      %p588 = por %p586, %p587
      %p589 = scmp.ne.s32.totalorder %s578, %s579
      %p590 = scmp.eq.s32.totalorder %s95, 0
      %p591 = por %p589, %p590
      %p592 = scmp.ne.s32.totalorder %s578, %s579
      %p593 = scmp.eq.s32.totalorder %s96, 3
      %p594 = por %p592, %p593
      %p596 = scmp.ne.s32.totalorder %s579, %s595
      %p597 = scmp.eq.s32.totalorder %s96, 0
      %p598 = por %p596, %p597
      %s599 = ssub.s32 %s98, %s105
      %p600 = scmp.eq.s32.totalorder %s599, 0
      %s602 = sadd.s32 %s601, 1
      %s603 = scalar_select %p600, %s601, %s602
      %p606 = pneg %p600
      %p607 = scmp.eq.s32.totalorder %s90, 3
      %p608 = por %p606, %p607
      %p609 = scmp.ne.s32.totalorder %s601, %s604
      %p610 = scmp.eq.s32.totalorder %s90, 0
      %p611 = por %p609, %p610
      %p612 = scmp.ne.s32.totalorder %s601, %s604
      %p613 = scmp.eq.s32.totalorder %s95, 3
      %p614 = por %p612, %p613
      %p615 = scmp.ne.s32.totalorder %s604, %s605
      %p616 = scmp.eq.s32.totalorder %s95, 0
      %p617 = por %p615, %p616
      %p618 = scmp.ne.s32.totalorder %s604, %s605
      %p619 = scmp.eq.s32.totalorder %s96, 3
      %p620 = por %p618, %p619
      %p622 = scmp.ne.s32.totalorder %s605, %s621
      %p623 = scmp.eq.s32.totalorder %s96, 0
      %p624 = por %p622, %p623
      %s625 = ssub.s32 %s98, %s105
      %p626 = scmp.eq.s32.totalorder %s625, 0
      %s628 = sadd.s32 %s627, 1
      %s629 = scalar_select %p626, %s627, %s628
      %p632 = pneg %p626
      %p633 = scmp.eq.s32.totalorder %s90, 3
      %p634 = por %p632, %p633
      %p635 = scmp.ne.s32.totalorder %s627, %s630
      %p636 = scmp.eq.s32.totalorder %s90, 0
      %p637 = por %p635, %p636
      %p638 = scmp.ne.s32.totalorder %s627, %s630
      %p639 = scmp.eq.s32.totalorder %s95, 3
      %p640 = por %p638, %p639
      %p641 = scmp.ne.s32.totalorder %s630, %s631
      %p642 = scmp.eq.s32.totalorder %s95, 0
      %p643 = por %p641, %p642
      %p644 = scmp.ne.s32.totalorder %s630, %s631
      %p645 = scmp.eq.s32.totalorder %s96, 3
      %p646 = por %p644, %p645
      %p648 = scmp.ne.s32.totalorder %s631, %s647
      %p649 = scmp.eq.s32.totalorder %s96, 0
      %p650 = por %p648, %p649
      %s651 = ssub.s32 %s98, %s105
      %p652 = scmp.eq.s32.totalorder %s651, 0
      %s654 = sadd.s32 %s653, 1
      %s655 = scalar_select %p652, %s653, %s654
      %p658 = pneg %p652
      %p659 = scmp.eq.s32.totalorder %s90, 3
      %p660 = por %p658, %p659
      %p661 = scmp.ne.s32.totalorder %s653, %s656
      %p662 = scmp.eq.s32.totalorder %s90, 0
      %p663 = por %p661, %p662
      %p664 = scmp.ne.s32.totalorder %s653, %s656
      %p665 = scmp.eq.s32.totalorder %s95, 3
      %p666 = por %p664, %p665
      %p667 = scmp.ne.s32.totalorder %s656, %s657
      %p668 = scmp.eq.s32.totalorder %s95, 0
      %p669 = por %p667, %p668
      %p670 = scmp.ne.s32.totalorder %s656, %s657
      %p671 = scmp.eq.s32.totalorder %s96, 3
      %p672 = por %p670, %p671
      %p674 = scmp.ne.s32.totalorder %s657, %s673
      %p675 = scmp.eq.s32.totalorder %s96, 0
      %p676 = por %p674, %p675
      %s677 = ssub.s32 %s98, %s105
      %p678 = scmp.eq.s32.totalorder %s677, 0
      %s680 = sadd.s32 %s679, 1
      %s681 = scalar_select %p678, %s679, %s680
      %p684 = pneg %p678
      %p685 = scmp.eq.s32.totalorder %s90, 3
      %p686 = por %p684, %p685
      %p687 = scmp.ne.s32.totalorder %s679, %s682
      %p688 = scmp.eq.s32.totalorder %s90, 0
      %p689 = por %p687, %p688
      %p690 = scmp.ne.s32.totalorder %s679, %s682
      %p691 = scmp.eq.s32.totalorder %s95, 3
      %p692 = por %p690, %p691
      %p693 = scmp.ne.s32.totalorder %s682, %s683
      %p694 = scmp.eq.s32.totalorder %s95, 0
      %p695 = por %p693, %p694
      %p696 = scmp.ne.s32.totalorder %s682, %s683
      %p697 = scmp.eq.s32.totalorder %s96, 3
      %p698 = por %p696, %p697
      %p700 = scmp.ne.s32.totalorder %s683, %s699
      %p701 = scmp.eq.s32.totalorder %s96, 0
      %p702 = por %p700, %p701
      %s703 = ssub.s32 %s98, %s105
      %p704 = scmp.eq.s32.totalorder %s703, 0
      %s706 = sadd.s32 %s705, 1
      %s707 = scalar_select %p704, %s705, %s706
      %p710 = pneg %p704
      %p711 = scmp.eq.s32.totalorder %s90, 3
      %p712 = por %p710, %p711
      %p713 = scmp.ne.s32.totalorder %s705, %s708
      %p714 = scmp.eq.s32.totalorder %s90, 0
      %p715 = por %p713, %p714
      %p716 = scmp.ne.s32.totalorder %s705, %s708
      %p717 = scmp.eq.s32.totalorder %s95, 3
      %p718 = por %p716, %p717
      %p719 = scmp.ne.s32.totalorder %s708, %s709
      %p720 = scmp.eq.s32.totalorder %s95, 0
      %p721 = por %p719, %p720
      %p722 = scmp.ne.s32.totalorder %s708, %s709
      %p723 = scmp.eq.s32.totalorder %s96, 3
      %p724 = por %p722, %p723
      %p726 = scmp.ne.s32.totalorder %s709, %s725
      %p727 = scmp.eq.s32.totalorder %s96, 0
      %p728 = por %p726, %p727
      %s729 = ssub.s32 %s98, %s105
      %p730 = scmp.eq.s32.totalorder %s729, 0
      %s732 = sadd.s32 %s731, 1
      %s733 = scalar_select %p730, %s731, %s732
      %p736 = pneg %p730
      %p737 = scmp.eq.s32.totalorder %s90, 3
      %p738 = por %p736, %p737
      %p739 = scmp.ne.s32.totalorder %s731, %s734
      %p740 = scmp.eq.s32.totalorder %s90, 0
      %p741 = por %p739, %p740
      %p742 = scmp.ne.s32.totalorder %s731, %s734
      %p743 = scmp.eq.s32.totalorder %s95, 3
      %p744 = por %p742, %p743
      %p745 = scmp.ne.s32.totalorder %s734, %s735
      %p746 = scmp.eq.s32.totalorder %s95, 0
      %p747 = por %p745, %p746
      %p748 = scmp.ne.s32.totalorder %s734, %s735
      %p749 = scmp.eq.s32.totalorder %s96, 3
      %p750 = por %p748, %p749
      %p752 = scmp.ne.s32.totalorder %s735, %s751
      %p753 = scmp.eq.s32.totalorder %s96, 0
      %p754 = por %p752, %p753
      %s755 = ssub.s32 %s98, %s105
      %p756 = scmp.eq.s32.totalorder %s755, 0
      %s758 = sadd.s32 %s757, 1
      %s759 = scalar_select %p756, %s757, %s758
      %p762 = pneg %p756
      %p763 = scmp.eq.s32.totalorder %s90, 3
      %p764 = por %p762, %p763
      %p765 = scmp.ne.s32.totalorder %s757, %s760
      %p766 = scmp.eq.s32.totalorder %s90, 0
      %p767 = por %p765, %p766
      %p768 = scmp.ne.s32.totalorder %s757, %s760
      %p769 = scmp.eq.s32.totalorder %s95, 3
      %p770 = por %p768, %p769
      %p771 = scmp.ne.s32.totalorder %s760, %s761
      %p772 = scmp.eq.s32.totalorder %s95, 0
      %p773 = por %p771, %p772
      %p774 = scmp.ne.s32.totalorder %s760, %s761
      %p775 = scmp.eq.s32.totalorder %s96, 3
      %p776 = por %p774, %p775
      %p778 = scmp.ne.s32.totalorder %s761, %s777
      %p779 = scmp.eq.s32.totalorder %s96, 0
      %p780 = por %p778, %p779
      %s781 = ssub.s32 %s98, %s105
      %p782 = scmp.eq.s32.totalorder %s781, 0
      %s784 = sadd.s32 %s783, 1
      %s785 = scalar_select %p782, %s783, %s784
      %p788 = pneg %p782
      %p789 = scmp.eq.s32.totalorder %s90, 3
      %p790 = por %p788, %p789
      %p791 = scmp.ne.s32.totalorder %s783, %s786
      %p792 = scmp.eq.s32.totalorder %s90, 0
      %p793 = por %p791, %p792
      %p794 = scmp.ne.s32.totalorder %s783, %s786
      %p795 = scmp.eq.s32.totalorder %s95, 3
      %p796 = por %p794, %p795
      %p797 = scmp.ne.s32.totalorder %s786, %s787
      %p798 = scmp.eq.s32.totalorder %s95, 0
      %p799 = por %p797, %p798
      %p800 = scmp.ne.s32.totalorder %s786, %s787
      %p801 = scmp.eq.s32.totalorder %s96, 3
      %p802 = por %p800, %p801
      %p804 = scmp.ne.s32.totalorder %s787, %s803
      %p805 = scmp.eq.s32.totalorder %s96, 0
      %p806 = por %p804, %p805
      %s807 = ssub.s32 %s98, %s105
      %p808 = scmp.eq.s32.totalorder %s807, 0
      %s810 = sadd.s32 %s809, 1
      %s811 = scalar_select %p808, %s809, %s810
      %p814 = pneg %p808
      %p815 = scmp.eq.s32.totalorder %s90, 3
      %p816 = por %p814, %p815
      %p817 = scmp.ne.s32.totalorder %s809, %s812
      %p818 = scmp.eq.s32.totalorder %s90, 0
      %p819 = por %p817, %p818
      %p820 = scmp.ne.s32.totalorder %s809, %s812
      %p821 = scmp.eq.s32.totalorder %s95, 3
      %p822 = por %p820, %p821
      %p823 = scmp.ne.s32.totalorder %s812, %s813
      %p824 = scmp.eq.s32.totalorder %s95, 0
      %p825 = por %p823, %p824
      %p826 = scmp.ne.s32.totalorder %s812, %s813
      %p827 = scmp.eq.s32.totalorder %s96, 3
      %p828 = por %p826, %p827
      %p830 = scmp.ne.s32.totalorder %s813, %s829
      %p831 = scmp.eq.s32.totalorder %s96, 0
      %p832 = por %p830, %p831
      %s833 = ssub.s32 %s98, %s105
      %p834 = scmp.eq.s32.totalorder %s833, 0
      %s836 = sadd.s32 %s835, 1
      %s837 = scalar_select %p834, %s835, %s836
      %p840 = pneg %p834
      %p841 = scmp.eq.s32.totalorder %s90, 3
      %p842 = por %p840, %p841
      %p843 = scmp.ne.s32.totalorder %s835, %s838
      %p844 = scmp.eq.s32.totalorder %s90, 0
      %p845 = por %p843, %p844
      %p846 = scmp.ne.s32.totalorder %s835, %s838
      %p847 = scmp.eq.s32.totalorder %s95, 3
      %p848 = por %p846, %p847
      %p849 = scmp.ne.s32.totalorder %s838, %s839
      %p850 = scmp.eq.s32.totalorder %s95, 0
      %p851 = por %p849, %p850
      %p852 = scmp.ne.s32.totalorder %s838, %s839
      %p853 = scmp.eq.s32.totalorder %s96, 3
      %p854 = por %p852, %p853
      %p856 = scmp.ne.s32.totalorder %s839, %s855
      %p857 = scmp.eq.s32.totalorder %s96, 0
      %p858 = por %p856, %p857
      %s859 = ssub.s32 %s97, %s109
      %p860 = scmp.eq.s32.totalorder %s859, 0
      %s862 = sadd.s32 %s861, 1
      %s863 = scalar_select %p860, %s861, %s862
      %p866 = pneg %p860
      %p867 = scmp.eq.s32.totalorder %s90, 3
      %p868 = por %p866, %p867
      %p869 = scmp.ne.s32.totalorder %s861, %s864
      %p870 = scmp.eq.s32.totalorder %s90, 0
      %p871 = por %p869, %p870
      %p872 = scmp.ne.s32.totalorder %s861, %s864
      %p873 = scmp.eq.s32.totalorder %s95, 3
      %p874 = por %p872, %p873
      %p875 = scmp.ne.s32.totalorder %s864, %s865
      %p876 = scmp.eq.s32.totalorder %s95, 0
      %p877 = por %p875, %p876
      %p878 = scmp.ne.s32.totalorder %s864, %s865
      %p879 = scmp.eq.s32.totalorder %s96, 3
      %p880 = por %p878, %p879
      %p882 = scmp.ne.s32.totalorder %s865, %s881
      %p883 = scmp.eq.s32.totalorder %s96, 0
      %p884 = por %p882, %p883
      %p885 = scmp.le.s32.totalorder 1, %s90
      %p886 = scmp.lt.s32.totalorder %s90, 5
      %p887 = pnand %p885, %p886
      %p888 = pneg %p887
      // Predicated region
      $region9: #{tpu_custom_call.1} parent=5 // pred_check
        _
      $region10: #{tpu_custom_call.1} parent=5 // pred_check_branch
        %890 = sbr.rel (%p887) target = $region12
      $region11: #{tpu_custom_call.1} parent=5 // pred_region
        %s891 = ssub.s32 %s90, 1
        // Predicated region
        $region13: #{tpu_custom_call.1} parent=11 // pred_check
          %p892 = pneg %p175
        $region14: #{tpu_custom_call.1} parent=11 // pred_check_branch
          %894 = sbr.rel (%p892) target = $region16
        $region15: #{tpu_custom_call.1} parent=11 // pred_region
          %s896 = ssub.s32 128, 128
          %897 = vsyncadd [#allocation4], %s896
          %s899 = sshll.u32 [#allocation3], 4
          %s900 = int_to_ptr.vmem [resolvable:$true] %s899
          %902 = dma.hbm_to_vmem [thread:$0]  %s5, 128, %s900, [#allocation4]
        $region16: #{tpu_custom_call.1} parent=11 // pred_fallthru
          _
      $region12: #{tpu_custom_call.1} parent=5 // pred_fallthru
        _
      %p903 = scmp.lt.s32.totalorder %s90, 4
      // Predicated region
      $region17: #{tpu_custom_call.1} parent=5 // pred_check
        %p904 = pneg %p903
      $region18: #{tpu_custom_call.1} parent=5 // pred_check_branch
        %906 = sbr.rel (%p904) target = $region20
      $region19: #{tpu_custom_call.1} parent=5 // pred_region
        // Predicated region
        $region21: #{tpu_custom_call.1} parent=19 // pred_check
          %p907 = pneg %p122
        $region22: #{tpu_custom_call.1} parent=19 // pred_check_branch
          %909 = sbr.rel (%p907) target = $region24
        $region23: #{tpu_custom_call.1} parent=19 // pred_region
          %p910 = scmp.lt.s32.totalorder %s97, 1
          %s911 = scalar_select %p910, %s97, 1
          %s912 = smul.addr %s911, 2
          %s913 = smul.addr %s912, 8
          %s914 = scalar_lea.vmem %s1, %s913
        $region24: #{tpu_custom_call.1} parent=19 // pred_fallthru
          _
        // Predicated region
        $region25: #{tpu_custom_call.1} parent=19 // pred_check
          %p915 = pneg %p148
        $region26: #{tpu_custom_call.1} parent=19 // pred_check_branch
          %917 = sbr.rel (%p915) target = $region28
        $region27: #{tpu_custom_call.1} parent=19 // pred_region
          %p918 = scmp.lt.s32.totalorder %s97, 1
          %s919 = scalar_select %p918, %s97, 1
          %s920 = smul.addr %s919, 2
          %s921 = smul.addr %s920, 8
          %s922 = scalar_lea.vmem %s3, %s921
        $region28: #{tpu_custom_call.1} parent=19 // pred_fallthru
          _
        // Predicated region
        $region29: #{tpu_custom_call.1} parent=19 // pred_check
          %p923 = pneg %p195
        $region30: #{tpu_custom_call.1} parent=19 // pred_check_branch
          %925 = sbr.rel (%p923) target = $region32
        $region31: #{tpu_custom_call.1} parent=19 // pred_region
          %p926 = scmp.lt.s32.totalorder %s98, 1
          %s927 = scalar_select %p926, %s98, 1
          %s928 = smul.addr %s927, 4
          %s929 = smul.addr %s928, 4
          %s930 = scalar_lea.vmem %s7, %s929
        $region32: #{tpu_custom_call.1} parent=19 // pred_fallthru
          _
        // Predicated region
        $region33: #{tpu_custom_call.1} parent=19 // pred_check
          %p931 = pneg %p221
        $region34: #{tpu_custom_call.1} parent=19 // pred_check_branch
          %933 = sbr.rel (%p931) target = $region36
        $region35: #{tpu_custom_call.1} parent=19 // pred_region
          %s934 = sand.u32 %s90, 1
          %s935 = scalar_lea.sflag [#allocation7], %s934
          %s936 = sand.u32 %s211, 1
          %s937 = smul.addr %s936, 16
          %s938 = scalar_lea.vmem [#allocation6], %s937
          %s940 = ssub.s32 256, 256
          %941 = vsyncadd %s935, %s940
          %s942 = smul.addr %s98, 4
          %s943 = smul.addr %s942, 64
          %s944 = scalar_lea.hbm %s9, %s943
          %s945 = sshll.u32 %s938, 4
          %s946 = int_to_ptr.vmem [resolvable:$true] %s945
          %951 = dma.hbm_to_vmem [thread:$0]  %s944, 256, %s946, %s935, 64, 64, 4
        $region36: #{tpu_custom_call.1} parent=19 // pred_fallthru
          _
        // Predicated region
        $region37: #{tpu_custom_call.1} parent=19 // pred_check
          %p952 = pneg %p247
        $region38: #{tpu_custom_call.1} parent=19 // pred_check_branch
          %954 = sbr.rel (%p952) target = $region40
        $region39: #{tpu_custom_call.1} parent=19 // pred_region
          %s955 = sand.u32 %s90, 1
          %s956 = scalar_lea.sflag [#allocation7], %s955
          %s957 = sand.u32 %s237, 1
          %s958 = smul.addr %s957, 16
          %s959 = scalar_lea.vmem [#allocation8], %s958
          %s961 = ssub.s32 256, 256
          %962 = vsyncadd %s956, %s961
          %s963 = smul.addr %s98, 4
          %s964 = smul.addr %s963, 64
          %s965 = scalar_lea.hbm %s11, %s964
          %s966 = sshll.u32 %s959, 4
          %s967 = int_to_ptr.vmem [resolvable:$true] %s966
          %972 = dma.hbm_to_vmem [thread:$0]  %s965, 256, %s967, %s956, 64, 64, 4
        $region40: #{tpu_custom_call.1} parent=19 // pred_fallthru
          _
        // Predicated region
        $region41: #{tpu_custom_call.1} parent=19 // pred_check
          %p973 = pneg %p273
        $region42: #{tpu_custom_call.1} parent=19 // pred_check_branch
          %975 = sbr.rel (%p973) target = $region44
        $region43: #{tpu_custom_call.1} parent=19 // pred_region
          %s976 = sand.u32 %s90, 1
          %s977 = scalar_lea.sflag [#allocation10], %s976
          %s978 = sand.u32 %s263, 1
          %s979 = scalar_lea.vmem [#allocation9], %s978
          %s981 = ssub.s32 16, 16
          %982 = vsyncadd %s977, %s981
          %s983 = smul.addr %s98, 16
          %s984 = scalar_lea.hbm %s13, %s983
          %s986 = sshll.u32 %s979, 4
          %s987 = int_to_ptr.vmem [resolvable:$true] %s986
          %989 = dma.hbm_to_vmem [thread:$0]  %s984, 16, %s987, %s977
        $region44: #{tpu_custom_call.1} parent=19 // pred_fallthru
          _
        // Predicated region
        $region45: #{tpu_custom_call.1} parent=19 // pred_check
          %p990 = pneg %p299
        $region46: #{tpu_custom_call.1} parent=19 // pred_check_branch
          %992 = sbr.rel (%p990) target = $region48
        $region47: #{tpu_custom_call.1} parent=19 // pred_region
          %s993 = sand.u32 %s90, 1
          %s994 = scalar_lea.sflag [#allocation10], %s993
          %s995 = sand.u32 %s289, 1
          %s996 = scalar_lea.vmem [#allocation11], %s995
          %s998 = ssub.s32 16, 16
          %999 = vsyncadd %s994, %s998
          %s1000 = smul.addr %s98, 16
          %s1001 = scalar_lea.hbm %s15, %s1000
          %s1003 = sshll.u32 %s996, 4
          %s1004 = int_to_ptr.vmem [resolvable:$true] %s1003
          %1006 = dma.hbm_to_vmem [thread:$0]  %s1001, 16, %s1004, %s994
        $region48: #{tpu_custom_call.1} parent=19 // pred_fallthru
          _
        // Predicated region
        $region49: #{tpu_custom_call.1} parent=19 // pred_check
          %p1007 = pneg %p325
        $region50: #{tpu_custom_call.1} parent=19 // pred_check_branch
          %1009 = sbr.rel (%p1007) target = $region52
        $region51: #{tpu_custom_call.1} parent=19 // pred_region
          %s1010 = sand.u32 %s90, 1
          %s1011 = scalar_lea.sflag [#allocation13], %s1010
          %s1012 = sand.u32 %s315, 1
          %s1013 = scalar_lea.vmem [#allocation12], %s1012
          %s1015 = ssub.s32 16, 16
          %1016 = vsyncadd %s1011, %s1015
          %s1017 = smul.addr %s98, 16
          %s1018 = scalar_lea.hbm %s17, %s1017
          %s1020 = sshll.u32 %s1013, 4
          %s1021 = int_to_ptr.vmem [resolvable:$true] %s1020
          %1023 = dma.hbm_to_vmem [thread:$0]  %s1018, 16, %s1021, %s1011
        $region52: #{tpu_custom_call.1} parent=19 // pred_fallthru
          _
        // Predicated region
        $region53: #{tpu_custom_call.1} parent=19 // pred_check
          %p1024 = pneg %p351
        $region54: #{tpu_custom_call.1} parent=19 // pred_check_branch
          %1026 = sbr.rel (%p1024) target = $region56
        $region55: #{tpu_custom_call.1} parent=19 // pred_region
          %p1027 = scmp.lt.s32.totalorder %s98, 1
          %s1028 = scalar_select %p1027, %s98, 1
          %s1029 = smul.addr %s1028, 4
          %s1030 = smul.addr %s1029, 4
          %s1031 = scalar_lea.vmem %s19, %s1030
        $region56: #{tpu_custom_call.1} parent=19 // pred_fallthru
          _
        // Predicated region
        $region57: #{tpu_custom_call.1} parent=19 // pred_check
          %p1032 = pneg %p377
        $region58: #{tpu_custom_call.1} parent=19 // pred_check_branch
          %1034 = sbr.rel (%p1032) target = $region60
        $region59: #{tpu_custom_call.1} parent=19 // pred_region
          %s1035 = sand.u32 %s90, 1
          %s1036 = scalar_lea.sflag [#allocation13], %s1035
          %s1037 = sand.u32 %s367, 1
          %s1038 = scalar_lea.vmem [#allocation14], %s1037
          %s1040 = ssub.s32 16, 16
          %1041 = vsyncadd %s1036, %s1040
          %s1042 = smul.addr %s98, 16
          %s1043 = scalar_lea.hbm %s21, %s1042
          %s1045 = sshll.u32 %s1038, 4
          %s1046 = int_to_ptr.vmem [resolvable:$true] %s1045
          %1048 = dma.hbm_to_vmem [thread:$0]  %s1043, 16, %s1046, %s1036
        $region60: #{tpu_custom_call.1} parent=19 // pred_fallthru
          _
        // Predicated region
        $region61: #{tpu_custom_call.1} parent=19 // pred_check
          %p1049 = pneg %p403
        $region62: #{tpu_custom_call.1} parent=19 // pred_check_branch
          %1051 = sbr.rel (%p1049) target = $region64
        $region63: #{tpu_custom_call.1} parent=19 // pred_region
          %s1052 = sand.u32 %s90, 1
          %s1053 = scalar_lea.sflag [#allocation16], %s1052
          %s1054 = sand.u32 %s393, 1
          %s1055 = smul.addr %s1054, 16
          %s1056 = scalar_lea.vmem [#allocation15], %s1055
          %s1058 = ssub.s32 256, 256
          %1059 = vsyncadd %s1053, %s1058
          %s1060 = smul.addr %s98, 4
          %s1061 = smul.addr %s1060, 64
          %s1062 = scalar_lea.hbm %s23, %s1061
          %s1063 = sshll.u32 %s1056, 4
          %s1064 = int_to_ptr.vmem [resolvable:$true] %s1063
          %1069 = dma.hbm_to_vmem [thread:$0]  %s1062, 256, %s1064, %s1053, 64, 64, 4
        $region64: #{tpu_custom_call.1} parent=19 // pred_fallthru
          _
        // Predicated region
        $region65: #{tpu_custom_call.1} parent=19 // pred_check
          %p1070 = pneg %p429
        $region66: #{tpu_custom_call.1} parent=19 // pred_check_branch
          %1072 = sbr.rel (%p1070) target = $region68
        $region67: #{tpu_custom_call.1} parent=19 // pred_region
          %s1073 = sand.u32 %s90, 1
          %s1074 = scalar_lea.sflag [#allocation16], %s1073
          %s1075 = sand.u32 %s419, 1
          %s1076 = smul.addr %s1075, 16
          %s1077 = scalar_lea.vmem [#allocation17], %s1076
          %s1079 = ssub.s32 256, 256
          %1080 = vsyncadd %s1074, %s1079
          %s1081 = smul.addr %s98, 4
          %s1082 = smul.addr %s1081, 64
          %s1083 = scalar_lea.hbm %s25, %s1082
          %s1084 = sshll.u32 %s1077, 4
          %s1085 = int_to_ptr.vmem [resolvable:$true] %s1084
          %1090 = dma.hbm_to_vmem [thread:$0]  %s1083, 256, %s1085, %s1074, 64, 64, 4
        $region68: #{tpu_custom_call.1} parent=19 // pred_fallthru
          _
        // Predicated region
        $region69: #{tpu_custom_call.1} parent=19 // pred_check
          %p1091 = pneg %p455
        $region70: #{tpu_custom_call.1} parent=19 // pred_check_branch
          %1093 = sbr.rel (%p1091) target = $region72
        $region71: #{tpu_custom_call.1} parent=19 // pred_region
          %s1094 = sand.u32 %s90, 1
          %s1095 = scalar_lea.sflag [#allocation19], %s1094
          %s1096 = sand.u32 %s445, 1
          %s1097 = smul.addr %s1096, 16
          %s1098 = scalar_lea.vmem [#allocation18], %s1097
          %s1100 = ssub.s32 256, 256
          %1101 = vsyncadd %s1095, %s1100
          %s1102 = smul.addr %s98, 4
          %s1103 = smul.addr %s1102, 64
          %s1104 = scalar_lea.hbm %s27, %s1103
          %s1105 = sshll.u32 %s1098, 4
          %s1106 = int_to_ptr.vmem [resolvable:$true] %s1105
          %1111 = dma.hbm_to_vmem [thread:$0]  %s1104, 256, %s1106, %s1095, 64, 64, 4
        $region72: #{tpu_custom_call.1} parent=19 // pred_fallthru
          _
        // Predicated region
        $region73: #{tpu_custom_call.1} parent=19 // pred_check
          %p1112 = pneg %p481
        $region74: #{tpu_custom_call.1} parent=19 // pred_check_branch
          %1114 = sbr.rel (%p1112) target = $region76
        $region75: #{tpu_custom_call.1} parent=19 // pred_region
          %s1115 = sand.u32 %s90, 1
          %s1116 = scalar_lea.sflag [#allocation19], %s1115
          %s1117 = sand.u32 %s471, 1
          %s1118 = scalar_lea.vmem [#allocation20], %s1117
          %s1120 = ssub.s32 16, 16
          %1121 = vsyncadd %s1116, %s1120
          %s1122 = smul.addr %s98, 16
          %s1123 = scalar_lea.hbm %s29, %s1122
          %s1125 = sshll.u32 %s1118, 4
          %s1126 = int_to_ptr.vmem [resolvable:$true] %s1125
          %1128 = dma.hbm_to_vmem [thread:$0]  %s1123, 16, %s1126, %s1116
        $region76: #{tpu_custom_call.1} parent=19 // pred_fallthru
          _
        // Predicated region
        $region77: #{tpu_custom_call.1} parent=19 // pred_check
          %p1129 = pneg %p507
        $region78: #{tpu_custom_call.1} parent=19 // pred_check_branch
          %1131 = sbr.rel (%p1129) target = $region80
        $region79: #{tpu_custom_call.1} parent=19 // pred_region
          %s1132 = sand.u32 %s90, 1
          %s1133 = scalar_lea.sflag [#allocation22], %s1132
          %s1134 = sand.u32 %s497, 1
          %s1135 = scalar_lea.vmem [#allocation21], %s1134
          %s1137 = ssub.s32 16, 16
          %1138 = vsyncadd %s1133, %s1137
          %s1139 = smul.addr %s98, 16
          %s1140 = scalar_lea.hbm %s31, %s1139
          %s1142 = sshll.u32 %s1135, 4
          %s1143 = int_to_ptr.vmem [resolvable:$true] %s1142
          %1145 = dma.hbm_to_vmem [thread:$0]  %s1140, 16, %s1143, %s1133
        $region80: #{tpu_custom_call.1} parent=19 // pred_fallthru
          _
        // Predicated region
        $region81: #{tpu_custom_call.1} parent=19 // pred_check
          %p1146 = pneg %p533
        $region82: #{tpu_custom_call.1} parent=19 // pred_check_branch
          %1148 = sbr.rel (%p1146) target = $region84
        $region83: #{tpu_custom_call.1} parent=19 // pred_region
          %s1149 = sand.u32 %s90, 1
          %s1150 = scalar_lea.sflag [#allocation22], %s1149
          %s1151 = sand.u32 %s523, 1
          %s1152 = scalar_lea.vmem [#allocation23], %s1151
          %s1154 = ssub.s32 16, 16
          %1155 = vsyncadd %s1150, %s1154
          %s1156 = smul.addr %s98, 16
          %s1157 = scalar_lea.hbm %s33, %s1156
          %s1159 = sshll.u32 %s1152, 4
          %s1160 = int_to_ptr.vmem [resolvable:$true] %s1159
          %1162 = dma.hbm_to_vmem [thread:$0]  %s1157, 16, %s1160, %s1150
        $region84: #{tpu_custom_call.1} parent=19 // pred_fallthru
          _
        // Predicated region
        $region85: #{tpu_custom_call.1} parent=19 // pred_check
          %p1163 = pneg %p559
        $region86: #{tpu_custom_call.1} parent=19 // pred_check_branch
          %1165 = sbr.rel (%p1163) target = $region88
        $region87: #{tpu_custom_call.1} parent=19 // pred_region
          %s1166 = sand.u32 %s90, 1
          %s1167 = scalar_lea.sflag [#allocation25], %s1166
          %s1168 = sand.u32 %s549, 1
          %s1169 = smul.addr %s1168, 16
          %s1170 = scalar_lea.vmem [#allocation24], %s1169
          %s1172 = ssub.s32 256, 256
          %1173 = vsyncadd %s1167, %s1172
          %s1174 = smul.addr %s98, 4
          %s1175 = smul.addr %s1174, 64
          %s1176 = scalar_lea.hbm %s35, %s1175
          %s1177 = sshll.u32 %s1170, 4
          %s1178 = int_to_ptr.vmem [resolvable:$true] %s1177
          %1183 = dma.hbm_to_vmem [thread:$0]  %s1176, 256, %s1178, %s1167, 64, 64, 4
        $region88: #{tpu_custom_call.1} parent=19 // pred_fallthru
          _
        // Predicated region
        $region89: #{tpu_custom_call.1} parent=19 // pred_check
          %p1184 = pneg %p585
        $region90: #{tpu_custom_call.1} parent=19 // pred_check_branch
          %1186 = sbr.rel (%p1184) target = $region92
        $region91: #{tpu_custom_call.1} parent=19 // pred_region
          %p1187 = scmp.lt.s32.totalorder %s98, 1
          %s1188 = scalar_select %p1187, %s98, 1
          %s1189 = scalar_lea.vmem %s37, %s1188
        $region92: #{tpu_custom_call.1} parent=19 // pred_fallthru
          _
        // Predicated region
        $region93: #{tpu_custom_call.1} parent=19 // pred_check
          %p1190 = pneg %p611
        $region94: #{tpu_custom_call.1} parent=19 // pred_check_branch
          %1192 = sbr.rel (%p1190) target = $region96
        $region95: #{tpu_custom_call.1} parent=19 // pred_region
          %p1193 = scmp.lt.s32.totalorder %s98, 1
          %s1194 = scalar_select %p1193, %s98, 1
          %s1195 = scalar_lea.vmem %s39, %s1194
        $region96: #{tpu_custom_call.1} parent=19 // pred_fallthru
          _
        // Predicated region
        $region97: #{tpu_custom_call.1} parent=19 // pred_check
          %p1196 = pneg %p637
        $region98: #{tpu_custom_call.1} parent=19 // pred_check_branch
          %1198 = sbr.rel (%p1196) target = $region100
        $region99: #{tpu_custom_call.1} parent=19 // pred_region
          %p1199 = scmp.lt.s32.totalorder %s98, 1
          %s1200 = scalar_select %p1199, %s98, 1
          %s1201 = scalar_lea.vmem %s41, %s1200
        $region100: #{tpu_custom_call.1} parent=19 // pred_fallthru
          _
        // Predicated region
        $region101: #{tpu_custom_call.1} parent=19 // pred_check
          %p1202 = pneg %p663
        $region102: #{tpu_custom_call.1} parent=19 // pred_check_branch
          %1204 = sbr.rel (%p1202) target = $region104
        $region103: #{tpu_custom_call.1} parent=19 // pred_region
          %p1205 = scmp.lt.s32.totalorder %s98, 1
          %s1206 = scalar_select %p1205, %s98, 1
          %s1207 = scalar_lea.vmem %s43, %s1206
        $region104: #{tpu_custom_call.1} parent=19 // pred_fallthru
          _
        // Predicated region
        $region105: #{tpu_custom_call.1} parent=19 // pred_check
          %p1208 = pneg %p689
        $region106: #{tpu_custom_call.1} parent=19 // pred_check_branch
          %1210 = sbr.rel (%p1208) target = $region108
        $region107: #{tpu_custom_call.1} parent=19 // pred_region
          %p1211 = scmp.lt.s32.totalorder %s98, 1
          %s1212 = scalar_select %p1211, %s98, 1
          %s1213 = scalar_lea.vmem %s45, %s1212
        $region108: #{tpu_custom_call.1} parent=19 // pred_fallthru
          _
        // Predicated region
        $region109: #{tpu_custom_call.1} parent=19 // pred_check
          %p1214 = pneg %p715
        $region110: #{tpu_custom_call.1} parent=19 // pred_check_branch
          %1216 = sbr.rel (%p1214) target = $region112
        $region111: #{tpu_custom_call.1} parent=19 // pred_region
          %p1217 = scmp.lt.s32.totalorder %s98, 1
          %s1218 = scalar_select %p1217, %s98, 1
          %s1219 = scalar_lea.vmem %s47, %s1218
        $region112: #{tpu_custom_call.1} parent=19 // pred_fallthru
          _
        // Predicated region
        $region113: #{tpu_custom_call.1} parent=19 // pred_check
          %p1220 = pneg %p741
        $region114: #{tpu_custom_call.1} parent=19 // pred_check_branch
          %1222 = sbr.rel (%p1220) target = $region116
        $region115: #{tpu_custom_call.1} parent=19 // pred_region
          %p1223 = scmp.lt.s32.totalorder %s98, 1
          %s1224 = scalar_select %p1223, %s98, 1
          %s1225 = scalar_lea.vmem %s49, %s1224
        $region116: #{tpu_custom_call.1} parent=19 // pred_fallthru
          _
        // Predicated region
        $region117: #{tpu_custom_call.1} parent=19 // pred_check
          %p1226 = pneg %p767
        $region118: #{tpu_custom_call.1} parent=19 // pred_check_branch
          %1228 = sbr.rel (%p1226) target = $region120
        $region119: #{tpu_custom_call.1} parent=19 // pred_region
          %s1229 = sand.u32 %s90, 1
          %s1230 = scalar_lea.sflag [#allocation25], %s1229
          %s1231 = sand.u32 %s757, 1
          %s1232 = smul.addr %s1231, 16
          %s1233 = scalar_lea.vmem [#allocation26], %s1232
          %s1235 = ssub.s32 256, 256
          %1236 = vsyncadd %s1230, %s1235
          %s1237 = smul.addr %s98, 4
          %s1238 = smul.addr %s1237, 64
          %s1239 = scalar_lea.hbm %s51, %s1238
          %s1240 = sshll.u32 %s1233, 4
          %s1241 = int_to_ptr.vmem [resolvable:$true] %s1240
          %1246 = dma.hbm_to_vmem [thread:$0]  %s1239, 256, %s1241, %s1230, 64, 64, 4
        $region120: #{tpu_custom_call.1} parent=19 // pred_fallthru
          _
        // Predicated region
        $region121: #{tpu_custom_call.1} parent=19 // pred_check
          %p1247 = pneg %p793
        $region122: #{tpu_custom_call.1} parent=19 // pred_check_branch
          %1249 = sbr.rel (%p1247) target = $region124
        $region123: #{tpu_custom_call.1} parent=19 // pred_region
          %p1250 = scmp.lt.s32.totalorder %s98, 1
          %s1251 = scalar_select %p1250, %s98, 1
          %s1252 = scalar_lea.vmem %s53, %s1251
        $region124: #{tpu_custom_call.1} parent=19 // pred_fallthru
          _
        // Predicated region
        $region125: #{tpu_custom_call.1} parent=19 // pred_check
          %p1253 = pneg %p819
        $region126: #{tpu_custom_call.1} parent=19 // pred_check_branch
          %1255 = sbr.rel (%p1253) target = $region128
        $region127: #{tpu_custom_call.1} parent=19 // pred_region
          %p1256 = scmp.lt.s32.totalorder %s98, 1
          %s1257 = scalar_select %p1256, %s98, 1
          %s1258 = smul.addr %s1257, 8
          %s1259 = smul.addr %s1258, 4
          %s1260 = scalar_lea.vmem %s55, %s1259
        $region128: #{tpu_custom_call.1} parent=19 // pred_fallthru
          _
        // Predicated region
        $region129: #{tpu_custom_call.1} parent=19 // pred_check
          %p1261 = pneg %p845
        $region130: #{tpu_custom_call.1} parent=19 // pred_check_branch
          %1263 = sbr.rel (%p1261) target = $region132
        $region131: #{tpu_custom_call.1} parent=19 // pred_region
          %p1264 = scmp.lt.s32.totalorder %s98, 1
          %s1265 = scalar_select %p1264, %s98, 1
          %s1266 = scalar_lea.vmem %s57, %s1265
        $region132: #{tpu_custom_call.1} parent=19 // pred_fallthru
          _
      $region20: #{tpu_custom_call.1} parent=5 // pred_fallthru
        _
      %p1267 = scmp.le.s32.totalorder 1, %s90
      %p1268 = scmp.lt.s32.totalorder %s90, 5
      %p1269 = pnand %p1267, %p1268
      %p1270 = pneg %p1269
      // Predicated region
      $region133: #{tpu_custom_call.1} parent=5 // pred_check
        _
      $region134: #{tpu_custom_call.1} parent=5 // pred_check_branch
        %1272 = sbr.rel (%p1269) target = $region136
      $region135: #{tpu_custom_call.1} parent=5 // pred_region
        %s1273 = ssub.s32 %s90, 1
        // Predicated region
        $region137: #{tpu_custom_call.1} parent=135 // pred_check
          %p1274 = pneg %p175
        $region138: #{tpu_custom_call.1} parent=135 // pred_check_branch
          %1276 = sbr.rel (%p1274) target = $region140
        $region139: #{tpu_custom_call.1} parent=135 // pred_region
          %1277 = dma.done [#allocation4], 128
        $region140: #{tpu_custom_call.1} parent=135 // pred_fallthru
          _
        %s1278 = sand.u32 %s95, 1
        %s1279 = scalar_lea.sflag [#allocation7], %s1278
        %s1280 = sand.u32 %s214, 1
        %s1281 = smul.addr %s1280, 16
        %s1282 = scalar_lea.vmem [#allocation6], %s1281
        // Predicated region
        $region141: #{tpu_custom_call.1} parent=135 // pred_check
          %p1283 = pneg %p227
        $region142: #{tpu_custom_call.1} parent=135 // pred_check_branch
          %1285 = sbr.rel (%p1283) target = $region144
        $region143: #{tpu_custom_call.1} parent=135 // pred_region
          %1286 = dma.done %s1279, 256
        $region144: #{tpu_custom_call.1} parent=135 // pred_fallthru
          _
        %s1287 = sand.u32 %s95, 1
        %s1288 = scalar_lea.sflag [#allocation7], %s1287
        %s1289 = sand.u32 %s240, 1
        %s1290 = smul.addr %s1289, 16
        %s1291 = scalar_lea.vmem [#allocation8], %s1290
        // Predicated region
        $region145: #{tpu_custom_call.1} parent=135 // pred_check
          %p1292 = pneg %p253
        $region146: #{tpu_custom_call.1} parent=135 // pred_check_branch
          %1294 = sbr.rel (%p1292) target = $region148
        $region147: #{tpu_custom_call.1} parent=135 // pred_region
          %1295 = dma.done %s1288, 256
        $region148: #{tpu_custom_call.1} parent=135 // pred_fallthru
          _
        %s1296 = sand.u32 %s95, 1
        %s1297 = scalar_lea.sflag [#allocation10], %s1296
        %s1298 = sand.u32 %s266, 1
        %s1299 = scalar_lea.vmem [#allocation9], %s1298
        // Predicated region
        $region149: #{tpu_custom_call.1} parent=135 // pred_check
          %p1300 = pneg %p279
        $region150: #{tpu_custom_call.1} parent=135 // pred_check_branch
          %1302 = sbr.rel (%p1300) target = $region152
        $region151: #{tpu_custom_call.1} parent=135 // pred_region
          %1303 = dma.done %s1297, 16
        $region152: #{tpu_custom_call.1} parent=135 // pred_fallthru
          _
        %s1304 = sand.u32 %s95, 1
        %s1305 = scalar_lea.sflag [#allocation10], %s1304
        %s1306 = sand.u32 %s292, 1
        %s1307 = scalar_lea.vmem [#allocation11], %s1306
        // Predicated region
        $region153: #{tpu_custom_call.1} parent=135 // pred_check
          %p1308 = pneg %p305
        $region154: #{tpu_custom_call.1} parent=135 // pred_check_branch
          %1310 = sbr.rel (%p1308) target = $region156
        $region155: #{tpu_custom_call.1} parent=135 // pred_region
          %1311 = dma.done %s1305, 16
        $region156: #{tpu_custom_call.1} parent=135 // pred_fallthru
          _
        %s1312 = sand.u32 %s95, 1
        %s1313 = scalar_lea.sflag [#allocation13], %s1312
        %s1314 = sand.u32 %s318, 1
        %s1315 = scalar_lea.vmem [#allocation12], %s1314
        // Predicated region
        $region157: #{tpu_custom_call.1} parent=135 // pred_check
          %p1316 = pneg %p331
        $region158: #{tpu_custom_call.1} parent=135 // pred_check_branch
          %1318 = sbr.rel (%p1316) target = $region160
        $region159: #{tpu_custom_call.1} parent=135 // pred_region
          %1319 = dma.done %s1313, 16
        $region160: #{tpu_custom_call.1} parent=135 // pred_fallthru
          _
        %s1320 = sand.u32 %s95, 1
        %s1321 = scalar_lea.sflag [#allocation13], %s1320
        %s1322 = sand.u32 %s370, 1
        %s1323 = scalar_lea.vmem [#allocation14], %s1322
        // Predicated region
        $region161: #{tpu_custom_call.1} parent=135 // pred_check
          %p1324 = pneg %p383
        $region162: #{tpu_custom_call.1} parent=135 // pred_check_branch
          %1326 = sbr.rel (%p1324) target = $region164
        $region163: #{tpu_custom_call.1} parent=135 // pred_region
          %1327 = dma.done %s1321, 16
        $region164: #{tpu_custom_call.1} parent=135 // pred_fallthru
          _
        %s1328 = sand.u32 %s95, 1
        %s1329 = scalar_lea.sflag [#allocation16], %s1328
        %s1330 = sand.u32 %s396, 1
        %s1331 = smul.addr %s1330, 16
        %s1332 = scalar_lea.vmem [#allocation15], %s1331
        // Predicated region
        $region165: #{tpu_custom_call.1} parent=135 // pred_check
          %p1333 = pneg %p409
        $region166: #{tpu_custom_call.1} parent=135 // pred_check_branch
          %1335 = sbr.rel (%p1333) target = $region168
        $region167: #{tpu_custom_call.1} parent=135 // pred_region
          %1336 = dma.done %s1329, 256
        $region168: #{tpu_custom_call.1} parent=135 // pred_fallthru
          _
        %s1337 = sand.u32 %s95, 1
        %s1338 = scalar_lea.sflag [#allocation16], %s1337
        %s1339 = sand.u32 %s422, 1
        %s1340 = smul.addr %s1339, 16
        %s1341 = scalar_lea.vmem [#allocation17], %s1340
        // Predicated region
        $region169: #{tpu_custom_call.1} parent=135 // pred_check
          %p1342 = pneg %p435
        $region170: #{tpu_custom_call.1} parent=135 // pred_check_branch
          %1344 = sbr.rel (%p1342) target = $region172
        $region171: #{tpu_custom_call.1} parent=135 // pred_region
          %1345 = dma.done %s1338, 256
        $region172: #{tpu_custom_call.1} parent=135 // pred_fallthru
          _
        %s1346 = sand.u32 %s95, 1
        %s1347 = scalar_lea.sflag [#allocation19], %s1346
        %s1348 = sand.u32 %s448, 1
        %s1349 = smul.addr %s1348, 16
        %s1350 = scalar_lea.vmem [#allocation18], %s1349
        // Predicated region
        $region173: #{tpu_custom_call.1} parent=135 // pred_check
          %p1351 = pneg %p461
        $region174: #{tpu_custom_call.1} parent=135 // pred_check_branch
          %1353 = sbr.rel (%p1351) target = $region176
        $region175: #{tpu_custom_call.1} parent=135 // pred_region
          %1354 = dma.done %s1347, 256
        $region176: #{tpu_custom_call.1} parent=135 // pred_fallthru
          _
        %s1355 = sand.u32 %s95, 1
        %s1356 = scalar_lea.sflag [#allocation19], %s1355
        %s1357 = sand.u32 %s474, 1
        %s1358 = scalar_lea.vmem [#allocation20], %s1357
        // Predicated region
        $region177: #{tpu_custom_call.1} parent=135 // pred_check
          %p1359 = pneg %p487
        $region178: #{tpu_custom_call.1} parent=135 // pred_check_branch
          %1361 = sbr.rel (%p1359) target = $region180
        $region179: #{tpu_custom_call.1} parent=135 // pred_region
          %1362 = dma.done %s1356, 16
        $region180: #{tpu_custom_call.1} parent=135 // pred_fallthru
          _
        %s1363 = sand.u32 %s95, 1
        %s1364 = scalar_lea.sflag [#allocation22], %s1363
        %s1365 = sand.u32 %s500, 1
        %s1366 = scalar_lea.vmem [#allocation21], %s1365
        // Predicated region
        $region181: #{tpu_custom_call.1} parent=135 // pred_check
          %p1367 = pneg %p513
        $region182: #{tpu_custom_call.1} parent=135 // pred_check_branch
          %1369 = sbr.rel (%p1367) target = $region184
        $region183: #{tpu_custom_call.1} parent=135 // pred_region
          %1370 = dma.done %s1364, 16
        $region184: #{tpu_custom_call.1} parent=135 // pred_fallthru
          _
        %s1371 = sand.u32 %s95, 1
        %s1372 = scalar_lea.sflag [#allocation22], %s1371
        %s1373 = sand.u32 %s526, 1
        %s1374 = scalar_lea.vmem [#allocation23], %s1373
        // Predicated region
        $region185: #{tpu_custom_call.1} parent=135 // pred_check
          %p1375 = pneg %p539
        $region186: #{tpu_custom_call.1} parent=135 // pred_check_branch
          %1377 = sbr.rel (%p1375) target = $region188
        $region187: #{tpu_custom_call.1} parent=135 // pred_region
          %1378 = dma.done %s1372, 16
        $region188: #{tpu_custom_call.1} parent=135 // pred_fallthru
          _
        %s1379 = sand.u32 %s95, 1
        %s1380 = scalar_lea.sflag [#allocation25], %s1379
        %s1381 = sand.u32 %s552, 1
        %s1382 = smul.addr %s1381, 16
        %s1383 = scalar_lea.vmem [#allocation24], %s1382
        // Predicated region
        $region189: #{tpu_custom_call.1} parent=135 // pred_check
          %p1384 = pneg %p565
        $region190: #{tpu_custom_call.1} parent=135 // pred_check_branch
          %1386 = sbr.rel (%p1384) target = $region192
        $region191: #{tpu_custom_call.1} parent=135 // pred_region
          %1387 = dma.done %s1380, 256
        $region192: #{tpu_custom_call.1} parent=135 // pred_fallthru
          _
        %s1388 = sand.u32 %s95, 1
        %s1389 = scalar_lea.sflag [#allocation25], %s1388
        %s1390 = sand.u32 %s760, 1
        %s1391 = smul.addr %s1390, 16
        %s1392 = scalar_lea.vmem [#allocation26], %s1391
        // Predicated region
        $region193: #{tpu_custom_call.1} parent=135 // pred_check
          %p1393 = pneg %p773
        $region194: #{tpu_custom_call.1} parent=135 // pred_check_branch
          %1395 = sbr.rel (%p1393) target = $region196
        $region195: #{tpu_custom_call.1} parent=135 // pred_region
          %1396 = dma.done %s1389, 256
        $region196: #{tpu_custom_call.1} parent=135 // pred_fallthru
          _
        %p1397 = scmp.lt.s32.totalorder %s99, 1
        %s1398 = scalar_select %p1397, %s99, 1
        %s1399 = smul.addr %s1398, 2
        %s1400 = smul.addr %s1399, 8
        %s1401 = scalar_lea.vmem %s1, %s1400
        %p1402 = pneg %p128
        %p1403 = pneg %p125
        %p1404 = scmp.lt.s32.totalorder %s99, 1
        %s1405 = scalar_select %p1404, %s99, 1
        %s1406 = smul.addr %s1405, 2
        %s1407 = smul.addr %s1406, 8
        %s1408 = scalar_lea.vmem %s3, %s1407
        %p1409 = pneg %p154
        %p1410 = pneg %p151
        %p1411 = pneg %p175
        %p1412 = pneg %p172
        %p1413 = scmp.lt.s32.totalorder %s100, 1
        %s1414 = scalar_select %p1413, %s100, 1
        %s1415 = smul.addr %s1414, 4
        %s1416 = smul.addr %s1415, 4
        %s1417 = scalar_lea.vmem %s7, %s1416
        %p1418 = pneg %p201
        %p1419 = pneg %p198
        %s1420 = sand.u32 %s95, 1
        %s1421 = scalar_lea.sflag [#allocation7], %s1420
        %s1422 = sand.u32 %s214, 1
        %s1423 = smul.addr %s1422, 16
        %s1424 = scalar_lea.vmem [#allocation6], %s1423
        %p1425 = pneg %p227
        %p1426 = pneg %p224
        %s1427 = sand.u32 %s95, 1
        %s1428 = scalar_lea.sflag [#allocation7], %s1427
        %s1429 = sand.u32 %s240, 1
        %s1430 = smul.addr %s1429, 16
        %s1431 = scalar_lea.vmem [#allocation8], %s1430
        %p1432 = pneg %p253
        %p1433 = pneg %p250
        %s1434 = sand.u32 %s95, 1
        %s1435 = scalar_lea.sflag [#allocation10], %s1434
        %s1436 = sand.u32 %s266, 1
        %s1437 = scalar_lea.vmem [#allocation9], %s1436
        %p1438 = pneg %p279
        %p1439 = pneg %p276
        %s1440 = sand.u32 %s95, 1
        %s1441 = scalar_lea.sflag [#allocation10], %s1440
        %s1442 = sand.u32 %s292, 1
        %s1443 = scalar_lea.vmem [#allocation11], %s1442
        %p1444 = pneg %p305
        %p1445 = pneg %p302
        %s1446 = sand.u32 %s95, 1
        %s1447 = scalar_lea.sflag [#allocation13], %s1446
        %s1448 = sand.u32 %s318, 1
        %s1449 = scalar_lea.vmem [#allocation12], %s1448
        %p1450 = pneg %p331
        %p1451 = pneg %p328
        %p1452 = scmp.lt.s32.totalorder %s100, 1
        %s1453 = scalar_select %p1452, %s100, 1
        %s1454 = smul.addr %s1453, 4
        %s1455 = smul.addr %s1454, 4
        %s1456 = scalar_lea.vmem %s19, %s1455
        %p1457 = pneg %p357
        %p1458 = pneg %p354
        %s1459 = sand.u32 %s95, 1
        %s1460 = scalar_lea.sflag [#allocation13], %s1459
        %s1461 = sand.u32 %s370, 1
        %s1462 = scalar_lea.vmem [#allocation14], %s1461
        %p1463 = pneg %p383
        %p1464 = pneg %p380
        %s1465 = sand.u32 %s95, 1
        %s1466 = scalar_lea.sflag [#allocation16], %s1465
        %s1467 = sand.u32 %s396, 1
        %s1468 = smul.addr %s1467, 16
        %s1469 = scalar_lea.vmem [#allocation15], %s1468
        %p1470 = pneg %p409
        %p1471 = pneg %p406
        %s1472 = sand.u32 %s95, 1
        %s1473 = scalar_lea.sflag [#allocation16], %s1472
        %s1474 = sand.u32 %s422, 1
        %s1475 = smul.addr %s1474, 16
        %s1476 = scalar_lea.vmem [#allocation17], %s1475
        %p1477 = pneg %p435
        %p1478 = pneg %p432
        %s1479 = sand.u32 %s95, 1
        %s1480 = scalar_lea.sflag [#allocation19], %s1479
        %s1481 = sand.u32 %s448, 1
        %s1482 = smul.addr %s1481, 16
        %s1483 = scalar_lea.vmem [#allocation18], %s1482
        %p1484 = pneg %p461
        %p1485 = pneg %p458
        %s1486 = sand.u32 %s95, 1
        %s1487 = scalar_lea.sflag [#allocation19], %s1486
        %s1488 = sand.u32 %s474, 1
        %s1489 = scalar_lea.vmem [#allocation20], %s1488
        %p1490 = pneg %p487
        %p1491 = pneg %p484
        %s1492 = sand.u32 %s95, 1
        %s1493 = scalar_lea.sflag [#allocation22], %s1492
        %s1494 = sand.u32 %s500, 1
        %s1495 = scalar_lea.vmem [#allocation21], %s1494
        %p1496 = pneg %p513
        %p1497 = pneg %p510
        %s1498 = sand.u32 %s95, 1
        %s1499 = scalar_lea.sflag [#allocation22], %s1498
        %s1500 = sand.u32 %s526, 1
        %s1501 = scalar_lea.vmem [#allocation23], %s1500
        %p1502 = pneg %p539
        %p1503 = pneg %p536
        %s1504 = sand.u32 %s95, 1
        %s1505 = scalar_lea.sflag [#allocation25], %s1504
        %s1506 = sand.u32 %s552, 1
        %s1507 = smul.addr %s1506, 16
        %s1508 = scalar_lea.vmem [#allocation24], %s1507
        %p1509 = pneg %p565
        %p1510 = pneg %p562
        %p1511 = scmp.lt.s32.totalorder %s100, 1
        %s1512 = scalar_select %p1511, %s100, 1
        %s1513 = scalar_lea.vmem %s37, %s1512
        %p1514 = pneg %p591
        %p1515 = pneg %p588
        %p1516 = scmp.lt.s32.totalorder %s100, 1
        %s1517 = scalar_select %p1516, %s100, 1
        %s1518 = scalar_lea.vmem %s39, %s1517
        %p1519 = pneg %p617
        %p1520 = pneg %p614
        %p1521 = scmp.lt.s32.totalorder %s100, 1
        %s1522 = scalar_select %p1521, %s100, 1
        %s1523 = scalar_lea.vmem %s41, %s1522
        %p1524 = pneg %p643
        %p1525 = pneg %p640
        %p1526 = scmp.lt.s32.totalorder %s100, 1
        %s1527 = scalar_select %p1526, %s100, 1
        %s1528 = scalar_lea.vmem %s43, %s1527
        %p1529 = pneg %p669
        %p1530 = pneg %p666
        %p1531 = scmp.lt.s32.totalorder %s100, 1
        %s1532 = scalar_select %p1531, %s100, 1
        %s1533 = scalar_lea.vmem %s45, %s1532
        %p1534 = pneg %p695
        %p1535 = pneg %p692
        %p1536 = scmp.lt.s32.totalorder %s100, 1
        %s1537 = scalar_select %p1536, %s100, 1
        %s1538 = scalar_lea.vmem %s47, %s1537
        %p1539 = pneg %p721
        %p1540 = pneg %p718
        %p1541 = scmp.lt.s32.totalorder %s100, 1
        %s1542 = scalar_select %p1541, %s100, 1
        %s1543 = scalar_lea.vmem %s49, %s1542
        %p1544 = pneg %p747
        %p1545 = pneg %p744
        %s1546 = sand.u32 %s95, 1
        %s1547 = scalar_lea.sflag [#allocation25], %s1546
        %s1548 = sand.u32 %s760, 1
        %s1549 = smul.addr %s1548, 16
        %s1550 = scalar_lea.vmem [#allocation26], %s1549
        %p1551 = pneg %p773
        %p1552 = pneg %p770
        %p1553 = scmp.lt.s32.totalorder %s100, 1
        %s1554 = scalar_select %p1553, %s100, 1
        %s1555 = scalar_lea.vmem %s53, %s1554
        %p1556 = pneg %p799
        %p1557 = pneg %p796
        %p1558 = scmp.lt.s32.totalorder %s100, 1
        %s1559 = scalar_select %p1558, %s100, 1
        %s1560 = smul.addr %s1559, 8
        %s1561 = smul.addr %s1560, 4
        %s1562 = scalar_lea.vmem %s55, %s1561
        %p1563 = pneg %p825
        %p1564 = pneg %p822
        %p1565 = scmp.lt.s32.totalorder %s100, 1
        %s1566 = scalar_select %p1565, %s100, 1
        %s1567 = scalar_lea.vmem %s57, %s1566
        %p1568 = pneg %p851
        %p1569 = pneg %p848
        %p1570 = pneg %p877
        %p1571 = pneg %p874
        %s1572 = sand.u32 %s864, 1
        %s1573 = scalar_lea.sflag [#allocation5], %s1572
        %s1574 = sand.u32 %s864, 1
        %s1575 = smul.addr %s1574, 8
        %s1576 = scalar_lea.vmem [#allocation27], %s1575
        %p1577 = scmp.lt.s32.totalorder %s99, 1
        %s1578 = scalar_select %p1577, %s99, 1
        %s1579 = smul.addr %s1578, 2
        %s1580 = smul.addr %s1579, 8
        %s1581 = scalar_lea.vmem %s1, %s1580
        %p1582 = scmp.lt.s32.totalorder %s99, 1
        %s1583 = scalar_select %p1582, %s99, 1
        %s1584 = smul.addr %s1583, 2
        %s1585 = smul.addr %s1584, 8
        %s1586 = scalar_lea.vmem %s3, %s1585
        %p1587 = scmp.lt.s32.totalorder %s100, 1
        %s1588 = scalar_select %p1587, %s100, 1
        %s1589 = smul.addr %s1588, 4
        %s1590 = smul.addr %s1589, 4
        %s1591 = scalar_lea.vmem %s7, %s1590
        %p1592 = scmp.lt.s32.totalorder %s100, 1
        %s1593 = scalar_select %p1592, %s100, 1
        %s1594 = smul.addr %s1593, 4
        %s1595 = smul.addr %s1594, 4
        %s1596 = scalar_lea.vmem %s19, %s1595
        %p1597 = scmp.lt.s32.totalorder %s100, 1
        %s1598 = scalar_select %p1597, %s100, 1
        %s1599 = scalar_lea.vmem %s37, %s1598
        %p1600 = scmp.lt.s32.totalorder %s100, 1
        %s1601 = scalar_select %p1600, %s100, 1
        %s1602 = scalar_lea.vmem %s39, %s1601
        %p1603 = scmp.lt.s32.totalorder %s100, 1
        %s1604 = scalar_select %p1603, %s100, 1
        %s1605 = scalar_lea.vmem %s41, %s1604
        %p1606 = scmp.lt.s32.totalorder %s100, 1
        %s1607 = scalar_select %p1606, %s100, 1
        %s1608 = scalar_lea.vmem %s43, %s1607
        %p1609 = scmp.lt.s32.totalorder %s100, 1
        %s1610 = scalar_select %p1609, %s100, 1
        %s1611 = scalar_lea.vmem %s45, %s1610
        %p1612 = scmp.lt.s32.totalorder %s100, 1
        %s1613 = scalar_select %p1612, %s100, 1
        %s1614 = scalar_lea.vmem %s47, %s1613
        %p1615 = scmp.lt.s32.totalorder %s100, 1
        %s1616 = scalar_select %p1615, %s100, 1
        %s1617 = scalar_lea.vmem %s49, %s1616
        %p1618 = scmp.lt.s32.totalorder %s100, 1
        %s1619 = scalar_select %p1618, %s100, 1
        %s1620 = scalar_lea.vmem %s53, %s1619
        %p1621 = scmp.lt.s32.totalorder %s100, 1
        %s1622 = scalar_select %p1621, %s100, 1
        %s1623 = smul.addr %s1622, 8
        %s1624 = smul.addr %s1623, 4
        %s1625 = scalar_lea.vmem %s55, %s1624
        %p1626 = scmp.lt.s32.totalorder %s100, 1
        %s1627 = scalar_select %p1626, %s100, 1
        %s1628 = scalar_lea.vmem %s57, %s1627
        %p1630 = scmp.eq.s32.totalorder %s100, 0
        // Predicated region
        $region197: #{tpu_custom_call.1} parent=135 // pred_check
          %p1631 = pneg %p1630
        $region198: #{tpu_custom_call.1} parent=135 // pred_check_branch
          %1633 = sbr.rel (%p1631) target = $region200
        $region199: #{tpu_custom_call.1} parent=135 // pred_region
          %vm1634 = vcmask 261120
          %1635 = vst.msk [vmem:[#allocation2] sm:$0xff] %vm1634, 0.0
        $region200: #{tpu_custom_call.1} parent=135 // pred_fallthru
          _
        %v1636 = vld [vmem:[#allocation2] sm:$0xff]
        %v1637 = vld [vmem:[%s1581] sm:$0xff]
        %v1638 = vld [vmem:[%s1581 + $0x8] sm:$0xff]
        %v1639 = vld [vmem:[%s1586] sm:$0xff]
        %v1640 = vld [vmem:[%s1586 + $0x8] sm:$0xff]
        %v1641 = vld [vmem:[#allocation3] sm:$0xff]
        %v1642 = vadd.f32 %v1636, %v1641
        %v1643 = vpack.c.bf16 %v1642, %v1642
        %v1644 = vld [vmem:[%s1591] sm:$0xf]
        %v1645 = vld [vmem:[%s1591 + $0x4] sm:$0xf]
        %v1646 = vld [vmem:[%s1591 + $0x8] sm:$0xf]
        %v1647 = vld [vmem:[%s1591 + $0xc] sm:$0xf]
        %v1648 = vld [vmem:[%s1299] sm:$0x1]
        %v1650 = vlaneseq
        %v1651 = vshrl.u32 %v1650, 7
        %v1652 = vsub.s32 0, %v1651
        %v1653 = vrot.slane %v1648, %v1652
        %v1659 = vunpack.c.l.b16 %v1644
        %v1660 = vunpack.c.l.b16 %v1645
        %v1661 = vunpack.c.l.b16 %v1646
        %v1662 = vunpack.c.l.b16 %v1647
        %v1663 = vpack.c.b16 %v1660, %v1659
        %v1664 = vpack.c.b16 %v1662, %v1661
        %vm1667 = vcmask 261120
        %v1669 = vsel %vm1667, %v1643, 0
        %1671 = vmatprep.subr.bf16.mxu0 0
        %1672 = vmatpush1.bf16.msra.mxu0 %v1663
        %1673 = vmatprep.subr.bf16.mxu0 0
        %1674 = vmatpush1.bf16.msra.mxu0 %v1664
        %1675 = vmatprep.subr.bf16.mxu0 0
        %1676 = vmatpush1.bf16.msra.mxu0 0
        %1677 = vmatprep.subr.bf16.mxu0 0
        %1678 = vmatpush1.bf16.msra.mxu0 0
        %1679 = vmatprep.subr.bf16.mxu0 0
        %1680 = vmatpush1.bf16.msra.mxu0 0
        %1681 = vmatprep.subr.bf16.mxu0 0
        %1682 = vmatpush1.bf16.msra.mxu0 0
        %1683 = vmatprep.subr.bf16.mxu0 0
        %1684 = vmatpush1.bf16.msra.mxu0 0
        %1685 = vmatprep.subr.bf16.mxu0 0
        %1686 = vmatpush1.bf16.msra.mxu0 0
        %1687 = vmatprep.subr.bf16.mxu0 0
        %1688 = vmatpush1.bf16.msra.mxu0 0
        %1689 = vmatprep.subr.bf16.mxu0 0
        %1690 = vmatpush1.bf16.msra.mxu0 0
        %1691 = vmatprep.subr.bf16.mxu0 0
        %1692 = vmatpush1.bf16.msra.mxu0 0
        %1693 = vmatprep.subr.bf16.mxu0 0
        %1694 = vmatpush1.bf16.msra.mxu0 0
        %1695 = vmatprep.subr.bf16.mxu0 0
        %1696 = vmatpush1.bf16.msra.mxu0 0
        %1697 = vmatprep.subr.bf16.mxu0 0
        %1698 = vmatpush1.bf16.msra.mxu0 0
        %1699 = vmatprep.subr.bf16.mxu0 0
        %1700 = vmatpush1.bf16.msra.mxu0 0
        %1701 = vmatprep.subr.bf16.mxu0 0
        %1702 = vmatpush1.bf16.msra.mxu0 0
        %1703 = vmatprep.mubr.bf16.mxu0 0
        %1704 = vmatmul.mubr.bf16.gmra.mrb[0].mxu0 %v1669
        %v1705 = vpop.f32.mrb[0].mxu0
        %v1706 = vadd.f32 %v1653, %v1705
        %v1707 = vpop.f32.mrb[0].mxu0
        %v1708 = vpop.f32.mrb[0].mxu0
        %v1709 = vpop.f32.mrb[0].mxu0
        %1710 = vdwg.mxu0
        %v1711 = vld [vmem:[%s1282] sm:$0xf]
        %v1712 = vld [vmem:[%s1282 + $0x4] sm:$0xf]
        %v1713 = vld [vmem:[%s1282 + $0x8] sm:$0xf]
        %v1714 = vld [vmem:[%s1282 + $0xc] sm:$0xf]
        %v1715 = vld [vmem:[%s1307] sm:$0x1]
        %v1717 = vlaneseq
        %v1718 = vshrl.u32 %v1717, 7
        %v1719 = vsub.s32 0, %v1718
        %v1720 = vrot.slane %v1715, %v1719
        %v1726 = vunpack.c.l.b16 %v1711
        %v1727 = vunpack.c.l.b16 %v1712
        %v1728 = vunpack.c.l.b16 %v1713
        %v1729 = vunpack.c.l.b16 %v1714
        %v1730 = vpack.c.b16 %v1727, %v1726
        %v1731 = vpack.c.b16 %v1729, %v1728
        %1734 = vmatprep.subr.bf16.mxu0 0
        %1735 = vmatpush1.bf16.msra.mxu0 %v1730
        %1736 = vmatprep.subr.bf16.mxu0 0
        %1737 = vmatpush1.bf16.msra.mxu0 %v1731
        %1738 = vmatprep.subr.bf16.mxu0 0
        %1739 = vmatpush1.bf16.msra.mxu0 0
        %1740 = vmatprep.subr.bf16.mxu0 0
        %1741 = vmatpush1.bf16.msra.mxu0 0
        %1742 = vmatprep.subr.bf16.mxu0 0
        %1743 = vmatpush1.bf16.msra.mxu0 0
        %1744 = vmatprep.subr.bf16.mxu0 0
        %1745 = vmatpush1.bf16.msra.mxu0 0
        %1746 = vmatprep.subr.bf16.mxu0 0
        %1747 = vmatpush1.bf16.msra.mxu0 0
        %1748 = vmatprep.subr.bf16.mxu0 0
        %1749 = vmatpush1.bf16.msra.mxu0 0
        %1750 = vmatprep.subr.bf16.mxu0 0
        %1751 = vmatpush1.bf16.msra.mxu0 0
        %1752 = vmatprep.subr.bf16.mxu0 0
        %1753 = vmatpush1.bf16.msra.mxu0 0
        %1754 = vmatprep.subr.bf16.mxu0 0
        %1755 = vmatpush1.bf16.msra.mxu0 0
        %1756 = vmatprep.subr.bf16.mxu0 0
        %1757 = vmatpush1.bf16.msra.mxu0 0
        %1758 = vmatprep.subr.bf16.mxu0 0
        %1759 = vmatpush1.bf16.msra.mxu0 0
        %1760 = vmatprep.subr.bf16.mxu0 0
        %1761 = vmatpush1.bf16.msra.mxu0 0
        %1762 = vmatprep.subr.bf16.mxu0 0
        %1763 = vmatpush1.bf16.msra.mxu0 0
        %1764 = vmatprep.subr.bf16.mxu0 0
        %1765 = vmatpush1.bf16.msra.mxu0 0
        %1766 = vmatprep.mubr.bf16.mxu0 0
        %1767 = vmatmul.mubr.bf16.gmra.mrb[0].mxu0 %v1669
        %v1768 = vpop.f32.mrb[0].mxu0
        %v1769 = vadd.f32 %v1720, %v1768
        %v1770 = vpop.f32.mrb[0].mxu0
        %v1771 = vpop.f32.mrb[0].mxu0
        %v1772 = vpop.f32.mrb[0].mxu0
        %1773 = vdwg.mxu0
        %v1774 = vpack.c.bf16 %v1636, %v1636
        %v1775 = vld [vmem:[%s1291] sm:$0xf]
        %v1776 = vld [vmem:[%s1291 + $0x4] sm:$0xf]
        %v1777 = vld [vmem:[%s1291 + $0x8] sm:$0xf]
        %v1778 = vld [vmem:[%s1291 + $0xc] sm:$0xf]
        %v1779 = vld [vmem:[%s1315] sm:$0x1]
        %v1781 = vlaneseq
        %v1782 = vshrl.u32 %v1781, 7
        %v1783 = vsub.s32 0, %v1782
        %v1784 = vrot.slane %v1779, %v1783
        %v1790 = vunpack.c.l.b16 %v1775
        %v1791 = vunpack.c.l.b16 %v1776
        %v1792 = vunpack.c.l.b16 %v1777
        %v1793 = vunpack.c.l.b16 %v1778
        %v1794 = vpack.c.b16 %v1791, %v1790
        %v1795 = vpack.c.b16 %v1793, %v1792
        %v1799 = vsel %vm1667, %v1774, 0
        %1801 = vmatprep.subr.bf16.mxu0 0
        %1802 = vmatpush1.bf16.msra.mxu0 %v1794
        %1803 = vmatprep.subr.bf16.mxu0 0
        %1804 = vmatpush1.bf16.msra.mxu0 %v1795
        %1805 = vmatprep.subr.bf16.mxu0 0
        %1806 = vmatpush1.bf16.msra.mxu0 0
        %1807 = vmatprep.subr.bf16.mxu0 0
        %1808 = vmatpush1.bf16.msra.mxu0 0
        %1809 = vmatprep.subr.bf16.mxu0 0
        %1810 = vmatpush1.bf16.msra.mxu0 0
        %1811 = vmatprep.subr.bf16.mxu0 0
        %1812 = vmatpush1.bf16.msra.mxu0 0
        %1813 = vmatprep.subr.bf16.mxu0 0
        %1814 = vmatpush1.bf16.msra.mxu0 0
        %1815 = vmatprep.subr.bf16.mxu0 0
        %1816 = vmatpush1.bf16.msra.mxu0 0
        %1817 = vmatprep.subr.bf16.mxu0 0
        %1818 = vmatpush1.bf16.msra.mxu0 0
        %1819 = vmatprep.subr.bf16.mxu0 0
        %1820 = vmatpush1.bf16.msra.mxu0 0
        %1821 = vmatprep.subr.bf16.mxu0 0
        %1822 = vmatpush1.bf16.msra.mxu0 0
        %1823 = vmatprep.subr.bf16.mxu0 0
        %1824 = vmatpush1.bf16.msra.mxu0 0
        %1825 = vmatprep.subr.bf16.mxu0 0
        %1826 = vmatpush1.bf16.msra.mxu0 0
        %1827 = vmatprep.subr.bf16.mxu0 0
        %1828 = vmatpush1.bf16.msra.mxu0 0
        %1829 = vmatprep.subr.bf16.mxu0 0
        %1830 = vmatpush1.bf16.msra.mxu0 0
        %1831 = vmatprep.subr.bf16.mxu0 0
        %1832 = vmatpush1.bf16.msra.mxu0 0
        %1833 = vmatprep.mubr.bf16.mxu0 0
        %1834 = vmatmul.mubr.bf16.gmra.mrb[0].mxu0 %v1799
        %v1835 = vpop.f32.mrb[0].mxu0
        %v1836 = vadd.f32 %v1784, %v1835
        %v1837 = vpop.f32.mrb[0].mxu0
        %v1838 = vpop.f32.mrb[0].mxu0
        %v1839 = vpop.f32.mrb[0].mxu0
        %1840 = vdwg.mxu0
        %1842 = vrot.lane.b32.xlu0 %v1706, 120
        %v1843 = vpop.permute.xlu0 %1842
        %1845 = vrot.lane.b32.xlu0 %v1706, 112
        %v1846 = vpop.permute.xlu0 %1845
        %1848 = vrot.lane.b32.xlu0 %v1706, 104
        %v1849 = vpop.permute.xlu0 %1848
        %v1851 = vcombine.low %v1706, %v1846
        %v1852 = vcombine.high %v1706, %v1846
        %v1854 = vunpack.c.l.s4 1983009808
        %v1855 = vunpack.c.0.s8 %v1854
        %v1856 = vlaneseq
        %v1857 = vshrl.u32 %v1856, 7
        %v1858 = vsub.s32 %v1855, %v1857
        %v1859 = vrot.slane %v1851, %v1858
        %v1861 = vunpack.c.l.s4 1983009808
        %v1862 = vunpack.c.0.s8 %v1861
        %v1863 = vlaneseq
        %v1864 = vshrl.u32 %v1863, 7
        %v1865 = vsub.s32 %v1862, %v1864
        %v1866 = vrot.slane %v1852, %v1865
        %v1867 = vcombine.low %v1843, %v1849
        %v1868 = vcombine.high %v1843, %v1849
        %v1870 = vunpack.c.l.s4 1983009808
        %v1871 = vunpack.c.0.s8 %v1870
        %v1872 = vlaneseq
        %v1873 = vshrl.u32 %v1872, 7
        %v1874 = vsub.s32 %v1871, %v1873
        %v1875 = vrot.slane %v1867, %v1874
        %v1877 = vunpack.c.l.s4 1983009808
        %v1878 = vunpack.c.0.s8 %v1877
        %v1879 = vlaneseq
        %v1880 = vshrl.u32 %v1879, 7
        %v1881 = vsub.s32 %v1878, %v1880
        %v1882 = vrot.slane %v1868, %v1881
        %v1883 = vcombine.low %v1859, %v1875
        %v1884 = vcombine.high %v1859, %v1875
        %v1886 = vunpack.c.l.s4 1934713408
        %v1887 = vunpack.c.0.s8 %v1886
        %v1888 = vlaneseq
        %v1889 = vshrl.u32 %v1888, 7
        %v1890 = vsub.s32 %v1887, %v1889
        %v1891 = vrot.slane %v1883, %v1890
        %v1893 = vunpack.c.l.s4 1934713408
        %v1894 = vunpack.c.0.s8 %v1893
        %v1895 = vlaneseq
        %v1896 = vshrl.u32 %v1895, 7
        %v1897 = vsub.s32 %v1894, %v1896
        %v1898 = vrot.slane %v1884, %v1897
        %v1899 = vcombine.low %v1866, %v1882
        %v1900 = vcombine.high %v1866, %v1882
        %v1902 = vunpack.c.l.s4 1934713408
        %v1903 = vunpack.c.0.s8 %v1902
        %v1904 = vlaneseq
        %v1905 = vshrl.u32 %v1904, 7
        %v1906 = vsub.s32 %v1903, %v1905
        %v1907 = vrot.slane %v1899, %v1906
        %v1909 = vunpack.c.l.s4 1934713408
        %v1910 = vunpack.c.0.s8 %v1909
        %v1911 = vlaneseq
        %v1912 = vshrl.u32 %v1911, 7
        %v1913 = vsub.s32 %v1910, %v1912
        %v1914 = vrot.slane %v1900, %v1913
        %v1915 = vcombine.high %v1891, 0.0
        %v1916 = vcombine.high %v1898, 0.0
        %v1917 = vcombine.high %v1907, 0.0
        %v1918 = vcombine.high %v1914, 0.0
        %1920 = vrot.lane.b32.xlu0 %v1769, 120
        %v1921 = vpop.permute.xlu0 %1920
        %1923 = vrot.lane.b32.xlu0 %v1769, 112
        %v1924 = vpop.permute.xlu0 %1923
        %1926 = vrot.lane.b32.xlu0 %v1769, 104
        %v1927 = vpop.permute.xlu0 %1926
        %v1929 = vcombine.low %v1769, %v1924
        %v1930 = vcombine.high %v1769, %v1924
        %v1932 = vunpack.c.l.s4 1983009808
        %v1933 = vunpack.c.0.s8 %v1932
        %v1934 = vlaneseq
        %v1935 = vshrl.u32 %v1934, 7
        %v1936 = vsub.s32 %v1933, %v1935
        %v1937 = vrot.slane %v1929, %v1936
        %v1939 = vunpack.c.l.s4 1983009808
        %v1940 = vunpack.c.0.s8 %v1939
        %v1941 = vlaneseq
        %v1942 = vshrl.u32 %v1941, 7
        %v1943 = vsub.s32 %v1940, %v1942
        %v1944 = vrot.slane %v1930, %v1943
        %v1945 = vcombine.low %v1921, %v1927
        %v1946 = vcombine.high %v1921, %v1927
        %v1948 = vunpack.c.l.s4 1983009808
        %v1949 = vunpack.c.0.s8 %v1948
        %v1950 = vlaneseq
        %v1951 = vshrl.u32 %v1950, 7
        %v1952 = vsub.s32 %v1949, %v1951
        %v1953 = vrot.slane %v1945, %v1952
        %v1955 = vunpack.c.l.s4 1983009808
        %v1956 = vunpack.c.0.s8 %v1955
        %v1957 = vlaneseq
        %v1958 = vshrl.u32 %v1957, 7
        %v1959 = vsub.s32 %v1956, %v1958
        %v1960 = vrot.slane %v1946, %v1959
        %v1961 = vcombine.low %v1937, %v1953
        %v1962 = vcombine.high %v1937, %v1953
        %v1964 = vunpack.c.l.s4 1934713408
        %v1965 = vunpack.c.0.s8 %v1964
        %v1966 = vlaneseq
        %v1967 = vshrl.u32 %v1966, 7
        %v1968 = vsub.s32 %v1965, %v1967
        %v1969 = vrot.slane %v1961, %v1968
        %v1971 = vunpack.c.l.s4 1934713408
        %v1972 = vunpack.c.0.s8 %v1971
        %v1973 = vlaneseq
        %v1974 = vshrl.u32 %v1973, 7
        %v1975 = vsub.s32 %v1972, %v1974
        %v1976 = vrot.slane %v1962, %v1975
        %v1977 = vcombine.low %v1944, %v1960
        %v1978 = vcombine.high %v1944, %v1960
        %v1980 = vunpack.c.l.s4 1934713408
        %v1981 = vunpack.c.0.s8 %v1980
        %v1982 = vlaneseq
        %v1983 = vshrl.u32 %v1982, 7
        %v1984 = vsub.s32 %v1981, %v1983
        %v1985 = vrot.slane %v1977, %v1984
        %v1987 = vunpack.c.l.s4 1934713408
        %v1988 = vunpack.c.0.s8 %v1987
        %v1989 = vlaneseq
        %v1990 = vshrl.u32 %v1989, 7
        %v1991 = vsub.s32 %v1988, %v1990
        %v1992 = vrot.slane %v1978, %v1991
        %v1993 = vcombine.high %v1969, 0.0
        %v1994 = vcombine.high %v1976, 0.0
        %v1995 = vcombine.high %v1985, 0.0
        %v1996 = vcombine.high %v1992, 0.0
        %1998 = vrot.lane.b32.xlu0 %v1836, 120
        %v1999 = vpop.permute.xlu0 %1998
        %2001 = vrot.lane.b32.xlu0 %v1836, 112
        %v2002 = vpop.permute.xlu0 %2001
        %2004 = vrot.lane.b32.xlu0 %v1836, 104
        %v2005 = vpop.permute.xlu0 %2004
        %v2007 = vcombine.low %v1836, %v2002
        %v2008 = vcombine.high %v1836, %v2002
        %v2010 = vunpack.c.l.s4 1983009808
        %v2011 = vunpack.c.0.s8 %v2010
        %v2012 = vlaneseq
        %v2013 = vshrl.u32 %v2012, 7
        %v2014 = vsub.s32 %v2011, %v2013
        %v2015 = vrot.slane %v2007, %v2014
        %v2017 = vunpack.c.l.s4 1983009808
        %v2018 = vunpack.c.0.s8 %v2017
        %v2019 = vlaneseq
        %v2020 = vshrl.u32 %v2019, 7
        %v2021 = vsub.s32 %v2018, %v2020
        %v2022 = vrot.slane %v2008, %v2021
        %v2023 = vcombine.low %v1999, %v2005
        %v2024 = vcombine.high %v1999, %v2005
        %v2026 = vunpack.c.l.s4 1983009808
        %v2027 = vunpack.c.0.s8 %v2026
        %v2028 = vlaneseq
        %v2029 = vshrl.u32 %v2028, 7
        %v2030 = vsub.s32 %v2027, %v2029
        %v2031 = vrot.slane %v2023, %v2030
        %v2033 = vunpack.c.l.s4 1983009808
        %v2034 = vunpack.c.0.s8 %v2033
        %v2035 = vlaneseq
        %v2036 = vshrl.u32 %v2035, 7
        %v2037 = vsub.s32 %v2034, %v2036
        %v2038 = vrot.slane %v2024, %v2037
        %v2039 = vcombine.low %v2015, %v2031
        %v2040 = vcombine.high %v2015, %v2031
        %v2042 = vunpack.c.l.s4 1934713408
        %v2043 = vunpack.c.0.s8 %v2042
        %v2044 = vlaneseq
        %v2045 = vshrl.u32 %v2044, 7
        %v2046 = vsub.s32 %v2043, %v2045
        %v2047 = vrot.slane %v2039, %v2046
        %v2049 = vunpack.c.l.s4 1934713408
        %v2050 = vunpack.c.0.s8 %v2049
        %v2051 = vlaneseq
        %v2052 = vshrl.u32 %v2051, 7
        %v2053 = vsub.s32 %v2050, %v2052
        %v2054 = vrot.slane %v2040, %v2053
        %v2055 = vcombine.low %v2022, %v2038
        %v2056 = vcombine.high %v2022, %v2038
        %v2058 = vunpack.c.l.s4 1934713408
        %v2059 = vunpack.c.0.s8 %v2058
        %v2060 = vlaneseq
        %v2061 = vshrl.u32 %v2060, 7
        %v2062 = vsub.s32 %v2059, %v2061
        %v2063 = vrot.slane %v2055, %v2062
        %v2065 = vunpack.c.l.s4 1934713408
        %v2066 = vunpack.c.0.s8 %v2065
        %v2067 = vlaneseq
        %v2068 = vshrl.u32 %v2067, 7
        %v2069 = vsub.s32 %v2066, %v2068
        %v2070 = vrot.slane %v2056, %v2069
        %v2071 = vcombine.high %v2047, 0.0
        %v2072 = vcombine.high %v2054, 0.0
        %v2073 = vcombine.high %v2063, 0.0
        %v2074 = vcombine.high %v2070, 0.0
        %v2075 = vpack.c.bf16 %v1891, %v1891
        %v2076 = vpack.c.bf16 %v1915, %v1915
        %v2077 = vpack.c.bf16 %v1898, %v1898
        %v2078 = vpack.c.bf16 %v1916, %v1916
        %v2079 = vpack.c.bf16 %v1907, %v1907
        %v2080 = vpack.c.bf16 %v1917, %v1917
        %v2081 = vpack.c.bf16 %v1914, %v1914
        %v2082 = vpack.c.bf16 %v1918, %v1918
        %v2083 = vpack.c.bf16 %v1969, %v1969
        %v2084 = vpack.c.bf16 %v1993, %v1993
        %v2085 = vpack.c.bf16 %v1976, %v1976
        %v2086 = vpack.c.bf16 %v1994, %v1994
        %v2087 = vpack.c.bf16 %v1985, %v1985
        %v2088 = vpack.c.bf16 %v1995, %v1995
        %v2089 = vpack.c.bf16 %v1992, %v1992
        %v2090 = vpack.c.bf16 %v1996, %v1996
        %v2091 = vcombine.low %v2075, %v2079
        %v2093 = vunpack.c.l.s4 1983009808
        %v2094 = vunpack.c.0.s8 %v2093
        %v2095 = vlaneseq
        %v2096 = vshrl.u32 %v2095, 7
        %v2097 = vsub.s32 %v2094, %v2096
        %v2098 = vrot.slane %v2091, %v2097
        %v2099 = vcombine.low %v2077, %v2081
        %v2101 = vunpack.c.l.s4 1983009808
        %v2102 = vunpack.c.0.s8 %v2101
        %v2103 = vlaneseq
        %v2104 = vshrl.u32 %v2103, 7
        %v2105 = vsub.s32 %v2102, %v2104
        %v2106 = vrot.slane %v2099, %v2105
        %v2107 = vcombine.low %v2098, %v2106
        %v2109 = vunpack.c.l.s4 1934713408
        %v2110 = vunpack.c.0.s8 %v2109
        %v2111 = vlaneseq
        %v2112 = vshrl.u32 %v2111, 7
        %v2113 = vsub.s32 %v2110, %v2112
        %v2114 = vrot.slane %v2107, %v2113
        %v2115 = vcombine.high %v2114, 0
        %v2116 = vcombine.low %v2076, %v2080
        %v2118 = vunpack.c.l.s4 1983009808
        %v2119 = vunpack.c.0.s8 %v2118
        %v2120 = vlaneseq
        %v2121 = vshrl.u32 %v2120, 7
        %v2122 = vsub.s32 %v2119, %v2121
        %v2123 = vrot.slane %v2116, %v2122
        %v2124 = vcombine.low %v2078, %v2082
        %v2126 = vunpack.c.l.s4 1983009808
        %v2127 = vunpack.c.0.s8 %v2126
        %v2128 = vlaneseq
        %v2129 = vshrl.u32 %v2128, 7
        %v2130 = vsub.s32 %v2127, %v2129
        %v2131 = vrot.slane %v2124, %v2130
        %v2132 = vcombine.low %v2123, %v2131
        %v2134 = vunpack.c.l.s4 1934713408
        %v2135 = vunpack.c.0.s8 %v2134
        %v2136 = vlaneseq
        %v2137 = vshrl.u32 %v2136, 7
        %v2138 = vsub.s32 %v2135, %v2137
        %v2139 = vrot.slane %v2132, %v2138
        %v2140 = vcombine.high %v2139, 0
        %v2143 = vpack.i.b16 %v2139, %v2114
        %v2144 = vshrl.u32 %v2114, 16
        %v2145 = vshrl.u32 %v2139, 16
        %v2146 = vpack.i.b16 %v2145, %v2144
        %v2149 = vpack.i.b16 %v2140, %v2115
        %v2150 = vshrl.u32 %v2115, 16
        %v2151 = vshrl.u32 %v2140, 16
        %v2152 = vpack.i.b16 %v2151, %v2150
        %2153 = vxpose.xlu0.c.b16.start [1/8] %v2083, 128
        %2154 = vxpose.xlu0.c.b16.cont [2/8] 0, 128
        %2155 = vxpose.xlu0.c.b16.cont [3/8] 0, 128
        %2156 = vxpose.xlu0.c.b16.cont [4/8] 0, 128
        %2157 = vxpose.xlu0.c.b16.cont [5/8] 0, 128
        %2158 = vxpose.xlu0.c.b16.cont [6/8] 0, 128
        %2159 = vxpose.xlu0.c.b16.cont [7/8] 0, 128
        %2160 = vxpose.xlu0.c.b16.end [8/8] 0, 128
        %v2161 = vpop.trf.xlu0
        %v2162 = vpop.trf.xlu0
        %v2163 = vpop.trf.xlu0
        %v2164 = vpop.trf.xlu0
        %v2165 = vpop.trf.xlu0
        %v2166 = vpop.trf.xlu0
        %v2167 = vpop.trf.xlu0
        %v2168 = vpop.trf.xlu0
        %2169 = vxpose.xlu0.c.b16.start [1/8] %v2084, 128
        %2170 = vxpose.xlu0.c.b16.cont [2/8] 0, 128
        %2171 = vxpose.xlu0.c.b16.cont [3/8] 0, 128
        %2172 = vxpose.xlu0.c.b16.cont [4/8] 0, 128
        %2173 = vxpose.xlu0.c.b16.cont [5/8] 0, 128
        %2174 = vxpose.xlu0.c.b16.cont [6/8] 0, 128
        %2175 = vxpose.xlu0.c.b16.cont [7/8] 0, 128
        %2176 = vxpose.xlu0.c.b16.end [8/8] 0, 128
        %v2177 = vpop.trf.xlu0
        %v2178 = vpop.trf.xlu0
        %v2179 = vpop.trf.xlu0
        %v2180 = vpop.trf.xlu0
        %v2181 = vpop.trf.xlu0
        %v2182 = vpop.trf.xlu0
        %v2183 = vpop.trf.xlu0
        %v2184 = vpop.trf.xlu0
        %2185 = vxpose.xlu0.c.b16.start [1/8] %v2085, 128
        %2186 = vxpose.xlu0.c.b16.cont [2/8] 0, 128
        %2187 = vxpose.xlu0.c.b16.cont [3/8] 0, 128
        %2188 = vxpose.xlu0.c.b16.cont [4/8] 0, 128
        %2189 = vxpose.xlu0.c.b16.cont [5/8] 0, 128
        %2190 = vxpose.xlu0.c.b16.cont [6/8] 0, 128
        %2191 = vxpose.xlu0.c.b16.cont [7/8] 0, 128
        %2192 = vxpose.xlu0.c.b16.end [8/8] 0, 128
        %v2193 = vpop.trf.xlu0
        %v2194 = vpop.trf.xlu0
        %v2195 = vpop.trf.xlu0
        %v2196 = vpop.trf.xlu0
        %v2197 = vpop.trf.xlu0
        %v2198 = vpop.trf.xlu0
        %v2199 = vpop.trf.xlu0
        %v2200 = vpop.trf.xlu0
        %2201 = vxpose.xlu0.c.b16.start [1/8] %v2086, 128
        %2202 = vxpose.xlu0.c.b16.cont [2/8] 0, 128
        %2203 = vxpose.xlu0.c.b16.cont [3/8] 0, 128
        %2204 = vxpose.xlu0.c.b16.cont [4/8] 0, 128
        %2205 = vxpose.xlu0.c.b16.cont [5/8] 0, 128
        %2206 = vxpose.xlu0.c.b16.cont [6/8] 0, 128
        %2207 = vxpose.xlu0.c.b16.cont [7/8] 0, 128
        %2208 = vxpose.xlu0.c.b16.end [8/8] 0, 128
        %v2209 = vpop.trf.xlu0
        %v2210 = vpop.trf.xlu0
        %v2211 = vpop.trf.xlu0
        %v2212 = vpop.trf.xlu0
        %v2213 = vpop.trf.xlu0
        %v2214 = vpop.trf.xlu0
        %v2215 = vpop.trf.xlu0
        %v2216 = vpop.trf.xlu0
        %2217 = vxpose.xlu0.c.b16.start [1/8] %v2087, 128
        %2218 = vxpose.xlu0.c.b16.cont [2/8] 0, 128
        %2219 = vxpose.xlu0.c.b16.cont [3/8] 0, 128
        %2220 = vxpose.xlu0.c.b16.cont [4/8] 0, 128
        %2221 = vxpose.xlu0.c.b16.cont [5/8] 0, 128
        %2222 = vxpose.xlu0.c.b16.cont [6/8] 0, 128
        %2223 = vxpose.xlu0.c.b16.cont [7/8] 0, 128
        %2224 = vxpose.xlu0.c.b16.end [8/8] 0, 128
        %v2225 = vpop.trf.xlu0
        %v2226 = vpop.trf.xlu0
        %v2227 = vpop.trf.xlu0
        %v2228 = vpop.trf.xlu0
        %v2229 = vpop.trf.xlu0
        %v2230 = vpop.trf.xlu0
        %v2231 = vpop.trf.xlu0
        %v2232 = vpop.trf.xlu0
        %2233 = vxpose.xlu0.c.b16.start [1/8] %v2088, 128
        %2234 = vxpose.xlu0.c.b16.cont [2/8] 0, 128
        %2235 = vxpose.xlu0.c.b16.cont [3/8] 0, 128
        %2236 = vxpose.xlu0.c.b16.cont [4/8] 0, 128
        %2237 = vxpose.xlu0.c.b16.cont [5/8] 0, 128
        %2238 = vxpose.xlu0.c.b16.cont [6/8] 0, 128
        %2239 = vxpose.xlu0.c.b16.cont [7/8] 0, 128
        %2240 = vxpose.xlu0.c.b16.end [8/8] 0, 128
        %v2241 = vpop.trf.xlu0
        %v2242 = vpop.trf.xlu0
        %v2243 = vpop.trf.xlu0
        %v2244 = vpop.trf.xlu0
        %v2245 = vpop.trf.xlu0
        %v2246 = vpop.trf.xlu0
        %v2247 = vpop.trf.xlu0
        %v2248 = vpop.trf.xlu0
        %2249 = vxpose.xlu0.c.b16.start [1/8] %v2089, 128
        %2250 = vxpose.xlu0.c.b16.cont [2/8] 0, 128
        %2251 = vxpose.xlu0.c.b16.cont [3/8] 0, 128
        %2252 = vxpose.xlu0.c.b16.cont [4/8] 0, 128
        %2253 = vxpose.xlu0.c.b16.cont [5/8] 0, 128
        %2254 = vxpose.xlu0.c.b16.cont [6/8] 0, 128
        %2255 = vxpose.xlu0.c.b16.cont [7/8] 0, 128
        %2256 = vxpose.xlu0.c.b16.end [8/8] 0, 128
        %v2257 = vpop.trf.xlu0
        %v2258 = vpop.trf.xlu0
        %v2259 = vpop.trf.xlu0
        %v2260 = vpop.trf.xlu0
        %v2261 = vpop.trf.xlu0
        %v2262 = vpop.trf.xlu0
        %v2263 = vpop.trf.xlu0
        %v2264 = vpop.trf.xlu0
        %2265 = vxpose.xlu0.c.b16.start [1/8] %v2090, 128
        %2266 = vxpose.xlu0.c.b16.cont [2/8] 0, 128
        %2267 = vxpose.xlu0.c.b16.cont [3/8] 0, 128
        %2268 = vxpose.xlu0.c.b16.cont [4/8] 0, 128
        %2269 = vxpose.xlu0.c.b16.cont [5/8] 0, 128
        %2270 = vxpose.xlu0.c.b16.cont [6/8] 0, 128
        %2271 = vxpose.xlu0.c.b16.cont [7/8] 0, 128
        %2272 = vxpose.xlu0.c.b16.end [8/8] 0, 128
        %v2273 = vpop.trf.xlu0
        %v2274 = vpop.trf.xlu0
        %v2275 = vpop.trf.xlu0
        %v2276 = vpop.trf.xlu0
        %v2277 = vpop.trf.xlu0
        %v2278 = vpop.trf.xlu0
        %v2279 = vpop.trf.xlu0
        %v2280 = vpop.trf.xlu0
        %v2281 = vcombine.low %v2161, %v2225
        %v2283 = vunpack.c.l.s4 1983009808
        %v2284 = vunpack.c.0.s8 %v2283
        %v2285 = vlaneseq
        %v2286 = vshrl.u32 %v2285, 7
        %v2287 = vsub.s32 %v2284, %v2286
        %v2288 = vrot.slane %v2281, %v2287
        %v2289 = vcombine.low %v2193, %v2257
        %v2291 = vunpack.c.l.s4 1983009808
        %v2292 = vunpack.c.0.s8 %v2291
        %v2293 = vlaneseq
        %v2294 = vshrl.u32 %v2293, 7
        %v2295 = vsub.s32 %v2292, %v2294
        %v2296 = vrot.slane %v2289, %v2295
        %v2297 = vcombine.low %v2288, %v2296
        %v2298 = vcombine.high %v2288, %v2296
        %v2300 = vunpack.c.l.s4 1934713408
        %v2301 = vunpack.c.0.s8 %v2300
        %v2302 = vlaneseq
        %v2303 = vshrl.u32 %v2302, 7
        %v2304 = vsub.s32 %v2301, %v2303
        %v2305 = vrot.slane %v2297, %v2304
        %v2307 = vunpack.c.l.s4 1934713408
        %v2308 = vunpack.c.0.s8 %v2307
        %v2309 = vlaneseq
        %v2310 = vshrl.u32 %v2309, 7
        %v2311 = vsub.s32 %v2308, %v2310
        %v2312 = vrot.slane %v2298, %v2311
        %v2313 = vcombine.high %v2305, 0
        %v2314 = vcombine.high %v2312, 0
        %v2315 = vcombine.low %v2177, %v2241
        %v2317 = vunpack.c.l.s4 1983009808
        %v2318 = vunpack.c.0.s8 %v2317
        %v2319 = vlaneseq
        %v2320 = vshrl.u32 %v2319, 7
        %v2321 = vsub.s32 %v2318, %v2320
        %v2322 = vrot.slane %v2315, %v2321
        %v2323 = vcombine.low %v2209, %v2273
        %v2325 = vunpack.c.l.s4 1983009808
        %v2326 = vunpack.c.0.s8 %v2325
        %v2327 = vlaneseq
        %v2328 = vshrl.u32 %v2327, 7
        %v2329 = vsub.s32 %v2326, %v2328
        %v2330 = vrot.slane %v2323, %v2329
        %v2331 = vcombine.low %v2322, %v2330
        %v2332 = vcombine.high %v2322, %v2330
        %v2334 = vunpack.c.l.s4 1934713408
        %v2335 = vunpack.c.0.s8 %v2334
        %v2336 = vlaneseq
        %v2337 = vshrl.u32 %v2336, 7
        %v2338 = vsub.s32 %v2335, %v2337
        %v2339 = vrot.slane %v2331, %v2338
        %v2341 = vunpack.c.l.s4 1934713408
        %v2342 = vunpack.c.0.s8 %v2341
        %v2343 = vlaneseq
        %v2344 = vshrl.u32 %v2343, 7
        %v2345 = vsub.s32 %v2342, %v2344
        %v2346 = vrot.slane %v2332, %v2345
        %v2347 = vcombine.high %v2339, 0
        %v2348 = vcombine.high %v2346, 0
        %v2351 = vpack.i.b16 %v2339, %v2305
        %v2353 = vshrl.u32 %v2305, 16
        %v2354 = vshrl.u32 %v2339, 16
        %v2355 = vpack.i.b16 %v2354, %v2353
        %v2359 = vpack.i.b16 %v2347, %v2313
        %v2361 = vshrl.u32 %v2313, 16
        %v2362 = vshrl.u32 %v2347, 16
        %v2363 = vpack.i.b16 %v2362, %v2361
        %v2367 = vpack.i.b16 %v2346, %v2312
        %v2369 = vshrl.u32 %v2312, 16
        %v2370 = vshrl.u32 %v2346, 16
        %v2371 = vpack.i.b16 %v2370, %v2369
        %v2375 = vpack.i.b16 %v2348, %v2314
        %v2377 = vshrl.u32 %v2314, 16
        %v2378 = vshrl.u32 %v2348, 16
        %v2379 = vpack.i.b16 %v2378, %v2377
        %2381 = vxpose.xlu0.c.b16.start [1/8] %v2351, 128
        %2382 = vxpose.xlu0.c.b16.cont [2/8] 0, 128
        %2383 = vxpose.xlu0.c.b16.cont [3/8] 0, 128
        %2384 = vxpose.xlu0.c.b16.cont [4/8] 0, 128
        %2385 = vxpose.xlu0.c.b16.cont [5/8] 0, 128
        %2386 = vxpose.xlu0.c.b16.cont [6/8] 0, 128
        %2387 = vxpose.xlu0.c.b16.cont [7/8] 0, 128
        %2388 = vxpose.xlu0.c.b16.end [8/8] 0, 128
        %v2389 = vpop.trf.xlu0
        %v2390 = vpop.trf.xlu0
        %v2391 = vpop.trf.xlu0
        %v2392 = vpop.trf.xlu0
        %v2393 = vpop.trf.xlu0
        %v2394 = vpop.trf.xlu0
        %v2395 = vpop.trf.xlu0
        %v2396 = vpop.trf.xlu0
        %2397 = vxpose.xlu0.c.b16.start [1/8] %v2355, 128
        %2398 = vxpose.xlu0.c.b16.cont [2/8] 0, 128
        %2399 = vxpose.xlu0.c.b16.cont [3/8] 0, 128
        %2400 = vxpose.xlu0.c.b16.cont [4/8] 0, 128
        %2401 = vxpose.xlu0.c.b16.cont [5/8] 0, 128
        %2402 = vxpose.xlu0.c.b16.cont [6/8] 0, 128
        %2403 = vxpose.xlu0.c.b16.cont [7/8] 0, 128
        %2404 = vxpose.xlu0.c.b16.end [8/8] 0, 128
        %v2405 = vpop.trf.xlu0
        %v2406 = vpop.trf.xlu0
        %v2407 = vpop.trf.xlu0
        %v2408 = vpop.trf.xlu0
        %v2409 = vpop.trf.xlu0
        %v2410 = vpop.trf.xlu0
        %v2411 = vpop.trf.xlu0
        %v2412 = vpop.trf.xlu0
        %2413 = vxpose.xlu0.c.b16.start [1/8] %v2359, 128
        %2414 = vxpose.xlu0.c.b16.cont [2/8] 0, 128
        %2415 = vxpose.xlu0.c.b16.cont [3/8] 0, 128
        %2416 = vxpose.xlu0.c.b16.cont [4/8] 0, 128
        %2417 = vxpose.xlu0.c.b16.cont [5/8] 0, 128
        %2418 = vxpose.xlu0.c.b16.cont [6/8] 0, 128
        %2419 = vxpose.xlu0.c.b16.cont [7/8] 0, 128
        %2420 = vxpose.xlu0.c.b16.end [8/8] 0, 128
        %v2421 = vpop.trf.xlu0
        %v2422 = vpop.trf.xlu0
        %v2423 = vpop.trf.xlu0
        %v2424 = vpop.trf.xlu0
        %v2425 = vpop.trf.xlu0
        %v2426 = vpop.trf.xlu0
        %v2427 = vpop.trf.xlu0
        %v2428 = vpop.trf.xlu0
        %2429 = vxpose.xlu0.c.b16.start [1/8] %v2363, 128
        %2430 = vxpose.xlu0.c.b16.cont [2/8] 0, 128
        %2431 = vxpose.xlu0.c.b16.cont [3/8] 0, 128
        %2432 = vxpose.xlu0.c.b16.cont [4/8] 0, 128
        %2433 = vxpose.xlu0.c.b16.cont [5/8] 0, 128
        %2434 = vxpose.xlu0.c.b16.cont [6/8] 0, 128
        %2435 = vxpose.xlu0.c.b16.cont [7/8] 0, 128
        %2436 = vxpose.xlu0.c.b16.end [8/8] 0, 128
        %v2437 = vpop.trf.xlu0
        %v2438 = vpop.trf.xlu0
        %v2439 = vpop.trf.xlu0
        %v2440 = vpop.trf.xlu0
        %v2441 = vpop.trf.xlu0
        %v2442 = vpop.trf.xlu0
        %v2443 = vpop.trf.xlu0
        %v2444 = vpop.trf.xlu0
        %2445 = vxpose.xlu0.c.b16.start [1/8] %v2367, 128
        %2446 = vxpose.xlu0.c.b16.cont [2/8] 0, 128
        %2447 = vxpose.xlu0.c.b16.cont [3/8] 0, 128
        %2448 = vxpose.xlu0.c.b16.cont [4/8] 0, 128
        %2449 = vxpose.xlu0.c.b16.cont [5/8] 0, 128
        %2450 = vxpose.xlu0.c.b16.cont [6/8] 0, 128
        %2451 = vxpose.xlu0.c.b16.cont [7/8] 0, 128
        %2452 = vxpose.xlu0.c.b16.end [8/8] 0, 128
        %v2453 = vpop.trf.xlu0
        %v2454 = vpop.trf.xlu0
        %v2455 = vpop.trf.xlu0
        %v2456 = vpop.trf.xlu0
        %v2457 = vpop.trf.xlu0
        %v2458 = vpop.trf.xlu0
        %v2459 = vpop.trf.xlu0
        %v2460 = vpop.trf.xlu0
        %2461 = vxpose.xlu0.c.b16.start [1/8] %v2371, 128
        %2462 = vxpose.xlu0.c.b16.cont [2/8] 0, 128
        %2463 = vxpose.xlu0.c.b16.cont [3/8] 0, 128
        %2464 = vxpose.xlu0.c.b16.cont [4/8] 0, 128
        %2465 = vxpose.xlu0.c.b16.cont [5/8] 0, 128
        %2466 = vxpose.xlu0.c.b16.cont [6/8] 0, 128
        %2467 = vxpose.xlu0.c.b16.cont [7/8] 0, 128
        %2468 = vxpose.xlu0.c.b16.end [8/8] 0, 128
        %v2469 = vpop.trf.xlu0
        %v2470 = vpop.trf.xlu0
        %v2471 = vpop.trf.xlu0
        %v2472 = vpop.trf.xlu0
        %v2473 = vpop.trf.xlu0
        %v2474 = vpop.trf.xlu0
        %v2475 = vpop.trf.xlu0
        %v2476 = vpop.trf.xlu0
        %2477 = vxpose.xlu0.c.b16.start [1/8] %v2375, 128
        %2478 = vxpose.xlu0.c.b16.cont [2/8] 0, 128
        %2479 = vxpose.xlu0.c.b16.cont [3/8] 0, 128
        %2480 = vxpose.xlu0.c.b16.cont [4/8] 0, 128
        %2481 = vxpose.xlu0.c.b16.cont [5/8] 0, 128
        %2482 = vxpose.xlu0.c.b16.cont [6/8] 0, 128
        %2483 = vxpose.xlu0.c.b16.cont [7/8] 0, 128
        %2484 = vxpose.xlu0.c.b16.end [8/8] 0, 128
        %v2485 = vpop.trf.xlu0
        %v2486 = vpop.trf.xlu0
        %v2487 = vpop.trf.xlu0
        %v2488 = vpop.trf.xlu0
        %v2489 = vpop.trf.xlu0
        %v2490 = vpop.trf.xlu0
        %v2491 = vpop.trf.xlu0
        %v2492 = vpop.trf.xlu0
        %2493 = vxpose.xlu0.c.b16.start [1/8] %v2379, 128
        %2494 = vxpose.xlu0.c.b16.cont [2/8] 0, 128
        %2495 = vxpose.xlu0.c.b16.cont [3/8] 0, 128
        %2496 = vxpose.xlu0.c.b16.cont [4/8] 0, 128
        %2497 = vxpose.xlu0.c.b16.cont [5/8] 0, 128
        %2498 = vxpose.xlu0.c.b16.cont [6/8] 0, 128
        %2499 = vxpose.xlu0.c.b16.cont [7/8] 0, 128
        %2500 = vxpose.xlu0.c.b16.end [8/8] 0, 128
        %v2501 = vpop.trf.xlu0
        %v2502 = vpop.trf.xlu0
        %v2503 = vpop.trf.xlu0
        %v2504 = vpop.trf.xlu0
        %v2505 = vpop.trf.xlu0
        %v2506 = vpop.trf.xlu0
        %v2507 = vpop.trf.xlu0
        %v2508 = vpop.trf.xlu0
        %v2509 = vcombine.low %v2389, %v2453
        %v2511 = vunpack.c.l.s4 1983009808
        %v2512 = vunpack.c.0.s8 %v2511
        %v2513 = vlaneseq
        %v2514 = vshrl.u32 %v2513, 7
        %v2515 = vsub.s32 %v2512, %v2514
        %v2516 = vrot.slane %v2509, %v2515
        %v2517 = vcombine.low %v2421, %v2485
        %v2519 = vunpack.c.l.s4 1983009808
        %v2520 = vunpack.c.0.s8 %v2519
        %v2521 = vlaneseq
        %v2522 = vshrl.u32 %v2521, 7
        %v2523 = vsub.s32 %v2520, %v2522
        %v2524 = vrot.slane %v2517, %v2523
        %v2525 = vcombine.low %v2516, %v2524
        %v2527 = vunpack.c.l.s4 1934713408
        %v2528 = vunpack.c.0.s8 %v2527
        %v2529 = vlaneseq
        %v2530 = vshrl.u32 %v2529, 7
        %v2531 = vsub.s32 %v2528, %v2530
        %v2532 = vrot.slane %v2525, %v2531
        %v2533 = vcombine.high %v2532, 0
        %v2534 = vcombine.low %v2405, %v2469
        %v2536 = vunpack.c.l.s4 1983009808
        %v2537 = vunpack.c.0.s8 %v2536
        %v2538 = vlaneseq
        %v2539 = vshrl.u32 %v2538, 7
        %v2540 = vsub.s32 %v2537, %v2539
        %v2541 = vrot.slane %v2534, %v2540
        %v2542 = vcombine.low %v2437, %v2501
        %v2544 = vunpack.c.l.s4 1983009808
        %v2545 = vunpack.c.0.s8 %v2544
        %v2546 = vlaneseq
        %v2547 = vshrl.u32 %v2546, 7
        %v2548 = vsub.s32 %v2545, %v2547
        %v2549 = vrot.slane %v2542, %v2548
        %v2550 = vcombine.low %v2541, %v2549
        %v2552 = vunpack.c.l.s4 1934713408
        %v2553 = vunpack.c.0.s8 %v2552
        %v2554 = vlaneseq
        %v2555 = vshrl.u32 %v2554, 7
        %v2556 = vsub.s32 %v2553, %v2555
        %v2557 = vrot.slane %v2550, %v2556
        %v2558 = vcombine.high %v2557, 0
        %v2561 = vpack.i.b16 %v2557, %v2532
        %v2562 = vshrl.u32 %v2532, 16
        %v2563 = vshrl.u32 %v2557, 16
        %v2564 = vpack.i.b16 %v2563, %v2562
        %v2567 = vpack.i.b16 %v2558, %v2533
        %v2568 = vshrl.u32 %v2533, 16
        %v2569 = vshrl.u32 %v2558, 16
        %v2570 = vpack.i.b16 %v2569, %v2568
        %vm2571 = vcmask 64512
        %v2573 = vsel %vm2571, %v2143, 0
        %vm2575 = vcmask 1043456
        %v2577 = vsel %vm2575, %v2561, 0
        %2579 = vmatprep.subr.bf16.mxu0 0
        %2580 = vmatpush1.bf16.msra.mxu0 %v2577
        %2581 = vmatprep.subr.bf16.mxu0 0
        %2582 = vmatpush1.bf16.msra.mxu0 0
        %2583 = vmatprep.subr.bf16.mxu0 0
        %2584 = vmatpush1.bf16.msra.mxu0 0
        %2585 = vmatprep.subr.bf16.mxu0 0
        %2586 = vmatpush1.bf16.msra.mxu0 0
        %2587 = vmatprep.subr.bf16.mxu0 0
        %2588 = vmatpush1.bf16.msra.mxu0 0
        %2589 = vmatprep.subr.bf16.mxu0 0
        %2590 = vmatpush1.bf16.msra.mxu0 0
        %2591 = vmatprep.subr.bf16.mxu0 0
        %2592 = vmatpush1.bf16.msra.mxu0 0
        %2593 = vmatprep.subr.bf16.mxu0 0
        %2594 = vmatpush1.bf16.msra.mxu0 0
        %2595 = vmatprep.subr.bf16.mxu0 0
        %2596 = vmatpush1.bf16.msra.mxu0 0
        %2597 = vmatprep.subr.bf16.mxu0 0
        %2598 = vmatpush1.bf16.msra.mxu0 0
        %2599 = vmatprep.subr.bf16.mxu0 0
        %2600 = vmatpush1.bf16.msra.mxu0 0
        %2601 = vmatprep.subr.bf16.mxu0 0
        %2602 = vmatpush1.bf16.msra.mxu0 0
        %2603 = vmatprep.subr.bf16.mxu0 0
        %2604 = vmatpush1.bf16.msra.mxu0 0
        %2605 = vmatprep.subr.bf16.mxu0 0
        %2606 = vmatpush1.bf16.msra.mxu0 0
        %2607 = vmatprep.subr.bf16.mxu0 0
        %2608 = vmatpush1.bf16.msra.mxu0 0
        %2609 = vmatprep.subr.bf16.mxu0 0
        %2610 = vmatpush1.bf16.msra.mxu0 0
        %2611 = vmatprep.mubr.bf16.mxu0 0
        %2612 = vmatmul.mubr.bf16.gmra.mrb[0].mxu0 %v2573
        %v2613 = vpop.f32.mrb[0].mxu0
        %v2614 = vadd.f32 0.0, %v2613
        %v2615 = vpop.f32.mrb[0].mxu0
        %v2616 = vpop.f32.mrb[0].mxu0
        %v2617 = vpop.f32.mrb[0].mxu0
        %2618 = vdwg.mxu0
        %v2620 = vsel %vm2571, %v2146, 0
        %v2623 = vsel %vm2575, %v2564, 0
        %2625 = vmatprep.subr.bf16.mxu0 0
        %2626 = vmatpush1.bf16.msra.mxu0 %v2623
        %2627 = vmatprep.subr.bf16.mxu0 0
        %2628 = vmatpush1.bf16.msra.mxu0 0
        %2629 = vmatprep.subr.bf16.mxu0 0
        %2630 = vmatpush1.bf16.msra.mxu0 0
        %2631 = vmatprep.subr.bf16.mxu0 0
        %2632 = vmatpush1.bf16.msra.mxu0 0
        %2633 = vmatprep.subr.bf16.mxu0 0
        %2634 = vmatpush1.bf16.msra.mxu0 0
        %2635 = vmatprep.subr.bf16.mxu0 0
        %2636 = vmatpush1.bf16.msra.mxu0 0
        %2637 = vmatprep.subr.bf16.mxu0 0
        %2638 = vmatpush1.bf16.msra.mxu0 0
        %2639 = vmatprep.subr.bf16.mxu0 0
        %2640 = vmatpush1.bf16.msra.mxu0 0
        %2641 = vmatprep.subr.bf16.mxu0 0
        %2642 = vmatpush1.bf16.msra.mxu0 0
        %2643 = vmatprep.subr.bf16.mxu0 0
        %2644 = vmatpush1.bf16.msra.mxu0 0
        %2645 = vmatprep.subr.bf16.mxu0 0
        %2646 = vmatpush1.bf16.msra.mxu0 0
        %2647 = vmatprep.subr.bf16.mxu0 0
        %2648 = vmatpush1.bf16.msra.mxu0 0
        %2649 = vmatprep.subr.bf16.mxu0 0
        %2650 = vmatpush1.bf16.msra.mxu0 0
        %2651 = vmatprep.subr.bf16.mxu0 0
        %2652 = vmatpush1.bf16.msra.mxu0 0
        %2653 = vmatprep.subr.bf16.mxu0 0
        %2654 = vmatpush1.bf16.msra.mxu0 0
        %2655 = vmatprep.subr.bf16.mxu0 0
        %2656 = vmatpush1.bf16.msra.mxu0 0
        %2657 = vmatprep.mubr.bf16.mxu0 0
        %2658 = vmatmul.mubr.bf16.gmra.mrb[0].mxu0 %v2620
        %v2659 = vpop.f32.mrb[0].mxu0
        %v2660 = vadd.f32 0.0, %v2659
        %v2661 = vpop.f32.mrb[0].mxu0
        %v2662 = vpop.f32.mrb[0].mxu0
        %v2663 = vpop.f32.mrb[0].mxu0
        %2664 = vdwg.mxu0
        %v2666 = vsel %vm2571, %v2149, 0
        %v2669 = vsel %vm2575, %v2567, 0
        %2671 = vmatprep.subr.bf16.mxu0 0
        %2672 = vmatpush1.bf16.msra.mxu0 %v2669
        %2673 = vmatprep.subr.bf16.mxu0 0
        %2674 = vmatpush1.bf16.msra.mxu0 0
        %2675 = vmatprep.subr.bf16.mxu0 0
        %2676 = vmatpush1.bf16.msra.mxu0 0
        %2677 = vmatprep.subr.bf16.mxu0 0
        %2678 = vmatpush1.bf16.msra.mxu0 0
        %2679 = vmatprep.subr.bf16.mxu0 0
        %2680 = vmatpush1.bf16.msra.mxu0 0
        %2681 = vmatprep.subr.bf16.mxu0 0
        %2682 = vmatpush1.bf16.msra.mxu0 0
        %2683 = vmatprep.subr.bf16.mxu0 0
        %2684 = vmatpush1.bf16.msra.mxu0 0
        %2685 = vmatprep.subr.bf16.mxu0 0
        %2686 = vmatpush1.bf16.msra.mxu0 0
        %2687 = vmatprep.subr.bf16.mxu0 0
        %2688 = vmatpush1.bf16.msra.mxu0 0
        %2689 = vmatprep.subr.bf16.mxu0 0
        %2690 = vmatpush1.bf16.msra.mxu0 0
        %2691 = vmatprep.subr.bf16.mxu0 0
        %2692 = vmatpush1.bf16.msra.mxu0 0
        %2693 = vmatprep.subr.bf16.mxu0 0
        %2694 = vmatpush1.bf16.msra.mxu0 0
        %2695 = vmatprep.subr.bf16.mxu0 0
        %2696 = vmatpush1.bf16.msra.mxu0 0
        %2697 = vmatprep.subr.bf16.mxu0 0
        %2698 = vmatpush1.bf16.msra.mxu0 0
        %2699 = vmatprep.subr.bf16.mxu0 0
        %2700 = vmatpush1.bf16.msra.mxu0 0
        %2701 = vmatprep.subr.bf16.mxu0 0
        %2702 = vmatpush1.bf16.msra.mxu0 0
        %2703 = vmatprep.mubr.bf16.mxu0 0
        %2704 = vmatmul.mubr.bf16.gmra.mrb[0].mxu0 %v2666
        %v2705 = vpop.f32.mrb[0].mxu0
        %v2706 = vadd.f32 0.0, %v2705
        %v2707 = vpop.f32.mrb[0].mxu0
        %v2708 = vpop.f32.mrb[0].mxu0
        %v2709 = vpop.f32.mrb[0].mxu0
        %2710 = vdwg.mxu0
        %v2712 = vsel %vm2571, %v2152, 0
        %v2715 = vsel %vm2575, %v2570, 0
        %2717 = vmatprep.subr.bf16.mxu0 0
        %2718 = vmatpush1.bf16.msra.mxu0 %v2715
        %2719 = vmatprep.subr.bf16.mxu0 0
        %2720 = vmatpush1.bf16.msra.mxu0 0
        %2721 = vmatprep.subr.bf16.mxu0 0
        %2722 = vmatpush1.bf16.msra.mxu0 0
        %2723 = vmatprep.subr.bf16.mxu0 0
        %2724 = vmatpush1.bf16.msra.mxu0 0
        %2725 = vmatprep.subr.bf16.mxu0 0
        %2726 = vmatpush1.bf16.msra.mxu0 0
        %2727 = vmatprep.subr.bf16.mxu0 0
        %2728 = vmatpush1.bf16.msra.mxu0 0
        %2729 = vmatprep.subr.bf16.mxu0 0
        %2730 = vmatpush1.bf16.msra.mxu0 0
        %2731 = vmatprep.subr.bf16.mxu0 0
        %2732 = vmatpush1.bf16.msra.mxu0 0
        %2733 = vmatprep.subr.bf16.mxu0 0
        %2734 = vmatpush1.bf16.msra.mxu0 0
        %2735 = vmatprep.subr.bf16.mxu0 0
        %2736 = vmatpush1.bf16.msra.mxu0 0
        %2737 = vmatprep.subr.bf16.mxu0 0
        %2738 = vmatpush1.bf16.msra.mxu0 0
        %2739 = vmatprep.subr.bf16.mxu0 0
        %2740 = vmatpush1.bf16.msra.mxu0 0
        %2741 = vmatprep.subr.bf16.mxu0 0
        %2742 = vmatpush1.bf16.msra.mxu0 0
        %2743 = vmatprep.subr.bf16.mxu0 0
        %2744 = vmatpush1.bf16.msra.mxu0 0
        %2745 = vmatprep.subr.bf16.mxu0 0
        %2746 = vmatpush1.bf16.msra.mxu0 0
        %2747 = vmatprep.subr.bf16.mxu0 0
        %2748 = vmatpush1.bf16.msra.mxu0 0
        %2749 = vmatprep.mubr.bf16.mxu0 0
        %2750 = vmatmul.mubr.bf16.gmra.mrb[0].mxu0 %v2712
        %v2751 = vpop.f32.mrb[0].mxu0
        %v2752 = vadd.f32 0.0, %v2751
        %v2753 = vpop.f32.mrb[0].mxu0
        %v2754 = vpop.f32.mrb[0].mxu0
        %v2755 = vpop.f32.mrb[0].mxu0
        %2756 = vdwg.mxu0
        %v2757 = vsel %vm2571, %v2614, -inf
        %2758 = vmax.xlane.f32.xlu0 %v2757
        %v2759 = vpop.xlane.xlu0 %2758
        %v2760 = vsel %vm2571, %v2660, -inf
        %2761 = vmax.xlane.f32.xlu0 %v2760
        %v2762 = vpop.xlane.xlu0 %2761
        %v2763 = vsel %vm2571, %v2706, -inf
        %2764 = vmax.xlane.f32.xlu0 %v2763
        %v2765 = vpop.xlane.xlu0 %2764
        %v2766 = vsel %vm2571, %v2752, -inf
        %2767 = vmax.xlane.f32.xlu0 %v2766
        %v2768 = vpop.xlane.xlu0 %2767
        %v2769 = vsub.f32 %v2614, %v2759
        %v2770 = vsub.f32 %v2660, %v2762
        %v2771 = vsub.f32 %v2706, %v2765
        %v2772 = vsub.f32 %v2752, %v2768
        %v2773 = vmul.f32 %v2769, 1.442695
        %v2774 = vpow.pop %v2773
        %v2775 = vmul.f32 %v2770, 1.442695
        %v2776 = vpow.pop %v2775
        %v2777 = vmul.f32 %v2771, 1.442695
        %v2778 = vpow.pop %v2777
        %v2779 = vmul.f32 %v2772, 1.442695
        %v2780 = vpow.pop %v2779
        %v2781 = vsel %vm2571, %v2774, 0.0
        %2782 = vadd.xlane.f32.xlu0 %v2781
        %v2783 = vpop.xlane.xlu0 %2782
        %v2784 = vsel %vm2571, %v2776, 0.0
        %2785 = vadd.xlane.f32.xlu0 %v2784
        %v2786 = vpop.xlane.xlu0 %2785
        %v2787 = vsel %vm2571, %v2778, 0.0
        %2788 = vadd.xlane.f32.xlu0 %v2787
        %v2789 = vpop.xlane.xlu0 %2788
        %v2790 = vsel %vm2571, %v2780, 0.0
        %2791 = vadd.xlane.f32.xlu0 %v2790
        %v2792 = vpop.xlane.xlu0 %2791
        %v2793 = vrcp.pop %v2783
        %v2794 = vrcp.pop %v2786
        %v2795 = vrcp.pop %v2789
        %v2796 = vrcp.pop %v2792
        %v2797 = vmul.f32 %v2774, %v2793
        %v2798 = vmul.f32 %v2776, %v2794
        %v2799 = vmul.f32 %v2778, %v2795
        %v2800 = vmul.f32 %v2780, %v2796
        %v2801 = vpack.c.bf16 %v2797, %v2797
        %v2802 = vpack.c.bf16 %v2798, %v2798
        %v2803 = vpack.c.bf16 %v2799, %v2799
        %v2804 = vpack.c.bf16 %v2800, %v2800
        %v2805 = vpack.c.bf16 %v2047, %v2047
        %v2806 = vpack.c.bf16 %v2071, %v2071
        %v2807 = vpack.c.bf16 %v2054, %v2054
        %v2808 = vpack.c.bf16 %v2072, %v2072
        %v2809 = vpack.c.bf16 %v2063, %v2063
        %v2810 = vpack.c.bf16 %v2073, %v2073
        %v2811 = vpack.c.bf16 %v2070, %v2070
        %v2812 = vpack.c.bf16 %v2074, %v2074
        %2813 = vxpose.xlu0.c.b16.start [1/8] %v2805, 128
        %2814 = vxpose.xlu0.c.b16.cont [2/8] 0, 128
        %2815 = vxpose.xlu0.c.b16.cont [3/8] 0, 128
        %2816 = vxpose.xlu0.c.b16.cont [4/8] 0, 128
        %2817 = vxpose.xlu0.c.b16.cont [5/8] 0, 128
        %2818 = vxpose.xlu0.c.b16.cont [6/8] 0, 128
        %2819 = vxpose.xlu0.c.b16.cont [7/8] 0, 128
        %2820 = vxpose.xlu0.c.b16.end [8/8] 0, 128
        %v2821 = vpop.trf.xlu0
        %v2822 = vpop.trf.xlu0
        %v2823 = vpop.trf.xlu0
        %v2824 = vpop.trf.xlu0
        %v2825 = vpop.trf.xlu0
        %v2826 = vpop.trf.xlu0
        %v2827 = vpop.trf.xlu0
        %v2828 = vpop.trf.xlu0
        %2829 = vxpose.xlu0.c.b16.start [1/8] %v2806, 128
        %2830 = vxpose.xlu0.c.b16.cont [2/8] 0, 128
        %2831 = vxpose.xlu0.c.b16.cont [3/8] 0, 128
        %2832 = vxpose.xlu0.c.b16.cont [4/8] 0, 128
        %2833 = vxpose.xlu0.c.b16.cont [5/8] 0, 128
        %2834 = vxpose.xlu0.c.b16.cont [6/8] 0, 128
        %2835 = vxpose.xlu0.c.b16.cont [7/8] 0, 128
        %2836 = vxpose.xlu0.c.b16.end [8/8] 0, 128
        %v2837 = vpop.trf.xlu0
        %v2838 = vpop.trf.xlu0
        %v2839 = vpop.trf.xlu0
        %v2840 = vpop.trf.xlu0
        %v2841 = vpop.trf.xlu0
        %v2842 = vpop.trf.xlu0
        %v2843 = vpop.trf.xlu0
        %v2844 = vpop.trf.xlu0
        %2845 = vxpose.xlu0.c.b16.start [1/8] %v2807, 128
        %2846 = vxpose.xlu0.c.b16.cont [2/8] 0, 128
        %2847 = vxpose.xlu0.c.b16.cont [3/8] 0, 128
        %2848 = vxpose.xlu0.c.b16.cont [4/8] 0, 128
        %2849 = vxpose.xlu0.c.b16.cont [5/8] 0, 128
        %2850 = vxpose.xlu0.c.b16.cont [6/8] 0, 128
        %2851 = vxpose.xlu0.c.b16.cont [7/8] 0, 128
        %2852 = vxpose.xlu0.c.b16.end [8/8] 0, 128
        %v2853 = vpop.trf.xlu0
        %v2854 = vpop.trf.xlu0
        %v2855 = vpop.trf.xlu0
        %v2856 = vpop.trf.xlu0
        %v2857 = vpop.trf.xlu0
        %v2858 = vpop.trf.xlu0
        %v2859 = vpop.trf.xlu0
        %v2860 = vpop.trf.xlu0
        %2861 = vxpose.xlu0.c.b16.start [1/8] %v2808, 128
        %2862 = vxpose.xlu0.c.b16.cont [2/8] 0, 128
        %2863 = vxpose.xlu0.c.b16.cont [3/8] 0, 128
        %2864 = vxpose.xlu0.c.b16.cont [4/8] 0, 128
        %2865 = vxpose.xlu0.c.b16.cont [5/8] 0, 128
        %2866 = vxpose.xlu0.c.b16.cont [6/8] 0, 128
        %2867 = vxpose.xlu0.c.b16.cont [7/8] 0, 128
        %2868 = vxpose.xlu0.c.b16.end [8/8] 0, 128
        %v2869 = vpop.trf.xlu0
        %v2870 = vpop.trf.xlu0
        %v2871 = vpop.trf.xlu0
        %v2872 = vpop.trf.xlu0
        %v2873 = vpop.trf.xlu0
        %v2874 = vpop.trf.xlu0
        %v2875 = vpop.trf.xlu0
        %v2876 = vpop.trf.xlu0
        %2877 = vxpose.xlu0.c.b16.start [1/8] %v2809, 128
        %2878 = vxpose.xlu0.c.b16.cont [2/8] 0, 128
        %2879 = vxpose.xlu0.c.b16.cont [3/8] 0, 128
        %2880 = vxpose.xlu0.c.b16.cont [4/8] 0, 128
        %2881 = vxpose.xlu0.c.b16.cont [5/8] 0, 128
        %2882 = vxpose.xlu0.c.b16.cont [6/8] 0, 128
        %2883 = vxpose.xlu0.c.b16.cont [7/8] 0, 128
        %2884 = vxpose.xlu0.c.b16.end [8/8] 0, 128
        %v2885 = vpop.trf.xlu0
        %v2886 = vpop.trf.xlu0
        %v2887 = vpop.trf.xlu0
        %v2888 = vpop.trf.xlu0
        %v2889 = vpop.trf.xlu0
        %v2890 = vpop.trf.xlu0
        %v2891 = vpop.trf.xlu0
        %v2892 = vpop.trf.xlu0
        %2893 = vxpose.xlu0.c.b16.start [1/8] %v2810, 128
        %2894 = vxpose.xlu0.c.b16.cont [2/8] 0, 128
        %2895 = vxpose.xlu0.c.b16.cont [3/8] 0, 128
        %2896 = vxpose.xlu0.c.b16.cont [4/8] 0, 128
        %2897 = vxpose.xlu0.c.b16.cont [5/8] 0, 128
        %2898 = vxpose.xlu0.c.b16.cont [6/8] 0, 128
        %2899 = vxpose.xlu0.c.b16.cont [7/8] 0, 128
        %2900 = vxpose.xlu0.c.b16.end [8/8] 0, 128
        %v2901 = vpop.trf.xlu0
        %v2902 = vpop.trf.xlu0
        %v2903 = vpop.trf.xlu0
        %v2904 = vpop.trf.xlu0
        %v2905 = vpop.trf.xlu0
        %v2906 = vpop.trf.xlu0
        %v2907 = vpop.trf.xlu0
        %v2908 = vpop.trf.xlu0
        %2909 = vxpose.xlu0.c.b16.start [1/8] %v2811, 128
        %2910 = vxpose.xlu0.c.b16.cont [2/8] 0, 128
        %2911 = vxpose.xlu0.c.b16.cont [3/8] 0, 128
        %2912 = vxpose.xlu0.c.b16.cont [4/8] 0, 128
        %2913 = vxpose.xlu0.c.b16.cont [5/8] 0, 128
        %2914 = vxpose.xlu0.c.b16.cont [6/8] 0, 128
        %2915 = vxpose.xlu0.c.b16.cont [7/8] 0, 128
        %2916 = vxpose.xlu0.c.b16.end [8/8] 0, 128
        %v2917 = vpop.trf.xlu0
        %v2918 = vpop.trf.xlu0
        %v2919 = vpop.trf.xlu0
        %v2920 = vpop.trf.xlu0
        %v2921 = vpop.trf.xlu0
        %v2922 = vpop.trf.xlu0
        %v2923 = vpop.trf.xlu0
        %v2924 = vpop.trf.xlu0
        %2925 = vxpose.xlu0.c.b16.start [1/8] %v2812, 128
        %2926 = vxpose.xlu0.c.b16.cont [2/8] 0, 128
        %2927 = vxpose.xlu0.c.b16.cont [3/8] 0, 128
        %2928 = vxpose.xlu0.c.b16.cont [4/8] 0, 128
        %2929 = vxpose.xlu0.c.b16.cont [5/8] 0, 128
        %2930 = vxpose.xlu0.c.b16.cont [6/8] 0, 128
        %2931 = vxpose.xlu0.c.b16.cont [7/8] 0, 128
        %2932 = vxpose.xlu0.c.b16.end [8/8] 0, 128
        %v2933 = vpop.trf.xlu0
        %v2934 = vpop.trf.xlu0
        %v2935 = vpop.trf.xlu0
        %v2936 = vpop.trf.xlu0
        %v2937 = vpop.trf.xlu0
        %v2938 = vpop.trf.xlu0
        %v2939 = vpop.trf.xlu0
        %v2940 = vpop.trf.xlu0
        %v2941 = vcombine.low %v2821, %v2885
        %v2943 = vunpack.c.l.s4 1983009808
        %v2944 = vunpack.c.0.s8 %v2943
        %v2945 = vlaneseq
        %v2946 = vshrl.u32 %v2945, 7
        %v2947 = vsub.s32 %v2944, %v2946
        %v2948 = vrot.slane %v2941, %v2947
        %v2949 = vcombine.low %v2853, %v2917
        %v2951 = vunpack.c.l.s4 1983009808
        %v2952 = vunpack.c.0.s8 %v2951
        %v2953 = vlaneseq
        %v2954 = vshrl.u32 %v2953, 7
        %v2955 = vsub.s32 %v2952, %v2954
        %v2956 = vrot.slane %v2949, %v2955
        %v2957 = vcombine.low %v2948, %v2956
        %v2958 = vcombine.high %v2948, %v2956
        %v2960 = vunpack.c.l.s4 1934713408
        %v2961 = vunpack.c.0.s8 %v2960
        %v2962 = vlaneseq
        %v2963 = vshrl.u32 %v2962, 7
        %v2964 = vsub.s32 %v2961, %v2963
        %v2965 = vrot.slane %v2957, %v2964
        %v2967 = vunpack.c.l.s4 1934713408
        %v2968 = vunpack.c.0.s8 %v2967
        %v2969 = vlaneseq
        %v2970 = vshrl.u32 %v2969, 7
        %v2971 = vsub.s32 %v2968, %v2970
        %v2972 = vrot.slane %v2958, %v2971
        %v2973 = vcombine.high %v2965, 0
        %v2974 = vcombine.high %v2972, 0
        %v2975 = vcombine.low %v2837, %v2901
        %v2977 = vunpack.c.l.s4 1983009808
        %v2978 = vunpack.c.0.s8 %v2977
        %v2979 = vlaneseq
        %v2980 = vshrl.u32 %v2979, 7
        %v2981 = vsub.s32 %v2978, %v2980
        %v2982 = vrot.slane %v2975, %v2981
        %v2983 = vcombine.low %v2869, %v2933
        %v2985 = vunpack.c.l.s4 1983009808
        %v2986 = vunpack.c.0.s8 %v2985
        %v2987 = vlaneseq
        %v2988 = vshrl.u32 %v2987, 7
        %v2989 = vsub.s32 %v2986, %v2988
        %v2990 = vrot.slane %v2983, %v2989
        %v2991 = vcombine.low %v2982, %v2990
        %v2992 = vcombine.high %v2982, %v2990
        %v2994 = vunpack.c.l.s4 1934713408
        %v2995 = vunpack.c.0.s8 %v2994
        %v2996 = vlaneseq
        %v2997 = vshrl.u32 %v2996, 7
        %v2998 = vsub.s32 %v2995, %v2997
        %v2999 = vrot.slane %v2991, %v2998
        %v3001 = vunpack.c.l.s4 1934713408
        %v3002 = vunpack.c.0.s8 %v3001
        %v3003 = vlaneseq
        %v3004 = vshrl.u32 %v3003, 7
        %v3005 = vsub.s32 %v3002, %v3004
        %v3006 = vrot.slane %v2992, %v3005
        %v3007 = vcombine.high %v2999, 0
        %v3008 = vcombine.high %v3006, 0
        %v3011 = vpack.i.b16 %v2999, %v2965
        %v3013 = vshrl.u32 %v2965, 16
        %v3014 = vshrl.u32 %v2999, 16
        %v3015 = vpack.i.b16 %v3014, %v3013
        %v3019 = vpack.i.b16 %v3007, %v2973
        %v3021 = vshrl.u32 %v2973, 16
        %v3022 = vshrl.u32 %v3007, 16
        %v3023 = vpack.i.b16 %v3022, %v3021
        %v3027 = vpack.i.b16 %v3006, %v2972
        %v3029 = vshrl.u32 %v2972, 16
        %v3030 = vshrl.u32 %v3006, 16
        %v3031 = vpack.i.b16 %v3030, %v3029
        %v3035 = vpack.i.b16 %v3008, %v2974
        %v3037 = vshrl.u32 %v2974, 16
        %v3038 = vshrl.u32 %v3008, 16
        %v3039 = vpack.i.b16 %v3038, %v3037
        %3041 = vxpose.xlu0.c.b16.start [1/8] %v3011, 128
        %3042 = vxpose.xlu0.c.b16.cont [2/8] 0, 128
        %3043 = vxpose.xlu0.c.b16.cont [3/8] 0, 128
        %3044 = vxpose.xlu0.c.b16.cont [4/8] 0, 128
        %3045 = vxpose.xlu0.c.b16.cont [5/8] 0, 128
        %3046 = vxpose.xlu0.c.b16.cont [6/8] 0, 128
        %3047 = vxpose.xlu0.c.b16.cont [7/8] 0, 128
        %3048 = vxpose.xlu0.c.b16.end [8/8] 0, 128
        %v3049 = vpop.trf.xlu0
        %v3050 = vpop.trf.xlu0
        %v3051 = vpop.trf.xlu0
        %v3052 = vpop.trf.xlu0
        %v3053 = vpop.trf.xlu0
        %v3054 = vpop.trf.xlu0
        %v3055 = vpop.trf.xlu0
        %v3056 = vpop.trf.xlu0
        %3057 = vxpose.xlu0.c.b16.start [1/8] %v3015, 128
        %3058 = vxpose.xlu0.c.b16.cont [2/8] 0, 128
        %3059 = vxpose.xlu0.c.b16.cont [3/8] 0, 128
        %3060 = vxpose.xlu0.c.b16.cont [4/8] 0, 128
        %3061 = vxpose.xlu0.c.b16.cont [5/8] 0, 128
        %3062 = vxpose.xlu0.c.b16.cont [6/8] 0, 128
        %3063 = vxpose.xlu0.c.b16.cont [7/8] 0, 128
        %3064 = vxpose.xlu0.c.b16.end [8/8] 0, 128
        %v3065 = vpop.trf.xlu0
        %v3066 = vpop.trf.xlu0
        %v3067 = vpop.trf.xlu0
        %v3068 = vpop.trf.xlu0
        %v3069 = vpop.trf.xlu0
        %v3070 = vpop.trf.xlu0
        %v3071 = vpop.trf.xlu0
        %v3072 = vpop.trf.xlu0
        %3073 = vxpose.xlu0.c.b16.start [1/8] %v3019, 128
        %3074 = vxpose.xlu0.c.b16.cont [2/8] 0, 128
        %3075 = vxpose.xlu0.c.b16.cont [3/8] 0, 128
        %3076 = vxpose.xlu0.c.b16.cont [4/8] 0, 128
        %3077 = vxpose.xlu0.c.b16.cont [5/8] 0, 128
        %3078 = vxpose.xlu0.c.b16.cont [6/8] 0, 128
        %3079 = vxpose.xlu0.c.b16.cont [7/8] 0, 128
        %3080 = vxpose.xlu0.c.b16.end [8/8] 0, 128
        %v3081 = vpop.trf.xlu0
        %v3082 = vpop.trf.xlu0
        %v3083 = vpop.trf.xlu0
        %v3084 = vpop.trf.xlu0
        %v3085 = vpop.trf.xlu0
        %v3086 = vpop.trf.xlu0
        %v3087 = vpop.trf.xlu0
        %v3088 = vpop.trf.xlu0
        %3089 = vxpose.xlu0.c.b16.start [1/8] %v3023, 128
        %3090 = vxpose.xlu0.c.b16.cont [2/8] 0, 128
        %3091 = vxpose.xlu0.c.b16.cont [3/8] 0, 128
        %3092 = vxpose.xlu0.c.b16.cont [4/8] 0, 128
        %3093 = vxpose.xlu0.c.b16.cont [5/8] 0, 128
        %3094 = vxpose.xlu0.c.b16.cont [6/8] 0, 128
        %3095 = vxpose.xlu0.c.b16.cont [7/8] 0, 128
        %3096 = vxpose.xlu0.c.b16.end [8/8] 0, 128
        %v3097 = vpop.trf.xlu0
        %v3098 = vpop.trf.xlu0
        %v3099 = vpop.trf.xlu0
        %v3100 = vpop.trf.xlu0
        %v3101 = vpop.trf.xlu0
        %v3102 = vpop.trf.xlu0
        %v3103 = vpop.trf.xlu0
        %v3104 = vpop.trf.xlu0
        %3105 = vxpose.xlu0.c.b16.start [1/8] %v3027, 128
        %3106 = vxpose.xlu0.c.b16.cont [2/8] 0, 128
        %3107 = vxpose.xlu0.c.b16.cont [3/8] 0, 128
        %3108 = vxpose.xlu0.c.b16.cont [4/8] 0, 128
        %3109 = vxpose.xlu0.c.b16.cont [5/8] 0, 128
        %3110 = vxpose.xlu0.c.b16.cont [6/8] 0, 128
        %3111 = vxpose.xlu0.c.b16.cont [7/8] 0, 128
        %3112 = vxpose.xlu0.c.b16.end [8/8] 0, 128
        %v3113 = vpop.trf.xlu0
        %v3114 = vpop.trf.xlu0
        %v3115 = vpop.trf.xlu0
        %v3116 = vpop.trf.xlu0
        %v3117 = vpop.trf.xlu0
        %v3118 = vpop.trf.xlu0
        %v3119 = vpop.trf.xlu0
        %v3120 = vpop.trf.xlu0
        %3121 = vxpose.xlu0.c.b16.start [1/8] %v3031, 128
        %3122 = vxpose.xlu0.c.b16.cont [2/8] 0, 128
        %3123 = vxpose.xlu0.c.b16.cont [3/8] 0, 128
        %3124 = vxpose.xlu0.c.b16.cont [4/8] 0, 128
        %3125 = vxpose.xlu0.c.b16.cont [5/8] 0, 128
        %3126 = vxpose.xlu0.c.b16.cont [6/8] 0, 128
        %3127 = vxpose.xlu0.c.b16.cont [7/8] 0, 128
        %3128 = vxpose.xlu0.c.b16.end [8/8] 0, 128
        %v3129 = vpop.trf.xlu0
        %v3130 = vpop.trf.xlu0
        %v3131 = vpop.trf.xlu0
        %v3132 = vpop.trf.xlu0
        %v3133 = vpop.trf.xlu0
        %v3134 = vpop.trf.xlu0
        %v3135 = vpop.trf.xlu0
        %v3136 = vpop.trf.xlu0
        %3137 = vxpose.xlu0.c.b16.start [1/8] %v3035, 128
        %3138 = vxpose.xlu0.c.b16.cont [2/8] 0, 128
        %3139 = vxpose.xlu0.c.b16.cont [3/8] 0, 128
        %3140 = vxpose.xlu0.c.b16.cont [4/8] 0, 128
        %3141 = vxpose.xlu0.c.b16.cont [5/8] 0, 128
        %3142 = vxpose.xlu0.c.b16.cont [6/8] 0, 128
        %3143 = vxpose.xlu0.c.b16.cont [7/8] 0, 128
        %3144 = vxpose.xlu0.c.b16.end [8/8] 0, 128
        %v3145 = vpop.trf.xlu0
        %v3146 = vpop.trf.xlu0
        %v3147 = vpop.trf.xlu0
        %v3148 = vpop.trf.xlu0
        %v3149 = vpop.trf.xlu0
        %v3150 = vpop.trf.xlu0
        %v3151 = vpop.trf.xlu0
        %v3152 = vpop.trf.xlu0
        %3153 = vxpose.xlu0.c.b16.start [1/8] %v3039, 128
        %3154 = vxpose.xlu0.c.b16.cont [2/8] 0, 128
        %3155 = vxpose.xlu0.c.b16.cont [3/8] 0, 128
        %3156 = vxpose.xlu0.c.b16.cont [4/8] 0, 128
        %3157 = vxpose.xlu0.c.b16.cont [5/8] 0, 128
        %3158 = vxpose.xlu0.c.b16.cont [6/8] 0, 128
        %3159 = vxpose.xlu0.c.b16.cont [7/8] 0, 128
        %3160 = vxpose.xlu0.c.b16.end [8/8] 0, 128
        %v3161 = vpop.trf.xlu0
        %v3162 = vpop.trf.xlu0
        %v3163 = vpop.trf.xlu0
        %v3164 = vpop.trf.xlu0
        %v3165 = vpop.trf.xlu0
        %v3166 = vpop.trf.xlu0
        %v3167 = vpop.trf.xlu0
        %v3168 = vpop.trf.xlu0
        %v3169 = vcombine.low %v3049, %v3113
        %v3171 = vunpack.c.l.s4 1983009808
        %v3172 = vunpack.c.0.s8 %v3171
        %v3173 = vlaneseq
        %v3174 = vshrl.u32 %v3173, 7
        %v3175 = vsub.s32 %v3172, %v3174
        %v3176 = vrot.slane %v3169, %v3175
        %v3177 = vcombine.low %v3081, %v3145
        %v3179 = vunpack.c.l.s4 1983009808
        %v3180 = vunpack.c.0.s8 %v3179
        %v3181 = vlaneseq
        %v3182 = vshrl.u32 %v3181, 7
        %v3183 = vsub.s32 %v3180, %v3182
        %v3184 = vrot.slane %v3177, %v3183
        %v3185 = vcombine.low %v3176, %v3184
        %v3187 = vunpack.c.l.s4 1934713408
        %v3188 = vunpack.c.0.s8 %v3187
        %v3189 = vlaneseq
        %v3190 = vshrl.u32 %v3189, 7
        %v3191 = vsub.s32 %v3188, %v3190
        %v3192 = vrot.slane %v3185, %v3191
        %v3193 = vcombine.high %v3192, 0
        %v3194 = vcombine.low %v3065, %v3129
        %v3196 = vunpack.c.l.s4 1983009808
        %v3197 = vunpack.c.0.s8 %v3196
        %v3198 = vlaneseq
        %v3199 = vshrl.u32 %v3198, 7
        %v3200 = vsub.s32 %v3197, %v3199
        %v3201 = vrot.slane %v3194, %v3200
        %v3202 = vcombine.low %v3097, %v3161
        %v3204 = vunpack.c.l.s4 1983009808
        %v3205 = vunpack.c.0.s8 %v3204
        %v3206 = vlaneseq
        %v3207 = vshrl.u32 %v3206, 7
        %v3208 = vsub.s32 %v3205, %v3207
        %v3209 = vrot.slane %v3202, %v3208
        %v3210 = vcombine.low %v3201, %v3209
        %v3212 = vunpack.c.l.s4 1934713408
        %v3213 = vunpack.c.0.s8 %v3212
        %v3214 = vlaneseq
        %v3215 = vshrl.u32 %v3214, 7
        %v3216 = vsub.s32 %v3213, %v3215
        %v3217 = vrot.slane %v3210, %v3216
        %v3218 = vcombine.high %v3217, 0
        %v3221 = vpack.i.b16 %v3217, %v3192
        %v3222 = vshrl.u32 %v3192, 16
        %v3223 = vshrl.u32 %v3217, 16
        %v3224 = vpack.i.b16 %v3223, %v3222
        %v3227 = vpack.i.b16 %v3218, %v3193
        %v3228 = vshrl.u32 %v3193, 16
        %v3229 = vshrl.u32 %v3218, 16
        %v3230 = vpack.i.b16 %v3229, %v3228
        %v3232 = vsel %vm2571, %v3221, 0
        %v3235 = vsel %vm2571, %v2801, 0
        %3237 = vmatprep.subr.bf16.mxu0 0
        %3238 = vmatpush1.bf16.xpose.msra.mxu0 %v3235
        %3239 = vmatprep.subr.bf16.mxu0 0
        %3240 = vmatpush1.bf16.xpose.msra.mxu0 0
        %3241 = vmatprep.subr.bf16.mxu0 0
        %3242 = vmatpush1.bf16.xpose.msra.mxu0 0
        %3243 = vmatprep.subr.bf16.mxu0 0
        %3244 = vmatpush1.bf16.xpose.msra.mxu0 0
        %3245 = vmatprep.subr.bf16.mxu0 0
        %3246 = vmatpush1.bf16.xpose.msra.mxu0 0
        %3247 = vmatprep.subr.bf16.mxu0 0
        %3248 = vmatpush1.bf16.xpose.msra.mxu0 0
        %3249 = vmatprep.subr.bf16.mxu0 0
        %3250 = vmatpush1.bf16.xpose.msra.mxu0 0
        %3251 = vmatprep.subr.bf16.mxu0 0
        %3252 = vmatpush1.bf16.xpose.msra.mxu0 0
        %3253 = vmatprep.subr.bf16.mxu0 0
        %3254 = vmatpush1.bf16.xpose.msra.mxu0 0
        %3255 = vmatprep.subr.bf16.mxu0 0
        %3256 = vmatpush1.bf16.xpose.msra.mxu0 0
        %3257 = vmatprep.subr.bf16.mxu0 0
        %3258 = vmatpush1.bf16.xpose.msra.mxu0 0
        %3259 = vmatprep.subr.bf16.mxu0 0
        %3260 = vmatpush1.bf16.xpose.msra.mxu0 0
        %3261 = vmatprep.subr.bf16.mxu0 0
        %3262 = vmatpush1.bf16.xpose.msra.mxu0 0
        %3263 = vmatprep.subr.bf16.mxu0 0
        %3264 = vmatpush1.bf16.xpose.msra.mxu0 0
        %3265 = vmatprep.subr.bf16.mxu0 0
        %3266 = vmatpush1.bf16.xpose.msra.mxu0 0
        %3267 = vmatprep.subr.bf16.mxu0 0
        %3268 = vmatpush1.bf16.xpose.msra.mxu0 0
        %3269 = vmatprep.mubr.bf16.mxu0 0
        %3270 = vmatmul.mubr.bf16.gmra.mrb[0].mxu0 %v3232
        %v3271 = vpop.f32.mrb[0].mxu0
        %v3272 = vadd.f32 0.0, %v3271
        %v3273 = vpop.f32.mrb[0].mxu0
        %v3274 = vpop.f32.mrb[0].mxu0
        %v3275 = vpop.f32.mrb[0].mxu0
        %3276 = vdwg.mxu0
        %v3278 = vsel %vm2571, %v3224, 0
        %v3281 = vsel %vm2571, %v2802, 0
        %3283 = vmatprep.subr.bf16.mxu0 0
        %3284 = vmatpush1.bf16.xpose.msra.mxu0 %v3281
        %3285 = vmatprep.subr.bf16.mxu0 0
        %3286 = vmatpush1.bf16.xpose.msra.mxu0 0
        %3287 = vmatprep.subr.bf16.mxu0 0
        %3288 = vmatpush1.bf16.xpose.msra.mxu0 0
        %3289 = vmatprep.subr.bf16.mxu0 0
        %3290 = vmatpush1.bf16.xpose.msra.mxu0 0
        %3291 = vmatprep.subr.bf16.mxu0 0
        %3292 = vmatpush1.bf16.xpose.msra.mxu0 0
        %3293 = vmatprep.subr.bf16.mxu0 0
        %3294 = vmatpush1.bf16.xpose.msra.mxu0 0
        %3295 = vmatprep.subr.bf16.mxu0 0
        %3296 = vmatpush1.bf16.xpose.msra.mxu0 0
        %3297 = vmatprep.subr.bf16.mxu0 0
        %3298 = vmatpush1.bf16.xpose.msra.mxu0 0
        %3299 = vmatprep.subr.bf16.mxu0 0
        %3300 = vmatpush1.bf16.xpose.msra.mxu0 0
        %3301 = vmatprep.subr.bf16.mxu0 0
        %3302 = vmatpush1.bf16.xpose.msra.mxu0 0
        %3303 = vmatprep.subr.bf16.mxu0 0
        %3304 = vmatpush1.bf16.xpose.msra.mxu0 0
        %3305 = vmatprep.subr.bf16.mxu0 0
        %3306 = vmatpush1.bf16.xpose.msra.mxu0 0
        %3307 = vmatprep.subr.bf16.mxu0 0
        %3308 = vmatpush1.bf16.xpose.msra.mxu0 0
        %3309 = vmatprep.subr.bf16.mxu0 0
        %3310 = vmatpush1.bf16.xpose.msra.mxu0 0
        %3311 = vmatprep.subr.bf16.mxu0 0
        %3312 = vmatpush1.bf16.xpose.msra.mxu0 0
        %3313 = vmatprep.subr.bf16.mxu0 0
        %3314 = vmatpush1.bf16.xpose.msra.mxu0 0
        %3315 = vmatprep.mubr.bf16.mxu0 0
        %3316 = vmatmul.mubr.bf16.gmra.mrb[0].mxu0 %v3278
        %v3317 = vpop.f32.mrb[0].mxu0
        %v3318 = vadd.f32 0.0, %v3317
        %v3319 = vpop.f32.mrb[0].mxu0
        %v3320 = vpop.f32.mrb[0].mxu0
        %v3321 = vpop.f32.mrb[0].mxu0
        %3322 = vdwg.mxu0
        %v3324 = vsel %vm2571, %v3227, 0
        %v3327 = vsel %vm2571, %v2803, 0
        %3329 = vmatprep.subr.bf16.mxu0 0
        %3330 = vmatpush1.bf16.xpose.msra.mxu0 %v3327
        %3331 = vmatprep.subr.bf16.mxu0 0
        %3332 = vmatpush1.bf16.xpose.msra.mxu0 0
        %3333 = vmatprep.subr.bf16.mxu0 0
        %3334 = vmatpush1.bf16.xpose.msra.mxu0 0
        %3335 = vmatprep.subr.bf16.mxu0 0
        %3336 = vmatpush1.bf16.xpose.msra.mxu0 0
        %3337 = vmatprep.subr.bf16.mxu0 0
        %3338 = vmatpush1.bf16.xpose.msra.mxu0 0
        %3339 = vmatprep.subr.bf16.mxu0 0
        %3340 = vmatpush1.bf16.xpose.msra.mxu0 0
        %3341 = vmatprep.subr.bf16.mxu0 0
        %3342 = vmatpush1.bf16.xpose.msra.mxu0 0
        %3343 = vmatprep.subr.bf16.mxu0 0
        %3344 = vmatpush1.bf16.xpose.msra.mxu0 0
        %3345 = vmatprep.subr.bf16.mxu0 0
        %3346 = vmatpush1.bf16.xpose.msra.mxu0 0
        %3347 = vmatprep.subr.bf16.mxu0 0
        %3348 = vmatpush1.bf16.xpose.msra.mxu0 0
        %3349 = vmatprep.subr.bf16.mxu0 0
        %3350 = vmatpush1.bf16.xpose.msra.mxu0 0
        %3351 = vmatprep.subr.bf16.mxu0 0
        %3352 = vmatpush1.bf16.xpose.msra.mxu0 0
        %3353 = vmatprep.subr.bf16.mxu0 0
        %3354 = vmatpush1.bf16.xpose.msra.mxu0 0
        %3355 = vmatprep.subr.bf16.mxu0 0
        %3356 = vmatpush1.bf16.xpose.msra.mxu0 0
        %3357 = vmatprep.subr.bf16.mxu0 0
        %3358 = vmatpush1.bf16.xpose.msra.mxu0 0
        %3359 = vmatprep.subr.bf16.mxu0 0
        %3360 = vmatpush1.bf16.xpose.msra.mxu0 0
        %3361 = vmatprep.mubr.bf16.mxu0 0
        %3362 = vmatmul.mubr.bf16.gmra.mrb[0].mxu0 %v3324
        %v3363 = vpop.f32.mrb[0].mxu0
        %v3364 = vadd.f32 0.0, %v3363
        %v3365 = vpop.f32.mrb[0].mxu0
        %v3366 = vpop.f32.mrb[0].mxu0
        %v3367 = vpop.f32.mrb[0].mxu0
        %3368 = vdwg.mxu0
        %v3370 = vsel %vm2571, %v3230, 0
        %v3373 = vsel %vm2571, %v2804, 0
        %3375 = vmatprep.subr.bf16.mxu0 0
        %3376 = vmatpush1.bf16.xpose.msra.mxu0 %v3373
        %3377 = vmatprep.subr.bf16.mxu0 0
        %3378 = vmatpush1.bf16.xpose.msra.mxu0 0
        %3379 = vmatprep.subr.bf16.mxu0 0
        %3380 = vmatpush1.bf16.xpose.msra.mxu0 0
        %3381 = vmatprep.subr.bf16.mxu0 0
        %3382 = vmatpush1.bf16.xpose.msra.mxu0 0
        %3383 = vmatprep.subr.bf16.mxu0 0
        %3384 = vmatpush1.bf16.xpose.msra.mxu0 0
        %3385 = vmatprep.subr.bf16.mxu0 0
        %3386 = vmatpush1.bf16.xpose.msra.mxu0 0
        %3387 = vmatprep.subr.bf16.mxu0 0
        %3388 = vmatpush1.bf16.xpose.msra.mxu0 0
        %3389 = vmatprep.subr.bf16.mxu0 0
        %3390 = vmatpush1.bf16.xpose.msra.mxu0 0
        %3391 = vmatprep.subr.bf16.mxu0 0
        %3392 = vmatpush1.bf16.xpose.msra.mxu0 0
        %3393 = vmatprep.subr.bf16.mxu0 0
        %3394 = vmatpush1.bf16.xpose.msra.mxu0 0
        %3395 = vmatprep.subr.bf16.mxu0 0
        %3396 = vmatpush1.bf16.xpose.msra.mxu0 0
        %3397 = vmatprep.subr.bf16.mxu0 0
        %3398 = vmatpush1.bf16.xpose.msra.mxu0 0
        %3399 = vmatprep.subr.bf16.mxu0 0
        %3400 = vmatpush1.bf16.xpose.msra.mxu0 0
        %3401 = vmatprep.subr.bf16.mxu0 0
        %3402 = vmatpush1.bf16.xpose.msra.mxu0 0
        %3403 = vmatprep.subr.bf16.mxu0 0
        %3404 = vmatpush1.bf16.xpose.msra.mxu0 0
        %3405 = vmatprep.subr.bf16.mxu0 0
        %3406 = vmatpush1.bf16.xpose.msra.mxu0 0
        %3407 = vmatprep.mubr.bf16.mxu0 0
        %3408 = vmatmul.mubr.bf16.gmra.mrb[0].mxu0 %v3370
        %v3409 = vpop.f32.mrb[0].mxu0
        %v3410 = vadd.f32 0.0, %v3409
        %v3411 = vpop.f32.mrb[0].mxu0
        %v3412 = vpop.f32.mrb[0].mxu0
        %v3413 = vpop.f32.mrb[0].mxu0
        %3414 = vdwg.mxu0
        %3415 = vxpose.xlu0.b32.start [1/16] %v3272, 128
        %3416 = vxpose.xlu0.b32.cont [2/16] 0.0, 128
        %3417 = vxpose.xlu0.b32.cont [3/16] 0.0, 128
        %3418 = vxpose.xlu0.b32.cont [4/16] 0.0, 128
        %3419 = vxpose.xlu0.b32.cont [5/16] 0.0, 128
        %3420 = vxpose.xlu0.b32.cont [6/16] 0.0, 128
        %3421 = vxpose.xlu0.b32.cont [7/16] 0.0, 128
        %3422 = vxpose.xlu0.b32.cont [8/16] 0.0, 128
        %3423 = vxpose.xlu0.b32.cont [9/16] 0.0, 128
        %3424 = vxpose.xlu0.b32.cont [10/16] 0.0, 128
        %3425 = vxpose.xlu0.b32.cont [11/16] 0.0, 128
        %3426 = vxpose.xlu0.b32.cont [12/16] 0.0, 128
        %3427 = vxpose.xlu0.b32.cont [13/16] 0.0, 128
        %3428 = vxpose.xlu0.b32.cont [14/16] 0.0, 128
        %3429 = vxpose.xlu0.b32.cont [15/16] 0.0, 128
        %3430 = vxpose.xlu0.b32.end [16/16] 0.0, 128
        %v3431 = vpop.trf.xlu0
        %v3432 = vpop.trf.xlu0
        %v3433 = vpop.trf.xlu0
        %v3434 = vpop.trf.xlu0
        %v3435 = vpop.trf.xlu0
        %v3436 = vpop.trf.xlu0
        %v3437 = vpop.trf.xlu0
        %v3438 = vpop.trf.xlu0
        %v3439 = vpop.trf.xlu0
        %v3440 = vpop.trf.xlu0
        %v3441 = vpop.trf.xlu0
        %v3442 = vpop.trf.xlu0
        %v3443 = vpop.trf.xlu0
        %v3444 = vpop.trf.xlu0
        %v3445 = vpop.trf.xlu0
        %v3446 = vpop.trf.xlu0
        %3447 = vxpose.xlu0.b32.start [1/16] %v3318, 128
        %3448 = vxpose.xlu0.b32.cont [2/16] 0.0, 128
        %3449 = vxpose.xlu0.b32.cont [3/16] 0.0, 128
        %3450 = vxpose.xlu0.b32.cont [4/16] 0.0, 128
        %3451 = vxpose.xlu0.b32.cont [5/16] 0.0, 128
        %3452 = vxpose.xlu0.b32.cont [6/16] 0.0, 128
        %3453 = vxpose.xlu0.b32.cont [7/16] 0.0, 128
        %3454 = vxpose.xlu0.b32.cont [8/16] 0.0, 128
        %3455 = vxpose.xlu0.b32.cont [9/16] 0.0, 128
        %3456 = vxpose.xlu0.b32.cont [10/16] 0.0, 128
        %3457 = vxpose.xlu0.b32.cont [11/16] 0.0, 128
        %3458 = vxpose.xlu0.b32.cont [12/16] 0.0, 128
        %3459 = vxpose.xlu0.b32.cont [13/16] 0.0, 128
        %3460 = vxpose.xlu0.b32.cont [14/16] 0.0, 128
        %3461 = vxpose.xlu0.b32.cont [15/16] 0.0, 128
        %3462 = vxpose.xlu0.b32.end [16/16] 0.0, 128
        %v3463 = vpop.trf.xlu0
        %v3464 = vpop.trf.xlu0
        %v3465 = vpop.trf.xlu0
        %v3466 = vpop.trf.xlu0
        %v3467 = vpop.trf.xlu0
        %v3468 = vpop.trf.xlu0
        %v3469 = vpop.trf.xlu0
        %v3470 = vpop.trf.xlu0
        %v3471 = vpop.trf.xlu0
        %v3472 = vpop.trf.xlu0
        %v3473 = vpop.trf.xlu0
        %v3474 = vpop.trf.xlu0
        %v3475 = vpop.trf.xlu0
        %v3476 = vpop.trf.xlu0
        %v3477 = vpop.trf.xlu0
        %v3478 = vpop.trf.xlu0
        %3479 = vxpose.xlu0.b32.start [1/16] %v3364, 128
        %3480 = vxpose.xlu0.b32.cont [2/16] 0.0, 128
        %3481 = vxpose.xlu0.b32.cont [3/16] 0.0, 128
        %3482 = vxpose.xlu0.b32.cont [4/16] 0.0, 128
        %3483 = vxpose.xlu0.b32.cont [5/16] 0.0, 128
        %3484 = vxpose.xlu0.b32.cont [6/16] 0.0, 128
        %3485 = vxpose.xlu0.b32.cont [7/16] 0.0, 128
        %3486 = vxpose.xlu0.b32.cont [8/16] 0.0, 128
        %3487 = vxpose.xlu0.b32.cont [9/16] 0.0, 128
        %3488 = vxpose.xlu0.b32.cont [10/16] 0.0, 128
        %3489 = vxpose.xlu0.b32.cont [11/16] 0.0, 128
        %3490 = vxpose.xlu0.b32.cont [12/16] 0.0, 128
        %3491 = vxpose.xlu0.b32.cont [13/16] 0.0, 128
        %3492 = vxpose.xlu0.b32.cont [14/16] 0.0, 128
        %3493 = vxpose.xlu0.b32.cont [15/16] 0.0, 128
        %3494 = vxpose.xlu0.b32.end [16/16] 0.0, 128
        %v3495 = vpop.trf.xlu0
        %v3496 = vpop.trf.xlu0
        %v3497 = vpop.trf.xlu0
        %v3498 = vpop.trf.xlu0
        %v3499 = vpop.trf.xlu0
        %v3500 = vpop.trf.xlu0
        %v3501 = vpop.trf.xlu0
        %v3502 = vpop.trf.xlu0
        %v3503 = vpop.trf.xlu0
        %v3504 = vpop.trf.xlu0
        %v3505 = vpop.trf.xlu0
        %v3506 = vpop.trf.xlu0
        %v3507 = vpop.trf.xlu0
        %v3508 = vpop.trf.xlu0
        %v3509 = vpop.trf.xlu0
        %v3510 = vpop.trf.xlu0
        %3511 = vxpose.xlu0.b32.start [1/16] %v3410, 128
        %3512 = vxpose.xlu0.b32.cont [2/16] 0.0, 128
        %3513 = vxpose.xlu0.b32.cont [3/16] 0.0, 128
        %3514 = vxpose.xlu0.b32.cont [4/16] 0.0, 128
        %3515 = vxpose.xlu0.b32.cont [5/16] 0.0, 128
        %3516 = vxpose.xlu0.b32.cont [6/16] 0.0, 128
        %3517 = vxpose.xlu0.b32.cont [7/16] 0.0, 128
        %3518 = vxpose.xlu0.b32.cont [8/16] 0.0, 128
        %3519 = vxpose.xlu0.b32.cont [9/16] 0.0, 128
        %3520 = vxpose.xlu0.b32.cont [10/16] 0.0, 128
        %3521 = vxpose.xlu0.b32.cont [11/16] 0.0, 128
        %3522 = vxpose.xlu0.b32.cont [12/16] 0.0, 128
        %3523 = vxpose.xlu0.b32.cont [13/16] 0.0, 128
        %3524 = vxpose.xlu0.b32.cont [14/16] 0.0, 128
        %3525 = vxpose.xlu0.b32.cont [15/16] 0.0, 128
        %3526 = vxpose.xlu0.b32.end [16/16] 0.0, 128
        %v3527 = vpop.trf.xlu0
        %v3528 = vpop.trf.xlu0
        %v3529 = vpop.trf.xlu0
        %v3530 = vpop.trf.xlu0
        %v3531 = vpop.trf.xlu0
        %v3532 = vpop.trf.xlu0
        %v3533 = vpop.trf.xlu0
        %v3534 = vpop.trf.xlu0
        %v3535 = vpop.trf.xlu0
        %v3536 = vpop.trf.xlu0
        %v3537 = vpop.trf.xlu0
        %v3538 = vpop.trf.xlu0
        %v3539 = vpop.trf.xlu0
        %v3540 = vpop.trf.xlu0
        %v3541 = vpop.trf.xlu0
        %v3542 = vpop.trf.xlu0
        %v3543 = vcombine.low %v3431, %v3495
        %v3544 = vcombine.high %v3431, %v3495
        %v3546 = vunpack.c.l.s4 1983009808
        %v3547 = vunpack.c.0.s8 %v3546
        %v3548 = vlaneseq
        %v3549 = vshrl.u32 %v3548, 7
        %v3550 = vsub.s32 %v3547, %v3549
        %v3551 = vrot.slane %v3543, %v3550
        %v3553 = vunpack.c.l.s4 1983009808
        %v3554 = vunpack.c.0.s8 %v3553
        %v3555 = vlaneseq
        %v3556 = vshrl.u32 %v3555, 7
        %v3557 = vsub.s32 %v3554, %v3556
        %v3558 = vrot.slane %v3544, %v3557
        %v3559 = vcombine.low %v3463, %v3527
        %v3560 = vcombine.high %v3463, %v3527
        %v3562 = vunpack.c.l.s4 1983009808
        %v3563 = vunpack.c.0.s8 %v3562
        %v3564 = vlaneseq
        %v3565 = vshrl.u32 %v3564, 7
        %v3566 = vsub.s32 %v3563, %v3565
        %v3567 = vrot.slane %v3559, %v3566
        %v3569 = vunpack.c.l.s4 1983009808
        %v3570 = vunpack.c.0.s8 %v3569
        %v3571 = vlaneseq
        %v3572 = vshrl.u32 %v3571, 7
        %v3573 = vsub.s32 %v3570, %v3572
        %v3574 = vrot.slane %v3560, %v3573
        %v3575 = vcombine.low %v3551, %v3567
        %v3576 = vcombine.high %v3551, %v3567
        %v3578 = vunpack.c.l.s4 1934713408
        %v3579 = vunpack.c.0.s8 %v3578
        %v3580 = vlaneseq
        %v3581 = vshrl.u32 %v3580, 7
        %v3582 = vsub.s32 %v3579, %v3581
        %v3583 = vrot.slane %v3575, %v3582
        %v3585 = vunpack.c.l.s4 1934713408
        %v3586 = vunpack.c.0.s8 %v3585
        %v3587 = vlaneseq
        %v3588 = vshrl.u32 %v3587, 7
        %v3589 = vsub.s32 %v3586, %v3588
        %v3590 = vrot.slane %v3576, %v3589
        %v3591 = vcombine.low %v3558, %v3574
        %v3592 = vcombine.high %v3558, %v3574
        %v3594 = vunpack.c.l.s4 1934713408
        %v3595 = vunpack.c.0.s8 %v3594
        %v3596 = vlaneseq
        %v3597 = vshrl.u32 %v3596, 7
        %v3598 = vsub.s32 %v3595, %v3597
        %v3599 = vrot.slane %v3591, %v3598
        %v3601 = vunpack.c.l.s4 1934713408
        %v3602 = vunpack.c.0.s8 %v3601
        %v3603 = vlaneseq
        %v3604 = vshrl.u32 %v3603, 7
        %v3605 = vsub.s32 %v3602, %v3604
        %v3606 = vrot.slane %v3592, %v3605
        %v3607 = vcombine.high %v3583, 0.0
        %v3608 = vcombine.high %v3590, 0.0
        %v3609 = vcombine.high %v3599, 0.0
        %v3610 = vcombine.high %v3606, 0.0
        %v3611 = vcombine.low %v3583, %v3590
        %v3613 = vunpack.c.l.s4 1983009808
        %v3614 = vunpack.c.0.s8 %v3613
        %v3615 = vlaneseq
        %v3616 = vshrl.u32 %v3615, 7
        %v3617 = vsub.s32 %v3614, %v3616
        %v3618 = vrot.slane %v3611, %v3617
        %v3619 = vcombine.low %v3607, %v3608
        %v3621 = vunpack.c.l.s4 1983009808
        %v3622 = vunpack.c.0.s8 %v3621
        %v3623 = vlaneseq
        %v3624 = vshrl.u32 %v3623, 7
        %v3625 = vsub.s32 %v3622, %v3624
        %v3626 = vrot.slane %v3619, %v3625
        %v3627 = vcombine.low %v3599, %v3606
        %v3629 = vunpack.c.l.s4 1983009808
        %v3630 = vunpack.c.0.s8 %v3629
        %v3631 = vlaneseq
        %v3632 = vshrl.u32 %v3631, 7
        %v3633 = vsub.s32 %v3630, %v3632
        %v3634 = vrot.slane %v3627, %v3633
        %v3635 = vcombine.low %v3609, %v3610
        %v3637 = vunpack.c.l.s4 1983009808
        %v3638 = vunpack.c.0.s8 %v3637
        %v3639 = vlaneseq
        %v3640 = vshrl.u32 %v3639, 7
        %v3641 = vsub.s32 %v3638, %v3640
        %v3642 = vrot.slane %v3635, %v3641
        %v3643 = vcombine.low %v3618, %v3626
        %v3644 = vcombine.high %v3618, %v3626
        %v3646 = vunpack.c.l.s4 1934713408
        %v3647 = vunpack.c.0.s8 %v3646
        %v3648 = vlaneseq
        %v3649 = vshrl.u32 %v3648, 7
        %v3650 = vsub.s32 %v3647, %v3649
        %v3651 = vrot.slane %v3643, %v3650
        %v3653 = vunpack.c.l.s4 1934713408
        %v3654 = vunpack.c.0.s8 %v3653
        %v3655 = vlaneseq
        %v3656 = vshrl.u32 %v3655, 7
        %v3657 = vsub.s32 %v3654, %v3656
        %v3658 = vrot.slane %v3644, %v3657
        %v3659 = vcombine.low %v3634, %v3642
        %v3660 = vcombine.high %v3634, %v3642
        %v3662 = vunpack.c.l.s4 1934713408
        %v3663 = vunpack.c.0.s8 %v3662
        %v3664 = vlaneseq
        %v3665 = vshrl.u32 %v3664, 7
        %v3666 = vsub.s32 %v3663, %v3665
        %v3667 = vrot.slane %v3659, %v3666
        %v3669 = vunpack.c.l.s4 1934713408
        %v3670 = vunpack.c.0.s8 %v3669
        %v3671 = vlaneseq
        %v3672 = vshrl.u32 %v3671, 7
        %v3673 = vsub.s32 %v3670, %v3672
        %v3674 = vrot.slane %v3660, %v3673
        %v3675 = vcombine.low %v3651, %v3667
        %v3676 = vcombine.high %v3651, %v3667
        %v3677 = vcombine.low %v3658, %v3674
        %v3678 = vcombine.high %v3658, %v3674
        %3680 = vrot.lane.b32.xlu0 %v3676, 8
        %v3681 = vpop.permute.xlu0 %3680
        %3684 = vrot.lane.b32.xlu0 %v3677, 16
        %v3685 = vpop.permute.xlu0 %3684
        %3688 = vrot.lane.b32.xlu0 %v3678, 24
        %v3689 = vpop.permute.xlu0 %3688
        %v3691 = vsel %vm2571, %v3675, %v3681
        %vm3692 = vcmask 130048
        %v3693 = vsel %vm3692, %v3691, %v3685
        %vm3694 = vcmask 195584
        %v3695 = vsel %vm3694, %v3693, %v3689
        %v3696 = vpack.c.bf16 %v3695, %v3695
        %v3697 = vld [vmem:[%s1596] sm:$0xf]
        %v3698 = vld [vmem:[%s1596 + $0x4] sm:$0xf]
        %v3699 = vld [vmem:[%s1596 + $0x8] sm:$0xf]
        %v3700 = vld [vmem:[%s1596 + $0xc] sm:$0xf]
        %v3701 = vld [vmem:[%s1323] sm:$0x1]
        %v3703 = vlaneseq
        %v3704 = vshrl.u32 %v3703, 7
        %v3705 = vsub.s32 0, %v3704
        %v3706 = vrot.slane %v3701, %v3705
        %v3712 = vunpack.c.l.b16 %v3697
        %v3713 = vunpack.c.l.b16 %v3698
        %v3714 = vunpack.c.l.b16 %v3699
        %v3715 = vunpack.c.l.b16 %v3700
        %v3716 = vpack.c.b16 %v3713, %v3712
        %v3717 = vpack.c.b16 %v3715, %v3714
        %v3721 = vsel %vm1667, %v3696, 0
        %3723 = vmatprep.subr.bf16.mxu0 0
        %3724 = vmatpush1.bf16.msra.mxu0 %v3716
        %3725 = vmatprep.subr.bf16.mxu0 0
        %3726 = vmatpush1.bf16.msra.mxu0 %v3717
        %3727 = vmatprep.subr.bf16.mxu0 0
        %3728 = vmatpush1.bf16.msra.mxu0 0
        %3729 = vmatprep.subr.bf16.mxu0 0
        %3730 = vmatpush1.bf16.msra.mxu0 0
        %3731 = vmatprep.subr.bf16.mxu0 0
        %3732 = vmatpush1.bf16.msra.mxu0 0
        %3733 = vmatprep.subr.bf16.mxu0 0
        %3734 = vmatpush1.bf16.msra.mxu0 0
        %3735 = vmatprep.subr.bf16.mxu0 0
        %3736 = vmatpush1.bf16.msra.mxu0 0
        %3737 = vmatprep.subr.bf16.mxu0 0
        %3738 = vmatpush1.bf16.msra.mxu0 0
        %3739 = vmatprep.subr.bf16.mxu0 0
        %3740 = vmatpush1.bf16.msra.mxu0 0
        %3741 = vmatprep.subr.bf16.mxu0 0
        %3742 = vmatpush1.bf16.msra.mxu0 0
        %3743 = vmatprep.subr.bf16.mxu0 0
        %3744 = vmatpush1.bf16.msra.mxu0 0
        %3745 = vmatprep.subr.bf16.mxu0 0
        %3746 = vmatpush1.bf16.msra.mxu0 0
        %3747 = vmatprep.subr.bf16.mxu0 0
        %3748 = vmatpush1.bf16.msra.mxu0 0
        %3749 = vmatprep.subr.bf16.mxu0 0
        %3750 = vmatpush1.bf16.msra.mxu0 0
        %3751 = vmatprep.subr.bf16.mxu0 0
        %3752 = vmatpush1.bf16.msra.mxu0 0
        %3753 = vmatprep.subr.bf16.mxu0 0
        %3754 = vmatpush1.bf16.msra.mxu0 0
        %3755 = vmatprep.mubr.bf16.mxu0 0
        %3756 = vmatmul.mubr.bf16.gmra.mrb[0].mxu0 %v3721
        %v3757 = vpop.f32.mrb[0].mxu0
        %v3758 = vadd.f32 %v3706, %v3757
        %v3759 = vpop.f32.mrb[0].mxu0
        %v3760 = vpop.f32.mrb[0].mxu0
        %v3761 = vpop.f32.mrb[0].mxu0
        %3762 = vdwg.mxu0
        %v3763 = vadd.f32 %v1636, %v3758
        %v3764 = vsel %vm1667, %v3763, 0.0
        %3765 = vadd.xlane.f32.xlu0 %v3764
        %v3766 = vpop.xlane.xlu0 %3765
        %v3767 = vrcp.pop 32.0
        %v3768 = vmul.f32 %v3766, %v3767
        %v3769 = vsub.f32 %v3763, %v3768
        %v3770 = vmul.f32 %v3769, %v3769
        %v3771 = vsel %vm1667, %v3770, 0.0
        %3772 = vadd.xlane.f32.xlu0 %v3771
        %v3773 = vpop.xlane.xlu0 %3772
        %v3774 = vmul.f32 %v3773, %v3767
        %v3775 = vadd.f32 %v3774, 1e-05
        %v3776 = vrsqrt.pop %v3775
        %v3777 = vmul.f32 %v3769, %v3776
        %v3778 = vld [vmem:[%s1602] sm:$0x1]
        %v3780 = vlaneseq
        %v3781 = vshrl.u32 %v3780, 7
        %v3782 = vsub.s32 0, %v3781
        %v3783 = vrot.slane %v3778, %v3782
        %v3785 = vmul.f32 %v3777, %v3783
        %v3786 = vld [vmem:[%s1605] sm:$0x1]
        %v3788 = vlaneseq
        %v3789 = vshrl.u32 %v3788, 7
        %v3790 = vsub.s32 0, %v3789
        %v3791 = vrot.slane %v3786, %v3790
        %v3793 = vadd.f32 %v3785, %v3791
        %v3794 = vadd.f32 %v3793, %v1641
        %v3795 = vpack.c.bf16 %v3794, %v3794
        %v3796 = vld [vmem:[%s1332] sm:$0xf]
        %v3797 = vld [vmem:[%s1332 + $0x4] sm:$0xf]
        %v3798 = vld [vmem:[%s1332 + $0x8] sm:$0xf]
        %v3799 = vld [vmem:[%s1332 + $0xc] sm:$0xf]
        %v3800 = vld [vmem:[%s1358] sm:$0x1]
        %v3802 = vlaneseq
        %v3803 = vshrl.u32 %v3802, 7
        %v3804 = vsub.s32 0, %v3803
        %v3805 = vrot.slane %v3800, %v3804
        %v3811 = vunpack.c.l.b16 %v3796
        %v3812 = vunpack.c.l.b16 %v3797
        %v3813 = vunpack.c.l.b16 %v3798
        %v3814 = vunpack.c.l.b16 %v3799
        %v3815 = vpack.c.b16 %v3812, %v3811
        %v3816 = vpack.c.b16 %v3814, %v3813
        %v3820 = vsel %vm1667, %v3795, 0
        %3822 = vmatprep.subr.bf16.mxu0 0
        %3823 = vmatpush1.bf16.msra.mxu0 %v3815
        %3824 = vmatprep.subr.bf16.mxu0 0
        %3825 = vmatpush1.bf16.msra.mxu0 %v3816
        %3826 = vmatprep.subr.bf16.mxu0 0
        %3827 = vmatpush1.bf16.msra.mxu0 0
        %3828 = vmatprep.subr.bf16.mxu0 0
        %3829 = vmatpush1.bf16.msra.mxu0 0
        %3830 = vmatprep.subr.bf16.mxu0 0
        %3831 = vmatpush1.bf16.msra.mxu0 0
        %3832 = vmatprep.subr.bf16.mxu0 0
        %3833 = vmatpush1.bf16.msra.mxu0 0
        %3834 = vmatprep.subr.bf16.mxu0 0
        %3835 = vmatpush1.bf16.msra.mxu0 0
        %3836 = vmatprep.subr.bf16.mxu0 0
        %3837 = vmatpush1.bf16.msra.mxu0 0
        %3838 = vmatprep.subr.bf16.mxu0 0
        %3839 = vmatpush1.bf16.msra.mxu0 0
        %3840 = vmatprep.subr.bf16.mxu0 0
        %3841 = vmatpush1.bf16.msra.mxu0 0
        %3842 = vmatprep.subr.bf16.mxu0 0
        %3843 = vmatpush1.bf16.msra.mxu0 0
        %3844 = vmatprep.subr.bf16.mxu0 0
        %3845 = vmatpush1.bf16.msra.mxu0 0
        %3846 = vmatprep.subr.bf16.mxu0 0
        %3847 = vmatpush1.bf16.msra.mxu0 0
        %3848 = vmatprep.subr.bf16.mxu0 0
        %3849 = vmatpush1.bf16.msra.mxu0 0
        %3850 = vmatprep.subr.bf16.mxu0 0
        %3851 = vmatpush1.bf16.msra.mxu0 0
        %3852 = vmatprep.subr.bf16.mxu0 0
        %3853 = vmatpush1.bf16.msra.mxu0 0
        %3854 = vmatprep.mubr.bf16.mxu0 0
        %3855 = vmatmul.mubr.bf16.gmra.mrb[0].mxu0 %v3820
        %v3856 = vpop.f32.mrb[0].mxu0
        %v3857 = vadd.f32 %v3805, %v3856
        %v3858 = vpop.f32.mrb[0].mxu0
        %v3859 = vpop.f32.mrb[0].mxu0
        %v3860 = vpop.f32.mrb[0].mxu0
        %3861 = vdwg.mxu0
        %v3862 = vpack.c.bf16 %v1640, %v1639
        %v3863 = vld [vmem:[%s1341] sm:$0xf]
        %v3864 = vld [vmem:[%s1341 + $0x4] sm:$0xf]
        %v3865 = vld [vmem:[%s1341 + $0x8] sm:$0xf]
        %v3866 = vld [vmem:[%s1341 + $0xc] sm:$0xf]
        %v3867 = vld [vmem:[%s1366] sm:$0x1]
        %v3869 = vlaneseq
        %v3870 = vshrl.u32 %v3869, 7
        %v3871 = vsub.s32 0, %v3870
        %v3872 = vrot.slane %v3867, %v3871
        %v3878 = vunpack.c.l.b16 %v3863
        %v3879 = vunpack.c.l.b16 %v3864
        %v3880 = vunpack.c.l.b16 %v3865
        %v3881 = vunpack.c.l.b16 %v3866
        %v3882 = vpack.c.b16 %v3879, %v3878
        %v3883 = vpack.c.b16 %v3881, %v3880
        %v3887 = vsel %vm1667, %v3862, 0
        %3889 = vmatprep.subr.bf16.mxu0 0
        %3890 = vmatpush1.bf16.msra.mxu0 %v3882
        %3891 = vmatprep.subr.bf16.mxu0 0
        %3892 = vmatpush1.bf16.msra.mxu0 %v3883
        %3893 = vmatprep.subr.bf16.mxu0 0
        %3894 = vmatpush1.bf16.msra.mxu0 0
        %3895 = vmatprep.subr.bf16.mxu0 0
        %3896 = vmatpush1.bf16.msra.mxu0 0
        %3897 = vmatprep.subr.bf16.mxu0 0
        %3898 = vmatpush1.bf16.msra.mxu0 0
        %3899 = vmatprep.subr.bf16.mxu0 0
        %3900 = vmatpush1.bf16.msra.mxu0 0
        %3901 = vmatprep.subr.bf16.mxu0 0
        %3902 = vmatpush1.bf16.msra.mxu0 0
        %3903 = vmatprep.subr.bf16.mxu0 0
        %3904 = vmatpush1.bf16.msra.mxu0 0
        %3905 = vmatprep.subr.bf16.mxu0 0
        %3906 = vmatpush1.bf16.msra.mxu0 0
        %3907 = vmatprep.subr.bf16.mxu0 0
        %3908 = vmatpush1.bf16.msra.mxu0 0
        %3909 = vmatprep.subr.bf16.mxu0 0
        %3910 = vmatpush1.bf16.msra.mxu0 0
        %3911 = vmatprep.subr.bf16.mxu0 0
        %3912 = vmatpush1.bf16.msra.mxu0 0
        %3913 = vmatprep.subr.bf16.mxu0 0
        %3914 = vmatpush1.bf16.msra.mxu0 0
        %3915 = vmatprep.subr.bf16.mxu0 0
        %3916 = vmatpush1.bf16.msra.mxu0 0
        %3917 = vmatprep.subr.bf16.mxu0 0
        %3918 = vmatpush1.bf16.msra.mxu0 0
        %3919 = vmatprep.subr.bf16.mxu0 0
        %3920 = vmatpush1.bf16.msra.mxu0 0
        %3921 = vmatprep.mubr.bf16.mxu0 0
        %3922 = vmatmul.mubr.bf16.gmra.mrb[0].mxu0 %v3887
        %v3923 = vpop.f32.mrb[0].mxu0
        %v3924 = vadd.f32 %v3872, %v3923
        %v3925 = vpop.f32.mrb[0].mxu0
        %v3926 = vpop.f32.mrb[0].mxu0
        %v3927 = vadd.f32 %v3872, %v3926
        %v3928 = vpop.f32.mrb[0].mxu0
        %3929 = vdwg.mxu0
        %v3930 = vpack.c.bf16 %v1638, %v1637
        %v3931 = vld [vmem:[%s1350] sm:$0xf]
        %v3932 = vld [vmem:[%s1350 + $0x4] sm:$0xf]
        %v3933 = vld [vmem:[%s1350 + $0x8] sm:$0xf]
        %v3934 = vld [vmem:[%s1350 + $0xc] sm:$0xf]
        %v3935 = vld [vmem:[%s1374] sm:$0x1]
        %v3937 = vlaneseq
        %v3938 = vshrl.u32 %v3937, 7
        %v3939 = vsub.s32 0, %v3938
        %v3940 = vrot.slane %v3935, %v3939
        %v3946 = vunpack.c.l.b16 %v3931
        %v3947 = vunpack.c.l.b16 %v3932
        %v3948 = vunpack.c.l.b16 %v3933
        %v3949 = vunpack.c.l.b16 %v3934
        %v3950 = vpack.c.b16 %v3947, %v3946
        %v3951 = vpack.c.b16 %v3949, %v3948
        %v3955 = vsel %vm1667, %v3930, 0
        %3957 = vmatprep.subr.bf16.mxu0 0
        %3958 = vmatpush1.bf16.msra.mxu0 %v3950
        %3959 = vmatprep.subr.bf16.mxu0 0
        %3960 = vmatpush1.bf16.msra.mxu0 %v3951
        %3961 = vmatprep.subr.bf16.mxu0 0
        %3962 = vmatpush1.bf16.msra.mxu0 0
        %3963 = vmatprep.subr.bf16.mxu0 0
        %3964 = vmatpush1.bf16.msra.mxu0 0
        %3965 = vmatprep.subr.bf16.mxu0 0
        %3966 = vmatpush1.bf16.msra.mxu0 0
        %3967 = vmatprep.subr.bf16.mxu0 0
        %3968 = vmatpush1.bf16.msra.mxu0 0
        %3969 = vmatprep.subr.bf16.mxu0 0
        %3970 = vmatpush1.bf16.msra.mxu0 0
        %3971 = vmatprep.subr.bf16.mxu0 0
        %3972 = vmatpush1.bf16.msra.mxu0 0
        %3973 = vmatprep.subr.bf16.mxu0 0
        %3974 = vmatpush1.bf16.msra.mxu0 0
        %3975 = vmatprep.subr.bf16.mxu0 0
        %3976 = vmatpush1.bf16.msra.mxu0 0
        %3977 = vmatprep.subr.bf16.mxu0 0
        %3978 = vmatpush1.bf16.msra.mxu0 0
        %3979 = vmatprep.subr.bf16.mxu0 0
        %3980 = vmatpush1.bf16.msra.mxu0 0
        %3981 = vmatprep.subr.bf16.mxu0 0
        %3982 = vmatpush1.bf16.msra.mxu0 0
        %3983 = vmatprep.subr.bf16.mxu0 0
        %3984 = vmatpush1.bf16.msra.mxu0 0
        %3985 = vmatprep.subr.bf16.mxu0 0
        %3986 = vmatpush1.bf16.msra.mxu0 0
        %3987 = vmatprep.subr.bf16.mxu0 0
        %3988 = vmatpush1.bf16.msra.mxu0 0
        %3989 = vmatprep.mubr.bf16.mxu0 0
        %3990 = vmatmul.mubr.bf16.gmra.mrb[0].mxu0 %v3955
        %v3991 = vpop.f32.mrb[0].mxu0
        %v3992 = vadd.f32 %v3940, %v3991
        %v3993 = vpop.f32.mrb[0].mxu0
        %v3994 = vpop.f32.mrb[0].mxu0
        %v3995 = vadd.f32 %v3940, %v3994
        %v3996 = vpop.f32.mrb[0].mxu0
        %3997 = vdwg.mxu0
        %3999 = vrot.lane.b32.xlu0 %v3857, 120
        %v4000 = vpop.permute.xlu0 %3999
        %4002 = vrot.lane.b32.xlu0 %v3857, 112
        %v4003 = vpop.permute.xlu0 %4002
        %4005 = vrot.lane.b32.xlu0 %v3857, 104
        %v4006 = vpop.permute.xlu0 %4005
        %v4008 = vcombine.low %v3857, %v4003
        %v4009 = vcombine.high %v3857, %v4003
        %v4011 = vunpack.c.l.s4 1983009808
        %v4012 = vunpack.c.0.s8 %v4011
        %v4013 = vlaneseq
        %v4014 = vshrl.u32 %v4013, 7
        %v4015 = vsub.s32 %v4012, %v4014
        %v4016 = vrot.slane %v4008, %v4015
        %v4018 = vunpack.c.l.s4 1983009808
        %v4019 = vunpack.c.0.s8 %v4018
        %v4020 = vlaneseq
        %v4021 = vshrl.u32 %v4020, 7
        %v4022 = vsub.s32 %v4019, %v4021
        %v4023 = vrot.slane %v4009, %v4022
        %v4024 = vcombine.low %v4000, %v4006
        %v4025 = vcombine.high %v4000, %v4006
        %v4027 = vunpack.c.l.s4 1983009808
        %v4028 = vunpack.c.0.s8 %v4027
        %v4029 = vlaneseq
        %v4030 = vshrl.u32 %v4029, 7
        %v4031 = vsub.s32 %v4028, %v4030
        %v4032 = vrot.slane %v4024, %v4031
        %v4034 = vunpack.c.l.s4 1983009808
        %v4035 = vunpack.c.0.s8 %v4034
        %v4036 = vlaneseq
        %v4037 = vshrl.u32 %v4036, 7
        %v4038 = vsub.s32 %v4035, %v4037
        %v4039 = vrot.slane %v4025, %v4038
        %v4040 = vcombine.low %v4016, %v4032
        %v4041 = vcombine.high %v4016, %v4032
        %v4043 = vunpack.c.l.s4 1934713408
        %v4044 = vunpack.c.0.s8 %v4043
        %v4045 = vlaneseq
        %v4046 = vshrl.u32 %v4045, 7
        %v4047 = vsub.s32 %v4044, %v4046
        %v4048 = vrot.slane %v4040, %v4047
        %v4050 = vunpack.c.l.s4 1934713408
        %v4051 = vunpack.c.0.s8 %v4050
        %v4052 = vlaneseq
        %v4053 = vshrl.u32 %v4052, 7
        %v4054 = vsub.s32 %v4051, %v4053
        %v4055 = vrot.slane %v4041, %v4054
        %v4056 = vcombine.low %v4023, %v4039
        %v4057 = vcombine.high %v4023, %v4039
        %v4059 = vunpack.c.l.s4 1934713408
        %v4060 = vunpack.c.0.s8 %v4059
        %v4061 = vlaneseq
        %v4062 = vshrl.u32 %v4061, 7
        %v4063 = vsub.s32 %v4060, %v4062
        %v4064 = vrot.slane %v4056, %v4063
        %v4066 = vunpack.c.l.s4 1934713408
        %v4067 = vunpack.c.0.s8 %v4066
        %v4068 = vlaneseq
        %v4069 = vshrl.u32 %v4068, 7
        %v4070 = vsub.s32 %v4067, %v4069
        %v4071 = vrot.slane %v4057, %v4070
        %v4072 = vcombine.high %v4048, 0.0
        %v4073 = vcombine.high %v4055, 0.0
        %v4074 = vcombine.high %v4064, 0.0
        %v4075 = vcombine.high %v4071, 0.0
        %4078 = vrot.lane.b32.xlu0 %v3924, 120
        %v4079 = vpop.permute.xlu0 %4078
        %4080 = vrot.lane.b32.xlu0 %v3927, 120
        %v4081 = vpop.permute.xlu0 %4080
        %4084 = vrot.lane.b32.xlu0 %v3924, 112
        %v4085 = vpop.permute.xlu0 %4084
        %4086 = vrot.lane.b32.xlu0 %v3927, 112
        %v4087 = vpop.permute.xlu0 %4086
        %4090 = vrot.lane.b32.xlu0 %v3924, 104
        %v4091 = vpop.permute.xlu0 %4090
        %4092 = vrot.lane.b32.xlu0 %v3927, 104
        %v4093 = vpop.permute.xlu0 %4092
        %v4096 = vcombine.low %v3924, %v4085
        %v4097 = vcombine.high %v3924, %v4085
        %v4099 = vunpack.c.l.s4 1983009808
        %v4100 = vunpack.c.0.s8 %v4099
        %v4101 = vlaneseq
        %v4102 = vshrl.u32 %v4101, 7
        %v4103 = vsub.s32 %v4100, %v4102
        %v4104 = vrot.slane %v4096, %v4103
        %v4106 = vunpack.c.l.s4 1983009808
        %v4107 = vunpack.c.0.s8 %v4106
        %v4108 = vlaneseq
        %v4109 = vshrl.u32 %v4108, 7
        %v4110 = vsub.s32 %v4107, %v4109
        %v4111 = vrot.slane %v4097, %v4110
        %v4112 = vcombine.low %v4079, %v4091
        %v4113 = vcombine.high %v4079, %v4091
        %v4115 = vunpack.c.l.s4 1983009808
        %v4116 = vunpack.c.0.s8 %v4115
        %v4117 = vlaneseq
        %v4118 = vshrl.u32 %v4117, 7
        %v4119 = vsub.s32 %v4116, %v4118
        %v4120 = vrot.slane %v4112, %v4119
        %v4122 = vunpack.c.l.s4 1983009808
        %v4123 = vunpack.c.0.s8 %v4122
        %v4124 = vlaneseq
        %v4125 = vshrl.u32 %v4124, 7
        %v4126 = vsub.s32 %v4123, %v4125
        %v4127 = vrot.slane %v4113, %v4126
        %v4128 = vcombine.low %v4104, %v4120
        %v4129 = vcombine.high %v4104, %v4120
        %v4131 = vunpack.c.l.s4 1934713408
        %v4132 = vunpack.c.0.s8 %v4131
        %v4133 = vlaneseq
        %v4134 = vshrl.u32 %v4133, 7
        %v4135 = vsub.s32 %v4132, %v4134
        %v4136 = vrot.slane %v4128, %v4135
        %v4138 = vunpack.c.l.s4 1934713408
        %v4139 = vunpack.c.0.s8 %v4138
        %v4140 = vlaneseq
        %v4141 = vshrl.u32 %v4140, 7
        %v4142 = vsub.s32 %v4139, %v4141
        %v4143 = vrot.slane %v4129, %v4142
        %v4144 = vcombine.low %v4111, %v4127
        %v4145 = vcombine.high %v4111, %v4127
        %v4147 = vunpack.c.l.s4 1934713408
        %v4148 = vunpack.c.0.s8 %v4147
        %v4149 = vlaneseq
        %v4150 = vshrl.u32 %v4149, 7
        %v4151 = vsub.s32 %v4148, %v4150
        %v4152 = vrot.slane %v4144, %v4151
        %v4154 = vunpack.c.l.s4 1934713408
        %v4155 = vunpack.c.0.s8 %v4154
        %v4156 = vlaneseq
        %v4157 = vshrl.u32 %v4156, 7
        %v4158 = vsub.s32 %v4155, %v4157
        %v4159 = vrot.slane %v4145, %v4158
        %v4160 = vcombine.high %v4136, 0.0
        %v4161 = vcombine.high %v4143, 0.0
        %v4162 = vcombine.high %v4152, 0.0
        %v4163 = vcombine.high %v4159, 0.0
        %v4164 = vcombine.low %v3927, %v4087
        %v4165 = vcombine.high %v3927, %v4087
        %v4167 = vunpack.c.l.s4 1983009808
        %v4168 = vunpack.c.0.s8 %v4167
        %v4169 = vlaneseq
        %v4170 = vshrl.u32 %v4169, 7
        %v4171 = vsub.s32 %v4168, %v4170
        %v4172 = vrot.slane %v4164, %v4171
        %v4174 = vunpack.c.l.s4 1983009808
        %v4175 = vunpack.c.0.s8 %v4174
        %v4176 = vlaneseq
        %v4177 = vshrl.u32 %v4176, 7
        %v4178 = vsub.s32 %v4175, %v4177
        %v4179 = vrot.slane %v4165, %v4178
        %v4180 = vcombine.low %v4081, %v4093
        %v4181 = vcombine.high %v4081, %v4093
        %v4183 = vunpack.c.l.s4 1983009808
        %v4184 = vunpack.c.0.s8 %v4183
        %v4185 = vlaneseq
        %v4186 = vshrl.u32 %v4185, 7
        %v4187 = vsub.s32 %v4184, %v4186
        %v4188 = vrot.slane %v4180, %v4187
        %v4190 = vunpack.c.l.s4 1983009808
        %v4191 = vunpack.c.0.s8 %v4190
        %v4192 = vlaneseq
        %v4193 = vshrl.u32 %v4192, 7
        %v4194 = vsub.s32 %v4191, %v4193
        %v4195 = vrot.slane %v4181, %v4194
        %v4196 = vcombine.low %v4172, %v4188
        %v4197 = vcombine.high %v4172, %v4188
        %v4199 = vunpack.c.l.s4 1934713408
        %v4200 = vunpack.c.0.s8 %v4199
        %v4201 = vlaneseq
        %v4202 = vshrl.u32 %v4201, 7
        %v4203 = vsub.s32 %v4200, %v4202
        %v4204 = vrot.slane %v4196, %v4203
        %v4206 = vunpack.c.l.s4 1934713408
        %v4207 = vunpack.c.0.s8 %v4206
        %v4208 = vlaneseq
        %v4209 = vshrl.u32 %v4208, 7
        %v4210 = vsub.s32 %v4207, %v4209
        %v4211 = vrot.slane %v4197, %v4210
        %v4212 = vcombine.low %v4179, %v4195
        %v4213 = vcombine.high %v4179, %v4195
        %v4215 = vunpack.c.l.s4 1934713408
        %v4216 = vunpack.c.0.s8 %v4215
        %v4217 = vlaneseq
        %v4218 = vshrl.u32 %v4217, 7
        %v4219 = vsub.s32 %v4216, %v4218
        %v4220 = vrot.slane %v4212, %v4219
        %v4222 = vunpack.c.l.s4 1934713408
        %v4223 = vunpack.c.0.s8 %v4222
        %v4224 = vlaneseq
        %v4225 = vshrl.u32 %v4224, 7
        %v4226 = vsub.s32 %v4223, %v4225
        %v4227 = vrot.slane %v4213, %v4226
        %v4228 = vcombine.high %v4204, 0.0
        %v4229 = vcombine.high %v4211, 0.0
        %v4230 = vcombine.high %v4220, 0.0
        %v4231 = vcombine.high %v4227, 0.0
        %4234 = vrot.lane.b32.xlu0 %v3992, 120
        %v4235 = vpop.permute.xlu0 %4234
        %4236 = vrot.lane.b32.xlu0 %v3995, 120
        %v4237 = vpop.permute.xlu0 %4236
        %4240 = vrot.lane.b32.xlu0 %v3992, 112
        %v4241 = vpop.permute.xlu0 %4240
        %4242 = vrot.lane.b32.xlu0 %v3995, 112
        %v4243 = vpop.permute.xlu0 %4242
        %4246 = vrot.lane.b32.xlu0 %v3992, 104
        %v4247 = vpop.permute.xlu0 %4246
        %4248 = vrot.lane.b32.xlu0 %v3995, 104
        %v4249 = vpop.permute.xlu0 %4248
        %v4252 = vcombine.low %v3992, %v4241
        %v4253 = vcombine.high %v3992, %v4241
        %v4255 = vunpack.c.l.s4 1983009808
        %v4256 = vunpack.c.0.s8 %v4255
        %v4257 = vlaneseq
        %v4258 = vshrl.u32 %v4257, 7
        %v4259 = vsub.s32 %v4256, %v4258
        %v4260 = vrot.slane %v4252, %v4259
        %v4262 = vunpack.c.l.s4 1983009808
        %v4263 = vunpack.c.0.s8 %v4262
        %v4264 = vlaneseq
        %v4265 = vshrl.u32 %v4264, 7
        %v4266 = vsub.s32 %v4263, %v4265
        %v4267 = vrot.slane %v4253, %v4266
        %v4268 = vcombine.low %v4235, %v4247
        %v4269 = vcombine.high %v4235, %v4247
        %v4271 = vunpack.c.l.s4 1983009808
        %v4272 = vunpack.c.0.s8 %v4271
        %v4273 = vlaneseq
        %v4274 = vshrl.u32 %v4273, 7
        %v4275 = vsub.s32 %v4272, %v4274
        %v4276 = vrot.slane %v4268, %v4275
        %v4278 = vunpack.c.l.s4 1983009808
        %v4279 = vunpack.c.0.s8 %v4278
        %v4280 = vlaneseq
        %v4281 = vshrl.u32 %v4280, 7
        %v4282 = vsub.s32 %v4279, %v4281
        %v4283 = vrot.slane %v4269, %v4282
        %v4284 = vcombine.low %v4260, %v4276
        %v4285 = vcombine.high %v4260, %v4276
        %v4287 = vunpack.c.l.s4 1934713408
        %v4288 = vunpack.c.0.s8 %v4287
        %v4289 = vlaneseq
        %v4290 = vshrl.u32 %v4289, 7
        %v4291 = vsub.s32 %v4288, %v4290
        %v4292 = vrot.slane %v4284, %v4291
        %v4294 = vunpack.c.l.s4 1934713408
        %v4295 = vunpack.c.0.s8 %v4294
        %v4296 = vlaneseq
        %v4297 = vshrl.u32 %v4296, 7
        %v4298 = vsub.s32 %v4295, %v4297
        %v4299 = vrot.slane %v4285, %v4298
        %v4300 = vcombine.low %v4267, %v4283
        %v4301 = vcombine.high %v4267, %v4283
        %v4303 = vunpack.c.l.s4 1934713408
        %v4304 = vunpack.c.0.s8 %v4303
        %v4305 = vlaneseq
        %v4306 = vshrl.u32 %v4305, 7
        %v4307 = vsub.s32 %v4304, %v4306
        %v4308 = vrot.slane %v4300, %v4307
        %v4310 = vunpack.c.l.s4 1934713408
        %v4311 = vunpack.c.0.s8 %v4310
        %v4312 = vlaneseq
        %v4313 = vshrl.u32 %v4312, 7
        %v4314 = vsub.s32 %v4311, %v4313
        %v4315 = vrot.slane %v4301, %v4314
        %v4316 = vcombine.high %v4292, 0.0
        %v4317 = vcombine.high %v4299, 0.0
        %v4318 = vcombine.high %v4308, 0.0
        %v4319 = vcombine.high %v4315, 0.0
        %v4320 = vcombine.low %v3995, %v4243
        %v4321 = vcombine.high %v3995, %v4243
        %v4323 = vunpack.c.l.s4 1983009808
        %v4324 = vunpack.c.0.s8 %v4323
        %v4325 = vlaneseq
        %v4326 = vshrl.u32 %v4325, 7
        %v4327 = vsub.s32 %v4324, %v4326
        %v4328 = vrot.slane %v4320, %v4327
        %v4330 = vunpack.c.l.s4 1983009808
        %v4331 = vunpack.c.0.s8 %v4330
        %v4332 = vlaneseq
        %v4333 = vshrl.u32 %v4332, 7
        %v4334 = vsub.s32 %v4331, %v4333
        %v4335 = vrot.slane %v4321, %v4334
        %v4336 = vcombine.low %v4237, %v4249
        %v4337 = vcombine.high %v4237, %v4249
        %v4339 = vunpack.c.l.s4 1983009808
        %v4340 = vunpack.c.0.s8 %v4339
        %v4341 = vlaneseq
        %v4342 = vshrl.u32 %v4341, 7
        %v4343 = vsub.s32 %v4340, %v4342
        %v4344 = vrot.slane %v4336, %v4343
        %v4346 = vunpack.c.l.s4 1983009808
        %v4347 = vunpack.c.0.s8 %v4346
        %v4348 = vlaneseq
        %v4349 = vshrl.u32 %v4348, 7
        %v4350 = vsub.s32 %v4347, %v4349
        %v4351 = vrot.slane %v4337, %v4350
        %v4352 = vcombine.low %v4328, %v4344
        %v4353 = vcombine.high %v4328, %v4344
        %v4355 = vunpack.c.l.s4 1934713408
        %v4356 = vunpack.c.0.s8 %v4355
        %v4357 = vlaneseq
        %v4358 = vshrl.u32 %v4357, 7
        %v4359 = vsub.s32 %v4356, %v4358
        %v4360 = vrot.slane %v4352, %v4359
        %v4362 = vunpack.c.l.s4 1934713408
        %v4363 = vunpack.c.0.s8 %v4362
        %v4364 = vlaneseq
        %v4365 = vshrl.u32 %v4364, 7
        %v4366 = vsub.s32 %v4363, %v4365
        %v4367 = vrot.slane %v4353, %v4366
        %v4368 = vcombine.low %v4335, %v4351
        %v4369 = vcombine.high %v4335, %v4351
        %v4371 = vunpack.c.l.s4 1934713408
        %v4372 = vunpack.c.0.s8 %v4371
        %v4373 = vlaneseq
        %v4374 = vshrl.u32 %v4373, 7
        %v4375 = vsub.s32 %v4372, %v4374
        %v4376 = vrot.slane %v4368, %v4375
        %v4378 = vunpack.c.l.s4 1934713408
        %v4379 = vunpack.c.0.s8 %v4378
        %v4380 = vlaneseq
        %v4381 = vshrl.u32 %v4380, 7
        %v4382 = vsub.s32 %v4379, %v4381
        %v4383 = vrot.slane %v4369, %v4382
        %v4384 = vcombine.high %v4360, 0.0
        %v4385 = vcombine.high %v4367, 0.0
        %v4386 = vcombine.high %v4376, 0.0
        %v4387 = vcombine.high %v4383, 0.0
        %v4388 = vpack.c.bf16 %v4048, %v4048
        %v4389 = vpack.c.bf16 %v4072, %v4072
        %v4390 = vpack.c.bf16 %v4055, %v4055
        %v4391 = vpack.c.bf16 %v4073, %v4073
        %v4392 = vpack.c.bf16 %v4064, %v4064
        %v4393 = vpack.c.bf16 %v4074, %v4074
        %v4394 = vpack.c.bf16 %v4071, %v4071
        %v4395 = vpack.c.bf16 %v4075, %v4075
        %v4396 = vpack.c.bf16 %v4136, %v4136
        %v4397 = vpack.c.bf16 %v4160, %v4160
        %v4398 = vpack.c.bf16 %v4143, %v4143
        %v4399 = vpack.c.bf16 %v4161, %v4161
        %v4400 = vpack.c.bf16 %v4152, %v4152
        %v4401 = vpack.c.bf16 %v4162, %v4162
        %v4402 = vpack.c.bf16 %v4159, %v4159
        %v4403 = vpack.c.bf16 %v4163, %v4163
        %v4404 = vpack.c.bf16 %v4204, %v4204
        %v4405 = vpack.c.bf16 %v4228, %v4228
        %v4406 = vpack.c.bf16 %v4211, %v4211
        %v4407 = vpack.c.bf16 %v4229, %v4229
        %v4408 = vpack.c.bf16 %v4220, %v4220
        %v4409 = vpack.c.bf16 %v4230, %v4230
        %v4410 = vpack.c.bf16 %v4227, %v4227
        %v4411 = vpack.c.bf16 %v4231, %v4231
        %v4412 = vcombine.low %v4388, %v4392
        %v4414 = vunpack.c.l.s4 1983009808
        %v4415 = vunpack.c.0.s8 %v4414
        %v4416 = vlaneseq
        %v4417 = vshrl.u32 %v4416, 7
        %v4418 = vsub.s32 %v4415, %v4417
        %v4419 = vrot.slane %v4412, %v4418
        %v4420 = vcombine.low %v4390, %v4394
        %v4422 = vunpack.c.l.s4 1983009808
        %v4423 = vunpack.c.0.s8 %v4422
        %v4424 = vlaneseq
        %v4425 = vshrl.u32 %v4424, 7
        %v4426 = vsub.s32 %v4423, %v4425
        %v4427 = vrot.slane %v4420, %v4426
        %v4428 = vcombine.low %v4419, %v4427
        %v4430 = vunpack.c.l.s4 1934713408
        %v4431 = vunpack.c.0.s8 %v4430
        %v4432 = vlaneseq
        %v4433 = vshrl.u32 %v4432, 7
        %v4434 = vsub.s32 %v4431, %v4433
        %v4435 = vrot.slane %v4428, %v4434
        %v4436 = vcombine.high %v4435, 0
        %v4437 = vcombine.low %v4389, %v4393
        %v4439 = vunpack.c.l.s4 1983009808
        %v4440 = vunpack.c.0.s8 %v4439
        %v4441 = vlaneseq
        %v4442 = vshrl.u32 %v4441, 7
        %v4443 = vsub.s32 %v4440, %v4442
        %v4444 = vrot.slane %v4437, %v4443
        %v4445 = vcombine.low %v4391, %v4395
        %v4447 = vunpack.c.l.s4 1983009808
        %v4448 = vunpack.c.0.s8 %v4447
        %v4449 = vlaneseq
        %v4450 = vshrl.u32 %v4449, 7
        %v4451 = vsub.s32 %v4448, %v4450
        %v4452 = vrot.slane %v4445, %v4451
        %v4453 = vcombine.low %v4444, %v4452
        %v4455 = vunpack.c.l.s4 1934713408
        %v4456 = vunpack.c.0.s8 %v4455
        %v4457 = vlaneseq
        %v4458 = vshrl.u32 %v4457, 7
        %v4459 = vsub.s32 %v4456, %v4458
        %v4460 = vrot.slane %v4453, %v4459
        %v4461 = vcombine.high %v4460, 0
        %v4464 = vpack.i.b16 %v4460, %v4435
        %v4465 = vshrl.u32 %v4435, 16
        %v4466 = vshrl.u32 %v4460, 16
        %v4467 = vpack.i.b16 %v4466, %v4465
        %v4470 = vpack.i.b16 %v4461, %v4436
        %v4471 = vshrl.u32 %v4436, 16
        %v4472 = vshrl.u32 %v4461, 16
        %v4473 = vpack.i.b16 %v4472, %v4471
        %4474 = vxpose.xlu0.c.b16.start [1/8] %v4396, 128
        %4475 = vxpose.xlu0.c.b16.cont [2/8] 0, 128
        %4476 = vxpose.xlu0.c.b16.cont [3/8] 0, 128
        %4477 = vxpose.xlu0.c.b16.cont [4/8] 0, 128
        %4478 = vxpose.xlu0.c.b16.cont [5/8] 0, 128
        %4479 = vxpose.xlu0.c.b16.cont [6/8] 0, 128
        %4480 = vxpose.xlu0.c.b16.cont [7/8] 0, 128
        %4481 = vxpose.xlu0.c.b16.end [8/8] 0, 128
        %v4482 = vpop.trf.xlu0
        %v4483 = vpop.trf.xlu0
        %v4484 = vpop.trf.xlu0
        %v4485 = vpop.trf.xlu0
        %v4486 = vpop.trf.xlu0
        %v4487 = vpop.trf.xlu0
        %v4488 = vpop.trf.xlu0
        %v4489 = vpop.trf.xlu0
        %4490 = vxpose.xlu0.c.b16.start [1/8] %v4397, 128
        %4491 = vxpose.xlu0.c.b16.cont [2/8] 0, 128
        %4492 = vxpose.xlu0.c.b16.cont [3/8] 0, 128
        %4493 = vxpose.xlu0.c.b16.cont [4/8] 0, 128
        %4494 = vxpose.xlu0.c.b16.cont [5/8] 0, 128
        %4495 = vxpose.xlu0.c.b16.cont [6/8] 0, 128
        %4496 = vxpose.xlu0.c.b16.cont [7/8] 0, 128
        %4497 = vxpose.xlu0.c.b16.end [8/8] 0, 128
        %v4498 = vpop.trf.xlu0
        %v4499 = vpop.trf.xlu0
        %v4500 = vpop.trf.xlu0
        %v4501 = vpop.trf.xlu0
        %v4502 = vpop.trf.xlu0
        %v4503 = vpop.trf.xlu0
        %v4504 = vpop.trf.xlu0
        %v4505 = vpop.trf.xlu0
        %4506 = vxpose.xlu0.c.b16.start [1/8] %v4398, 128
        %4507 = vxpose.xlu0.c.b16.cont [2/8] 0, 128
        %4508 = vxpose.xlu0.c.b16.cont [3/8] 0, 128
        %4509 = vxpose.xlu0.c.b16.cont [4/8] 0, 128
        %4510 = vxpose.xlu0.c.b16.cont [5/8] 0, 128
        %4511 = vxpose.xlu0.c.b16.cont [6/8] 0, 128
        %4512 = vxpose.xlu0.c.b16.cont [7/8] 0, 128
        %4513 = vxpose.xlu0.c.b16.end [8/8] 0, 128
        %v4514 = vpop.trf.xlu0
        %v4515 = vpop.trf.xlu0
        %v4516 = vpop.trf.xlu0
        %v4517 = vpop.trf.xlu0
        %v4518 = vpop.trf.xlu0
        %v4519 = vpop.trf.xlu0
        %v4520 = vpop.trf.xlu0
        %v4521 = vpop.trf.xlu0
        %4522 = vxpose.xlu0.c.b16.start [1/8] %v4399, 128
        %4523 = vxpose.xlu0.c.b16.cont [2/8] 0, 128
        %4524 = vxpose.xlu0.c.b16.cont [3/8] 0, 128
        %4525 = vxpose.xlu0.c.b16.cont [4/8] 0, 128
        %4526 = vxpose.xlu0.c.b16.cont [5/8] 0, 128
        %4527 = vxpose.xlu0.c.b16.cont [6/8] 0, 128
        %4528 = vxpose.xlu0.c.b16.cont [7/8] 0, 128
        %4529 = vxpose.xlu0.c.b16.end [8/8] 0, 128
        %v4530 = vpop.trf.xlu0
        %v4531 = vpop.trf.xlu0
        %v4532 = vpop.trf.xlu0
        %v4533 = vpop.trf.xlu0
        %v4534 = vpop.trf.xlu0
        %v4535 = vpop.trf.xlu0
        %v4536 = vpop.trf.xlu0
        %v4537 = vpop.trf.xlu0
        %4538 = vxpose.xlu0.c.b16.start [1/8] %v4400, 128
        %4539 = vxpose.xlu0.c.b16.cont [2/8] 0, 128
        %4540 = vxpose.xlu0.c.b16.cont [3/8] 0, 128
        %4541 = vxpose.xlu0.c.b16.cont [4/8] 0, 128
        %4542 = vxpose.xlu0.c.b16.cont [5/8] 0, 128
        %4543 = vxpose.xlu0.c.b16.cont [6/8] 0, 128
        %4544 = vxpose.xlu0.c.b16.cont [7/8] 0, 128
        %4545 = vxpose.xlu0.c.b16.end [8/8] 0, 128
        %v4546 = vpop.trf.xlu0
        %v4547 = vpop.trf.xlu0
        %v4548 = vpop.trf.xlu0
        %v4549 = vpop.trf.xlu0
        %v4550 = vpop.trf.xlu0
        %v4551 = vpop.trf.xlu0
        %v4552 = vpop.trf.xlu0
        %v4553 = vpop.trf.xlu0
        %4554 = vxpose.xlu0.c.b16.start [1/8] %v4401, 128
        %4555 = vxpose.xlu0.c.b16.cont [2/8] 0, 128
        %4556 = vxpose.xlu0.c.b16.cont [3/8] 0, 128
        %4557 = vxpose.xlu0.c.b16.cont [4/8] 0, 128
        %4558 = vxpose.xlu0.c.b16.cont [5/8] 0, 128
        %4559 = vxpose.xlu0.c.b16.cont [6/8] 0, 128
        %4560 = vxpose.xlu0.c.b16.cont [7/8] 0, 128
        %4561 = vxpose.xlu0.c.b16.end [8/8] 0, 128
        %v4562 = vpop.trf.xlu0
        %v4563 = vpop.trf.xlu0
        %v4564 = vpop.trf.xlu0
        %v4565 = vpop.trf.xlu0
        %v4566 = vpop.trf.xlu0
        %v4567 = vpop.trf.xlu0
        %v4568 = vpop.trf.xlu0
        %v4569 = vpop.trf.xlu0
        %4570 = vxpose.xlu0.c.b16.start [1/8] %v4402, 128
        %4571 = vxpose.xlu0.c.b16.cont [2/8] 0, 128
        %4572 = vxpose.xlu0.c.b16.cont [3/8] 0, 128
        %4573 = vxpose.xlu0.c.b16.cont [4/8] 0, 128
        %4574 = vxpose.xlu0.c.b16.cont [5/8] 0, 128
        %4575 = vxpose.xlu0.c.b16.cont [6/8] 0, 128
        %4576 = vxpose.xlu0.c.b16.cont [7/8] 0, 128
        %4577 = vxpose.xlu0.c.b16.end [8/8] 0, 128
        %v4578 = vpop.trf.xlu0
        %v4579 = vpop.trf.xlu0
        %v4580 = vpop.trf.xlu0
        %v4581 = vpop.trf.xlu0
        %v4582 = vpop.trf.xlu0
        %v4583 = vpop.trf.xlu0
        %v4584 = vpop.trf.xlu0
        %v4585 = vpop.trf.xlu0
        %4586 = vxpose.xlu0.c.b16.start [1/8] %v4403, 128
        %4587 = vxpose.xlu0.c.b16.cont [2/8] 0, 128
        %4588 = vxpose.xlu0.c.b16.cont [3/8] 0, 128
        %4589 = vxpose.xlu0.c.b16.cont [4/8] 0, 128
        %4590 = vxpose.xlu0.c.b16.cont [5/8] 0, 128
        %4591 = vxpose.xlu0.c.b16.cont [6/8] 0, 128
        %4592 = vxpose.xlu0.c.b16.cont [7/8] 0, 128
        %4593 = vxpose.xlu0.c.b16.end [8/8] 0, 128
        %v4594 = vpop.trf.xlu0
        %v4595 = vpop.trf.xlu0
        %v4596 = vpop.trf.xlu0
        %v4597 = vpop.trf.xlu0
        %v4598 = vpop.trf.xlu0
        %v4599 = vpop.trf.xlu0
        %v4600 = vpop.trf.xlu0
        %v4601 = vpop.trf.xlu0
        %4602 = vxpose.xlu0.c.b16.start [1/8] %v4404, 128
        %4603 = vxpose.xlu0.c.b16.cont [2/8] 0, 128
        %4604 = vxpose.xlu0.c.b16.cont [3/8] 0, 128
        %4605 = vxpose.xlu0.c.b16.cont [4/8] 0, 128
        %4606 = vxpose.xlu0.c.b16.cont [5/8] 0, 128
        %4607 = vxpose.xlu0.c.b16.cont [6/8] 0, 128
        %4608 = vxpose.xlu0.c.b16.cont [7/8] 0, 128
        %4609 = vxpose.xlu0.c.b16.end [8/8] 0, 128
        %v4610 = vpop.trf.xlu0
        %v4611 = vpop.trf.xlu0
        %v4612 = vpop.trf.xlu0
        %v4613 = vpop.trf.xlu0
        %v4614 = vpop.trf.xlu0
        %v4615 = vpop.trf.xlu0
        %v4616 = vpop.trf.xlu0
        %v4617 = vpop.trf.xlu0
        %4618 = vxpose.xlu0.c.b16.start [1/8] %v4405, 128
        %4619 = vxpose.xlu0.c.b16.cont [2/8] 0, 128
        %4620 = vxpose.xlu0.c.b16.cont [3/8] 0, 128
        %4621 = vxpose.xlu0.c.b16.cont [4/8] 0, 128
        %4622 = vxpose.xlu0.c.b16.cont [5/8] 0, 128
        %4623 = vxpose.xlu0.c.b16.cont [6/8] 0, 128
        %4624 = vxpose.xlu0.c.b16.cont [7/8] 0, 128
        %4625 = vxpose.xlu0.c.b16.end [8/8] 0, 128
        %v4626 = vpop.trf.xlu0
        %v4627 = vpop.trf.xlu0
        %v4628 = vpop.trf.xlu0
        %v4629 = vpop.trf.xlu0
        %v4630 = vpop.trf.xlu0
        %v4631 = vpop.trf.xlu0
        %v4632 = vpop.trf.xlu0
        %v4633 = vpop.trf.xlu0
        %4634 = vxpose.xlu0.c.b16.start [1/8] %v4406, 128
        %4635 = vxpose.xlu0.c.b16.cont [2/8] 0, 128
        %4636 = vxpose.xlu0.c.b16.cont [3/8] 0, 128
        %4637 = vxpose.xlu0.c.b16.cont [4/8] 0, 128
        %4638 = vxpose.xlu0.c.b16.cont [5/8] 0, 128
        %4639 = vxpose.xlu0.c.b16.cont [6/8] 0, 128
        %4640 = vxpose.xlu0.c.b16.cont [7/8] 0, 128
        %4641 = vxpose.xlu0.c.b16.end [8/8] 0, 128
        %v4642 = vpop.trf.xlu0
        %v4643 = vpop.trf.xlu0
        %v4644 = vpop.trf.xlu0
        %v4645 = vpop.trf.xlu0
        %v4646 = vpop.trf.xlu0
        %v4647 = vpop.trf.xlu0
        %v4648 = vpop.trf.xlu0
        %v4649 = vpop.trf.xlu0
        %4650 = vxpose.xlu0.c.b16.start [1/8] %v4407, 128
        %4651 = vxpose.xlu0.c.b16.cont [2/8] 0, 128
        %4652 = vxpose.xlu0.c.b16.cont [3/8] 0, 128
        %4653 = vxpose.xlu0.c.b16.cont [4/8] 0, 128
        %4654 = vxpose.xlu0.c.b16.cont [5/8] 0, 128
        %4655 = vxpose.xlu0.c.b16.cont [6/8] 0, 128
        %4656 = vxpose.xlu0.c.b16.cont [7/8] 0, 128
        %4657 = vxpose.xlu0.c.b16.end [8/8] 0, 128
        %v4658 = vpop.trf.xlu0
        %v4659 = vpop.trf.xlu0
        %v4660 = vpop.trf.xlu0
        %v4661 = vpop.trf.xlu0
        %v4662 = vpop.trf.xlu0
        %v4663 = vpop.trf.xlu0
        %v4664 = vpop.trf.xlu0
        %v4665 = vpop.trf.xlu0
        %4666 = vxpose.xlu0.c.b16.start [1/8] %v4408, 128
        %4667 = vxpose.xlu0.c.b16.cont [2/8] 0, 128
        %4668 = vxpose.xlu0.c.b16.cont [3/8] 0, 128
        %4669 = vxpose.xlu0.c.b16.cont [4/8] 0, 128
        %4670 = vxpose.xlu0.c.b16.cont [5/8] 0, 128
        %4671 = vxpose.xlu0.c.b16.cont [6/8] 0, 128
        %4672 = vxpose.xlu0.c.b16.cont [7/8] 0, 128
        %4673 = vxpose.xlu0.c.b16.end [8/8] 0, 128
        %v4674 = vpop.trf.xlu0
        %v4675 = vpop.trf.xlu0
        %v4676 = vpop.trf.xlu0
        %v4677 = vpop.trf.xlu0
        %v4678 = vpop.trf.xlu0
        %v4679 = vpop.trf.xlu0
        %v4680 = vpop.trf.xlu0
        %v4681 = vpop.trf.xlu0
        %4682 = vxpose.xlu0.c.b16.start [1/8] %v4409, 128
        %4683 = vxpose.xlu0.c.b16.cont [2/8] 0, 128
        %4684 = vxpose.xlu0.c.b16.cont [3/8] 0, 128
        %4685 = vxpose.xlu0.c.b16.cont [4/8] 0, 128
        %4686 = vxpose.xlu0.c.b16.cont [5/8] 0, 128
        %4687 = vxpose.xlu0.c.b16.cont [6/8] 0, 128
        %4688 = vxpose.xlu0.c.b16.cont [7/8] 0, 128
        %4689 = vxpose.xlu0.c.b16.end [8/8] 0, 128
        %v4690 = vpop.trf.xlu0
        %v4691 = vpop.trf.xlu0
        %v4692 = vpop.trf.xlu0
        %v4693 = vpop.trf.xlu0
        %v4694 = vpop.trf.xlu0
        %v4695 = vpop.trf.xlu0
        %v4696 = vpop.trf.xlu0
        %v4697 = vpop.trf.xlu0
        %4698 = vxpose.xlu0.c.b16.start [1/8] %v4410, 128
        %4699 = vxpose.xlu0.c.b16.cont [2/8] 0, 128
        %4700 = vxpose.xlu0.c.b16.cont [3/8] 0, 128
        %4701 = vxpose.xlu0.c.b16.cont [4/8] 0, 128
        %4702 = vxpose.xlu0.c.b16.cont [5/8] 0, 128
        %4703 = vxpose.xlu0.c.b16.cont [6/8] 0, 128
        %4704 = vxpose.xlu0.c.b16.cont [7/8] 0, 128
        %4705 = vxpose.xlu0.c.b16.end [8/8] 0, 128
        %v4706 = vpop.trf.xlu0
        %v4707 = vpop.trf.xlu0
        %v4708 = vpop.trf.xlu0
        %v4709 = vpop.trf.xlu0
        %v4710 = vpop.trf.xlu0
        %v4711 = vpop.trf.xlu0
        %v4712 = vpop.trf.xlu0
        %v4713 = vpop.trf.xlu0
        %4714 = vxpose.xlu0.c.b16.start [1/8] %v4411, 128
        %4715 = vxpose.xlu0.c.b16.cont [2/8] 0, 128
        %4716 = vxpose.xlu0.c.b16.cont [3/8] 0, 128
        %4717 = vxpose.xlu0.c.b16.cont [4/8] 0, 128
        %4718 = vxpose.xlu0.c.b16.cont [5/8] 0, 128
        %4719 = vxpose.xlu0.c.b16.cont [6/8] 0, 128
        %4720 = vxpose.xlu0.c.b16.cont [7/8] 0, 128
        %4721 = vxpose.xlu0.c.b16.end [8/8] 0, 128
        %v4722 = vpop.trf.xlu0
        %v4723 = vpop.trf.xlu0
        %v4724 = vpop.trf.xlu0
        %v4725 = vpop.trf.xlu0
        %v4726 = vpop.trf.xlu0
        %v4727 = vpop.trf.xlu0
        %v4728 = vpop.trf.xlu0
        %v4729 = vpop.trf.xlu0
        %v4730 = vcombine.low %v4482, %v4546
        %v4732 = vunpack.c.l.s4 1983009808
        %v4733 = vunpack.c.0.s8 %v4732
        %v4734 = vlaneseq
        %v4735 = vshrl.u32 %v4734, 7
        %v4736 = vsub.s32 %v4733, %v4735
        %v4737 = vrot.slane %v4730, %v4736
        %v4738 = vcombine.low %v4514, %v4578
        %v4740 = vunpack.c.l.s4 1983009808
        %v4741 = vunpack.c.0.s8 %v4740
        %v4742 = vlaneseq
        %v4743 = vshrl.u32 %v4742, 7
        %v4744 = vsub.s32 %v4741, %v4743
        %v4745 = vrot.slane %v4738, %v4744
        %v4746 = vcombine.low %v4610, %v4674
        %v4748 = vunpack.c.l.s4 1983009808
        %v4749 = vunpack.c.0.s8 %v4748
        %v4750 = vlaneseq
        %v4751 = vshrl.u32 %v4750, 7
        %v4752 = vsub.s32 %v4749, %v4751
        %v4753 = vrot.slane %v4746, %v4752
        %v4754 = vcombine.low %v4642, %v4706
        %v4756 = vunpack.c.l.s4 1983009808
        %v4757 = vunpack.c.0.s8 %v4756
        %v4758 = vlaneseq
        %v4759 = vshrl.u32 %v4758, 7
        %v4760 = vsub.s32 %v4757, %v4759
        %v4761 = vrot.slane %v4754, %v4760
        %v4762 = vcombine.low %v4737, %v4745
        %v4763 = vcombine.high %v4737, %v4745
        %v4765 = vunpack.c.l.s4 1934713408
        %v4766 = vunpack.c.0.s8 %v4765
        %v4767 = vlaneseq
        %v4768 = vshrl.u32 %v4767, 7
        %v4769 = vsub.s32 %v4766, %v4768
        %v4770 = vrot.slane %v4762, %v4769
        %v4772 = vunpack.c.l.s4 1934713408
        %v4773 = vunpack.c.0.s8 %v4772
        %v4774 = vlaneseq
        %v4775 = vshrl.u32 %v4774, 7
        %v4776 = vsub.s32 %v4773, %v4775
        %v4777 = vrot.slane %v4763, %v4776
        %v4778 = vcombine.low %v4753, %v4761
        %v4779 = vcombine.high %v4753, %v4761
        %v4781 = vunpack.c.l.s4 1934713408
        %v4782 = vunpack.c.0.s8 %v4781
        %v4783 = vlaneseq
        %v4784 = vshrl.u32 %v4783, 7
        %v4785 = vsub.s32 %v4782, %v4784
        %v4786 = vrot.slane %v4778, %v4785
        %v4788 = vunpack.c.l.s4 1934713408
        %v4789 = vunpack.c.0.s8 %v4788
        %v4790 = vlaneseq
        %v4791 = vshrl.u32 %v4790, 7
        %v4792 = vsub.s32 %v4789, %v4791
        %v4793 = vrot.slane %v4779, %v4792
        %v4794 = vcombine.low %v4770, %v4786
        %v4795 = vcombine.high %v4770, %v4786
        %v4796 = vcombine.low %v4777, %v4793
        %v4797 = vcombine.high %v4777, %v4793
        %v4798 = vcombine.low %v4498, %v4562
        %v4800 = vunpack.c.l.s4 1983009808
        %v4801 = vunpack.c.0.s8 %v4800
        %v4802 = vlaneseq
        %v4803 = vshrl.u32 %v4802, 7
        %v4804 = vsub.s32 %v4801, %v4803
        %v4805 = vrot.slane %v4798, %v4804
        %v4806 = vcombine.low %v4530, %v4594
        %v4808 = vunpack.c.l.s4 1983009808
        %v4809 = vunpack.c.0.s8 %v4808
        %v4810 = vlaneseq
        %v4811 = vshrl.u32 %v4810, 7
        %v4812 = vsub.s32 %v4809, %v4811
        %v4813 = vrot.slane %v4806, %v4812
        %v4814 = vcombine.low %v4626, %v4690
        %v4816 = vunpack.c.l.s4 1983009808
        %v4817 = vunpack.c.0.s8 %v4816
        %v4818 = vlaneseq
        %v4819 = vshrl.u32 %v4818, 7
        %v4820 = vsub.s32 %v4817, %v4819
        %v4821 = vrot.slane %v4814, %v4820
        %v4822 = vcombine.low %v4658, %v4722
        %v4824 = vunpack.c.l.s4 1983009808
        %v4825 = vunpack.c.0.s8 %v4824
        %v4826 = vlaneseq
        %v4827 = vshrl.u32 %v4826, 7
        %v4828 = vsub.s32 %v4825, %v4827
        %v4829 = vrot.slane %v4822, %v4828
        %v4830 = vcombine.low %v4805, %v4813
        %v4831 = vcombine.high %v4805, %v4813
        %v4833 = vunpack.c.l.s4 1934713408
        %v4834 = vunpack.c.0.s8 %v4833
        %v4835 = vlaneseq
        %v4836 = vshrl.u32 %v4835, 7
        %v4837 = vsub.s32 %v4834, %v4836
        %v4838 = vrot.slane %v4830, %v4837
        %v4840 = vunpack.c.l.s4 1934713408
        %v4841 = vunpack.c.0.s8 %v4840
        %v4842 = vlaneseq
        %v4843 = vshrl.u32 %v4842, 7
        %v4844 = vsub.s32 %v4841, %v4843
        %v4845 = vrot.slane %v4831, %v4844
        %v4846 = vcombine.low %v4821, %v4829
        %v4847 = vcombine.high %v4821, %v4829
        %v4849 = vunpack.c.l.s4 1934713408
        %v4850 = vunpack.c.0.s8 %v4849
        %v4851 = vlaneseq
        %v4852 = vshrl.u32 %v4851, 7
        %v4853 = vsub.s32 %v4850, %v4852
        %v4854 = vrot.slane %v4846, %v4853
        %v4856 = vunpack.c.l.s4 1934713408
        %v4857 = vunpack.c.0.s8 %v4856
        %v4858 = vlaneseq
        %v4859 = vshrl.u32 %v4858, 7
        %v4860 = vsub.s32 %v4857, %v4859
        %v4861 = vrot.slane %v4847, %v4860
        %v4862 = vcombine.low %v4838, %v4854
        %v4863 = vcombine.high %v4838, %v4854
        %v4864 = vcombine.low %v4845, %v4861
        %v4865 = vcombine.high %v4845, %v4861
        %v4868 = vpack.i.b16 %v4862, %v4794
        %v4870 = vshrl.u32 %v4794, 16
        %v4871 = vshrl.u32 %v4862, 16
        %v4872 = vpack.i.b16 %v4871, %v4870
        %v4876 = vpack.i.b16 %v4863, %v4795
        %v4878 = vshrl.u32 %v4795, 16
        %v4879 = vshrl.u32 %v4863, 16
        %v4880 = vpack.i.b16 %v4879, %v4878
        %v4884 = vpack.i.b16 %v4864, %v4796
        %v4886 = vshrl.u32 %v4796, 16
        %v4887 = vshrl.u32 %v4864, 16
        %v4888 = vpack.i.b16 %v4887, %v4886
        %v4892 = vpack.i.b16 %v4865, %v4797
        %v4894 = vshrl.u32 %v4797, 16
        %v4895 = vshrl.u32 %v4865, 16
        %v4896 = vpack.i.b16 %v4895, %v4894
        %4898 = vxpose.xlu0.c.b16.start [1/8] %v4868, 128
        %4899 = vxpose.xlu0.c.b16.cont [2/8] 0, 128
        %4900 = vxpose.xlu0.c.b16.cont [3/8] 0, 128
        %4901 = vxpose.xlu0.c.b16.cont [4/8] 0, 128
        %4902 = vxpose.xlu0.c.b16.cont [5/8] 0, 128
        %4903 = vxpose.xlu0.c.b16.cont [6/8] 0, 128
        %4904 = vxpose.xlu0.c.b16.cont [7/8] 0, 128
        %4905 = vxpose.xlu0.c.b16.end [8/8] 0, 128
        %v4906 = vpop.trf.xlu0
        %v4907 = vpop.trf.xlu0
        %v4908 = vpop.trf.xlu0
        %v4909 = vpop.trf.xlu0
        %v4910 = vpop.trf.xlu0
        %v4911 = vpop.trf.xlu0
        %v4912 = vpop.trf.xlu0
        %v4913 = vpop.trf.xlu0
        %4914 = vxpose.xlu0.c.b16.start [1/8] %v4872, 128
        %4915 = vxpose.xlu0.c.b16.cont [2/8] 0, 128
        %4916 = vxpose.xlu0.c.b16.cont [3/8] 0, 128
        %4917 = vxpose.xlu0.c.b16.cont [4/8] 0, 128
        %4918 = vxpose.xlu0.c.b16.cont [5/8] 0, 128
        %4919 = vxpose.xlu0.c.b16.cont [6/8] 0, 128
        %4920 = vxpose.xlu0.c.b16.cont [7/8] 0, 128
        %4921 = vxpose.xlu0.c.b16.end [8/8] 0, 128
        %v4922 = vpop.trf.xlu0
        %v4923 = vpop.trf.xlu0
        %v4924 = vpop.trf.xlu0
        %v4925 = vpop.trf.xlu0
        %v4926 = vpop.trf.xlu0
        %v4927 = vpop.trf.xlu0
        %v4928 = vpop.trf.xlu0
        %v4929 = vpop.trf.xlu0
        %4930 = vxpose.xlu0.c.b16.start [1/8] %v4876, 128
        %4931 = vxpose.xlu0.c.b16.cont [2/8] 0, 128
        %4932 = vxpose.xlu0.c.b16.cont [3/8] 0, 128
        %4933 = vxpose.xlu0.c.b16.cont [4/8] 0, 128
        %4934 = vxpose.xlu0.c.b16.cont [5/8] 0, 128
        %4935 = vxpose.xlu0.c.b16.cont [6/8] 0, 128
        %4936 = vxpose.xlu0.c.b16.cont [7/8] 0, 128
        %4937 = vxpose.xlu0.c.b16.end [8/8] 0, 128
        %v4938 = vpop.trf.xlu0
        %v4939 = vpop.trf.xlu0
        %v4940 = vpop.trf.xlu0
        %v4941 = vpop.trf.xlu0
        %v4942 = vpop.trf.xlu0
        %v4943 = vpop.trf.xlu0
        %v4944 = vpop.trf.xlu0
        %v4945 = vpop.trf.xlu0
        %4946 = vxpose.xlu0.c.b16.start [1/8] %v4880, 128
        %4947 = vxpose.xlu0.c.b16.cont [2/8] 0, 128
        %4948 = vxpose.xlu0.c.b16.cont [3/8] 0, 128
        %4949 = vxpose.xlu0.c.b16.cont [4/8] 0, 128
        %4950 = vxpose.xlu0.c.b16.cont [5/8] 0, 128
        %4951 = vxpose.xlu0.c.b16.cont [6/8] 0, 128
        %4952 = vxpose.xlu0.c.b16.cont [7/8] 0, 128
        %4953 = vxpose.xlu0.c.b16.end [8/8] 0, 128
        %v4954 = vpop.trf.xlu0
        %v4955 = vpop.trf.xlu0
        %v4956 = vpop.trf.xlu0
        %v4957 = vpop.trf.xlu0
        %v4958 = vpop.trf.xlu0
        %v4959 = vpop.trf.xlu0
        %v4960 = vpop.trf.xlu0
        %v4961 = vpop.trf.xlu0
        %4962 = vxpose.xlu0.c.b16.start [1/8] %v4884, 128
        %4963 = vxpose.xlu0.c.b16.cont [2/8] 0, 128
        %4964 = vxpose.xlu0.c.b16.cont [3/8] 0, 128
        %4965 = vxpose.xlu0.c.b16.cont [4/8] 0, 128
        %4966 = vxpose.xlu0.c.b16.cont [5/8] 0, 128
        %4967 = vxpose.xlu0.c.b16.cont [6/8] 0, 128
        %4968 = vxpose.xlu0.c.b16.cont [7/8] 0, 128
        %4969 = vxpose.xlu0.c.b16.end [8/8] 0, 128
        %v4970 = vpop.trf.xlu0
        %v4971 = vpop.trf.xlu0
        %v4972 = vpop.trf.xlu0
        %v4973 = vpop.trf.xlu0
        %v4974 = vpop.trf.xlu0
        %v4975 = vpop.trf.xlu0
        %v4976 = vpop.trf.xlu0
        %v4977 = vpop.trf.xlu0
        %4978 = vxpose.xlu0.c.b16.start [1/8] %v4888, 128
        %4979 = vxpose.xlu0.c.b16.cont [2/8] 0, 128
        %4980 = vxpose.xlu0.c.b16.cont [3/8] 0, 128
        %4981 = vxpose.xlu0.c.b16.cont [4/8] 0, 128
        %4982 = vxpose.xlu0.c.b16.cont [5/8] 0, 128
        %4983 = vxpose.xlu0.c.b16.cont [6/8] 0, 128
        %4984 = vxpose.xlu0.c.b16.cont [7/8] 0, 128
        %4985 = vxpose.xlu0.c.b16.end [8/8] 0, 128
        %v4986 = vpop.trf.xlu0
        %v4987 = vpop.trf.xlu0
        %v4988 = vpop.trf.xlu0
        %v4989 = vpop.trf.xlu0
        %v4990 = vpop.trf.xlu0
        %v4991 = vpop.trf.xlu0
        %v4992 = vpop.trf.xlu0
        %v4993 = vpop.trf.xlu0
        %4994 = vxpose.xlu0.c.b16.start [1/8] %v4892, 128
        %4995 = vxpose.xlu0.c.b16.cont [2/8] 0, 128
        %4996 = vxpose.xlu0.c.b16.cont [3/8] 0, 128
        %4997 = vxpose.xlu0.c.b16.cont [4/8] 0, 128
        %4998 = vxpose.xlu0.c.b16.cont [5/8] 0, 128
        %4999 = vxpose.xlu0.c.b16.cont [6/8] 0, 128
        %5000 = vxpose.xlu0.c.b16.cont [7/8] 0, 128
        %5001 = vxpose.xlu0.c.b16.end [8/8] 0, 128
        %v5002 = vpop.trf.xlu0
        %v5003 = vpop.trf.xlu0
        %v5004 = vpop.trf.xlu0
        %v5005 = vpop.trf.xlu0
        %v5006 = vpop.trf.xlu0
        %v5007 = vpop.trf.xlu0
        %v5008 = vpop.trf.xlu0
        %v5009 = vpop.trf.xlu0
        %5010 = vxpose.xlu0.c.b16.start [1/8] %v4896, 128
        %5011 = vxpose.xlu0.c.b16.cont [2/8] 0, 128
        %5012 = vxpose.xlu0.c.b16.cont [3/8] 0, 128
        %5013 = vxpose.xlu0.c.b16.cont [4/8] 0, 128
        %5014 = vxpose.xlu0.c.b16.cont [5/8] 0, 128
        %5015 = vxpose.xlu0.c.b16.cont [6/8] 0, 128
        %5016 = vxpose.xlu0.c.b16.cont [7/8] 0, 128
        %5017 = vxpose.xlu0.c.b16.end [8/8] 0, 128
        %v5018 = vpop.trf.xlu0
        %v5019 = vpop.trf.xlu0
        %v5020 = vpop.trf.xlu0
        %v5021 = vpop.trf.xlu0
        %v5022 = vpop.trf.xlu0
        %v5023 = vpop.trf.xlu0
        %v5024 = vpop.trf.xlu0
        %v5025 = vpop.trf.xlu0
        %v5026 = vcombine.low %v4906, %v4970
        %v5028 = vunpack.c.l.s4 1983009808
        %v5029 = vunpack.c.0.s8 %v5028
        %v5030 = vlaneseq
        %v5031 = vshrl.u32 %v5030, 7
        %v5032 = vsub.s32 %v5029, %v5031
        %v5033 = vrot.slane %v5026, %v5032
        %v5034 = vcombine.low %v4938, %v5002
        %v5036 = vunpack.c.l.s4 1983009808
        %v5037 = vunpack.c.0.s8 %v5036
        %v5038 = vlaneseq
        %v5039 = vshrl.u32 %v5038, 7
        %v5040 = vsub.s32 %v5037, %v5039
        %v5041 = vrot.slane %v5034, %v5040
        %v5042 = vcombine.low %v5033, %v5041
        %v5044 = vunpack.c.l.s4 1934713408
        %v5045 = vunpack.c.0.s8 %v5044
        %v5046 = vlaneseq
        %v5047 = vshrl.u32 %v5046, 7
        %v5048 = vsub.s32 %v5045, %v5047
        %v5049 = vrot.slane %v5042, %v5048
        %v5050 = vcombine.high %v5049, 0
        %v5051 = vcombine.low %v4922, %v4986
        %v5053 = vunpack.c.l.s4 1983009808
        %v5054 = vunpack.c.0.s8 %v5053
        %v5055 = vlaneseq
        %v5056 = vshrl.u32 %v5055, 7
        %v5057 = vsub.s32 %v5054, %v5056
        %v5058 = vrot.slane %v5051, %v5057
        %v5059 = vcombine.low %v4954, %v5018
        %v5061 = vunpack.c.l.s4 1983009808
        %v5062 = vunpack.c.0.s8 %v5061
        %v5063 = vlaneseq
        %v5064 = vshrl.u32 %v5063, 7
        %v5065 = vsub.s32 %v5062, %v5064
        %v5066 = vrot.slane %v5059, %v5065
        %v5067 = vcombine.low %v5058, %v5066
        %v5069 = vunpack.c.l.s4 1934713408
        %v5070 = vunpack.c.0.s8 %v5069
        %v5071 = vlaneseq
        %v5072 = vshrl.u32 %v5071, 7
        %v5073 = vsub.s32 %v5070, %v5072
        %v5074 = vrot.slane %v5067, %v5073
        %v5075 = vcombine.high %v5074, 0
        %v5078 = vpack.i.b16 %v5074, %v5049
        %v5079 = vshrl.u32 %v5049, 16
        %v5080 = vshrl.u32 %v5074, 16
        %v5081 = vpack.i.b16 %v5080, %v5079
        %v5084 = vpack.i.b16 %v5075, %v5050
        %v5085 = vshrl.u32 %v5050, 16
        %v5086 = vshrl.u32 %v5075, 16
        %v5087 = vpack.i.b16 %v5086, %v5085
        %v5089 = vsel %vm2571, %v4464, 0
        %v5092 = vsel %vm2575, %v5078, 0
        %5094 = vmatprep.subr.bf16.mxu0 0
        %5095 = vmatpush1.bf16.msra.mxu0 %v5092
        %5096 = vmatprep.subr.bf16.mxu0 0
        %5097 = vmatpush1.bf16.msra.mxu0 0
        %5098 = vmatprep.subr.bf16.mxu0 0
        %5099 = vmatpush1.bf16.msra.mxu0 0
        %5100 = vmatprep.subr.bf16.mxu0 0
        %5101 = vmatpush1.bf16.msra.mxu0 0
        %5102 = vmatprep.subr.bf16.mxu0 0
        %5103 = vmatpush1.bf16.msra.mxu0 0
        %5104 = vmatprep.subr.bf16.mxu0 0
        %5105 = vmatpush1.bf16.msra.mxu0 0
        %5106 = vmatprep.subr.bf16.mxu0 0
        %5107 = vmatpush1.bf16.msra.mxu0 0
        %5108 = vmatprep.subr.bf16.mxu0 0
        %5109 = vmatpush1.bf16.msra.mxu0 0
        %5110 = vmatprep.subr.bf16.mxu0 0
        %5111 = vmatpush1.bf16.msra.mxu0 0
        %5112 = vmatprep.subr.bf16.mxu0 0
        %5113 = vmatpush1.bf16.msra.mxu0 0
        %5114 = vmatprep.subr.bf16.mxu0 0
        %5115 = vmatpush1.bf16.msra.mxu0 0
        %5116 = vmatprep.subr.bf16.mxu0 0
        %5117 = vmatpush1.bf16.msra.mxu0 0
        %5118 = vmatprep.subr.bf16.mxu0 0
        %5119 = vmatpush1.bf16.msra.mxu0 0
        %5120 = vmatprep.subr.bf16.mxu0 0
        %5121 = vmatpush1.bf16.msra.mxu0 0
        %5122 = vmatprep.subr.bf16.mxu0 0
        %5123 = vmatpush1.bf16.msra.mxu0 0
        %5124 = vmatprep.subr.bf16.mxu0 0
        %5125 = vmatpush1.bf16.msra.mxu0 0
        %5126 = vmatprep.mubr.bf16.mxu0 0
        %5127 = vmatmul.mubr.bf16.gmra.mrb[0].mxu0 %v5089
        %v5128 = vpop.f32.mrb[0].mxu0
        %v5129 = vadd.f32 0.0, %v5128
        %v5130 = vpop.f32.mrb[0].mxu0
        %v5131 = vpop.f32.mrb[0].mxu0
        %v5132 = vpop.f32.mrb[0].mxu0
        %5133 = vdwg.mxu0
        %v5135 = vsel %vm2571, %v4467, 0
        %v5138 = vsel %vm2575, %v5081, 0
        %5140 = vmatprep.subr.bf16.mxu0 0
        %5141 = vmatpush1.bf16.msra.mxu0 %v5138
        %5142 = vmatprep.subr.bf16.mxu0 0
        %5143 = vmatpush1.bf16.msra.mxu0 0
        %5144 = vmatprep.subr.bf16.mxu0 0
        %5145 = vmatpush1.bf16.msra.mxu0 0
        %5146 = vmatprep.subr.bf16.mxu0 0
        %5147 = vmatpush1.bf16.msra.mxu0 0
        %5148 = vmatprep.subr.bf16.mxu0 0
        %5149 = vmatpush1.bf16.msra.mxu0 0
        %5150 = vmatprep.subr.bf16.mxu0 0
        %5151 = vmatpush1.bf16.msra.mxu0 0
        %5152 = vmatprep.subr.bf16.mxu0 0
        %5153 = vmatpush1.bf16.msra.mxu0 0
        %5154 = vmatprep.subr.bf16.mxu0 0
        %5155 = vmatpush1.bf16.msra.mxu0 0
        %5156 = vmatprep.subr.bf16.mxu0 0
        %5157 = vmatpush1.bf16.msra.mxu0 0
        %5158 = vmatprep.subr.bf16.mxu0 0
        %5159 = vmatpush1.bf16.msra.mxu0 0
        %5160 = vmatprep.subr.bf16.mxu0 0
        %5161 = vmatpush1.bf16.msra.mxu0 0
        %5162 = vmatprep.subr.bf16.mxu0 0
        %5163 = vmatpush1.bf16.msra.mxu0 0
        %5164 = vmatprep.subr.bf16.mxu0 0
        %5165 = vmatpush1.bf16.msra.mxu0 0
        %5166 = vmatprep.subr.bf16.mxu0 0
        %5167 = vmatpush1.bf16.msra.mxu0 0
        %5168 = vmatprep.subr.bf16.mxu0 0
        %5169 = vmatpush1.bf16.msra.mxu0 0
        %5170 = vmatprep.subr.bf16.mxu0 0
        %5171 = vmatpush1.bf16.msra.mxu0 0
        %5172 = vmatprep.mubr.bf16.mxu0 0
        %5173 = vmatmul.mubr.bf16.gmra.mrb[0].mxu0 %v5135
        %v5174 = vpop.f32.mrb[0].mxu0
        %v5175 = vadd.f32 0.0, %v5174
        %v5176 = vpop.f32.mrb[0].mxu0
        %v5177 = vpop.f32.mrb[0].mxu0
        %v5178 = vpop.f32.mrb[0].mxu0
        %5179 = vdwg.mxu0
        %v5181 = vsel %vm2571, %v4470, 0
        %v5184 = vsel %vm2575, %v5084, 0
        %5186 = vmatprep.subr.bf16.mxu0 0
        %5187 = vmatpush1.bf16.msra.mxu0 %v5184
        %5188 = vmatprep.subr.bf16.mxu0 0
        %5189 = vmatpush1.bf16.msra.mxu0 0
        %5190 = vmatprep.subr.bf16.mxu0 0
        %5191 = vmatpush1.bf16.msra.mxu0 0
        %5192 = vmatprep.subr.bf16.mxu0 0
        %5193 = vmatpush1.bf16.msra.mxu0 0
        %5194 = vmatprep.subr.bf16.mxu0 0
        %5195 = vmatpush1.bf16.msra.mxu0 0
        %5196 = vmatprep.subr.bf16.mxu0 0
        %5197 = vmatpush1.bf16.msra.mxu0 0
        %5198 = vmatprep.subr.bf16.mxu0 0
        %5199 = vmatpush1.bf16.msra.mxu0 0
        %5200 = vmatprep.subr.bf16.mxu0 0
        %5201 = vmatpush1.bf16.msra.mxu0 0
        %5202 = vmatprep.subr.bf16.mxu0 0
        %5203 = vmatpush1.bf16.msra.mxu0 0
        %5204 = vmatprep.subr.bf16.mxu0 0
        %5205 = vmatpush1.bf16.msra.mxu0 0
        %5206 = vmatprep.subr.bf16.mxu0 0
        %5207 = vmatpush1.bf16.msra.mxu0 0
        %5208 = vmatprep.subr.bf16.mxu0 0
        %5209 = vmatpush1.bf16.msra.mxu0 0
        %5210 = vmatprep.subr.bf16.mxu0 0
        %5211 = vmatpush1.bf16.msra.mxu0 0
        %5212 = vmatprep.subr.bf16.mxu0 0
        %5213 = vmatpush1.bf16.msra.mxu0 0
        %5214 = vmatprep.subr.bf16.mxu0 0
        %5215 = vmatpush1.bf16.msra.mxu0 0
        %5216 = vmatprep.subr.bf16.mxu0 0
        %5217 = vmatpush1.bf16.msra.mxu0 0
        %5218 = vmatprep.mubr.bf16.mxu0 0
        %5219 = vmatmul.mubr.bf16.gmra.mrb[0].mxu0 %v5181
        %v5220 = vpop.f32.mrb[0].mxu0
        %v5221 = vadd.f32 0.0, %v5220
        %v5222 = vpop.f32.mrb[0].mxu0
        %v5223 = vpop.f32.mrb[0].mxu0
        %v5224 = vpop.f32.mrb[0].mxu0
        %5225 = vdwg.mxu0
        %v5227 = vsel %vm2571, %v4473, 0
        %v5230 = vsel %vm2575, %v5087, 0
        %5232 = vmatprep.subr.bf16.mxu0 0
        %5233 = vmatpush1.bf16.msra.mxu0 %v5230
        %5234 = vmatprep.subr.bf16.mxu0 0
        %5235 = vmatpush1.bf16.msra.mxu0 0
        %5236 = vmatprep.subr.bf16.mxu0 0
        %5237 = vmatpush1.bf16.msra.mxu0 0
        %5238 = vmatprep.subr.bf16.mxu0 0
        %5239 = vmatpush1.bf16.msra.mxu0 0
        %5240 = vmatprep.subr.bf16.mxu0 0
        %5241 = vmatpush1.bf16.msra.mxu0 0
        %5242 = vmatprep.subr.bf16.mxu0 0
        %5243 = vmatpush1.bf16.msra.mxu0 0
        %5244 = vmatprep.subr.bf16.mxu0 0
        %5245 = vmatpush1.bf16.msra.mxu0 0
        %5246 = vmatprep.subr.bf16.mxu0 0
        %5247 = vmatpush1.bf16.msra.mxu0 0
        %5248 = vmatprep.subr.bf16.mxu0 0
        %5249 = vmatpush1.bf16.msra.mxu0 0
        %5250 = vmatprep.subr.bf16.mxu0 0
        %5251 = vmatpush1.bf16.msra.mxu0 0
        %5252 = vmatprep.subr.bf16.mxu0 0
        %5253 = vmatpush1.bf16.msra.mxu0 0
        %5254 = vmatprep.subr.bf16.mxu0 0
        %5255 = vmatpush1.bf16.msra.mxu0 0
        %5256 = vmatprep.subr.bf16.mxu0 0
        %5257 = vmatpush1.bf16.msra.mxu0 0
        %5258 = vmatprep.subr.bf16.mxu0 0
        %5259 = vmatpush1.bf16.msra.mxu0 0
        %5260 = vmatprep.subr.bf16.mxu0 0
        %5261 = vmatpush1.bf16.msra.mxu0 0
        %5262 = vmatprep.subr.bf16.mxu0 0
        %5263 = vmatpush1.bf16.msra.mxu0 0
        %5264 = vmatprep.mubr.bf16.mxu0 0
        %5265 = vmatmul.mubr.bf16.gmra.mrb[0].mxu0 %v5227
        %v5266 = vpop.f32.mrb[0].mxu0
        %v5267 = vadd.f32 0.0, %v5266
        %v5268 = vpop.f32.mrb[0].mxu0
        %v5269 = vpop.f32.mrb[0].mxu0
        %v5270 = vpop.f32.mrb[0].mxu0
        %5271 = vdwg.mxu0
        %v5272 = vsel %vm3692, %v5129, -inf
        %5273 = vmax.xlane.f32.xlu0 %v5272
        %v5274 = vpop.xlane.xlu0 %5273
        %v5275 = vsel %vm3692, %v5175, -inf
        %5276 = vmax.xlane.f32.xlu0 %v5275
        %v5277 = vpop.xlane.xlu0 %5276
        %v5278 = vsel %vm3692, %v5221, -inf
        %5279 = vmax.xlane.f32.xlu0 %v5278
        %v5280 = vpop.xlane.xlu0 %5279
        %v5281 = vsel %vm3692, %v5267, -inf
        %5282 = vmax.xlane.f32.xlu0 %v5281
        %v5283 = vpop.xlane.xlu0 %5282
        %v5284 = vsub.f32 %v5129, %v5274
        %v5285 = vsub.f32 %v5175, %v5277
        %v5286 = vsub.f32 %v5221, %v5280
        %v5287 = vsub.f32 %v5267, %v5283
        %v5288 = vmul.f32 %v5284, 1.442695
        %v5289 = vpow.pop %v5288
        %v5290 = vmul.f32 %v5285, 1.442695
        %v5291 = vpow.pop %v5290
        %v5292 = vmul.f32 %v5286, 1.442695
        %v5293 = vpow.pop %v5292
        %v5294 = vmul.f32 %v5287, 1.442695
        %v5295 = vpow.pop %v5294
        %v5296 = vsel %vm3692, %v5289, 0.0
        %5297 = vadd.xlane.f32.xlu0 %v5296
        %v5298 = vpop.xlane.xlu0 %5297
        %v5299 = vsel %vm3692, %v5291, 0.0
        %5300 = vadd.xlane.f32.xlu0 %v5299
        %v5301 = vpop.xlane.xlu0 %5300
        %v5302 = vsel %vm3692, %v5293, 0.0
        %5303 = vadd.xlane.f32.xlu0 %v5302
        %v5304 = vpop.xlane.xlu0 %5303
        %v5305 = vsel %vm3692, %v5295, 0.0
        %5306 = vadd.xlane.f32.xlu0 %v5305
        %v5307 = vpop.xlane.xlu0 %5306
        %v5308 = vrcp.pop %v5298
        %v5309 = vrcp.pop %v5301
        %v5310 = vrcp.pop %v5304
        %v5311 = vrcp.pop %v5307
        %v5312 = vmul.f32 %v5289, %v5308
        %v5313 = vmul.f32 %v5291, %v5309
        %v5314 = vmul.f32 %v5293, %v5310
        %v5315 = vmul.f32 %v5295, %v5311
        %v5316 = vpack.c.bf16 %v5312, %v5312
        %v5317 = vpack.c.bf16 %v5313, %v5313
        %v5318 = vpack.c.bf16 %v5314, %v5314
        %v5319 = vpack.c.bf16 %v5315, %v5315
        %v5320 = vpack.c.bf16 %v4292, %v4292
        %v5321 = vpack.c.bf16 %v4316, %v4316
        %v5322 = vpack.c.bf16 %v4299, %v4299
        %v5323 = vpack.c.bf16 %v4317, %v4317
        %v5324 = vpack.c.bf16 %v4308, %v4308
        %v5325 = vpack.c.bf16 %v4318, %v4318
        %v5326 = vpack.c.bf16 %v4315, %v4315
        %v5327 = vpack.c.bf16 %v4319, %v4319
        %v5328 = vpack.c.bf16 %v4360, %v4360
        %v5329 = vpack.c.bf16 %v4384, %v4384
        %v5330 = vpack.c.bf16 %v4367, %v4367
        %v5331 = vpack.c.bf16 %v4385, %v4385
        %v5332 = vpack.c.bf16 %v4376, %v4376
        %v5333 = vpack.c.bf16 %v4386, %v4386
        %v5334 = vpack.c.bf16 %v4383, %v4383
        %v5335 = vpack.c.bf16 %v4387, %v4387
        %5336 = vxpose.xlu0.c.b16.start [1/8] %v5320, 128
        %5337 = vxpose.xlu0.c.b16.cont [2/8] 0, 128
        %5338 = vxpose.xlu0.c.b16.cont [3/8] 0, 128
        %5339 = vxpose.xlu0.c.b16.cont [4/8] 0, 128
        %5340 = vxpose.xlu0.c.b16.cont [5/8] 0, 128
        %5341 = vxpose.xlu0.c.b16.cont [6/8] 0, 128
        %5342 = vxpose.xlu0.c.b16.cont [7/8] 0, 128
        %5343 = vxpose.xlu0.c.b16.end [8/8] 0, 128
        %v5344 = vpop.trf.xlu0
        %v5345 = vpop.trf.xlu0
        %v5346 = vpop.trf.xlu0
        %v5347 = vpop.trf.xlu0
        %v5348 = vpop.trf.xlu0
        %v5349 = vpop.trf.xlu0
        %v5350 = vpop.trf.xlu0
        %v5351 = vpop.trf.xlu0
        %5352 = vxpose.xlu0.c.b16.start [1/8] %v5321, 128
        %5353 = vxpose.xlu0.c.b16.cont [2/8] 0, 128
        %5354 = vxpose.xlu0.c.b16.cont [3/8] 0, 128
        %5355 = vxpose.xlu0.c.b16.cont [4/8] 0, 128
        %5356 = vxpose.xlu0.c.b16.cont [5/8] 0, 128
        %5357 = vxpose.xlu0.c.b16.cont [6/8] 0, 128
        %5358 = vxpose.xlu0.c.b16.cont [7/8] 0, 128
        %5359 = vxpose.xlu0.c.b16.end [8/8] 0, 128
        %v5360 = vpop.trf.xlu0
        %v5361 = vpop.trf.xlu0
        %v5362 = vpop.trf.xlu0
        %v5363 = vpop.trf.xlu0
        %v5364 = vpop.trf.xlu0
        %v5365 = vpop.trf.xlu0
        %v5366 = vpop.trf.xlu0
        %v5367 = vpop.trf.xlu0
        %5368 = vxpose.xlu0.c.b16.start [1/8] %v5322, 128
        %5369 = vxpose.xlu0.c.b16.cont [2/8] 0, 128
        %5370 = vxpose.xlu0.c.b16.cont [3/8] 0, 128
        %5371 = vxpose.xlu0.c.b16.cont [4/8] 0, 128
        %5372 = vxpose.xlu0.c.b16.cont [5/8] 0, 128
        %5373 = vxpose.xlu0.c.b16.cont [6/8] 0, 128
        %5374 = vxpose.xlu0.c.b16.cont [7/8] 0, 128
        %5375 = vxpose.xlu0.c.b16.end [8/8] 0, 128
        %v5376 = vpop.trf.xlu0
        %v5377 = vpop.trf.xlu0
        %v5378 = vpop.trf.xlu0
        %v5379 = vpop.trf.xlu0
        %v5380 = vpop.trf.xlu0
        %v5381 = vpop.trf.xlu0
        %v5382 = vpop.trf.xlu0
        %v5383 = vpop.trf.xlu0
        %5384 = vxpose.xlu0.c.b16.start [1/8] %v5323, 128
        %5385 = vxpose.xlu0.c.b16.cont [2/8] 0, 128
        %5386 = vxpose.xlu0.c.b16.cont [3/8] 0, 128
        %5387 = vxpose.xlu0.c.b16.cont [4/8] 0, 128
        %5388 = vxpose.xlu0.c.b16.cont [5/8] 0, 128
        %5389 = vxpose.xlu0.c.b16.cont [6/8] 0, 128
        %5390 = vxpose.xlu0.c.b16.cont [7/8] 0, 128
        %5391 = vxpose.xlu0.c.b16.end [8/8] 0, 128
        %v5392 = vpop.trf.xlu0
        %v5393 = vpop.trf.xlu0
        %v5394 = vpop.trf.xlu0
        %v5395 = vpop.trf.xlu0
        %v5396 = vpop.trf.xlu0
        %v5397 = vpop.trf.xlu0
        %v5398 = vpop.trf.xlu0
        %v5399 = vpop.trf.xlu0
        %5400 = vxpose.xlu0.c.b16.start [1/8] %v5324, 128
        %5401 = vxpose.xlu0.c.b16.cont [2/8] 0, 128
        %5402 = vxpose.xlu0.c.b16.cont [3/8] 0, 128
        %5403 = vxpose.xlu0.c.b16.cont [4/8] 0, 128
        %5404 = vxpose.xlu0.c.b16.cont [5/8] 0, 128
        %5405 = vxpose.xlu0.c.b16.cont [6/8] 0, 128
        %5406 = vxpose.xlu0.c.b16.cont [7/8] 0, 128
        %5407 = vxpose.xlu0.c.b16.end [8/8] 0, 128
        %v5408 = vpop.trf.xlu0
        %v5409 = vpop.trf.xlu0
        %v5410 = vpop.trf.xlu0
        %v5411 = vpop.trf.xlu0
        %v5412 = vpop.trf.xlu0
        %v5413 = vpop.trf.xlu0
        %v5414 = vpop.trf.xlu0
        %v5415 = vpop.trf.xlu0
        %5416 = vxpose.xlu0.c.b16.start [1/8] %v5325, 128
        %5417 = vxpose.xlu0.c.b16.cont [2/8] 0, 128
        %5418 = vxpose.xlu0.c.b16.cont [3/8] 0, 128
        %5419 = vxpose.xlu0.c.b16.cont [4/8] 0, 128
        %5420 = vxpose.xlu0.c.b16.cont [5/8] 0, 128
        %5421 = vxpose.xlu0.c.b16.cont [6/8] 0, 128
        %5422 = vxpose.xlu0.c.b16.cont [7/8] 0, 128
        %5423 = vxpose.xlu0.c.b16.end [8/8] 0, 128
        %v5424 = vpop.trf.xlu0
        %v5425 = vpop.trf.xlu0
        %v5426 = vpop.trf.xlu0
        %v5427 = vpop.trf.xlu0
        %v5428 = vpop.trf.xlu0
        %v5429 = vpop.trf.xlu0
        %v5430 = vpop.trf.xlu0
        %v5431 = vpop.trf.xlu0
        %5432 = vxpose.xlu0.c.b16.start [1/8] %v5326, 128
        %5433 = vxpose.xlu0.c.b16.cont [2/8] 0, 128
        %5434 = vxpose.xlu0.c.b16.cont [3/8] 0, 128
        %5435 = vxpose.xlu0.c.b16.cont [4/8] 0, 128
        %5436 = vxpose.xlu0.c.b16.cont [5/8] 0, 128
        %5437 = vxpose.xlu0.c.b16.cont [6/8] 0, 128
        %5438 = vxpose.xlu0.c.b16.cont [7/8] 0, 128
        %5439 = vxpose.xlu0.c.b16.end [8/8] 0, 128
        %v5440 = vpop.trf.xlu0
        %v5441 = vpop.trf.xlu0
        %v5442 = vpop.trf.xlu0
        %v5443 = vpop.trf.xlu0
        %v5444 = vpop.trf.xlu0
        %v5445 = vpop.trf.xlu0
        %v5446 = vpop.trf.xlu0
        %v5447 = vpop.trf.xlu0
        %5448 = vxpose.xlu0.c.b16.start [1/8] %v5327, 128
        %5449 = vxpose.xlu0.c.b16.cont [2/8] 0, 128
        %5450 = vxpose.xlu0.c.b16.cont [3/8] 0, 128
        %5451 = vxpose.xlu0.c.b16.cont [4/8] 0, 128
        %5452 = vxpose.xlu0.c.b16.cont [5/8] 0, 128
        %5453 = vxpose.xlu0.c.b16.cont [6/8] 0, 128
        %5454 = vxpose.xlu0.c.b16.cont [7/8] 0, 128
        %5455 = vxpose.xlu0.c.b16.end [8/8] 0, 128
        %v5456 = vpop.trf.xlu0
        %v5457 = vpop.trf.xlu0
        %v5458 = vpop.trf.xlu0
        %v5459 = vpop.trf.xlu0
        %v5460 = vpop.trf.xlu0
        %v5461 = vpop.trf.xlu0
        %v5462 = vpop.trf.xlu0
        %v5463 = vpop.trf.xlu0
        %5464 = vxpose.xlu0.c.b16.start [1/8] %v5328, 128
        %5465 = vxpose.xlu0.c.b16.cont [2/8] 0, 128
        %5466 = vxpose.xlu0.c.b16.cont [3/8] 0, 128
        %5467 = vxpose.xlu0.c.b16.cont [4/8] 0, 128
        %5468 = vxpose.xlu0.c.b16.cont [5/8] 0, 128
        %5469 = vxpose.xlu0.c.b16.cont [6/8] 0, 128
        %5470 = vxpose.xlu0.c.b16.cont [7/8] 0, 128
        %5471 = vxpose.xlu0.c.b16.end [8/8] 0, 128
        %v5472 = vpop.trf.xlu0
        %v5473 = vpop.trf.xlu0
        %v5474 = vpop.trf.xlu0
        %v5475 = vpop.trf.xlu0
        %v5476 = vpop.trf.xlu0
        %v5477 = vpop.trf.xlu0
        %v5478 = vpop.trf.xlu0
        %v5479 = vpop.trf.xlu0
        %5480 = vxpose.xlu0.c.b16.start [1/8] %v5329, 128
        %5481 = vxpose.xlu0.c.b16.cont [2/8] 0, 128
        %5482 = vxpose.xlu0.c.b16.cont [3/8] 0, 128
        %5483 = vxpose.xlu0.c.b16.cont [4/8] 0, 128
        %5484 = vxpose.xlu0.c.b16.cont [5/8] 0, 128
        %5485 = vxpose.xlu0.c.b16.cont [6/8] 0, 128
        %5486 = vxpose.xlu0.c.b16.cont [7/8] 0, 128
        %5487 = vxpose.xlu0.c.b16.end [8/8] 0, 128
        %v5488 = vpop.trf.xlu0
        %v5489 = vpop.trf.xlu0
        %v5490 = vpop.trf.xlu0
        %v5491 = vpop.trf.xlu0
        %v5492 = vpop.trf.xlu0
        %v5493 = vpop.trf.xlu0
        %v5494 = vpop.trf.xlu0
        %v5495 = vpop.trf.xlu0
        %5496 = vxpose.xlu0.c.b16.start [1/8] %v5330, 128
        %5497 = vxpose.xlu0.c.b16.cont [2/8] 0, 128
        %5498 = vxpose.xlu0.c.b16.cont [3/8] 0, 128
        %5499 = vxpose.xlu0.c.b16.cont [4/8] 0, 128
        %5500 = vxpose.xlu0.c.b16.cont [5/8] 0, 128
        %5501 = vxpose.xlu0.c.b16.cont [6/8] 0, 128
        %5502 = vxpose.xlu0.c.b16.cont [7/8] 0, 128
        %5503 = vxpose.xlu0.c.b16.end [8/8] 0, 128
        %v5504 = vpop.trf.xlu0
        %v5505 = vpop.trf.xlu0
        %v5506 = vpop.trf.xlu0
        %v5507 = vpop.trf.xlu0
        %v5508 = vpop.trf.xlu0
        %v5509 = vpop.trf.xlu0
        %v5510 = vpop.trf.xlu0
        %v5511 = vpop.trf.xlu0
        %5512 = vxpose.xlu0.c.b16.start [1/8] %v5331, 128
        %5513 = vxpose.xlu0.c.b16.cont [2/8] 0, 128
        %5514 = vxpose.xlu0.c.b16.cont [3/8] 0, 128
        %5515 = vxpose.xlu0.c.b16.cont [4/8] 0, 128
        %5516 = vxpose.xlu0.c.b16.cont [5/8] 0, 128
        %5517 = vxpose.xlu0.c.b16.cont [6/8] 0, 128
        %5518 = vxpose.xlu0.c.b16.cont [7/8] 0, 128
        %5519 = vxpose.xlu0.c.b16.end [8/8] 0, 128
        %v5520 = vpop.trf.xlu0
        %v5521 = vpop.trf.xlu0
        %v5522 = vpop.trf.xlu0
        %v5523 = vpop.trf.xlu0
        %v5524 = vpop.trf.xlu0
        %v5525 = vpop.trf.xlu0
        %v5526 = vpop.trf.xlu0
        %v5527 = vpop.trf.xlu0
        %5528 = vxpose.xlu0.c.b16.start [1/8] %v5332, 128
        %5529 = vxpose.xlu0.c.b16.cont [2/8] 0, 128
        %5530 = vxpose.xlu0.c.b16.cont [3/8] 0, 128
        %5531 = vxpose.xlu0.c.b16.cont [4/8] 0, 128
        %5532 = vxpose.xlu0.c.b16.cont [5/8] 0, 128
        %5533 = vxpose.xlu0.c.b16.cont [6/8] 0, 128
        %5534 = vxpose.xlu0.c.b16.cont [7/8] 0, 128
        %5535 = vxpose.xlu0.c.b16.end [8/8] 0, 128
        %v5536 = vpop.trf.xlu0
        %v5537 = vpop.trf.xlu0
        %v5538 = vpop.trf.xlu0
        %v5539 = vpop.trf.xlu0
        %v5540 = vpop.trf.xlu0
        %v5541 = vpop.trf.xlu0
        %v5542 = vpop.trf.xlu0
        %v5543 = vpop.trf.xlu0
        %5544 = vxpose.xlu0.c.b16.start [1/8] %v5333, 128
        %5545 = vxpose.xlu0.c.b16.cont [2/8] 0, 128
        %5546 = vxpose.xlu0.c.b16.cont [3/8] 0, 128
        %5547 = vxpose.xlu0.c.b16.cont [4/8] 0, 128
        %5548 = vxpose.xlu0.c.b16.cont [5/8] 0, 128
        %5549 = vxpose.xlu0.c.b16.cont [6/8] 0, 128
        %5550 = vxpose.xlu0.c.b16.cont [7/8] 0, 128
        %5551 = vxpose.xlu0.c.b16.end [8/8] 0, 128
        %v5552 = vpop.trf.xlu0
        %v5553 = vpop.trf.xlu0
        %v5554 = vpop.trf.xlu0
        %v5555 = vpop.trf.xlu0
        %v5556 = vpop.trf.xlu0
        %v5557 = vpop.trf.xlu0
        %v5558 = vpop.trf.xlu0
        %v5559 = vpop.trf.xlu0
        %5560 = vxpose.xlu0.c.b16.start [1/8] %v5334, 128
        %5561 = vxpose.xlu0.c.b16.cont [2/8] 0, 128
        %5562 = vxpose.xlu0.c.b16.cont [3/8] 0, 128
        %5563 = vxpose.xlu0.c.b16.cont [4/8] 0, 128
        %5564 = vxpose.xlu0.c.b16.cont [5/8] 0, 128
        %5565 = vxpose.xlu0.c.b16.cont [6/8] 0, 128
        %5566 = vxpose.xlu0.c.b16.cont [7/8] 0, 128
        %5567 = vxpose.xlu0.c.b16.end [8/8] 0, 128
        %v5568 = vpop.trf.xlu0
        %v5569 = vpop.trf.xlu0
        %v5570 = vpop.trf.xlu0
        %v5571 = vpop.trf.xlu0
        %v5572 = vpop.trf.xlu0
        %v5573 = vpop.trf.xlu0
        %v5574 = vpop.trf.xlu0
        %v5575 = vpop.trf.xlu0
        %5576 = vxpose.xlu0.c.b16.start [1/8] %v5335, 128
        %5577 = vxpose.xlu0.c.b16.cont [2/8] 0, 128
        %5578 = vxpose.xlu0.c.b16.cont [3/8] 0, 128
        %5579 = vxpose.xlu0.c.b16.cont [4/8] 0, 128
        %5580 = vxpose.xlu0.c.b16.cont [5/8] 0, 128
        %5581 = vxpose.xlu0.c.b16.cont [6/8] 0, 128
        %5582 = vxpose.xlu0.c.b16.cont [7/8] 0, 128
        %5583 = vxpose.xlu0.c.b16.end [8/8] 0, 128
        %v5584 = vpop.trf.xlu0
        %v5585 = vpop.trf.xlu0
        %v5586 = vpop.trf.xlu0
        %v5587 = vpop.trf.xlu0
        %v5588 = vpop.trf.xlu0
        %v5589 = vpop.trf.xlu0
        %v5590 = vpop.trf.xlu0
        %v5591 = vpop.trf.xlu0
        %v5592 = vcombine.low %v5344, %v5408
        %v5594 = vunpack.c.l.s4 1983009808
        %v5595 = vunpack.c.0.s8 %v5594
        %v5596 = vlaneseq
        %v5597 = vshrl.u32 %v5596, 7
        %v5598 = vsub.s32 %v5595, %v5597
        %v5599 = vrot.slane %v5592, %v5598
        %v5600 = vcombine.low %v5376, %v5440
        %v5602 = vunpack.c.l.s4 1983009808
        %v5603 = vunpack.c.0.s8 %v5602
        %v5604 = vlaneseq
        %v5605 = vshrl.u32 %v5604, 7
        %v5606 = vsub.s32 %v5603, %v5605
        %v5607 = vrot.slane %v5600, %v5606
        %v5608 = vcombine.low %v5472, %v5536
        %v5610 = vunpack.c.l.s4 1983009808
        %v5611 = vunpack.c.0.s8 %v5610
        %v5612 = vlaneseq
        %v5613 = vshrl.u32 %v5612, 7
        %v5614 = vsub.s32 %v5611, %v5613
        %v5615 = vrot.slane %v5608, %v5614
        %v5616 = vcombine.low %v5504, %v5568
        %v5618 = vunpack.c.l.s4 1983009808
        %v5619 = vunpack.c.0.s8 %v5618
        %v5620 = vlaneseq
        %v5621 = vshrl.u32 %v5620, 7
        %v5622 = vsub.s32 %v5619, %v5621
        %v5623 = vrot.slane %v5616, %v5622
        %v5624 = vcombine.low %v5599, %v5607
        %v5625 = vcombine.high %v5599, %v5607
        %v5627 = vunpack.c.l.s4 1934713408
        %v5628 = vunpack.c.0.s8 %v5627
        %v5629 = vlaneseq
        %v5630 = vshrl.u32 %v5629, 7
        %v5631 = vsub.s32 %v5628, %v5630
        %v5632 = vrot.slane %v5624, %v5631
        %v5634 = vunpack.c.l.s4 1934713408
        %v5635 = vunpack.c.0.s8 %v5634
        %v5636 = vlaneseq
        %v5637 = vshrl.u32 %v5636, 7
        %v5638 = vsub.s32 %v5635, %v5637
        %v5639 = vrot.slane %v5625, %v5638
        %v5640 = vcombine.low %v5615, %v5623
        %v5641 = vcombine.high %v5615, %v5623
        %v5643 = vunpack.c.l.s4 1934713408
        %v5644 = vunpack.c.0.s8 %v5643
        %v5645 = vlaneseq
        %v5646 = vshrl.u32 %v5645, 7
        %v5647 = vsub.s32 %v5644, %v5646
        %v5648 = vrot.slane %v5640, %v5647
        %v5650 = vunpack.c.l.s4 1934713408
        %v5651 = vunpack.c.0.s8 %v5650
        %v5652 = vlaneseq
        %v5653 = vshrl.u32 %v5652, 7
        %v5654 = vsub.s32 %v5651, %v5653
        %v5655 = vrot.slane %v5641, %v5654
        %v5656 = vcombine.low %v5632, %v5648
        %v5657 = vcombine.high %v5632, %v5648
        %v5658 = vcombine.low %v5639, %v5655
        %v5659 = vcombine.high %v5639, %v5655
        %v5660 = vcombine.low %v5360, %v5424
        %v5662 = vunpack.c.l.s4 1983009808
        %v5663 = vunpack.c.0.s8 %v5662
        %v5664 = vlaneseq
        %v5665 = vshrl.u32 %v5664, 7
        %v5666 = vsub.s32 %v5663, %v5665
        %v5667 = vrot.slane %v5660, %v5666
        %v5668 = vcombine.low %v5392, %v5456
        %v5670 = vunpack.c.l.s4 1983009808
        %v5671 = vunpack.c.0.s8 %v5670
        %v5672 = vlaneseq
        %v5673 = vshrl.u32 %v5672, 7
        %v5674 = vsub.s32 %v5671, %v5673
        %v5675 = vrot.slane %v5668, %v5674
        %v5676 = vcombine.low %v5488, %v5552
        %v5678 = vunpack.c.l.s4 1983009808
        %v5679 = vunpack.c.0.s8 %v5678
        %v5680 = vlaneseq
        %v5681 = vshrl.u32 %v5680, 7
        %v5682 = vsub.s32 %v5679, %v5681
        %v5683 = vrot.slane %v5676, %v5682
        %v5684 = vcombine.low %v5520, %v5584
        %v5686 = vunpack.c.l.s4 1983009808
        %v5687 = vunpack.c.0.s8 %v5686
        %v5688 = vlaneseq
        %v5689 = vshrl.u32 %v5688, 7
        %v5690 = vsub.s32 %v5687, %v5689
        %v5691 = vrot.slane %v5684, %v5690
        %v5692 = vcombine.low %v5667, %v5675
        %v5693 = vcombine.high %v5667, %v5675
        %v5695 = vunpack.c.l.s4 1934713408
        %v5696 = vunpack.c.0.s8 %v5695
        %v5697 = vlaneseq
        %v5698 = vshrl.u32 %v5697, 7
        %v5699 = vsub.s32 %v5696, %v5698
        %v5700 = vrot.slane %v5692, %v5699
        %v5702 = vunpack.c.l.s4 1934713408
        %v5703 = vunpack.c.0.s8 %v5702
        %v5704 = vlaneseq
        %v5705 = vshrl.u32 %v5704, 7
        %v5706 = vsub.s32 %v5703, %v5705
        %v5707 = vrot.slane %v5693, %v5706
        %v5708 = vcombine.low %v5683, %v5691
        %v5709 = vcombine.high %v5683, %v5691
        %v5711 = vunpack.c.l.s4 1934713408
        %v5712 = vunpack.c.0.s8 %v5711
        %v5713 = vlaneseq
        %v5714 = vshrl.u32 %v5713, 7
        %v5715 = vsub.s32 %v5712, %v5714
        %v5716 = vrot.slane %v5708, %v5715
        %v5718 = vunpack.c.l.s4 1934713408
        %v5719 = vunpack.c.0.s8 %v5718
        %v5720 = vlaneseq
        %v5721 = vshrl.u32 %v5720, 7
        %v5722 = vsub.s32 %v5719, %v5721
        %v5723 = vrot.slane %v5709, %v5722
        %v5724 = vcombine.low %v5700, %v5716
        %v5725 = vcombine.high %v5700, %v5716
        %v5726 = vcombine.low %v5707, %v5723
        %v5727 = vcombine.high %v5707, %v5723
        %v5730 = vpack.i.b16 %v5724, %v5656
        %v5732 = vshrl.u32 %v5656, 16
        %v5733 = vshrl.u32 %v5724, 16
        %v5734 = vpack.i.b16 %v5733, %v5732
        %v5738 = vpack.i.b16 %v5725, %v5657
        %v5740 = vshrl.u32 %v5657, 16
        %v5741 = vshrl.u32 %v5725, 16
        %v5742 = vpack.i.b16 %v5741, %v5740
        %v5746 = vpack.i.b16 %v5726, %v5658
        %v5748 = vshrl.u32 %v5658, 16
        %v5749 = vshrl.u32 %v5726, 16
        %v5750 = vpack.i.b16 %v5749, %v5748
        %v5754 = vpack.i.b16 %v5727, %v5659
        %v5756 = vshrl.u32 %v5659, 16
        %v5757 = vshrl.u32 %v5727, 16
        %v5758 = vpack.i.b16 %v5757, %v5756
        %5760 = vxpose.xlu0.c.b16.start [1/8] %v5730, 128
        %5761 = vxpose.xlu0.c.b16.cont [2/8] 0, 128
        %5762 = vxpose.xlu0.c.b16.cont [3/8] 0, 128
        %5763 = vxpose.xlu0.c.b16.cont [4/8] 0, 128
        %5764 = vxpose.xlu0.c.b16.cont [5/8] 0, 128
        %5765 = vxpose.xlu0.c.b16.cont [6/8] 0, 128
        %5766 = vxpose.xlu0.c.b16.cont [7/8] 0, 128
        %5767 = vxpose.xlu0.c.b16.end [8/8] 0, 128
        %v5768 = vpop.trf.xlu0
        %v5769 = vpop.trf.xlu0
        %v5770 = vpop.trf.xlu0
        %v5771 = vpop.trf.xlu0
        %v5772 = vpop.trf.xlu0
        %v5773 = vpop.trf.xlu0
        %v5774 = vpop.trf.xlu0
        %v5775 = vpop.trf.xlu0
        %5776 = vxpose.xlu0.c.b16.start [1/8] %v5734, 128
        %5777 = vxpose.xlu0.c.b16.cont [2/8] 0, 128
        %5778 = vxpose.xlu0.c.b16.cont [3/8] 0, 128
        %5779 = vxpose.xlu0.c.b16.cont [4/8] 0, 128
        %5780 = vxpose.xlu0.c.b16.cont [5/8] 0, 128
        %5781 = vxpose.xlu0.c.b16.cont [6/8] 0, 128
        %5782 = vxpose.xlu0.c.b16.cont [7/8] 0, 128
        %5783 = vxpose.xlu0.c.b16.end [8/8] 0, 128
        %v5784 = vpop.trf.xlu0
        %v5785 = vpop.trf.xlu0
        %v5786 = vpop.trf.xlu0
        %v5787 = vpop.trf.xlu0
        %v5788 = vpop.trf.xlu0
        %v5789 = vpop.trf.xlu0
        %v5790 = vpop.trf.xlu0
        %v5791 = vpop.trf.xlu0
        %5792 = vxpose.xlu0.c.b16.start [1/8] %v5738, 128
        %5793 = vxpose.xlu0.c.b16.cont [2/8] 0, 128
        %5794 = vxpose.xlu0.c.b16.cont [3/8] 0, 128
        %5795 = vxpose.xlu0.c.b16.cont [4/8] 0, 128
        %5796 = vxpose.xlu0.c.b16.cont [5/8] 0, 128
        %5797 = vxpose.xlu0.c.b16.cont [6/8] 0, 128
        %5798 = vxpose.xlu0.c.b16.cont [7/8] 0, 128
        %5799 = vxpose.xlu0.c.b16.end [8/8] 0, 128
        %v5800 = vpop.trf.xlu0
        %v5801 = vpop.trf.xlu0
        %v5802 = vpop.trf.xlu0
        %v5803 = vpop.trf.xlu0
        %v5804 = vpop.trf.xlu0
        %v5805 = vpop.trf.xlu0
        %v5806 = vpop.trf.xlu0
        %v5807 = vpop.trf.xlu0
        %5808 = vxpose.xlu0.c.b16.start [1/8] %v5742, 128
        %5809 = vxpose.xlu0.c.b16.cont [2/8] 0, 128
        %5810 = vxpose.xlu0.c.b16.cont [3/8] 0, 128
        %5811 = vxpose.xlu0.c.b16.cont [4/8] 0, 128
        %5812 = vxpose.xlu0.c.b16.cont [5/8] 0, 128
        %5813 = vxpose.xlu0.c.b16.cont [6/8] 0, 128
        %5814 = vxpose.xlu0.c.b16.cont [7/8] 0, 128
        %5815 = vxpose.xlu0.c.b16.end [8/8] 0, 128
        %v5816 = vpop.trf.xlu0
        %v5817 = vpop.trf.xlu0
        %v5818 = vpop.trf.xlu0
        %v5819 = vpop.trf.xlu0
        %v5820 = vpop.trf.xlu0
        %v5821 = vpop.trf.xlu0
        %v5822 = vpop.trf.xlu0
        %v5823 = vpop.trf.xlu0
        %5824 = vxpose.xlu0.c.b16.start [1/8] %v5746, 128
        %5825 = vxpose.xlu0.c.b16.cont [2/8] 0, 128
        %5826 = vxpose.xlu0.c.b16.cont [3/8] 0, 128
        %5827 = vxpose.xlu0.c.b16.cont [4/8] 0, 128
        %5828 = vxpose.xlu0.c.b16.cont [5/8] 0, 128
        %5829 = vxpose.xlu0.c.b16.cont [6/8] 0, 128
        %5830 = vxpose.xlu0.c.b16.cont [7/8] 0, 128
        %5831 = vxpose.xlu0.c.b16.end [8/8] 0, 128
        %v5832 = vpop.trf.xlu0
        %v5833 = vpop.trf.xlu0
        %v5834 = vpop.trf.xlu0
        %v5835 = vpop.trf.xlu0
        %v5836 = vpop.trf.xlu0
        %v5837 = vpop.trf.xlu0
        %v5838 = vpop.trf.xlu0
        %v5839 = vpop.trf.xlu0
        %5840 = vxpose.xlu0.c.b16.start [1/8] %v5750, 128
        %5841 = vxpose.xlu0.c.b16.cont [2/8] 0, 128
        %5842 = vxpose.xlu0.c.b16.cont [3/8] 0, 128
        %5843 = vxpose.xlu0.c.b16.cont [4/8] 0, 128
        %5844 = vxpose.xlu0.c.b16.cont [5/8] 0, 128
        %5845 = vxpose.xlu0.c.b16.cont [6/8] 0, 128
        %5846 = vxpose.xlu0.c.b16.cont [7/8] 0, 128
        %5847 = vxpose.xlu0.c.b16.end [8/8] 0, 128
        %v5848 = vpop.trf.xlu0
        %v5849 = vpop.trf.xlu0
        %v5850 = vpop.trf.xlu0
        %v5851 = vpop.trf.xlu0
        %v5852 = vpop.trf.xlu0
        %v5853 = vpop.trf.xlu0
        %v5854 = vpop.trf.xlu0
        %v5855 = vpop.trf.xlu0
        %5856 = vxpose.xlu0.c.b16.start [1/8] %v5754, 128
        %5857 = vxpose.xlu0.c.b16.cont [2/8] 0, 128
        %5858 = vxpose.xlu0.c.b16.cont [3/8] 0, 128
        %5859 = vxpose.xlu0.c.b16.cont [4/8] 0, 128
        %5860 = vxpose.xlu0.c.b16.cont [5/8] 0, 128
        %5861 = vxpose.xlu0.c.b16.cont [6/8] 0, 128
        %5862 = vxpose.xlu0.c.b16.cont [7/8] 0, 128
        %5863 = vxpose.xlu0.c.b16.end [8/8] 0, 128
        %v5864 = vpop.trf.xlu0
        %v5865 = vpop.trf.xlu0
        %v5866 = vpop.trf.xlu0
        %v5867 = vpop.trf.xlu0
        %v5868 = vpop.trf.xlu0
        %v5869 = vpop.trf.xlu0
        %v5870 = vpop.trf.xlu0
        %v5871 = vpop.trf.xlu0
        %5872 = vxpose.xlu0.c.b16.start [1/8] %v5758, 128
        %5873 = vxpose.xlu0.c.b16.cont [2/8] 0, 128
        %5874 = vxpose.xlu0.c.b16.cont [3/8] 0, 128
        %5875 = vxpose.xlu0.c.b16.cont [4/8] 0, 128
        %5876 = vxpose.xlu0.c.b16.cont [5/8] 0, 128
        %5877 = vxpose.xlu0.c.b16.cont [6/8] 0, 128
        %5878 = vxpose.xlu0.c.b16.cont [7/8] 0, 128
        %5879 = vxpose.xlu0.c.b16.end [8/8] 0, 128
        %v5880 = vpop.trf.xlu0
        %v5881 = vpop.trf.xlu0
        %v5882 = vpop.trf.xlu0
        %v5883 = vpop.trf.xlu0
        %v5884 = vpop.trf.xlu0
        %v5885 = vpop.trf.xlu0
        %v5886 = vpop.trf.xlu0
        %v5887 = vpop.trf.xlu0
        %v5888 = vcombine.low %v5768, %v5832
        %v5890 = vunpack.c.l.s4 1983009808
        %v5891 = vunpack.c.0.s8 %v5890
        %v5892 = vlaneseq
        %v5893 = vshrl.u32 %v5892, 7
        %v5894 = vsub.s32 %v5891, %v5893
        %v5895 = vrot.slane %v5888, %v5894
        %v5896 = vcombine.low %v5800, %v5864
        %v5898 = vunpack.c.l.s4 1983009808
        %v5899 = vunpack.c.0.s8 %v5898
        %v5900 = vlaneseq
        %v5901 = vshrl.u32 %v5900, 7
        %v5902 = vsub.s32 %v5899, %v5901
        %v5903 = vrot.slane %v5896, %v5902
        %v5904 = vcombine.low %v5895, %v5903
        %v5906 = vunpack.c.l.s4 1934713408
        %v5907 = vunpack.c.0.s8 %v5906
        %v5908 = vlaneseq
        %v5909 = vshrl.u32 %v5908, 7
        %v5910 = vsub.s32 %v5907, %v5909
        %v5911 = vrot.slane %v5904, %v5910
        %v5912 = vcombine.high %v5911, 0
        %v5913 = vcombine.low %v5784, %v5848
        %v5915 = vunpack.c.l.s4 1983009808
        %v5916 = vunpack.c.0.s8 %v5915
        %v5917 = vlaneseq
        %v5918 = vshrl.u32 %v5917, 7
        %v5919 = vsub.s32 %v5916, %v5918
        %v5920 = vrot.slane %v5913, %v5919
        %v5921 = vcombine.low %v5816, %v5880
        %v5923 = vunpack.c.l.s4 1983009808
        %v5924 = vunpack.c.0.s8 %v5923
        %v5925 = vlaneseq
        %v5926 = vshrl.u32 %v5925, 7
        %v5927 = vsub.s32 %v5924, %v5926
        %v5928 = vrot.slane %v5921, %v5927
        %v5929 = vcombine.low %v5920, %v5928
        %v5931 = vunpack.c.l.s4 1934713408
        %v5932 = vunpack.c.0.s8 %v5931
        %v5933 = vlaneseq
        %v5934 = vshrl.u32 %v5933, 7
        %v5935 = vsub.s32 %v5932, %v5934
        %v5936 = vrot.slane %v5929, %v5935
        %v5937 = vcombine.high %v5936, 0
        %v5940 = vpack.i.b16 %v5936, %v5911
        %v5941 = vshrl.u32 %v5911, 16
        %v5942 = vshrl.u32 %v5936, 16
        %v5943 = vpack.i.b16 %v5942, %v5941
        %v5946 = vpack.i.b16 %v5937, %v5912
        %v5947 = vshrl.u32 %v5912, 16
        %v5948 = vshrl.u32 %v5937, 16
        %v5949 = vpack.i.b16 %v5948, %v5947
        %v5951 = vsel %vm3692, %v5940, 0
        %v5954 = vsel %vm3692, %v5316, 0
        %5956 = vmatprep.subr.bf16.mxu0 0
        %5957 = vmatpush1.bf16.xpose.msra.mxu0 %v5954
        %5958 = vmatprep.subr.bf16.mxu0 0
        %5959 = vmatpush1.bf16.xpose.msra.mxu0 0
        %5960 = vmatprep.subr.bf16.mxu0 0
        %5961 = vmatpush1.bf16.xpose.msra.mxu0 0
        %5962 = vmatprep.subr.bf16.mxu0 0
        %5963 = vmatpush1.bf16.xpose.msra.mxu0 0
        %5964 = vmatprep.subr.bf16.mxu0 0
        %5965 = vmatpush1.bf16.xpose.msra.mxu0 0
        %5966 = vmatprep.subr.bf16.mxu0 0
        %5967 = vmatpush1.bf16.xpose.msra.mxu0 0
        %5968 = vmatprep.subr.bf16.mxu0 0
        %5969 = vmatpush1.bf16.xpose.msra.mxu0 0
        %5970 = vmatprep.subr.bf16.mxu0 0
        %5971 = vmatpush1.bf16.xpose.msra.mxu0 0
        %5972 = vmatprep.subr.bf16.mxu0 0
        %5973 = vmatpush1.bf16.xpose.msra.mxu0 0
        %5974 = vmatprep.subr.bf16.mxu0 0
        %5975 = vmatpush1.bf16.xpose.msra.mxu0 0
        %5976 = vmatprep.subr.bf16.mxu0 0
        %5977 = vmatpush1.bf16.xpose.msra.mxu0 0
        %5978 = vmatprep.subr.bf16.mxu0 0
        %5979 = vmatpush1.bf16.xpose.msra.mxu0 0
        %5980 = vmatprep.subr.bf16.mxu0 0
        %5981 = vmatpush1.bf16.xpose.msra.mxu0 0
        %5982 = vmatprep.subr.bf16.mxu0 0
        %5983 = vmatpush1.bf16.xpose.msra.mxu0 0
        %5984 = vmatprep.subr.bf16.mxu0 0
        %5985 = vmatpush1.bf16.xpose.msra.mxu0 0
        %5986 = vmatprep.subr.bf16.mxu0 0
        %5987 = vmatpush1.bf16.xpose.msra.mxu0 0
        %5988 = vmatprep.mubr.bf16.mxu0 0
        %5989 = vmatmul.mubr.bf16.gmra.mrb[0].mxu0 %v5951
        %v5990 = vpop.f32.mrb[0].mxu0
        %v5991 = vadd.f32 0.0, %v5990
        %v5992 = vpop.f32.mrb[0].mxu0
        %v5993 = vpop.f32.mrb[0].mxu0
        %v5994 = vpop.f32.mrb[0].mxu0
        %5995 = vdwg.mxu0
        %v5997 = vsel %vm3692, %v5943, 0
        %v6000 = vsel %vm3692, %v5317, 0
        %6002 = vmatprep.subr.bf16.mxu0 0
        %6003 = vmatpush1.bf16.xpose.msra.mxu0 %v6000
        %6004 = vmatprep.subr.bf16.mxu0 0
        %6005 = vmatpush1.bf16.xpose.msra.mxu0 0
        %6006 = vmatprep.subr.bf16.mxu0 0
        %6007 = vmatpush1.bf16.xpose.msra.mxu0 0
        %6008 = vmatprep.subr.bf16.mxu0 0
        %6009 = vmatpush1.bf16.xpose.msra.mxu0 0
        %6010 = vmatprep.subr.bf16.mxu0 0
        %6011 = vmatpush1.bf16.xpose.msra.mxu0 0
        %6012 = vmatprep.subr.bf16.mxu0 0
        %6013 = vmatpush1.bf16.xpose.msra.mxu0 0
        %6014 = vmatprep.subr.bf16.mxu0 0
        %6015 = vmatpush1.bf16.xpose.msra.mxu0 0
        %6016 = vmatprep.subr.bf16.mxu0 0
        %6017 = vmatpush1.bf16.xpose.msra.mxu0 0
        %6018 = vmatprep.subr.bf16.mxu0 0
        %6019 = vmatpush1.bf16.xpose.msra.mxu0 0
        %6020 = vmatprep.subr.bf16.mxu0 0
        %6021 = vmatpush1.bf16.xpose.msra.mxu0 0
        %6022 = vmatprep.subr.bf16.mxu0 0
        %6023 = vmatpush1.bf16.xpose.msra.mxu0 0
        %6024 = vmatprep.subr.bf16.mxu0 0
        %6025 = vmatpush1.bf16.xpose.msra.mxu0 0
        %6026 = vmatprep.subr.bf16.mxu0 0
        %6027 = vmatpush1.bf16.xpose.msra.mxu0 0
        %6028 = vmatprep.subr.bf16.mxu0 0
        %6029 = vmatpush1.bf16.xpose.msra.mxu0 0
        %6030 = vmatprep.subr.bf16.mxu0 0
        %6031 = vmatpush1.bf16.xpose.msra.mxu0 0
        %6032 = vmatprep.subr.bf16.mxu0 0
        %6033 = vmatpush1.bf16.xpose.msra.mxu0 0
        %6034 = vmatprep.mubr.bf16.mxu0 0
        %6035 = vmatmul.mubr.bf16.gmra.mrb[0].mxu0 %v5997
        %v6036 = vpop.f32.mrb[0].mxu0
        %v6037 = vadd.f32 0.0, %v6036
        %v6038 = vpop.f32.mrb[0].mxu0
        %v6039 = vpop.f32.mrb[0].mxu0
        %v6040 = vpop.f32.mrb[0].mxu0
        %6041 = vdwg.mxu0
        %v6043 = vsel %vm3692, %v5946, 0
        %v6046 = vsel %vm3692, %v5318, 0
        %6048 = vmatprep.subr.bf16.mxu0 0
        %6049 = vmatpush1.bf16.xpose.msra.mxu0 %v6046
        %6050 = vmatprep.subr.bf16.mxu0 0
        %6051 = vmatpush1.bf16.xpose.msra.mxu0 0
        %6052 = vmatprep.subr.bf16.mxu0 0
        %6053 = vmatpush1.bf16.xpose.msra.mxu0 0
        %6054 = vmatprep.subr.bf16.mxu0 0
        %6055 = vmatpush1.bf16.xpose.msra.mxu0 0
        %6056 = vmatprep.subr.bf16.mxu0 0
        %6057 = vmatpush1.bf16.xpose.msra.mxu0 0
        %6058 = vmatprep.subr.bf16.mxu0 0
        %6059 = vmatpush1.bf16.xpose.msra.mxu0 0
        %6060 = vmatprep.subr.bf16.mxu0 0
        %6061 = vmatpush1.bf16.xpose.msra.mxu0 0
        %6062 = vmatprep.subr.bf16.mxu0 0
        %6063 = vmatpush1.bf16.xpose.msra.mxu0 0
        %6064 = vmatprep.subr.bf16.mxu0 0
        %6065 = vmatpush1.bf16.xpose.msra.mxu0 0
        %6066 = vmatprep.subr.bf16.mxu0 0
        %6067 = vmatpush1.bf16.xpose.msra.mxu0 0
        %6068 = vmatprep.subr.bf16.mxu0 0
        %6069 = vmatpush1.bf16.xpose.msra.mxu0 0
        %6070 = vmatprep.subr.bf16.mxu0 0
        %6071 = vmatpush1.bf16.xpose.msra.mxu0 0
        %6072 = vmatprep.subr.bf16.mxu0 0
        %6073 = vmatpush1.bf16.xpose.msra.mxu0 0
        %6074 = vmatprep.subr.bf16.mxu0 0
        %6075 = vmatpush1.bf16.xpose.msra.mxu0 0
        %6076 = vmatprep.subr.bf16.mxu0 0
        %6077 = vmatpush1.bf16.xpose.msra.mxu0 0
        %6078 = vmatprep.subr.bf16.mxu0 0
        %6079 = vmatpush1.bf16.xpose.msra.mxu0 0
        %6080 = vmatprep.mubr.bf16.mxu0 0
        %6081 = vmatmul.mubr.bf16.gmra.mrb[0].mxu0 %v6043
        %v6082 = vpop.f32.mrb[0].mxu0
        %v6083 = vadd.f32 0.0, %v6082
        %v6084 = vpop.f32.mrb[0].mxu0
        %v6085 = vpop.f32.mrb[0].mxu0
        %v6086 = vpop.f32.mrb[0].mxu0
        %6087 = vdwg.mxu0
        %v6089 = vsel %vm3692, %v5949, 0
        %v6092 = vsel %vm3692, %v5319, 0
        %6094 = vmatprep.subr.bf16.mxu0 0
        %6095 = vmatpush1.bf16.xpose.msra.mxu0 %v6092
        %6096 = vmatprep.subr.bf16.mxu0 0
        %6097 = vmatpush1.bf16.xpose.msra.mxu0 0
        %6098 = vmatprep.subr.bf16.mxu0 0
        %6099 = vmatpush1.bf16.xpose.msra.mxu0 0
        %6100 = vmatprep.subr.bf16.mxu0 0
        %6101 = vmatpush1.bf16.xpose.msra.mxu0 0
        %6102 = vmatprep.subr.bf16.mxu0 0
        %6103 = vmatpush1.bf16.xpose.msra.mxu0 0
        %6104 = vmatprep.subr.bf16.mxu0 0
        %6105 = vmatpush1.bf16.xpose.msra.mxu0 0
        %6106 = vmatprep.subr.bf16.mxu0 0
        %6107 = vmatpush1.bf16.xpose.msra.mxu0 0
        %6108 = vmatprep.subr.bf16.mxu0 0
        %6109 = vmatpush1.bf16.xpose.msra.mxu0 0
        %6110 = vmatprep.subr.bf16.mxu0 0
        %6111 = vmatpush1.bf16.xpose.msra.mxu0 0
        %6112 = vmatprep.subr.bf16.mxu0 0
        %6113 = vmatpush1.bf16.xpose.msra.mxu0 0
        %6114 = vmatprep.subr.bf16.mxu0 0
        %6115 = vmatpush1.bf16.xpose.msra.mxu0 0
        %6116 = vmatprep.subr.bf16.mxu0 0
        %6117 = vmatpush1.bf16.xpose.msra.mxu0 0
        %6118 = vmatprep.subr.bf16.mxu0 0
        %6119 = vmatpush1.bf16.xpose.msra.mxu0 0
        %6120 = vmatprep.subr.bf16.mxu0 0
        %6121 = vmatpush1.bf16.xpose.msra.mxu0 0
        %6122 = vmatprep.subr.bf16.mxu0 0
        %6123 = vmatpush1.bf16.xpose.msra.mxu0 0
        %6124 = vmatprep.subr.bf16.mxu0 0
        %6125 = vmatpush1.bf16.xpose.msra.mxu0 0
        %6126 = vmatprep.mubr.bf16.mxu0 0
        %6127 = vmatmul.mubr.bf16.gmra.mrb[0].mxu0 %v6089
        %v6128 = vpop.f32.mrb[0].mxu0
        %v6129 = vadd.f32 0.0, %v6128
        %v6130 = vpop.f32.mrb[0].mxu0
        %v6131 = vpop.f32.mrb[0].mxu0
        %v6132 = vpop.f32.mrb[0].mxu0
        %6133 = vdwg.mxu0
        %6134 = vxpose.xlu0.b32.start [1/16] %v5991, 128
        %6135 = vxpose.xlu0.b32.cont [2/16] 0.0, 128
        %6136 = vxpose.xlu0.b32.cont [3/16] 0.0, 128
        %6137 = vxpose.xlu0.b32.cont [4/16] 0.0, 128
        %6138 = vxpose.xlu0.b32.cont [5/16] 0.0, 128
        %6139 = vxpose.xlu0.b32.cont [6/16] 0.0, 128
        %6140 = vxpose.xlu0.b32.cont [7/16] 0.0, 128
        %6141 = vxpose.xlu0.b32.cont [8/16] 0.0, 128
        %6142 = vxpose.xlu0.b32.cont [9/16] 0.0, 128
        %6143 = vxpose.xlu0.b32.cont [10/16] 0.0, 128
        %6144 = vxpose.xlu0.b32.cont [11/16] 0.0, 128
        %6145 = vxpose.xlu0.b32.cont [12/16] 0.0, 128
        %6146 = vxpose.xlu0.b32.cont [13/16] 0.0, 128
        %6147 = vxpose.xlu0.b32.cont [14/16] 0.0, 128
        %6148 = vxpose.xlu0.b32.cont [15/16] 0.0, 128
        %6149 = vxpose.xlu0.b32.end [16/16] 0.0, 128
        %v6150 = vpop.trf.xlu0
        %v6151 = vpop.trf.xlu0
        %v6152 = vpop.trf.xlu0
        %v6153 = vpop.trf.xlu0
        %v6154 = vpop.trf.xlu0
        %v6155 = vpop.trf.xlu0
        %v6156 = vpop.trf.xlu0
        %v6157 = vpop.trf.xlu0
        %v6158 = vpop.trf.xlu0
        %v6159 = vpop.trf.xlu0
        %v6160 = vpop.trf.xlu0
        %v6161 = vpop.trf.xlu0
        %v6162 = vpop.trf.xlu0
        %v6163 = vpop.trf.xlu0
        %v6164 = vpop.trf.xlu0
        %v6165 = vpop.trf.xlu0
        %6166 = vxpose.xlu0.b32.start [1/16] %v6037, 128
        %6167 = vxpose.xlu0.b32.cont [2/16] 0.0, 128
        %6168 = vxpose.xlu0.b32.cont [3/16] 0.0, 128
        %6169 = vxpose.xlu0.b32.cont [4/16] 0.0, 128
        %6170 = vxpose.xlu0.b32.cont [5/16] 0.0, 128
        %6171 = vxpose.xlu0.b32.cont [6/16] 0.0, 128
        %6172 = vxpose.xlu0.b32.cont [7/16] 0.0, 128
        %6173 = vxpose.xlu0.b32.cont [8/16] 0.0, 128
        %6174 = vxpose.xlu0.b32.cont [9/16] 0.0, 128
        %6175 = vxpose.xlu0.b32.cont [10/16] 0.0, 128
        %6176 = vxpose.xlu0.b32.cont [11/16] 0.0, 128
        %6177 = vxpose.xlu0.b32.cont [12/16] 0.0, 128
        %6178 = vxpose.xlu0.b32.cont [13/16] 0.0, 128
        %6179 = vxpose.xlu0.b32.cont [14/16] 0.0, 128
        %6180 = vxpose.xlu0.b32.cont [15/16] 0.0, 128
        %6181 = vxpose.xlu0.b32.end [16/16] 0.0, 128
        %v6182 = vpop.trf.xlu0
        %v6183 = vpop.trf.xlu0
        %v6184 = vpop.trf.xlu0
        %v6185 = vpop.trf.xlu0
        %v6186 = vpop.trf.xlu0
        %v6187 = vpop.trf.xlu0
        %v6188 = vpop.trf.xlu0
        %v6189 = vpop.trf.xlu0
        %v6190 = vpop.trf.xlu0
        %v6191 = vpop.trf.xlu0
        %v6192 = vpop.trf.xlu0
        %v6193 = vpop.trf.xlu0
        %v6194 = vpop.trf.xlu0
        %v6195 = vpop.trf.xlu0
        %v6196 = vpop.trf.xlu0
        %v6197 = vpop.trf.xlu0
        %6198 = vxpose.xlu0.b32.start [1/16] %v6083, 128
        %6199 = vxpose.xlu0.b32.cont [2/16] 0.0, 128
        %6200 = vxpose.xlu0.b32.cont [3/16] 0.0, 128
        %6201 = vxpose.xlu0.b32.cont [4/16] 0.0, 128
        %6202 = vxpose.xlu0.b32.cont [5/16] 0.0, 128
        %6203 = vxpose.xlu0.b32.cont [6/16] 0.0, 128
        %6204 = vxpose.xlu0.b32.cont [7/16] 0.0, 128
        %6205 = vxpose.xlu0.b32.cont [8/16] 0.0, 128
        %6206 = vxpose.xlu0.b32.cont [9/16] 0.0, 128
        %6207 = vxpose.xlu0.b32.cont [10/16] 0.0, 128
        %6208 = vxpose.xlu0.b32.cont [11/16] 0.0, 128
        %6209 = vxpose.xlu0.b32.cont [12/16] 0.0, 128
        %6210 = vxpose.xlu0.b32.cont [13/16] 0.0, 128
        %6211 = vxpose.xlu0.b32.cont [14/16] 0.0, 128
        %6212 = vxpose.xlu0.b32.cont [15/16] 0.0, 128
        %6213 = vxpose.xlu0.b32.end [16/16] 0.0, 128
        %v6214 = vpop.trf.xlu0
        %v6215 = vpop.trf.xlu0
        %v6216 = vpop.trf.xlu0
        %v6217 = vpop.trf.xlu0
        %v6218 = vpop.trf.xlu0
        %v6219 = vpop.trf.xlu0
        %v6220 = vpop.trf.xlu0
        %v6221 = vpop.trf.xlu0
        %v6222 = vpop.trf.xlu0
        %v6223 = vpop.trf.xlu0
        %v6224 = vpop.trf.xlu0
        %v6225 = vpop.trf.xlu0
        %v6226 = vpop.trf.xlu0
        %v6227 = vpop.trf.xlu0
        %v6228 = vpop.trf.xlu0
        %v6229 = vpop.trf.xlu0
        %6230 = vxpose.xlu0.b32.start [1/16] %v6129, 128
        %6231 = vxpose.xlu0.b32.cont [2/16] 0.0, 128
        %6232 = vxpose.xlu0.b32.cont [3/16] 0.0, 128
        %6233 = vxpose.xlu0.b32.cont [4/16] 0.0, 128
        %6234 = vxpose.xlu0.b32.cont [5/16] 0.0, 128
        %6235 = vxpose.xlu0.b32.cont [6/16] 0.0, 128
        %6236 = vxpose.xlu0.b32.cont [7/16] 0.0, 128
        %6237 = vxpose.xlu0.b32.cont [8/16] 0.0, 128
        %6238 = vxpose.xlu0.b32.cont [9/16] 0.0, 128
        %6239 = vxpose.xlu0.b32.cont [10/16] 0.0, 128
        %6240 = vxpose.xlu0.b32.cont [11/16] 0.0, 128
        %6241 = vxpose.xlu0.b32.cont [12/16] 0.0, 128
        %6242 = vxpose.xlu0.b32.cont [13/16] 0.0, 128
        %6243 = vxpose.xlu0.b32.cont [14/16] 0.0, 128
        %6244 = vxpose.xlu0.b32.cont [15/16] 0.0, 128
        %6245 = vxpose.xlu0.b32.end [16/16] 0.0, 128
        %v6246 = vpop.trf.xlu0
        %v6247 = vpop.trf.xlu0
        %v6248 = vpop.trf.xlu0
        %v6249 = vpop.trf.xlu0
        %v6250 = vpop.trf.xlu0
        %v6251 = vpop.trf.xlu0
        %v6252 = vpop.trf.xlu0
        %v6253 = vpop.trf.xlu0
        %v6254 = vpop.trf.xlu0
        %v6255 = vpop.trf.xlu0
        %v6256 = vpop.trf.xlu0
        %v6257 = vpop.trf.xlu0
        %v6258 = vpop.trf.xlu0
        %v6259 = vpop.trf.xlu0
        %v6260 = vpop.trf.xlu0
        %v6261 = vpop.trf.xlu0
        %v6262 = vcombine.low %v6150, %v6214
        %v6263 = vcombine.high %v6150, %v6214
        %v6265 = vunpack.c.l.s4 1983009808
        %v6266 = vunpack.c.0.s8 %v6265
        %v6267 = vlaneseq
        %v6268 = vshrl.u32 %v6267, 7
        %v6269 = vsub.s32 %v6266, %v6268
        %v6270 = vrot.slane %v6262, %v6269
        %v6272 = vunpack.c.l.s4 1983009808
        %v6273 = vunpack.c.0.s8 %v6272
        %v6274 = vlaneseq
        %v6275 = vshrl.u32 %v6274, 7
        %v6276 = vsub.s32 %v6273, %v6275
        %v6277 = vrot.slane %v6263, %v6276
        %v6278 = vcombine.low %v6182, %v6246
        %v6279 = vcombine.high %v6182, %v6246
        %v6281 = vunpack.c.l.s4 1983009808
        %v6282 = vunpack.c.0.s8 %v6281
        %v6283 = vlaneseq
        %v6284 = vshrl.u32 %v6283, 7
        %v6285 = vsub.s32 %v6282, %v6284
        %v6286 = vrot.slane %v6278, %v6285
        %v6288 = vunpack.c.l.s4 1983009808
        %v6289 = vunpack.c.0.s8 %v6288
        %v6290 = vlaneseq
        %v6291 = vshrl.u32 %v6290, 7
        %v6292 = vsub.s32 %v6289, %v6291
        %v6293 = vrot.slane %v6279, %v6292
        %v6294 = vcombine.low %v6270, %v6286
        %v6295 = vcombine.high %v6270, %v6286
        %v6297 = vunpack.c.l.s4 1934713408
        %v6298 = vunpack.c.0.s8 %v6297
        %v6299 = vlaneseq
        %v6300 = vshrl.u32 %v6299, 7
        %v6301 = vsub.s32 %v6298, %v6300
        %v6302 = vrot.slane %v6294, %v6301
        %v6304 = vunpack.c.l.s4 1934713408
        %v6305 = vunpack.c.0.s8 %v6304
        %v6306 = vlaneseq
        %v6307 = vshrl.u32 %v6306, 7
        %v6308 = vsub.s32 %v6305, %v6307
        %v6309 = vrot.slane %v6295, %v6308
        %v6310 = vcombine.low %v6277, %v6293
        %v6311 = vcombine.high %v6277, %v6293
        %v6313 = vunpack.c.l.s4 1934713408
        %v6314 = vunpack.c.0.s8 %v6313
        %v6315 = vlaneseq
        %v6316 = vshrl.u32 %v6315, 7
        %v6317 = vsub.s32 %v6314, %v6316
        %v6318 = vrot.slane %v6310, %v6317
        %v6320 = vunpack.c.l.s4 1934713408
        %v6321 = vunpack.c.0.s8 %v6320
        %v6322 = vlaneseq
        %v6323 = vshrl.u32 %v6322, 7
        %v6324 = vsub.s32 %v6321, %v6323
        %v6325 = vrot.slane %v6311, %v6324
        %v6326 = vcombine.high %v6302, 0.0
        %v6327 = vcombine.high %v6309, 0.0
        %v6328 = vcombine.high %v6318, 0.0
        %v6329 = vcombine.high %v6325, 0.0
        %v6330 = vcombine.low %v6302, %v6309
        %v6332 = vunpack.c.l.s4 1983009808
        %v6333 = vunpack.c.0.s8 %v6332
        %v6334 = vlaneseq
        %v6335 = vshrl.u32 %v6334, 7
        %v6336 = vsub.s32 %v6333, %v6335
        %v6337 = vrot.slane %v6330, %v6336
        %v6338 = vcombine.low %v6326, %v6327
        %v6340 = vunpack.c.l.s4 1983009808
        %v6341 = vunpack.c.0.s8 %v6340
        %v6342 = vlaneseq
        %v6343 = vshrl.u32 %v6342, 7
        %v6344 = vsub.s32 %v6341, %v6343
        %v6345 = vrot.slane %v6338, %v6344
        %v6346 = vcombine.low %v6318, %v6325
        %v6348 = vunpack.c.l.s4 1983009808
        %v6349 = vunpack.c.0.s8 %v6348
        %v6350 = vlaneseq
        %v6351 = vshrl.u32 %v6350, 7
        %v6352 = vsub.s32 %v6349, %v6351
        %v6353 = vrot.slane %v6346, %v6352
        %v6354 = vcombine.low %v6328, %v6329
        %v6356 = vunpack.c.l.s4 1983009808
        %v6357 = vunpack.c.0.s8 %v6356
        %v6358 = vlaneseq
        %v6359 = vshrl.u32 %v6358, 7
        %v6360 = vsub.s32 %v6357, %v6359
        %v6361 = vrot.slane %v6354, %v6360
        %v6362 = vcombine.low %v6337, %v6345
        %v6363 = vcombine.high %v6337, %v6345
        %v6365 = vunpack.c.l.s4 1934713408
        %v6366 = vunpack.c.0.s8 %v6365
        %v6367 = vlaneseq
        %v6368 = vshrl.u32 %v6367, 7
        %v6369 = vsub.s32 %v6366, %v6368
        %v6370 = vrot.slane %v6362, %v6369
        %v6372 = vunpack.c.l.s4 1934713408
        %v6373 = vunpack.c.0.s8 %v6372
        %v6374 = vlaneseq
        %v6375 = vshrl.u32 %v6374, 7
        %v6376 = vsub.s32 %v6373, %v6375
        %v6377 = vrot.slane %v6363, %v6376
        %v6378 = vcombine.low %v6353, %v6361
        %v6379 = vcombine.high %v6353, %v6361
        %v6381 = vunpack.c.l.s4 1934713408
        %v6382 = vunpack.c.0.s8 %v6381
        %v6383 = vlaneseq
        %v6384 = vshrl.u32 %v6383, 7
        %v6385 = vsub.s32 %v6382, %v6384
        %v6386 = vrot.slane %v6378, %v6385
        %v6388 = vunpack.c.l.s4 1934713408
        %v6389 = vunpack.c.0.s8 %v6388
        %v6390 = vlaneseq
        %v6391 = vshrl.u32 %v6390, 7
        %v6392 = vsub.s32 %v6389, %v6391
        %v6393 = vrot.slane %v6379, %v6392
        %v6394 = vcombine.low %v6370, %v6386
        %v6395 = vcombine.high %v6370, %v6386
        %v6396 = vcombine.low %v6377, %v6393
        %v6397 = vcombine.high %v6377, %v6393
        %6399 = vrot.lane.b32.xlu0 %v6395, 8
        %v6400 = vpop.permute.xlu0 %6399
        %6403 = vrot.lane.b32.xlu0 %v6396, 16
        %v6404 = vpop.permute.xlu0 %6403
        %6407 = vrot.lane.b32.xlu0 %v6397, 24
        %v6408 = vpop.permute.xlu0 %6407
        %v6410 = vsel %vm2571, %v6394, %v6400
        %v6411 = vsel %vm3692, %v6410, %v6404
        %v6412 = vsel %vm3694, %v6411, %v6408
        %v6413 = vpack.c.bf16 %v6412, %v6412
        %v6414 = vld [vmem:[%s1383] sm:$0xf]
        %v6415 = vld [vmem:[%s1383 + $0x4] sm:$0xf]
        %v6416 = vld [vmem:[%s1383 + $0x8] sm:$0xf]
        %v6417 = vld [vmem:[%s1383 + $0xc] sm:$0xf]
        %v6418 = vld [vmem:[%s1599] sm:$0x1]
        %v6420 = vlaneseq
        %v6421 = vshrl.u32 %v6420, 7
        %v6422 = vsub.s32 0, %v6421
        %v6423 = vrot.slane %v6418, %v6422
        %v6429 = vunpack.c.l.b16 %v6414
        %v6430 = vunpack.c.l.b16 %v6415
        %v6431 = vunpack.c.l.b16 %v6416
        %v6432 = vunpack.c.l.b16 %v6417
        %v6433 = vpack.c.b16 %v6430, %v6429
        %v6434 = vpack.c.b16 %v6432, %v6431
        %v6438 = vsel %vm1667, %v6413, 0
        %6440 = vmatprep.subr.bf16.mxu0 0
        %6441 = vmatpush1.bf16.msra.mxu0 %v6433
        %6442 = vmatprep.subr.bf16.mxu0 0
        %6443 = vmatpush1.bf16.msra.mxu0 %v6434
        %6444 = vmatprep.subr.bf16.mxu0 0
        %6445 = vmatpush1.bf16.msra.mxu0 0
        %6446 = vmatprep.subr.bf16.mxu0 0
        %6447 = vmatpush1.bf16.msra.mxu0 0
        %6448 = vmatprep.subr.bf16.mxu0 0
        %6449 = vmatpush1.bf16.msra.mxu0 0
        %6450 = vmatprep.subr.bf16.mxu0 0
        %6451 = vmatpush1.bf16.msra.mxu0 0
        %6452 = vmatprep.subr.bf16.mxu0 0
        %6453 = vmatpush1.bf16.msra.mxu0 0
        %6454 = vmatprep.subr.bf16.mxu0 0
        %6455 = vmatpush1.bf16.msra.mxu0 0
        %6456 = vmatprep.subr.bf16.mxu0 0
        %6457 = vmatpush1.bf16.msra.mxu0 0
        %6458 = vmatprep.subr.bf16.mxu0 0
        %6459 = vmatpush1.bf16.msra.mxu0 0
        %6460 = vmatprep.subr.bf16.mxu0 0
        %6461 = vmatpush1.bf16.msra.mxu0 0
        %6462 = vmatprep.subr.bf16.mxu0 0
        %6463 = vmatpush1.bf16.msra.mxu0 0
        %6464 = vmatprep.subr.bf16.mxu0 0
        %6465 = vmatpush1.bf16.msra.mxu0 0
        %6466 = vmatprep.subr.bf16.mxu0 0
        %6467 = vmatpush1.bf16.msra.mxu0 0
        %6468 = vmatprep.subr.bf16.mxu0 0
        %6469 = vmatpush1.bf16.msra.mxu0 0
        %6470 = vmatprep.subr.bf16.mxu0 0
        %6471 = vmatpush1.bf16.msra.mxu0 0
        %6472 = vmatprep.mubr.bf16.mxu0 0
        %6473 = vmatmul.mubr.bf16.gmra.mrb[0].mxu0 %v6438
        %v6474 = vpop.f32.mrb[0].mxu0
        %v6475 = vadd.f32 %v6423, %v6474
        %v6476 = vpop.f32.mrb[0].mxu0
        %v6477 = vpop.f32.mrb[0].mxu0
        %v6478 = vpop.f32.mrb[0].mxu0
        %6479 = vdwg.mxu0
        %v6480 = vadd.f32 %v3793, %v6475
        %v6481 = vsel %vm1667, %v6480, 0.0
        %6482 = vadd.xlane.f32.xlu0 %v6481
        %v6483 = vpop.xlane.xlu0 %6482
        %v6484 = vmul.f32 %v6483, %v3767
        %v6485 = vsub.f32 %v6480, %v6484
        %v6486 = vmul.f32 %v6485, %v6485
        %v6487 = vsel %vm1667, %v6486, 0.0
        %6488 = vadd.xlane.f32.xlu0 %v6487
        %v6489 = vpop.xlane.xlu0 %6488
        %v6490 = vmul.f32 %v6489, %v3767
        %v6491 = vadd.f32 %v6490, 1e-05
        %v6492 = vrsqrt.pop %v6491
        %v6493 = vmul.f32 %v6485, %v6492
        %v6494 = vld [vmem:[%s1608] sm:$0x1]
        %v6496 = vlaneseq
        %v6497 = vshrl.u32 %v6496, 7
        %v6498 = vsub.s32 0, %v6497
        %v6499 = vrot.slane %v6494, %v6498
        %v6501 = vmul.f32 %v6493, %v6499
        %v6502 = vld [vmem:[%s1611] sm:$0x1]
        %v6504 = vlaneseq
        %v6505 = vshrl.u32 %v6504, 7
        %v6506 = vsub.s32 0, %v6505
        %v6507 = vrot.slane %v6502, %v6506
        %v6509 = vadd.f32 %v6501, %v6507
        %v6510 = vpack.c.bf16 %v6509, %v6509
        %v6511 = vld [vmem:[%s1392] sm:$0xf]
        %v6512 = vld [vmem:[%s1392 + $0x4] sm:$0xf]
        %v6513 = vld [vmem:[%s1392 + $0x8] sm:$0xf]
        %v6514 = vld [vmem:[%s1392 + $0xc] sm:$0xf]
        %v6515 = vld [vmem:[%s1620] sm:$0x1]
        %v6517 = vlaneseq
        %v6518 = vshrl.u32 %v6517, 7
        %v6519 = vsub.s32 0, %v6518
        %v6520 = vrot.slane %v6515, %v6519
        %v6526 = vunpack.c.l.b16 %v6511
        %v6527 = vunpack.c.l.b16 %v6512
        %v6528 = vunpack.c.l.b16 %v6513
        %v6529 = vunpack.c.l.b16 %v6514
        %v6530 = vpack.c.b16 %v6527, %v6526
        %v6531 = vpack.c.b16 %v6529, %v6528
        %v6535 = vsel %vm1667, %v6510, 0
        %6537 = vmatprep.subr.bf16.mxu0 0
        %6538 = vmatpush1.bf16.msra.mxu0 %v6530
        %6539 = vmatprep.subr.bf16.mxu0 0
        %6540 = vmatpush1.bf16.msra.mxu0 %v6531
        %6541 = vmatprep.subr.bf16.mxu0 0
        %6542 = vmatpush1.bf16.msra.mxu0 0
        %6543 = vmatprep.subr.bf16.mxu0 0
        %6544 = vmatpush1.bf16.msra.mxu0 0
        %6545 = vmatprep.subr.bf16.mxu0 0
        %6546 = vmatpush1.bf16.msra.mxu0 0
        %6547 = vmatprep.subr.bf16.mxu0 0
        %6548 = vmatpush1.bf16.msra.mxu0 0
        %6549 = vmatprep.subr.bf16.mxu0 0
        %6550 = vmatpush1.bf16.msra.mxu0 0
        %6551 = vmatprep.subr.bf16.mxu0 0
        %6552 = vmatpush1.bf16.msra.mxu0 0
        %6553 = vmatprep.subr.bf16.mxu0 0
        %6554 = vmatpush1.bf16.msra.mxu0 0
        %6555 = vmatprep.subr.bf16.mxu0 0
        %6556 = vmatpush1.bf16.msra.mxu0 0
        %6557 = vmatprep.subr.bf16.mxu0 0
        %6558 = vmatpush1.bf16.msra.mxu0 0
        %6559 = vmatprep.subr.bf16.mxu0 0
        %6560 = vmatpush1.bf16.msra.mxu0 0
        %6561 = vmatprep.subr.bf16.mxu0 0
        %6562 = vmatpush1.bf16.msra.mxu0 0
        %6563 = vmatprep.subr.bf16.mxu0 0
        %6564 = vmatpush1.bf16.msra.mxu0 0
        %6565 = vmatprep.subr.bf16.mxu0 0
        %6566 = vmatpush1.bf16.msra.mxu0 0
        %6567 = vmatprep.subr.bf16.mxu0 0
        %6568 = vmatpush1.bf16.msra.mxu0 0
        %6569 = vmatprep.mubr.bf16.mxu0 0
        %6570 = vmatmul.mubr.bf16.gmra.mrb[0].mxu0 %v6535
        %v6571 = vpop.f32.mrb[0].mxu0
        %v6572 = vadd.f32 %v6520, %v6571
        %v6573 = vpop.f32.mrb[0].mxu0
        %v6574 = vpop.f32.mrb[0].mxu0
        %v6575 = vpop.f32.mrb[0].mxu0
        %6576 = vdwg.mxu0
        %v6577 = vmax.f32 %v6572, 0.0
        %v6578 = vpack.c.bf16 %v6577, %v6577
        %v6579 = vld [vmem:[%s1625] sm:$0xf]
        %v6580 = vld [vmem:[%s1625 + $0x4] sm:$0xf]
        %v6581 = vld [vmem:[%s1625 + $0x8] sm:$0xf]
        %v6582 = vld [vmem:[%s1625 + $0xc] sm:$0xf]
        %v6583 = vld [vmem:[%s1625 + $0x10] sm:$0xf]
        %v6584 = vld [vmem:[%s1625 + $0x14] sm:$0xf]
        %v6585 = vld [vmem:[%s1625 + $0x18] sm:$0xf]
        %v6586 = vld [vmem:[%s1625 + $0x1c] sm:$0xf]
        %v6587 = vld [vmem:[%s1628] sm:$0x1]
        %v6589 = vlaneseq
        %v6590 = vshrl.u32 %v6589, 7
        %v6591 = vsub.s32 0, %v6590
        %v6592 = vrot.slane %v6587, %v6591
        %v6602 = vunpack.c.l.b16 %v6579
        %v6603 = vunpack.c.l.b16 %v6580
        %v6604 = vunpack.c.l.b16 %v6581
        %v6605 = vunpack.c.l.b16 %v6582
        %v6606 = vunpack.c.l.b16 %v6583
        %v6607 = vunpack.c.l.b16 %v6584
        %v6608 = vunpack.c.l.b16 %v6585
        %v6609 = vunpack.c.l.b16 %v6586
        %v6610 = vpack.c.b16 %v6603, %v6602
        %v6611 = vpack.c.b16 %v6605, %v6604
        %v6612 = vpack.c.b16 %v6607, %v6606
        %v6613 = vpack.c.b16 %v6609, %v6608
        %vm6618 = vcmask 523264
        %v6620 = vsel %vm6618, %v6578, 0
        %6622 = vmatprep.subr.bf16.mxu0 0
        %6623 = vmatpush1.bf16.msra.mxu0 %v6610
        %6624 = vmatprep.subr.bf16.mxu0 0
        %6625 = vmatpush1.bf16.msra.mxu0 %v6611
        %6626 = vmatprep.subr.bf16.mxu0 0
        %6627 = vmatpush1.bf16.msra.mxu0 %v6612
        %6628 = vmatprep.subr.bf16.mxu0 0
        %6629 = vmatpush1.bf16.msra.mxu0 %v6613
        %6630 = vmatprep.subr.bf16.mxu0 0
        %6631 = vmatpush1.bf16.msra.mxu0 0
        %6632 = vmatprep.subr.bf16.mxu0 0
        %6633 = vmatpush1.bf16.msra.mxu0 0
        %6634 = vmatprep.subr.bf16.mxu0 0
        %6635 = vmatpush1.bf16.msra.mxu0 0
        %6636 = vmatprep.subr.bf16.mxu0 0
        %6637 = vmatpush1.bf16.msra.mxu0 0
        %6638 = vmatprep.subr.bf16.mxu0 0
        %6639 = vmatpush1.bf16.msra.mxu0 0
        %6640 = vmatprep.subr.bf16.mxu0 0
        %6641 = vmatpush1.bf16.msra.mxu0 0
        %6642 = vmatprep.subr.bf16.mxu0 0
        %6643 = vmatpush1.bf16.msra.mxu0 0
        %6644 = vmatprep.subr.bf16.mxu0 0
        %6645 = vmatpush1.bf16.msra.mxu0 0
        %6646 = vmatprep.subr.bf16.mxu0 0
        %6647 = vmatpush1.bf16.msra.mxu0 0
        %6648 = vmatprep.subr.bf16.mxu0 0
        %6649 = vmatpush1.bf16.msra.mxu0 0
        %6650 = vmatprep.subr.bf16.mxu0 0
        %6651 = vmatpush1.bf16.msra.mxu0 0
        %6652 = vmatprep.subr.bf16.mxu0 0
        %6653 = vmatpush1.bf16.msra.mxu0 0
        %6654 = vmatprep.mubr.bf16.mxu0 0
        %6655 = vmatmul.mubr.bf16.gmra.mrb[0].mxu0 %v6620
        %v6656 = vpop.f32.mrb[0].mxu0
        %v6657 = vadd.f32 %v6592, %v6656
        %v6658 = vpop.f32.mrb[0].mxu0
        %v6659 = vpop.f32.mrb[0].mxu0
        %v6660 = vpop.f32.mrb[0].mxu0
        %6661 = vdwg.mxu0
        %v6662 = vadd.f32 %v6509, %v6657
        %v6663 = vsel %vm1667, %v6662, 0.0
        %6664 = vadd.xlane.f32.xlu0 %v6663
        %v6665 = vpop.xlane.xlu0 %6664
        %v6666 = vmul.f32 %v6665, %v3767
        %v6667 = vsub.f32 %v6662, %v6666
        %v6668 = vmul.f32 %v6667, %v6667
        %v6669 = vsel %vm1667, %v6668, 0.0
        %6670 = vadd.xlane.f32.xlu0 %v6669
        %v6671 = vpop.xlane.xlu0 %6670
        %v6672 = vmul.f32 %v6671, %v3767
        %v6673 = vadd.f32 %v6672, 1e-05
        %v6674 = vrsqrt.pop %v6673
        %v6675 = vmul.f32 %v6667, %v6674
        %v6676 = vld [vmem:[%s1614] sm:$0x1]
        %v6678 = vlaneseq
        %v6679 = vshrl.u32 %v6678, 7
        %v6680 = vsub.s32 0, %v6679
        %v6681 = vrot.slane %v6676, %v6680
        %v6683 = vmul.f32 %v6675, %v6681
        %v6684 = vld [vmem:[%s1617] sm:$0x1]
        %v6686 = vlaneseq
        %v6687 = vshrl.u32 %v6686, 7
        %v6688 = vsub.s32 0, %v6687
        %v6689 = vrot.slane %v6684, %v6688
        %v6691 = vadd.f32 %v6683, %v6689
        %6692 = vst.msk [vmem:[#allocation2] sm:$0xff] %vm1667, %v6691
        %p6693 = scmp.eq.s32.totalorder %s100, 1
        // Predicated region
        $region201: #{tpu_custom_call.1} parent=135 // pred_check
          %p6694 = pneg %p6693
        $region202: #{tpu_custom_call.1} parent=135 // pred_check_branch
          %6696 = sbr.rel (%p6694) target = $region204
        $region203: #{tpu_custom_call.1} parent=135 // pred_region
          %6697 = vst.msk [vmem:[%s1576] sm:$0xff] %vm1667, %v6691
        $region204: #{tpu_custom_call.1} parent=135 // pred_fallthru
          _
        %s6698 = sand.u32 %s864, 1
        %s6699 = scalar_lea.sflag [#allocation5], %s6698
        %s6700 = sand.u32 %s864, 1
        %s6701 = smul.addr %s6700, 8
        %s6702 = scalar_lea.vmem [#allocation27], %s6701
        // Predicated region
        $region205: #{tpu_custom_call.1} parent=135 // pred_check
          %p6703 = pneg %p874
        $region206: #{tpu_custom_call.1} parent=135 // pred_check_branch
          %6705 = sbr.rel (%p6703) target = $region208
        $region207: #{tpu_custom_call.1} parent=135 // pred_region
          %s6707 = ssub.s32 128, 128
          %6708 = vsyncadd %s6699, %s6707
          %s6709 = smul.addr %s99, 128
          %s6710 = scalar_lea.hbm %s59, %s6709
          %s6712 = sshll.u32 %s6702, 4
          %s6713 = int_to_ptr.vmem [resolvable:$true] %s6712
          %6715 = dma.vmem_to_hbm [thread:$0]  %s6713, 128, %s6710, %s6699
        $region208: #{tpu_custom_call.1} parent=135 // pred_fallthru
          _
      $region136: #{tpu_custom_call.1} parent=5 // pred_fallthru
        _
      %p6716 = scmp.le.s32.totalorder 2, %s90
      // Predicated region
      $region209: #{tpu_custom_call.1} parent=5 // pred_check
        %p6717 = pneg %p6716
      $region210: #{tpu_custom_call.1} parent=5 // pred_check_branch
        %6719 = sbr.rel (%p6717) target = $region212
      $region211: #{tpu_custom_call.1} parent=5 // pred_region
        %s6720 = ssub.s32 %s90, 2
        // Predicated region
        $region213: #{tpu_custom_call.1} parent=211 // pred_check
          %p6721 = pneg %p880
        $region214: #{tpu_custom_call.1} parent=211 // pred_check_branch
          %6723 = sbr.rel (%p6721) target = $region216
        $region215: #{tpu_custom_call.1} parent=211 // pred_region
          %s6724 = sand.u32 %s865, 1
          %s6725 = scalar_lea.sflag [#allocation5], %s6724
          %s6726 = sand.u32 %s865, 1
          %s6727 = smul.addr %s6726, 8
          %s6728 = scalar_lea.vmem [#allocation27], %s6727
          %6729 = dma.done %s6725, 128
        $region216: #{tpu_custom_call.1} parent=211 // pred_fallthru
          _
      $region212: #{tpu_custom_call.1} parent=5 // pred_fallthru
        _
    $region6: #{tpu_custom_call.1} parent=1 // loop_footer
      %s94 = sadd.s32 1, %s90
    $region7: #{tpu_custom_call.1} parent=1 // loop_footer_branch
      %89 = sbr.rel target = $region3
    $region8: #{tpu_custom_call.1} parent=1 // loop_exit
      _
    %6730 = vsyncpa [#allocation4], 1
    %s6731 = scalar_lea.sflag [#allocation4], 1
    %6732 = vsyncpa %s6731, 1
    %6733 = vsyncpa [#allocation7], 1
    %s6734 = scalar_lea.sflag [#allocation7], 1
    %6735 = vsyncpa %s6734, 1
    %6736 = vsyncpa [#allocation10], 1
    %s6737 = scalar_lea.sflag [#allocation10], 1
    %6738 = vsyncpa %s6737, 1
    %6739 = vsyncpa [#allocation13], 1
    %s6740 = scalar_lea.sflag [#allocation13], 1
    %6741 = vsyncpa %s6740, 1
    %6742 = vsyncpa [#allocation16], 1
    %s6743 = scalar_lea.sflag [#allocation16], 1
    %6744 = vsyncpa %s6743, 1
    %6745 = vsyncpa [#allocation19], 1
    %s6746 = scalar_lea.sflag [#allocation19], 1
    %6747 = vsyncpa %s6746, 1
    %6748 = vsyncpa [#allocation22], 1
    %s6749 = scalar_lea.sflag [#allocation22], 1
    %6750 = vsyncpa %s6749, 1
    %6751 = vsyncpa [#allocation25], 1
    %s6752 = scalar_lea.sflag [#allocation25], 1
    %6753 = vsyncpa %s6752, 1
    %6754 = vsyncpa [#allocation5], 1
    %s6755 = scalar_lea.sflag [#allocation5], 1
    %6756 = vsyncpa %s6755, 1

</llo_original>
